<compile_context>
chip_gen: v6e
topology: v6e:2x2x1
jax: 0.10.0
libtpu: 0.0.40
codegen_flags: <defaults>
</compile_context>

<pallas_src>
import math

import jax
import jax.numpy as jnp
from jax.experimental import pallas as pl
from jax.experimental.pallas import tpu as pltpu


K_LARGE, K_MID, K_SMALL = 13, 7, 3


def _build_effective_kernel(w13, b13, w7, b7, w3, b3):
    """Collapse the three depthwise convs + identity into one 13x13 kernel.

    Weights come in PyTorch depthwise layout (C, 1, K, K); returns
    w_eff of shape (13, 13, C) (channels last) and b_eff of shape (C,).
    """
    w_eff = jnp.transpose(w13[:, 0, :, :], (1, 2, 0))          # (13, 13, C)
    w7_t = jnp.transpose(w7[:, 0, :, :], (1, 2, 0))            # (7, 7, C)
    w3_t = jnp.transpose(w3[:, 0, :, :], (1, 2, 0))            # (3, 3, C)

    off7 = (K_LARGE - K_MID) // 2                              # 3
    off3 = (K_LARGE - K_SMALL) // 2                            # 5
    ctr = K_LARGE // 2                                         # 6

    w_eff = w_eff.at[off7:off7 + K_MID, off7:off7 + K_MID, :].add(w7_t)
    w_eff = w_eff.at[off3:off3 + K_SMALL, off3:off3 + K_SMALL, :].add(w3_t)
    w_eff = w_eff.at[ctr, ctr, :].add(1.0)                     # identity (+ cnn_feat)

    b_eff = b13 + b7 + b3                                      # (C,)
    return w_eff, b_eff


def _ppeg_kernel(xpad_ref, w_ref, b_ref, o_ref):
    # xpad_ref: (h + 12, h + 12, C) zero-padded channels-last feature map (1 batch elt)
    # w_ref:    (13, 13, C)         effective per-channel kernel taps
    # b_ref:    (1, C)              effective per-channel bias
    # o_ref:    (h, h, C)
    h, w, c = o_ref.shape
    k = w_ref.shape[0]

    acc = jnp.zeros((h, w, c), jnp.float32)
    for di in range(k):                       # fully unrolled 13x13 tap loop
        for dj in range(k):
            tap = xpad_ref[di:di + h, dj:dj + w, :].astype(jnp.float32)
            wgt = w_ref[di, dj, :].astype(jnp.float32)          # (C,)
            acc = acc + tap * wgt
    acc = acc + b_ref[0, :].astype(jnp.float32)
    o_ref[...] = acc.astype(o_ref.dtype)


def ppeg_forward(x, w13, b13, w7, b7, w3, b3):
    """x: (B, H, C) with H a perfect square. Weights in PyTorch (C,1,K,K) layout."""
    B, Htok, C = x.shape
    h = int(math.isqrt(Htok))
    assert h * h == Htok, f"token count {Htok} is not a perfect square"
    pad = K_LARGE // 2
    hp = h + 2 * pad

    w_eff, b_eff = _build_effective_kernel(w13, b13, w7, b7, w3, b3)
    w_eff = w_eff.astype(x.dtype)
    b_eff = b_eff.reshape(1, C).astype(x.dtype)

    # (B, H, C) -> (B, h, h, C) channels-last map + zero "same" padding (glue).
    feat = x.reshape(B, h, h, C)
    feat_pad = jnp.pad(feat, ((0, 0), (pad, pad), (pad, pad), (0, 0)))

    out = pl.pallas_call(
        _ppeg_kernel,
        out_shape=jax.ShapeDtypeStruct((B, h, h, C), x.dtype),
        grid=(B,),
        in_specs=[
            pl.BlockSpec((None, hp, hp, C), lambda b: (b, 0, 0, 0)),
            pl.BlockSpec((K_LARGE, K_LARGE, C), lambda b: (0, 0, 0)),
            pl.BlockSpec((1, C), lambda b: (0, 0)),
        ],
        out_specs=pl.BlockSpec((None, h, h, C), lambda b: (b, 0, 0, 0)),
        compiler_params=pltpu.CompilerParams(
            dimension_semantics=("parallel",)),
    )(feat_pad, w_eff, b_eff)

    return out.reshape(B, Htok, C)
    # TODO(synk): for very large token grids (h*h*C*4 bytes approaching the
    # 64 MiB v7x VMEM budget), tile the spatial rows with a halo instead of
    # loading the full padded map per batch element.


def ppeg_reference(x, w13, b13, w7, b7, w3, b3):
    """Plain-JAX reference mirroring the PyTorch module (NCHW depthwise convs)."""
    B, Htok, C = x.shape
    h = int(math.isqrt(Htok))
    feat = jnp.transpose(x, (0, 2, 1)).reshape(B, C, h, h)

    def dw(inp, w, b, k):
        out = jax.lax.conv_general_dilated(
            inp, w, window_strides=(1, 1),
            padding=[(k // 2, k // 2), (k // 2, k // 2)],
            feature_group_count=C,
            dimension_numbers=("NCHW", "OIHW", "NCHW"))
        return out + b[None, :, None, None]

    out = (dw(feat, w13, b13, K_LARGE) + feat
           + dw(feat, w7, b7, K_MID) + dw(feat, w3, b3, K_SMALL))
    return out.reshape(B, C, Htok).transpose(0, 2, 1)


if __name__ == "__main__":
    # Small shapes consistent with the module: batch=2, 8x8=64 tokens, dim=128
    # (dim kept a multiple of 128 so the channel/lane axis is lane-dense).
    B, h, C = 2, 8, 128
    Htok = h * h

    key = jax.random.PRNGKey(0)
    kx, k13w, k13b, k7w, k7b, k3w, k3b = jax.random.split(key, 7)

    x = jax.random.normal(kx, (B, Htok, C), dtype=jnp.float32)

    def init_conv(kw, kb, ksz):
        bound = 1.0 / math.sqrt(ksz * ksz)   # PyTorch depthwise fan_in = 1*k*k
        w = jax.random.uniform(kw, (C, 1, ksz, ksz), jnp.float32, -bound, bound)
        b = jax.random.uniform(kb, (C,), jnp.float32, -bound, bound)
        return w, b

    w13, b13 = init_conv(k13w, k13b, K_LARGE)
    w7, b7 = init_conv(k7w, k7b, K_MID)
    w3, b3 = init_conv(k3w, k3b, K_SMALL)

    out = ppeg_forward(x, w13, b13, w7, b7, w3, b3)
    out = jax.block_until_ready(out)

    ref = ppeg_reference(x, w13, b13, w7, b7, w3, b3)
    assert out.shape == (B, Htok, C)
    err = jnp.max(jnp.abs(out - ref))
    assert jnp.allclose(out, ref, atol=1e-4, rtol=1e-4), f"max err {err}"

    print("KERNEL_OK")
</pallas_src>

<mosaic_0001>
module attributes {stable_mosaic.version = 11 : i64} {
  func.func @_ppeg_kernel(%arg0: i32, %arg1: memref<1x20x20x128xf32, #tpu.memory_space<vmem>>, %arg2: memref<13x13x128xf32, #tpu.memory_space<vmem>>, %arg3: memref<1x128xf32, #tpu.memory_space<vmem>>, %arg4: memref<1x8x8x128xf32, #tpu.memory_space<vmem>>) attributes {dimension_semantics = [#tpu.dimension_semantics<parallel>], iteration_bounds = array<i64: 2>, scalar_prefetch = 0 : i64, scratch_operands = 0 : i64, tpu.core_type = #tpu.core_type<tc>, window_params = [{transform_indices = @transform_0, window_bounds = array<i64: 1, 20, 20, 128>}, {pipeline_mode = #tpu.pipeline_mode<synchronous>, transform_indices = @transform_1, window_bounds = array<i64: 13, 13, 128>}, {pipeline_mode = #tpu.pipeline_mode<synchronous>, transform_indices = @transform_2, window_bounds = array<i64: 1, 128>}, {transform_indices = @transform_3, window_bounds = array<i64: 1, 8, 8, 128>}]} {
    %cst = arith.constant 0.000000e+00 : f32
    %0 = vector.broadcast %cst : f32 to vector<8x8x128xf32>
    %c0 = arith.constant 0 : index
    %c0_0 = arith.constant 0 : index
    %c0_1 = arith.constant 0 : index
    %c0_2 = arith.constant 0 : index
    %1 = vector.load %arg1[%c0, %c0_0, %c0_1, %c0_2] : memref<1x20x20x128xf32, #tpu.memory_space<vmem>>, vector<1x8x8x128xf32>
    %2 = vector.shape_cast %1 : vector<1x8x8x128xf32> to vector<8x8x128xf32>
    %c0_3 = arith.constant 0 : index
    %c0_4 = arith.constant 0 : index
    %c0_5 = arith.constant 0 : index
    %3 = vector.load %arg2[%c0_3, %c0_4, %c0_5] : memref<13x13x128xf32, #tpu.memory_space<vmem>>, vector<1x1x128xf32>
    %4 = vector.shape_cast %3 : vector<1x1x128xf32> to vector<128xf32>
    %5 = vector.shape_cast %4 : vector<128xf32> to vector<1x1x128xf32>
    %6 = vector.broadcast %5 : vector<1x1x128xf32> to vector<8x8x128xf32>
    %7 = arith.mulf %2, %6 : vector<8x8x128xf32>
    %8 = arith.addf %0, %7 : vector<8x8x128xf32>
    %c0_6 = arith.constant 0 : index
    %c0_7 = arith.constant 0 : index
    %c1 = arith.constant 1 : index
    %c0_8 = arith.constant 0 : index
    %9 = vector.load %arg1[%c0_6, %c0_7, %c1, %c0_8] : memref<1x20x20x128xf32, #tpu.memory_space<vmem>>, vector<1x8x8x128xf32>
    %10 = vector.shape_cast %9 : vector<1x8x8x128xf32> to vector<8x8x128xf32>
    %c0_9 = arith.constant 0 : index
    %c1_10 = arith.constant 1 : index
    %c0_11 = arith.constant 0 : index
    %11 = vector.load %arg2[%c0_9, %c1_10, %c0_11] : memref<13x13x128xf32, #tpu.memory_space<vmem>>, vector<1x1x128xf32>
    %12 = vector.shape_cast %11 : vector<1x1x128xf32> to vector<128xf32>
    %13 = vector.shape_cast %12 : vector<128xf32> to vector<1x1x128xf32>
    %14 = vector.broadcast %13 : vector<1x1x128xf32> to vector<8x8x128xf32>
    %15 = arith.mulf %10, %14 : vector<8x8x128xf32>
    %16 = arith.addf %8, %15 : vector<8x8x128xf32>
    %c0_12 = arith.constant 0 : index
    %c0_13 = arith.constant 0 : index
    %c2 = arith.constant 2 : index
    %c0_14 = arith.constant 0 : index
    %17 = vector.load %arg1[%c0_12, %c0_13, %c2, %c0_14] : memref<1x20x20x128xf32, #tpu.memory_space<vmem>>, vector<1x8x8x128xf32>
    %18 = vector.shape_cast %17 : vector<1x8x8x128xf32> to vector<8x8x128xf32>
    %c0_15 = arith.constant 0 : index
    %c2_16 = arith.constant 2 : index
    %c0_17 = arith.constant 0 : index
    %19 = vector.load %arg2[%c0_15, %c2_16, %c0_17] : memref<13x13x128xf32, #tpu.memory_space<vmem>>, vector<1x1x128xf32>
    %20 = vector.shape_cast %19 : vector<1x1x128xf32> to vector<128xf32>
    %21 = vector.shape_cast %20 : vector<128xf32> to vector<1x1x128xf32>
    %22 = vector.broadcast %21 : vector<1x1x128xf32> to vector<8x8x128xf32>
    %23 = arith.mulf %18, %22 : vector<8x8x128xf32>
    %24 = arith.addf %16, %23 : vector<8x8x128xf32>
    %c0_18 = arith.constant 0 : index
    %c0_19 = arith.constant 0 : index
    %c3 = arith.constant 3 : index
    %c0_20 = arith.constant 0 : index
    %25 = vector.load %arg1[%c0_18, %c0_19, %c3, %c0_20] : memref<1x20x20x128xf32, #tpu.memory_space<vmem>>, vector<1x8x8x128xf32>
    %26 = vector.shape_cast %25 : vector<1x8x8x128xf32> to vector<8x8x128xf32>
    %c0_21 = arith.constant 0 : index
    %c3_22 = arith.constant 3 : index
    %c0_23 = arith.constant 0 : index
    %27 = vector.load %arg2[%c0_21, %c3_22, %c0_23] : memref<13x13x128xf32, #tpu.memory_space<vmem>>, vector<1x1x128xf32>
    %28 = vector.shape_cast %27 : vector<1x1x128xf32> to vector<128xf32>
    %29 = vector.shape_cast %28 : vector<128xf32> to vector<1x1x128xf32>
    %30 = vector.broadcast %29 : vector<1x1x128xf32> to vector<8x8x128xf32>
    %31 = arith.mulf %26, %30 : vector<8x8x128xf32>
    %32 = arith.addf %24, %31 : vector<8x8x128xf32>
    %c0_24 = arith.constant 0 : index
    %c0_25 = arith.constant 0 : index
    %c4 = arith.constant 4 : index
    %c0_26 = arith.constant 0 : index
    %33 = vector.load %arg1[%c0_24, %c0_25, %c4, %c0_26] : memref<1x20x20x128xf32, #tpu.memory_space<vmem>>, vector<1x8x8x128xf32>
    %34 = vector.shape_cast %33 : vector<1x8x8x128xf32> to vector<8x8x128xf32>
    %c0_27 = arith.constant 0 : index
    %c4_28 = arith.constant 4 : index
    %c0_29 = arith.constant 0 : index
    %35 = vector.load %arg2[%c0_27, %c4_28, %c0_29] : memref<13x13x128xf32, #tpu.memory_space<vmem>>, vector<1x1x128xf32>
    %36 = vector.shape_cast %35 : vector<1x1x128xf32> to vector<128xf32>
    %37 = vector.shape_cast %36 : vector<128xf32> to vector<1x1x128xf32>
    %38 = vector.broadcast %37 : vector<1x1x128xf32> to vector<8x8x128xf32>
    %39 = arith.mulf %34, %38 : vector<8x8x128xf32>
    %40 = arith.addf %32, %39 : vector<8x8x128xf32>
    %c0_30 = arith.constant 0 : index
    %c0_31 = arith.constant 0 : index
    %c5 = arith.constant 5 : index
    %c0_32 = arith.constant 0 : index
    %41 = vector.load %arg1[%c0_30, %c0_31, %c5, %c0_32] : memref<1x20x20x128xf32, #tpu.memory_space<vmem>>, vector<1x8x8x128xf32>
    %42 = vector.shape_cast %41 : vector<1x8x8x128xf32> to vector<8x8x128xf32>
    %c0_33 = arith.constant 0 : index
    %c5_34 = arith.constant 5 : index
    %c0_35 = arith.constant 0 : index
    %43 = vector.load %arg2[%c0_33, %c5_34, %c0_35] : memref<13x13x128xf32, #tpu.memory_space<vmem>>, vector<1x1x128xf32>
    %44 = vector.shape_cast %43 : vector<1x1x128xf32> to vector<128xf32>
    %45 = vector.shape_cast %44 : vector<128xf32> to vector<1x1x128xf32>
    %46 = vector.broadcast %45 : vector<1x1x128xf32> to vector<8x8x128xf32>
    %47 = arith.mulf %42, %46 : vector<8x8x128xf32>
    %48 = arith.addf %40, %47 : vector<8x8x128xf32>
    %c0_36 = arith.constant 0 : index
    %c0_37 = arith.constant 0 : index
    %c6 = arith.constant 6 : index
    %c0_38 = arith.constant 0 : index
    %49 = vector.load %arg1[%c0_36, %c0_37, %c6, %c0_38] : memref<1x20x20x128xf32, #tpu.memory_space<vmem>>, vector<1x8x8x128xf32>
    %50 = vector.shape_cast %49 : vector<1x8x8x128xf32> to vector<8x8x128xf32>
    %c0_39 = arith.constant 0 : index
    %c6_40 = arith.constant 6 : index
    %c0_41 = arith.constant 0 : index
    %51 = vector.load %arg2[%c0_39, %c6_40, %c0_41] : memref<13x13x128xf32, #tpu.memory_space<vmem>>, vector<1x1x128xf32>
    %52 = vector.shape_cast %51 : vector<1x1x128xf32> to vector<128xf32>
    %53 = vector.shape_cast %52 : vector<128xf32> to vector<1x1x128xf32>
    %54 = vector.broadcast %53 : vector<1x1x128xf32> to vector<8x8x128xf32>
    %55 = arith.mulf %50, %54 : vector<8x8x128xf32>
    %56 = arith.addf %48, %55 : vector<8x8x128xf32>
    %c0_42 = arith.constant 0 : index
    %c0_43 = arith.constant 0 : index
    %c7 = arith.constant 7 : index
    %c0_44 = arith.constant 0 : index
    %57 = vector.load %arg1[%c0_42, %c0_43, %c7, %c0_44] : memref<1x20x20x128xf32, #tpu.memory_space<vmem>>, vector<1x8x8x128xf32>
    %58 = vector.shape_cast %57 : vector<1x8x8x128xf32> to vector<8x8x128xf32>
    %c0_45 = arith.constant 0 : index
    %c7_46 = arith.constant 7 : index
    %c0_47 = arith.constant 0 : index
    %59 = vector.load %arg2[%c0_45, %c7_46, %c0_47] : memref<13x13x128xf32, #tpu.memory_space<vmem>>, vector<1x1x128xf32>
    %60 = vector.shape_cast %59 : vector<1x1x128xf32> to vector<128xf32>
    %61 = vector.shape_cast %60 : vector<128xf32> to vector<1x1x128xf32>
    %62 = vector.broadcast %61 : vector<1x1x128xf32> to vector<8x8x128xf32>
    %63 = arith.mulf %58, %62 : vector<8x8x128xf32>
    %64 = arith.addf %56, %63 : vector<8x8x128xf32>
    %c0_48 = arith.constant 0 : index
    %c0_49 = arith.constant 0 : index
    %c8 = arith.constant 8 : index
    %c0_50 = arith.constant 0 : index
    %65 = vector.load %arg1[%c0_48, %c0_49, %c8, %c0_50] : memref<1x20x20x128xf32, #tpu.memory_space<vmem>>, vector<1x8x8x128xf32>
    %66 = vector.shape_cast %65 : vector<1x8x8x128xf32> to vector<8x8x128xf32>
    %c0_51 = arith.constant 0 : index
    %c8_52 = arith.constant 8 : index
    %c0_53 = arith.constant 0 : index
    %67 = vector.load %arg2[%c0_51, %c8_52, %c0_53] : memref<13x13x128xf32, #tpu.memory_space<vmem>>, vector<1x1x128xf32>
    %68 = vector.shape_cast %67 : vector<1x1x128xf32> to vector<128xf32>
    %69 = vector.shape_cast %68 : vector<128xf32> to vector<1x1x128xf32>
    %70 = vector.broadcast %69 : vector<1x1x128xf32> to vector<8x8x128xf32>
    %71 = arith.mulf %66, %70 : vector<8x8x128xf32>
    %72 = arith.addf %64, %71 : vector<8x8x128xf32>
    %c0_54 = arith.constant 0 : index
    %c0_55 = arith.constant 0 : index
    %c9 = arith.constant 9 : index
    %c0_56 = arith.constant 0 : index
    %73 = vector.load %arg1[%c0_54, %c0_55, %c9, %c0_56] : memref<1x20x20x128xf32, #tpu.memory_space<vmem>>, vector<1x8x8x128xf32>
    %74 = vector.shape_cast %73 : vector<1x8x8x128xf32> to vector<8x8x128xf32>
    %c0_57 = arith.constant 0 : index
    %c9_58 = arith.constant 9 : index
    %c0_59 = arith.constant 0 : index
    %75 = vector.load %arg2[%c0_57, %c9_58, %c0_59] : memref<13x13x128xf32, #tpu.memory_space<vmem>>, vector<1x1x128xf32>
    %76 = vector.shape_cast %75 : vector<1x1x128xf32> to vector<128xf32>
    %77 = vector.shape_cast %76 : vector<128xf32> to vector<1x1x128xf32>
    %78 = vector.broadcast %77 : vector<1x1x128xf32> to vector<8x8x128xf32>
    %79 = arith.mulf %74, %78 : vector<8x8x128xf32>
    %80 = arith.addf %72, %79 : vector<8x8x128xf32>
    %c0_60 = arith.constant 0 : index
    %c0_61 = arith.constant 0 : index
    %c10 = arith.constant 10 : index
    %c0_62 = arith.constant 0 : index
    %81 = vector.load %arg1[%c0_60, %c0_61, %c10, %c0_62] : memref<1x20x20x128xf32, #tpu.memory_space<vmem>>, vector<1x8x8x128xf32>
    %82 = vector.shape_cast %81 : vector<1x8x8x128xf32> to vector<8x8x128xf32>
    %c0_63 = arith.constant 0 : index
    %c10_64 = arith.constant 10 : index
    %c0_65 = arith.constant 0 : index
    %83 = vector.load %arg2[%c0_63, %c10_64, %c0_65] : memref<13x13x128xf32, #tpu.memory_space<vmem>>, vector<1x1x128xf32>
    %84 = vector.shape_cast %83 : vector<1x1x128xf32> to vector<128xf32>
    %85 = vector.shape_cast %84 : vector<128xf32> to vector<1x1x128xf32>
    %86 = vector.broadcast %85 : vector<1x1x128xf32> to vector<8x8x128xf32>
    %87 = arith.mulf %82, %86 : vector<8x8x128xf32>
    %88 = arith.addf %80, %87 : vector<8x8x128xf32>
    %c0_66 = arith.constant 0 : index
    %c0_67 = arith.constant 0 : index
    %c11 = arith.constant 11 : index
    %c0_68 = arith.constant 0 : index
    %89 = vector.load %arg1[%c0_66, %c0_67, %c11, %c0_68] : memref<1x20x20x128xf32, #tpu.memory_space<vmem>>, vector<1x8x8x128xf32>
    %90 = vector.shape_cast %89 : vector<1x8x8x128xf32> to vector<8x8x128xf32>
    %c0_69 = arith.constant 0 : index
    %c11_70 = arith.constant 11 : index
    %c0_71 = arith.constant 0 : index
    %91 = vector.load %arg2[%c0_69, %c11_70, %c0_71] : memref<13x13x128xf32, #tpu.memory_space<vmem>>, vector<1x1x128xf32>
    %92 = vector.shape_cast %91 : vector<1x1x128xf32> to vector<128xf32>
    %93 = vector.shape_cast %92 : vector<128xf32> to vector<1x1x128xf32>
    %94 = vector.broadcast %93 : vector<1x1x128xf32> to vector<8x8x128xf32>
    %95 = arith.mulf %90, %94 : vector<8x8x128xf32>
    %96 = arith.addf %88, %95 : vector<8x8x128xf32>
    %c0_72 = arith.constant 0 : index
    %c0_73 = arith.constant 0 : index
    %c12 = arith.constant 12 : index
    %c0_74 = arith.constant 0 : index
    %97 = vector.load %arg1[%c0_72, %c0_73, %c12, %c0_74] : memref<1x20x20x128xf32, #tpu.memory_space<vmem>>, vector<1x8x8x128xf32>
    %98 = vector.shape_cast %97 : vector<1x8x8x128xf32> to vector<8x8x128xf32>
    %c0_75 = arith.constant 0 : index
    %c12_76 = arith.constant 12 : index
    %c0_77 = arith.constant 0 : index
    %99 = vector.load %arg2[%c0_75, %c12_76, %c0_77] : memref<13x13x128xf32, #tpu.memory_space<vmem>>, vector<1x1x128xf32>
    %100 = vector.shape_cast %99 : vector<1x1x128xf32> to vector<128xf32>
    %101 = vector.shape_cast %100 : vector<128xf32> to vector<1x1x128xf32>
    %102 = vector.broadcast %101 : vector<1x1x128xf32> to vector<8x8x128xf32>
    %103 = arith.mulf %98, %102 : vector<8x8x128xf32>
    %104 = arith.addf %96, %103 : vector<8x8x128xf32>
    %c0_78 = arith.constant 0 : index
    %c1_79 = arith.constant 1 : index
    %c0_80 = arith.constant 0 : index
    %c0_81 = arith.constant 0 : index
    %105 = vector.load %arg1[%c0_78, %c1_79, %c0_80, %c0_81] : memref<1x20x20x128xf32, #tpu.memory_space<vmem>>, vector<1x8x8x128xf32>
    %106 = vector.shape_cast %105 : vector<1x8x8x128xf32> to vector<8x8x128xf32>
    %c1_82 = arith.constant 1 : index
    %c0_83 = arith.constant 0 : index
    %c0_84 = arith.constant 0 : index
    %107 = vector.load %arg2[%c1_82, %c0_83, %c0_84] : memref<13x13x128xf32, #tpu.memory_space<vmem>>, vector<1x1x128xf32>
    %108 = vector.shape_cast %107 : vector<1x1x128xf32> to vector<128xf32>
    %109 = vector.shape_cast %108 : vector<128xf32> to vector<1x1x128xf32>
    %110 = vector.broadcast %109 : vector<1x1x128xf32> to vector<8x8x128xf32>
    %111 = arith.mulf %106, %110 : vector<8x8x128xf32>
    %112 = arith.addf %104, %111 : vector<8x8x128xf32>
    %c0_85 = arith.constant 0 : index
    %c1_86 = arith.constant 1 : index
    %c1_87 = arith.constant 1 : index
    %c0_88 = arith.constant 0 : index
    %113 = vector.load %arg1[%c0_85, %c1_86, %c1_87, %c0_88] : memref<1x20x20x128xf32, #tpu.memory_space<vmem>>, vector<1x8x8x128xf32>
    %114 = vector.shape_cast %113 : vector<1x8x8x128xf32> to vector<8x8x128xf32>
    %c1_89 = arith.constant 1 : index
    %c1_90 = arith.constant 1 : index
    %c0_91 = arith.constant 0 : index
    %115 = vector.load %arg2[%c1_89, %c1_90, %c0_91] : memref<13x13x128xf32, #tpu.memory_space<vmem>>, vector<1x1x128xf32>
    %116 = vector.shape_cast %115 : vector<1x1x128xf32> to vector<128xf32>
    %117 = vector.shape_cast %116 : vector<128xf32> to vector<1x1x128xf32>
    %118 = vector.broadcast %117 : vector<1x1x128xf32> to vector<8x8x128xf32>
    %119 = arith.mulf %114, %118 : vector<8x8x128xf32>
    %120 = arith.addf %112, %119 : vector<8x8x128xf32>
    %c0_92 = arith.constant 0 : index
    %c1_93 = arith.constant 1 : index
    %c2_94 = arith.constant 2 : index
    %c0_95 = arith.constant 0 : index
    %121 = vector.load %arg1[%c0_92, %c1_93, %c2_94, %c0_95] : memref<1x20x20x128xf32, #tpu.memory_space<vmem>>, vector<1x8x8x128xf32>
    %122 = vector.shape_cast %121 : vector<1x8x8x128xf32> to vector<8x8x128xf32>
    %c1_96 = arith.constant 1 : index
    %c2_97 = arith.constant 2 : index
    %c0_98 = arith.constant 0 : index
    %123 = vector.load %arg2[%c1_96, %c2_97, %c0_98] : memref<13x13x128xf32, #tpu.memory_space<vmem>>, vector<1x1x128xf32>
    %124 = vector.shape_cast %123 : vector<1x1x128xf32> to vector<128xf32>
    %125 = vector.shape_cast %124 : vector<128xf32> to vector<1x1x128xf32>
    %126 = vector.broadcast %125 : vector<1x1x128xf32> to vector<8x8x128xf32>
    %127 = arith.mulf %122, %126 : vector<8x8x128xf32>
    %128 = arith.addf %120, %127 : vector<8x8x128xf32>
    %c0_99 = arith.constant 0 : index
    %c1_100 = arith.constant 1 : index
    %c3_101 = arith.constant 3 : index
    %c0_102 = arith.constant 0 : index
    %129 = vector.load %arg1[%c0_99, %c1_100, %c3_101, %c0_102] : memref<1x20x20x128xf32, #tpu.memory_space<vmem>>, vector<1x8x8x128xf32>
    %130 = vector.shape_cast %129 : vector<1x8x8x128xf32> to vector<8x8x128xf32>
    %c1_103 = arith.constant 1 : index
    %c3_104 = arith.constant 3 : index
    %c0_105 = arith.constant 0 : index
    %131 = vector.load %arg2[%c1_103, %c3_104, %c0_105] : memref<13x13x128xf32, #tpu.memory_space<vmem>>, vector<1x1x128xf32>
    %132 = vector.shape_cast %131 : vector<1x1x128xf32> to vector<128xf32>
    %133 = vector.shape_cast %132 : vector<128xf32> to vector<1x1x128xf32>
    %134 = vector.broadcast %133 : vector<1x1x128xf32> to vector<8x8x128xf32>
    %135 = arith.mulf %130, %134 : vector<8x8x128xf32>
    %136 = arith.addf %128, %135 : vector<8x8x128xf32>
    %c0_106 = arith.constant 0 : index
    %c1_107 = arith.constant 1 : index
    %c4_108 = arith.constant 4 : index
    %c0_109 = arith.constant 0 : index
    %137 = vector.load %arg1[%c0_106, %c1_107, %c4_108, %c0_109] : memref<1x20x20x128xf32, #tpu.memory_space<vmem>>, vector<1x8x8x128xf32>
    %138 = vector.shape_cast %137 : vector<1x8x8x128xf32> to vector<8x8x128xf32>
    %c1_110 = arith.constant 1 : index
    %c4_111 = arith.constant 4 : index
    %c0_112 = arith.constant 0 : index
    %139 = vector.load %arg2[%c1_110, %c4_111, %c0_112] : memref<13x13x128xf32, #tpu.memory_space<vmem>>, vector<1x1x128xf32>
    %140 = vector.shape_cast %139 : vector<1x1x128xf32> to vector<128xf32>
    %141 = vector.shape_cast %140 : vector<128xf32> to vector<1x1x128xf32>
    %142 = vector.broadcast %141 : vector<1x1x128xf32> to vector<8x8x128xf32>
    %143 = arith.mulf %138, %142 : vector<8x8x128xf32>
    %144 = arith.addf %136, %143 : vector<8x8x128xf32>
    %c0_113 = arith.constant 0 : index
    %c1_114 = arith.constant 1 : index
    %c5_115 = arith.constant 5 : index
    %c0_116 = arith.constant 0 : index
    %145 = vector.load %arg1[%c0_113, %c1_114, %c5_115, %c0_116] : memref<1x20x20x128xf32, #tpu.memory_space<vmem>>, vector<1x8x8x128xf32>
    %146 = vector.shape_cast %145 : vector<1x8x8x128xf32> to vector<8x8x128xf32>
    %c1_117 = arith.constant 1 : index
    %c5_118 = arith.constant 5 : index
    %c0_119 = arith.constant 0 : index
    %147 = vector.load %arg2[%c1_117, %c5_118, %c0_119] : memref<13x13x128xf32, #tpu.memory_space<vmem>>, vector<1x1x128xf32>
    %148 = vector.shape_cast %147 : vector<1x1x128xf32> to vector<128xf32>
    %149 = vector.shape_cast %148 : vector<128xf32> to vector<1x1x128xf32>
    %150 = vector.broadcast %149 : vector<1x1x128xf32> to vector<8x8x128xf32>
    %151 = arith.mulf %146, %150 : vector<8x8x128xf32>
    %152 = arith.addf %144, %151 : vector<8x8x128xf32>
    %c0_120 = arith.constant 0 : index
    %c1_121 = arith.constant 1 : index
    %c6_122 = arith.constant 6 : index
    %c0_123 = arith.constant 0 : index
    %153 = vector.load %arg1[%c0_120, %c1_121, %c6_122, %c0_123] : memref<1x20x20x128xf32, #tpu.memory_space<vmem>>, vector<1x8x8x128xf32>
    %154 = vector.shape_cast %153 : vector<1x8x8x128xf32> to vector<8x8x128xf32>
    %c1_124 = arith.constant 1 : index
    %c6_125 = arith.constant 6 : index
    %c0_126 = arith.constant 0 : index
    %155 = vector.load %arg2[%c1_124, %c6_125, %c0_126] : memref<13x13x128xf32, #tpu.memory_space<vmem>>, vector<1x1x128xf32>
    %156 = vector.shape_cast %155 : vector<1x1x128xf32> to vector<128xf32>
    %157 = vector.shape_cast %156 : vector<128xf32> to vector<1x1x128xf32>
    %158 = vector.broadcast %157 : vector<1x1x128xf32> to vector<8x8x128xf32>
    %159 = arith.mulf %154, %158 : vector<8x8x128xf32>
    %160 = arith.addf %152, %159 : vector<8x8x128xf32>
    %c0_127 = arith.constant 0 : index
    %c1_128 = arith.constant 1 : index
    %c7_129 = arith.constant 7 : index
    %c0_130 = arith.constant 0 : index
    %161 = vector.load %arg1[%c0_127, %c1_128, %c7_129, %c0_130] : memref<1x20x20x128xf32, #tpu.memory_space<vmem>>, vector<1x8x8x128xf32>
    %162 = vector.shape_cast %161 : vector<1x8x8x128xf32> to vector<8x8x128xf32>
    %c1_131 = arith.constant 1 : index
    %c7_132 = arith.constant 7 : index
    %c0_133 = arith.constant 0 : index
    %163 = vector.load %arg2[%c1_131, %c7_132, %c0_133] : memref<13x13x128xf32, #tpu.memory_space<vmem>>, vector<1x1x128xf32>
    %164 = vector.shape_cast %163 : vector<1x1x128xf32> to vector<128xf32>
    %165 = vector.shape_cast %164 : vector<128xf32> to vector<1x1x128xf32>
    %166 = vector.broadcast %165 : vector<1x1x128xf32> to vector<8x8x128xf32>
    %167 = arith.mulf %162, %166 : vector<8x8x128xf32>
    %168 = arith.addf %160, %167 : vector<8x8x128xf32>
    %c0_134 = arith.constant 0 : index
    %c1_135 = arith.constant 1 : index
    %c8_136 = arith.constant 8 : index
    %c0_137 = arith.constant 0 : index
    %169 = vector.load %arg1[%c0_134, %c1_135, %c8_136, %c0_137] : memref<1x20x20x128xf32, #tpu.memory_space<vmem>>, vector<1x8x8x128xf32>
    %170 = vector.shape_cast %169 : vector<1x8x8x128xf32> to vector<8x8x128xf32>
    %c1_138 = arith.constant 1 : index
    %c8_139 = arith.constant 8 : index
    %c0_140 = arith.constant 0 : index
    %171 = vector.load %arg2[%c1_138, %c8_139, %c0_140] : memref<13x13x128xf32, #tpu.memory_space<vmem>>, vector<1x1x128xf32>
    %172 = vector.shape_cast %171 : vector<1x1x128xf32> to vector<128xf32>
    %173 = vector.shape_cast %172 : vector<128xf32> to vector<1x1x128xf32>
    %174 = vector.broadcast %173 : vector<1x1x128xf32> to vector<8x8x128xf32>
    %175 = arith.mulf %170, %174 : vector<8x8x128xf32>
    %176 = arith.addf %168, %175 : vector<8x8x128xf32>
    %c0_141 = arith.constant 0 : index
    %c1_142 = arith.constant 1 : index
    %c9_143 = arith.constant 9 : index
    %c0_144 = arith.constant 0 : index
    %177 = vector.load %arg1[%c0_141, %c1_142, %c9_143, %c0_144] : memref<1x20x20x128xf32, #tpu.memory_space<vmem>>, vector<1x8x8x128xf32>
    %178 = vector.shape_cast %177 : vector<1x8x8x128xf32> to vector<8x8x128xf32>
    %c1_145 = arith.constant 1 : index
    %c9_146 = arith.constant 9 : index
    %c0_147 = arith.constant 0 : index
    %179 = vector.load %arg2[%c1_145, %c9_146, %c0_147] : memref<13x13x128xf32, #tpu.memory_space<vmem>>, vector<1x1x128xf32>
    %180 = vector.shape_cast %179 : vector<1x1x128xf32> to vector<128xf32>
    %181 = vector.shape_cast %180 : vector<128xf32> to vector<1x1x128xf32>
    %182 = vector.broadcast %181 : vector<1x1x128xf32> to vector<8x8x128xf32>
    %183 = arith.mulf %178, %182 : vector<8x8x128xf32>
    %184 = arith.addf %176, %183 : vector<8x8x128xf32>
    %c0_148 = arith.constant 0 : index
    %c1_149 = arith.constant 1 : index
    %c10_150 = arith.constant 10 : index
    %c0_151 = arith.constant 0 : index
    %185 = vector.load %arg1[%c0_148, %c1_149, %c10_150, %c0_151] : memref<1x20x20x128xf32, #tpu.memory_space<vmem>>, vector<1x8x8x128xf32>
    %186 = vector.shape_cast %185 : vector<1x8x8x128xf32> to vector<8x8x128xf32>
    %c1_152 = arith.constant 1 : index
    %c10_153 = arith.constant 10 : index
    %c0_154 = arith.constant 0 : index
    %187 = vector.load %arg2[%c1_152, %c10_153, %c0_154] : memref<13x13x128xf32, #tpu.memory_space<vmem>>, vector<1x1x128xf32>
    %188 = vector.shape_cast %187 : vector<1x1x128xf32> to vector<128xf32>
    %189 = vector.shape_cast %188 : vector<128xf32> to vector<1x1x128xf32>
    %190 = vector.broadcast %189 : vector<1x1x128xf32> to vector<8x8x128xf32>
    %191 = arith.mulf %186, %190 : vector<8x8x128xf32>
    %192 = arith.addf %184, %191 : vector<8x8x128xf32>
    %c0_155 = arith.constant 0 : index
    %c1_156 = arith.constant 1 : index
    %c11_157 = arith.constant 11 : index
    %c0_158 = arith.constant 0 : index
    %193 = vector.load %arg1[%c0_155, %c1_156, %c11_157, %c0_158] : memref<1x20x20x128xf32, #tpu.memory_space<vmem>>, vector<1x8x8x128xf32>
    %194 = vector.shape_cast %193 : vector<1x8x8x128xf32> to vector<8x8x128xf32>
    %c1_159 = arith.constant 1 : index
    %c11_160 = arith.constant 11 : index
    %c0_161 = arith.constant 0 : index
    %195 = vector.load %arg2[%c1_159, %c11_160, %c0_161] : memref<13x13x128xf32, #tpu.memory_space<vmem>>, vector<1x1x128xf32>
    %196 = vector.shape_cast %195 : vector<1x1x128xf32> to vector<128xf32>
    %197 = vector.shape_cast %196 : vector<128xf32> to vector<1x1x128xf32>
    %198 = vector.broadcast %197 : vector<1x1x128xf32> to vector<8x8x128xf32>
    %199 = arith.mulf %194, %198 : vector<8x8x128xf32>
    %200 = arith.addf %192, %199 : vector<8x8x128xf32>
    %c0_162 = arith.constant 0 : index
    %c1_163 = arith.constant 1 : index
    %c12_164 = arith.constant 12 : index
    %c0_165 = arith.constant 0 : index
    %201 = vector.load %arg1[%c0_162, %c1_163, %c12_164, %c0_165] : memref<1x20x20x128xf32, #tpu.memory_space<vmem>>, vector<1x8x8x128xf32>
    %202 = vector.shape_cast %201 : vector<1x8x8x128xf32> to vector<8x8x128xf32>
    %c1_166 = arith.constant 1 : index
    %c12_167 = arith.constant 12 : index
    %c0_168 = arith.constant 0 : index
    %203 = vector.load %arg2[%c1_166, %c12_167, %c0_168] : memref<13x13x128xf32, #tpu.memory_space<vmem>>, vector<1x1x128xf32>
    %204 = vector.shape_cast %203 : vector<1x1x128xf32> to vector<128xf32>
    %205 = vector.shape_cast %204 : vector<128xf32> to vector<1x1x128xf32>
    %206 = vector.broadcast %205 : vector<1x1x128xf32> to vector<8x8x128xf32>
    %207 = arith.mulf %202, %206 : vector<8x8x128xf32>
    %208 = arith.addf %200, %207 : vector<8x8x128xf32>
    %c0_169 = arith.constant 0 : index
    %c2_170 = arith.constant 2 : index
    %c0_171 = arith.constant 0 : index
    %c0_172 = arith.constant 0 : index
    %209 = vector.load %arg1[%c0_169, %c2_170, %c0_171, %c0_172] : memref<1x20x20x128xf32, #tpu.memory_space<vmem>>, vector<1x8x8x128xf32>
    %210 = vector.shape_cast %209 : vector<1x8x8x128xf32> to vector<8x8x128xf32>
    %c2_173 = arith.constant 2 : index
    %c0_174 = arith.constant 0 : index
    %c0_175 = arith.constant 0 : index
    %211 = vector.load %arg2[%c2_173, %c0_174, %c0_175] : memref<13x13x128xf32, #tpu.memory_space<vmem>>, vector<1x1x128xf32>
    %212 = vector.shape_cast %211 : vector<1x1x128xf32> to vector<128xf32>
    %213 = vector.shape_cast %212 : vector<128xf32> to vector<1x1x128xf32>
    %214 = vector.broadcast %213 : vector<1x1x128xf32> to vector<8x8x128xf32>
    %215 = arith.mulf %210, %214 : vector<8x8x128xf32>
    %216 = arith.addf %208, %215 : vector<8x8x128xf32>
    %c0_176 = arith.constant 0 : index
    %c2_177 = arith.constant 2 : index
    %c1_178 = arith.constant 1 : index
    %c0_179 = arith.constant 0 : index
    %217 = vector.load %arg1[%c0_176, %c2_177, %c1_178, %c0_179] : memref<1x20x20x128xf32, #tpu.memory_space<vmem>>, vector<1x8x8x128xf32>
    %218 = vector.shape_cast %217 : vector<1x8x8x128xf32> to vector<8x8x128xf32>
    %c2_180 = arith.constant 2 : index
    %c1_181 = arith.constant 1 : index
    %c0_182 = arith.constant 0 : index
    %219 = vector.load %arg2[%c2_180, %c1_181, %c0_182] : memref<13x13x128xf32, #tpu.memory_space<vmem>>, vector<1x1x128xf32>
    %220 = vector.shape_cast %219 : vector<1x1x128xf32> to vector<128xf32>
    %221 = vector.shape_cast %220 : vector<128xf32> to vector<1x1x128xf32>
    %222 = vector.broadcast %221 : vector<1x1x128xf32> to vector<8x8x128xf32>
    %223 = arith.mulf %218, %222 : vector<8x8x128xf32>
    %224 = arith.addf %216, %223 : vector<8x8x128xf32>
    %c0_183 = arith.constant 0 : index
    %c2_184 = arith.constant 2 : index
    %c2_185 = arith.constant 2 : index
    %c0_186 = arith.constant 0 : index
    %225 = vector.load %arg1[%c0_183, %c2_184, %c2_185, %c0_186] : memref<1x20x20x128xf32, #tpu.memory_space<vmem>>, vector<1x8x8x128xf32>
    %226 = vector.shape_cast %225 : vector<1x8x8x128xf32> to vector<8x8x128xf32>
    %c2_187 = arith.constant 2 : index
    %c2_188 = arith.constant 2 : index
    %c0_189 = arith.constant 0 : index
    %227 = vector.load %arg2[%c2_187, %c2_188, %c0_189] : memref<13x13x128xf32, #tpu.memory_space<vmem>>, vector<1x1x128xf32>
    %228 = vector.shape_cast %227 : vector<1x1x128xf32> to vector<128xf32>
    %229 = vector.shape_cast %228 : vector<128xf32> to vector<1x1x128xf32>
    %230 = vector.broadcast %229 : vector<1x1x128xf32> to vector<8x8x128xf32>
    %231 = arith.mulf %226, %230 : vector<8x8x128xf32>
    %232 = arith.addf %224, %231 : vector<8x8x128xf32>
    %c0_190 = arith.constant 0 : index
    %c2_191 = arith.constant 2 : index
    %c3_192 = arith.constant 3 : index
    %c0_193 = arith.constant 0 : index
    %233 = vector.load %arg1[%c0_190, %c2_191, %c3_192, %c0_193] : memref<1x20x20x128xf32, #tpu.memory_space<vmem>>, vector<1x8x8x128xf32>
    %234 = vector.shape_cast %233 : vector<1x8x8x128xf32> to vector<8x8x128xf32>
    %c2_194 = arith.constant 2 : index
    %c3_195 = arith.constant 3 : index
    %c0_196 = arith.constant 0 : index
    %235 = vector.load %arg2[%c2_194, %c3_195, %c0_196] : memref<13x13x128xf32, #tpu.memory_space<vmem>>, vector<1x1x128xf32>
    %236 = vector.shape_cast %235 : vector<1x1x128xf32> to vector<128xf32>
    %237 = vector.shape_cast %236 : vector<128xf32> to vector<1x1x128xf32>
    %238 = vector.broadcast %237 : vector<1x1x128xf32> to vector<8x8x128xf32>
    %239 = arith.mulf %234, %238 : vector<8x8x128xf32>
    %240 = arith.addf %232, %239 : vector<8x8x128xf32>
    %c0_197 = arith.constant 0 : index
    %c2_198 = arith.constant 2 : index
    %c4_199 = arith.constant 4 : index
    %c0_200 = arith.constant 0 : index
    %241 = vector.load %arg1[%c0_197, %c2_198, %c4_199, %c0_200] : memref<1x20x20x128xf32, #tpu.memory_space<vmem>>, vector<1x8x8x128xf32>
    %242 = vector.shape_cast %241 : vector<1x8x8x128xf32> to vector<8x8x128xf32>
    %c2_201 = arith.constant 2 : index
    %c4_202 = arith.constant 4 : index
    %c0_203 = arith.constant 0 : index
    %243 = vector.load %arg2[%c2_201, %c4_202, %c0_203] : memref<13x13x128xf32, #tpu.memory_space<vmem>>, vector<1x1x128xf32>
    %244 = vector.shape_cast %243 : vector<1x1x128xf32> to vector<128xf32>
    %245 = vector.shape_cast %244 : vector<128xf32> to vector<1x1x128xf32>
    %246 = vector.broadcast %245 : vector<1x1x128xf32> to vector<8x8x128xf32>
    %247 = arith.mulf %242, %246 : vector<8x8x128xf32>
    %248 = arith.addf %240, %247 : vector<8x8x128xf32>
    %c0_204 = arith.constant 0 : index
    %c2_205 = arith.constant 2 : index
    %c5_206 = arith.constant 5 : index
    %c0_207 = arith.constant 0 : index
    %249 = vector.load %arg1[%c0_204, %c2_205, %c5_206, %c0_207] : memref<1x20x20x128xf32, #tpu.memory_space<vmem>>, vector<1x8x8x128xf32>
    %250 = vector.shape_cast %249 : vector<1x8x8x128xf32> to vector<8x8x128xf32>
    %c2_208 = arith.constant 2 : index
    %c5_209 = arith.constant 5 : index
    %c0_210 = arith.constant 0 : index
    %251 = vector.load %arg2[%c2_208, %c5_209, %c0_210] : memref<13x13x128xf32, #tpu.memory_space<vmem>>, vector<1x1x128xf32>
    %252 = vector.shape_cast %251 : vector<1x1x128xf32> to vector<128xf32>
    %253 = vector.shape_cast %252 : vector<128xf32> to vector<1x1x128xf32>
    %254 = vector.broadcast %253 : vector<1x1x128xf32> to vector<8x8x128xf32>
    %255 = arith.mulf %250, %254 : vector<8x8x128xf32>
    %256 = arith.addf %248, %255 : vector<8x8x128xf32>
    %c0_211 = arith.constant 0 : index
    %c2_212 = arith.constant 2 : index
    %c6_213 = arith.constant 6 : index
    %c0_214 = arith.constant 0 : index
    %257 = vector.load %arg1[%c0_211, %c2_212, %c6_213, %c0_214] : memref<1x20x20x128xf32, #tpu.memory_space<vmem>>, vector<1x8x8x128xf32>
    %258 = vector.shape_cast %257 : vector<1x8x8x128xf32> to vector<8x8x128xf32>
    %c2_215 = arith.constant 2 : index
    %c6_216 = arith.constant 6 : index
    %c0_217 = arith.constant 0 : index
    %259 = vector.load %arg2[%c2_215, %c6_216, %c0_217] : memref<13x13x128xf32, #tpu.memory_space<vmem>>, vector<1x1x128xf32>
    %260 = vector.shape_cast %259 : vector<1x1x128xf32> to vector<128xf32>
    %261 = vector.shape_cast %260 : vector<128xf32> to vector<1x1x128xf32>
    %262 = vector.broadcast %261 : vector<1x1x128xf32> to vector<8x8x128xf32>
    %263 = arith.mulf %258, %262 : vector<8x8x128xf32>
    %264 = arith.addf %256, %263 : vector<8x8x128xf32>
    %c0_218 = arith.constant 0 : index
    %c2_219 = arith.constant 2 : index
    %c7_220 = arith.constant 7 : index
    %c0_221 = arith.constant 0 : index
    %265 = vector.load %arg1[%c0_218, %c2_219, %c7_220, %c0_221] : memref<1x20x20x128xf32, #tpu.memory_space<vmem>>, vector<1x8x8x128xf32>
    %266 = vector.shape_cast %265 : vector<1x8x8x128xf32> to vector<8x8x128xf32>
    %c2_222 = arith.constant 2 : index
    %c7_223 = arith.constant 7 : index
    %c0_224 = arith.constant 0 : index
    %267 = vector.load %arg2[%c2_222, %c7_223, %c0_224] : memref<13x13x128xf32, #tpu.memory_space<vmem>>, vector<1x1x128xf32>
    %268 = vector.shape_cast %267 : vector<1x1x128xf32> to vector<128xf32>
    %269 = vector.shape_cast %268 : vector<128xf32> to vector<1x1x128xf32>
    %270 = vector.broadcast %269 : vector<1x1x128xf32> to vector<8x8x128xf32>
    %271 = arith.mulf %266, %270 : vector<8x8x128xf32>
    %272 = arith.addf %264, %271 : vector<8x8x128xf32>
    %c0_225 = arith.constant 0 : index
    %c2_226 = arith.constant 2 : index
    %c8_227 = arith.constant 8 : index
    %c0_228 = arith.constant 0 : index
    %273 = vector.load %arg1[%c0_225, %c2_226, %c8_227, %c0_228] : memref<1x20x20x128xf32, #tpu.memory_space<vmem>>, vector<1x8x8x128xf32>
    %274 = vector.shape_cast %273 : vector<1x8x8x128xf32> to vector<8x8x128xf32>
    %c2_229 = arith.constant 2 : index
    %c8_230 = arith.constant 8 : index
    %c0_231 = arith.constant 0 : index
    %275 = vector.load %arg2[%c2_229, %c8_230, %c0_231] : memref<13x13x128xf32, #tpu.memory_space<vmem>>, vector<1x1x128xf32>
    %276 = vector.shape_cast %275 : vector<1x1x128xf32> to vector<128xf32>
    %277 = vector.shape_cast %276 : vector<128xf32> to vector<1x1x128xf32>
    %278 = vector.broadcast %277 : vector<1x1x128xf32> to vector<8x8x128xf32>
    %279 = arith.mulf %274, %278 : vector<8x8x128xf32>
    %280 = arith.addf %272, %279 : vector<8x8x128xf32>
    %c0_232 = arith.constant 0 : index
    %c2_233 = arith.constant 2 : index
    %c9_234 = arith.constant 9 : index
    %c0_235 = arith.constant 0 : index
    %281 = vector.load %arg1[%c0_232, %c2_233, %c9_234, %c0_235] : memref<1x20x20x128xf32, #tpu.memory_space<vmem>>, vector<1x8x8x128xf32>
    %282 = vector.shape_cast %281 : vector<1x8x8x128xf32> to vector<8x8x128xf32>
    %c2_236 = arith.constant 2 : index
    %c9_237 = arith.constant 9 : index
    %c0_238 = arith.constant 0 : index
    %283 = vector.load %arg2[%c2_236, %c9_237, %c0_238] : memref<13x13x128xf32, #tpu.memory_space<vmem>>, vector<1x1x128xf32>
    %284 = vector.shape_cast %283 : vector<1x1x128xf32> to vector<128xf32>
    %285 = vector.shape_cast %284 : vector<128xf32> to vector<1x1x128xf32>
    %286 = vector.broadcast %285 : vector<1x1x128xf32> to vector<8x8x128xf32>
    %287 = arith.mulf %282, %286 : vector<8x8x128xf32>
    %288 = arith.addf %280, %287 : vector<8x8x128xf32>
    %c0_239 = arith.constant 0 : index
    %c2_240 = arith.constant 2 : index
    %c10_241 = arith.constant 10 : index
    %c0_242 = arith.constant 0 : index
    %289 = vector.load %arg1[%c0_239, %c2_240, %c10_241, %c0_242] : memref<1x20x20x128xf32, #tpu.memory_space<vmem>>, vector<1x8x8x128xf32>
    %290 = vector.shape_cast %289 : vector<1x8x8x128xf32> to vector<8x8x128xf32>
    %c2_243 = arith.constant 2 : index
    %c10_244 = arith.constant 10 : index
    %c0_245 = arith.constant 0 : index
    %291 = vector.load %arg2[%c2_243, %c10_244, %c0_245] : memref<13x13x128xf32, #tpu.memory_space<vmem>>, vector<1x1x128xf32>
    %292 = vector.shape_cast %291 : vector<1x1x128xf32> to vector<128xf32>
    %293 = vector.shape_cast %292 : vector<128xf32> to vector<1x1x128xf32>
    %294 = vector.broadcast %293 : vector<1x1x128xf32> to vector<8x8x128xf32>
    %295 = arith.mulf %290, %294 : vector<8x8x128xf32>
    %296 = arith.addf %288, %295 : vector<8x8x128xf32>
    %c0_246 = arith.constant 0 : index
    %c2_247 = arith.constant 2 : index
    %c11_248 = arith.constant 11 : index
    %c0_249 = arith.constant 0 : index
    %297 = vector.load %arg1[%c0_246, %c2_247, %c11_248, %c0_249] : memref<1x20x20x128xf32, #tpu.memory_space<vmem>>, vector<1x8x8x128xf32>
    %298 = vector.shape_cast %297 : vector<1x8x8x128xf32> to vector<8x8x128xf32>
    %c2_250 = arith.constant 2 : index
    %c11_251 = arith.constant 11 : index
    %c0_252 = arith.constant 0 : index
    %299 = vector.load %arg2[%c2_250, %c11_251, %c0_252] : memref<13x13x128xf32, #tpu.memory_space<vmem>>, vector<1x1x128xf32>
    %300 = vector.shape_cast %299 : vector<1x1x128xf32> to vector<128xf32>
    %301 = vector.shape_cast %300 : vector<128xf32> to vector<1x1x128xf32>
    %302 = vector.broadcast %301 : vector<1x1x128xf32> to vector<8x8x128xf32>
    %303 = arith.mulf %298, %302 : vector<8x8x128xf32>
    %304 = arith.addf %296, %303 : vector<8x8x128xf32>
    %c0_253 = arith.constant 0 : index
    %c2_254 = arith.constant 2 : index
    %c12_255 = arith.constant 12 : index
    %c0_256 = arith.constant 0 : index
    %305 = vector.load %arg1[%c0_253, %c2_254, %c12_255, %c0_256] : memref<1x20x20x128xf32, #tpu.memory_space<vmem>>, vector<1x8x8x128xf32>
    %306 = vector.shape_cast %305 : vector<1x8x8x128xf32> to vector<8x8x128xf32>
    %c2_257 = arith.constant 2 : index
    %c12_258 = arith.constant 12 : index
    %c0_259 = arith.constant 0 : index
    %307 = vector.load %arg2[%c2_257, %c12_258, %c0_259] : memref<13x13x128xf32, #tpu.memory_space<vmem>>, vector<1x1x128xf32>
    %308 = vector.shape_cast %307 : vector<1x1x128xf32> to vector<128xf32>
    %309 = vector.shape_cast %308 : vector<128xf32> to vector<1x1x128xf32>
    %310 = vector.broadcast %309 : vector<1x1x128xf32> to vector<8x8x128xf32>
    %311 = arith.mulf %306, %310 : vector<8x8x128xf32>
    %312 = arith.addf %304, %311 : vector<8x8x128xf32>
    %c0_260 = arith.constant 0 : index
    %c3_261 = arith.constant 3 : index
    %c0_262 = arith.constant 0 : index
    %c0_263 = arith.constant 0 : index
    %313 = vector.load %arg1[%c0_260, %c3_261, %c0_262, %c0_263] : memref<1x20x20x128xf32, #tpu.memory_space<vmem>>, vector<1x8x8x128xf32>
    %314 = vector.shape_cast %313 : vector<1x8x8x128xf32> to vector<8x8x128xf32>
    %c3_264 = arith.constant 3 : index
    %c0_265 = arith.constant 0 : index
    %c0_266 = arith.constant 0 : index
    %315 = vector.load %arg2[%c3_264, %c0_265, %c0_266] : memref<13x13x128xf32, #tpu.memory_space<vmem>>, vector<1x1x128xf32>
    %316 = vector.shape_cast %315 : vector<1x1x128xf32> to vector<128xf32>
    %317 = vector.shape_cast %316 : vector<128xf32> to vector<1x1x128xf32>
    %318 = vector.broadcast %317 : vector<1x1x128xf32> to vector<8x8x128xf32>
    %319 = arith.mulf %314, %318 : vector<8x8x128xf32>
    %320 = arith.addf %312, %319 : vector<8x8x128xf32>
    %c0_267 = arith.constant 0 : index
    %c3_268 = arith.constant 3 : index
    %c1_269 = arith.constant 1 : index
    %c0_270 = arith.constant 0 : index
    %321 = vector.load %arg1[%c0_267, %c3_268, %c1_269, %c0_270] : memref<1x20x20x128xf32, #tpu.memory_space<vmem>>, vector<1x8x8x128xf32>
    %322 = vector.shape_cast %321 : vector<1x8x8x128xf32> to vector<8x8x128xf32>
    %c3_271 = arith.constant 3 : index
    %c1_272 = arith.constant 1 : index
    %c0_273 = arith.constant 0 : index
    %323 = vector.load %arg2[%c3_271, %c1_272, %c0_273] : memref<13x13x128xf32, #tpu.memory_space<vmem>>, vector<1x1x128xf32>
    %324 = vector.shape_cast %323 : vector<1x1x128xf32> to vector<128xf32>
    %325 = vector.shape_cast %324 : vector<128xf32> to vector<1x1x128xf32>
    %326 = vector.broadcast %325 : vector<1x1x128xf32> to vector<8x8x128xf32>
    %327 = arith.mulf %322, %326 : vector<8x8x128xf32>
    %328 = arith.addf %320, %327 : vector<8x8x128xf32>
    %c0_274 = arith.constant 0 : index
    %c3_275 = arith.constant 3 : index
    %c2_276 = arith.constant 2 : index
    %c0_277 = arith.constant 0 : index
    %329 = vector.load %arg1[%c0_274, %c3_275, %c2_276, %c0_277] : memref<1x20x20x128xf32, #tpu.memory_space<vmem>>, vector<1x8x8x128xf32>
    %330 = vector.shape_cast %329 : vector<1x8x8x128xf32> to vector<8x8x128xf32>
    %c3_278 = arith.constant 3 : index
    %c2_279 = arith.constant 2 : index
    %c0_280 = arith.constant 0 : index
    %331 = vector.load %arg2[%c3_278, %c2_279, %c0_280] : memref<13x13x128xf32, #tpu.memory_space<vmem>>, vector<1x1x128xf32>
    %332 = vector.shape_cast %331 : vector<1x1x128xf32> to vector<128xf32>
    %333 = vector.shape_cast %332 : vector<128xf32> to vector<1x1x128xf32>
    %334 = vector.broadcast %333 : vector<1x1x128xf32> to vector<8x8x128xf32>
    %335 = arith.mulf %330, %334 : vector<8x8x128xf32>
    %336 = arith.addf %328, %335 : vector<8x8x128xf32>
    %c0_281 = arith.constant 0 : index
    %c3_282 = arith.constant 3 : index
    %c3_283 = arith.constant 3 : index
    %c0_284 = arith.constant 0 : index
    %337 = vector.load %arg1[%c0_281, %c3_282, %c3_283, %c0_284] : memref<1x20x20x128xf32, #tpu.memory_space<vmem>>, vector<1x8x8x128xf32>
    %338 = vector.shape_cast %337 : vector<1x8x8x128xf32> to vector<8x8x128xf32>
    %c3_285 = arith.constant 3 : index
    %c3_286 = arith.constant 3 : index
    %c0_287 = arith.constant 0 : index
    %339 = vector.load %arg2[%c3_285, %c3_286, %c0_287] : memref<13x13x128xf32, #tpu.memory_space<vmem>>, vector<1x1x128xf32>
    %340 = vector.shape_cast %339 : vector<1x1x128xf32> to vector<128xf32>
    %341 = vector.shape_cast %340 : vector<128xf32> to vector<1x1x128xf32>
    %342 = vector.broadcast %341 : vector<1x1x128xf32> to vector<8x8x128xf32>
    %343 = arith.mulf %338, %342 : vector<8x8x128xf32>
    %344 = arith.addf %336, %343 : vector<8x8x128xf32>
    %c0_288 = arith.constant 0 : index
    %c3_289 = arith.constant 3 : index
    %c4_290 = arith.constant 4 : index
    %c0_291 = arith.constant 0 : index
    %345 = vector.load %arg1[%c0_288, %c3_289, %c4_290, %c0_291] : memref<1x20x20x128xf32, #tpu.memory_space<vmem>>, vector<1x8x8x128xf32>
    %346 = vector.shape_cast %345 : vector<1x8x8x128xf32> to vector<8x8x128xf32>
    %c3_292 = arith.constant 3 : index
    %c4_293 = arith.constant 4 : index
    %c0_294 = arith.constant 0 : index
    %347 = vector.load %arg2[%c3_292, %c4_293, %c0_294] : memref<13x13x128xf32, #tpu.memory_space<vmem>>, vector<1x1x128xf32>
    %348 = vector.shape_cast %347 : vector<1x1x128xf32> to vector<128xf32>
    %349 = vector.shape_cast %348 : vector<128xf32> to vector<1x1x128xf32>
    %350 = vector.broadcast %349 : vector<1x1x128xf32> to vector<8x8x128xf32>
    %351 = arith.mulf %346, %350 : vector<8x8x128xf32>
    %352 = arith.addf %344, %351 : vector<8x8x128xf32>
    %c0_295 = arith.constant 0 : index
    %c3_296 = arith.constant 3 : index
    %c5_297 = arith.constant 5 : index
    %c0_298 = arith.constant 0 : index
    %353 = vector.load %arg1[%c0_295, %c3_296, %c5_297, %c0_298] : memref<1x20x20x128xf32, #tpu.memory_space<vmem>>, vector<1x8x8x128xf32>
    %354 = vector.shape_cast %353 : vector<1x8x8x128xf32> to vector<8x8x128xf32>
    %c3_299 = arith.constant 3 : index
    %c5_300 = arith.constant 5 : index
    %c0_301 = arith.constant 0 : index
    %355 = vector.load %arg2[%c3_299, %c5_300, %c0_301] : memref<13x13x128xf32, #tpu.memory_space<vmem>>, vector<1x1x128xf32>
    %356 = vector.shape_cast %355 : vector<1x1x128xf32> to vector<128xf32>
    %357 = vector.shape_cast %356 : vector<128xf32> to vector<1x1x128xf32>
    %358 = vector.broadcast %357 : vector<1x1x128xf32> to vector<8x8x128xf32>
    %359 = arith.mulf %354, %358 : vector<8x8x128xf32>
    %360 = arith.addf %352, %359 : vector<8x8x128xf32>
    %c0_302 = arith.constant 0 : index
    %c3_303 = arith.constant 3 : index
    %c6_304 = arith.constant 6 : index
    %c0_305 = arith.constant 0 : index
    %361 = vector.load %arg1[%c0_302, %c3_303, %c6_304, %c0_305] : memref<1x20x20x128xf32, #tpu.memory_space<vmem>>, vector<1x8x8x128xf32>
    %362 = vector.shape_cast %361 : vector<1x8x8x128xf32> to vector<8x8x128xf32>
    %c3_306 = arith.constant 3 : index
    %c6_307 = arith.constant 6 : index
    %c0_308 = arith.constant 0 : index
    %363 = vector.load %arg2[%c3_306, %c6_307, %c0_308] : memref<13x13x128xf32, #tpu.memory_space<vmem>>, vector<1x1x128xf32>
    %364 = vector.shape_cast %363 : vector<1x1x128xf32> to vector<128xf32>
    %365 = vector.shape_cast %364 : vector<128xf32> to vector<1x1x128xf32>
    %366 = vector.broadcast %365 : vector<1x1x128xf32> to vector<8x8x128xf32>
    %367 = arith.mulf %362, %366 : vector<8x8x128xf32>
    %368 = arith.addf %360, %367 : vector<8x8x128xf32>
    %c0_309 = arith.constant 0 : index
    %c3_310 = arith.constant 3 : index
    %c7_311 = arith.constant 7 : index
    %c0_312 = arith.constant 0 : index
    %369 = vector.load %arg1[%c0_309, %c3_310, %c7_311, %c0_312] : memref<1x20x20x128xf32, #tpu.memory_space<vmem>>, vector<1x8x8x128xf32>
    %370 = vector.shape_cast %369 : vector<1x8x8x128xf32> to vector<8x8x128xf32>
    %c3_313 = arith.constant 3 : index
    %c7_314 = arith.constant 7 : index
    %c0_315 = arith.constant 0 : index
    %371 = vector.load %arg2[%c3_313, %c7_314, %c0_315] : memref<13x13x128xf32, #tpu.memory_space<vmem>>, vector<1x1x128xf32>
    %372 = vector.shape_cast %371 : vector<1x1x128xf32> to vector<128xf32>
    %373 = vector.shape_cast %372 : vector<128xf32> to vector<1x1x128xf32>
    %374 = vector.broadcast %373 : vector<1x1x128xf32> to vector<8x8x128xf32>
    %375 = arith.mulf %370, %374 : vector<8x8x128xf32>
    %376 = arith.addf %368, %375 : vector<8x8x128xf32>
    %c0_316 = arith.constant 0 : index
    %c3_317 = arith.constant 3 : index
    %c8_318 = arith.constant 8 : index
    %c0_319 = arith.constant 0 : index
    %377 = vector.load %arg1[%c0_316, %c3_317, %c8_318, %c0_319] : memref<1x20x20x128xf32, #tpu.memory_space<vmem>>, vector<1x8x8x128xf32>
    %378 = vector.shape_cast %377 : vector<1x8x8x128xf32> to vector<8x8x128xf32>
    %c3_320 = arith.constant 3 : index
    %c8_321 = arith.constant 8 : index
    %c0_322 = arith.constant 0 : index
    %379 = vector.load %arg2[%c3_320, %c8_321, %c0_322] : memref<13x13x128xf32, #tpu.memory_space<vmem>>, vector<1x1x128xf32>
    %380 = vector.shape_cast %379 : vector<1x1x128xf32> to vector<128xf32>
    %381 = vector.shape_cast %380 : vector<128xf32> to vector<1x1x128xf32>
    %382 = vector.broadcast %381 : vector<1x1x128xf32> to vector<8x8x128xf32>
    %383 = arith.mulf %378, %382 : vector<8x8x128xf32>
    %384 = arith.addf %376, %383 : vector<8x8x128xf32>
    %c0_323 = arith.constant 0 : index
    %c3_324 = arith.constant 3 : index
    %c9_325 = arith.constant 9 : index
    %c0_326 = arith.constant 0 : index
    %385 = vector.load %arg1[%c0_323, %c3_324, %c9_325, %c0_326] : memref<1x20x20x128xf32, #tpu.memory_space<vmem>>, vector<1x8x8x128xf32>
    %386 = vector.shape_cast %385 : vector<1x8x8x128xf32> to vector<8x8x128xf32>
    %c3_327 = arith.constant 3 : index
    %c9_328 = arith.constant 9 : index
    %c0_329 = arith.constant 0 : index
    %387 = vector.load %arg2[%c3_327, %c9_328, %c0_329] : memref<13x13x128xf32, #tpu.memory_space<vmem>>, vector<1x1x128xf32>
    %388 = vector.shape_cast %387 : vector<1x1x128xf32> to vector<128xf32>
    %389 = vector.shape_cast %388 : vector<128xf32> to vector<1x1x128xf32>
    %390 = vector.broadcast %389 : vector<1x1x128xf32> to vector<8x8x128xf32>
    %391 = arith.mulf %386, %390 : vector<8x8x128xf32>
    %392 = arith.addf %384, %391 : vector<8x8x128xf32>
    %c0_330 = arith.constant 0 : index
    %c3_331 = arith.constant 3 : index
    %c10_332 = arith.constant 10 : index
    %c0_333 = arith.constant 0 : index
    %393 = vector.load %arg1[%c0_330, %c3_331, %c10_332, %c0_333] : memref<1x20x20x128xf32, #tpu.memory_space<vmem>>, vector<1x8x8x128xf32>
    %394 = vector.shape_cast %393 : vector<1x8x8x128xf32> to vector<8x8x128xf32>
    %c3_334 = arith.constant 3 : index
    %c10_335 = arith.constant 10 : index
    %c0_336 = arith.constant 0 : index
    %395 = vector.load %arg2[%c3_334, %c10_335, %c0_336] : memref<13x13x128xf32, #tpu.memory_space<vmem>>, vector<1x1x128xf32>
    %396 = vector.shape_cast %395 : vector<1x1x128xf32> to vector<128xf32>
    %397 = vector.shape_cast %396 : vector<128xf32> to vector<1x1x128xf32>
    %398 = vector.broadcast %397 : vector<1x1x128xf32> to vector<8x8x128xf32>
    %399 = arith.mulf %394, %398 : vector<8x8x128xf32>
    %400 = arith.addf %392, %399 : vector<8x8x128xf32>
    %c0_337 = arith.constant 0 : index
    %c3_338 = arith.constant 3 : index
    %c11_339 = arith.constant 11 : index
    %c0_340 = arith.constant 0 : index
    %401 = vector.load %arg1[%c0_337, %c3_338, %c11_339, %c0_340] : memref<1x20x20x128xf32, #tpu.memory_space<vmem>>, vector<1x8x8x128xf32>
    %402 = vector.shape_cast %401 : vector<1x8x8x128xf32> to vector<8x8x128xf32>
    %c3_341 = arith.constant 3 : index
    %c11_342 = arith.constant 11 : index
    %c0_343 = arith.constant 0 : index
    %403 = vector.load %arg2[%c3_341, %c11_342, %c0_343] : memref<13x13x128xf32, #tpu.memory_space<vmem>>, vector<1x1x128xf32>
    %404 = vector.shape_cast %403 : vector<1x1x128xf32> to vector<128xf32>
    %405 = vector.shape_cast %404 : vector<128xf32> to vector<1x1x128xf32>
    %406 = vector.broadcast %405 : vector<1x1x128xf32> to vector<8x8x128xf32>
    %407 = arith.mulf %402, %406 : vector<8x8x128xf32>
    %408 = arith.addf %400, %407 : vector<8x8x128xf32>
    %c0_344 = arith.constant 0 : index
    %c3_345 = arith.constant 3 : index
    %c12_346 = arith.constant 12 : index
    %c0_347 = arith.constant 0 : index
    %409 = vector.load %arg1[%c0_344, %c3_345, %c12_346, %c0_347] : memref<1x20x20x128xf32, #tpu.memory_space<vmem>>, vector<1x8x8x128xf32>
    %410 = vector.shape_cast %409 : vector<1x8x8x128xf32> to vector<8x8x128xf32>
    %c3_348 = arith.constant 3 : index
    %c12_349 = arith.constant 12 : index
    %c0_350 = arith.constant 0 : index
    %411 = vector.load %arg2[%c3_348, %c12_349, %c0_350] : memref<13x13x128xf32, #tpu.memory_space<vmem>>, vector<1x1x128xf32>
    %412 = vector.shape_cast %411 : vector<1x1x128xf32> to vector<128xf32>
    %413 = vector.shape_cast %412 : vector<128xf32> to vector<1x1x128xf32>
    %414 = vector.broadcast %413 : vector<1x1x128xf32> to vector<8x8x128xf32>
    %415 = arith.mulf %410, %414 : vector<8x8x128xf32>
    %416 = arith.addf %408, %415 : vector<8x8x128xf32>
    %c0_351 = arith.constant 0 : index
    %c4_352 = arith.constant 4 : index
    %c0_353 = arith.constant 0 : index
    %c0_354 = arith.constant 0 : index
    %417 = vector.load %arg1[%c0_351, %c4_352, %c0_353, %c0_354] : memref<1x20x20x128xf32, #tpu.memory_space<vmem>>, vector<1x8x8x128xf32>
    %418 = vector.shape_cast %417 : vector<1x8x8x128xf32> to vector<8x8x128xf32>
    %c4_355 = arith.constant 4 : index
    %c0_356 = arith.constant 0 : index
    %c0_357 = arith.constant 0 : index
    %419 = vector.load %arg2[%c4_355, %c0_356, %c0_357] : memref<13x13x128xf32, #tpu.memory_space<vmem>>, vector<1x1x128xf32>
    %420 = vector.shape_cast %419 : vector<1x1x128xf32> to vector<128xf32>
    %421 = vector.shape_cast %420 : vector<128xf32> to vector<1x1x128xf32>
    %422 = vector.broadcast %421 : vector<1x1x128xf32> to vector<8x8x128xf32>
    %423 = arith.mulf %418, %422 : vector<8x8x128xf32>
    %424 = arith.addf %416, %423 : vector<8x8x128xf32>
    %c0_358 = arith.constant 0 : index
    %c4_359 = arith.constant 4 : index
    %c1_360 = arith.constant 1 : index
    %c0_361 = arith.constant 0 : index
    %425 = vector.load %arg1[%c0_358, %c4_359, %c1_360, %c0_361] : memref<1x20x20x128xf32, #tpu.memory_space<vmem>>, vector<1x8x8x128xf32>
    %426 = vector.shape_cast %425 : vector<1x8x8x128xf32> to vector<8x8x128xf32>
    %c4_362 = arith.constant 4 : index
    %c1_363 = arith.constant 1 : index
    %c0_364 = arith.constant 0 : index
    %427 = vector.load %arg2[%c4_362, %c1_363, %c0_364] : memref<13x13x128xf32, #tpu.memory_space<vmem>>, vector<1x1x128xf32>
    %428 = vector.shape_cast %427 : vector<1x1x128xf32> to vector<128xf32>
    %429 = vector.shape_cast %428 : vector<128xf32> to vector<1x1x128xf32>
    %430 = vector.broadcast %429 : vector<1x1x128xf32> to vector<8x8x128xf32>
    %431 = arith.mulf %426, %430 : vector<8x8x128xf32>
    %432 = arith.addf %424, %431 : vector<8x8x128xf32>
    %c0_365 = arith.constant 0 : index
    %c4_366 = arith.constant 4 : index
    %c2_367 = arith.constant 2 : index
    %c0_368 = arith.constant 0 : index
    %433 = vector.load %arg1[%c0_365, %c4_366, %c2_367, %c0_368] : memref<1x20x20x128xf32, #tpu.memory_space<vmem>>, vector<1x8x8x128xf32>
    %434 = vector.shape_cast %433 : vector<1x8x8x128xf32> to vector<8x8x128xf32>
    %c4_369 = arith.constant 4 : index
    %c2_370 = arith.constant 2 : index
    %c0_371 = arith.constant 0 : index
    %435 = vector.load %arg2[%c4_369, %c2_370, %c0_371] : memref<13x13x128xf32, #tpu.memory_space<vmem>>, vector<1x1x128xf32>
    %436 = vector.shape_cast %435 : vector<1x1x128xf32> to vector<128xf32>
    %437 = vector.shape_cast %436 : vector<128xf32> to vector<1x1x128xf32>
    %438 = vector.broadcast %437 : vector<1x1x128xf32> to vector<8x8x128xf32>
    %439 = arith.mulf %434, %438 : vector<8x8x128xf32>
    %440 = arith.addf %432, %439 : vector<8x8x128xf32>
    %c0_372 = arith.constant 0 : index
    %c4_373 = arith.constant 4 : index
    %c3_374 = arith.constant 3 : index
    %c0_375 = arith.constant 0 : index
    %441 = vector.load %arg1[%c0_372, %c4_373, %c3_374, %c0_375] : memref<1x20x20x128xf32, #tpu.memory_space<vmem>>, vector<1x8x8x128xf32>
    %442 = vector.shape_cast %441 : vector<1x8x8x128xf32> to vector<8x8x128xf32>
    %c4_376 = arith.constant 4 : index
    %c3_377 = arith.constant 3 : index
    %c0_378 = arith.constant 0 : index
    %443 = vector.load %arg2[%c4_376, %c3_377, %c0_378] : memref<13x13x128xf32, #tpu.memory_space<vmem>>, vector<1x1x128xf32>
    %444 = vector.shape_cast %443 : vector<1x1x128xf32> to vector<128xf32>
    %445 = vector.shape_cast %444 : vector<128xf32> to vector<1x1x128xf32>
    %446 = vector.broadcast %445 : vector<1x1x128xf32> to vector<8x8x128xf32>
    %447 = arith.mulf %442, %446 : vector<8x8x128xf32>
    %448 = arith.addf %440, %447 : vector<8x8x128xf32>
    %c0_379 = arith.constant 0 : index
    %c4_380 = arith.constant 4 : index
    %c4_381 = arith.constant 4 : index
    %c0_382 = arith.constant 0 : index
    %449 = vector.load %arg1[%c0_379, %c4_380, %c4_381, %c0_382] : memref<1x20x20x128xf32, #tpu.memory_space<vmem>>, vector<1x8x8x128xf32>
    %450 = vector.shape_cast %449 : vector<1x8x8x128xf32> to vector<8x8x128xf32>
    %c4_383 = arith.constant 4 : index
    %c4_384 = arith.constant 4 : index
    %c0_385 = arith.constant 0 : index
    %451 = vector.load %arg2[%c4_383, %c4_384, %c0_385] : memref<13x13x128xf32, #tpu.memory_space<vmem>>, vector<1x1x128xf32>
    %452 = vector.shape_cast %451 : vector<1x1x128xf32> to vector<128xf32>
    %453 = vector.shape_cast %452 : vector<128xf32> to vector<1x1x128xf32>
    %454 = vector.broadcast %453 : vector<1x1x128xf32> to vector<8x8x128xf32>
    %455 = arith.mulf %450, %454 : vector<8x8x128xf32>
    %456 = arith.addf %448, %455 : vector<8x8x128xf32>
    %c0_386 = arith.constant 0 : index
    %c4_387 = arith.constant 4 : index
    %c5_388 = arith.constant 5 : index
    %c0_389 = arith.constant 0 : index
    %457 = vector.load %arg1[%c0_386, %c4_387, %c5_388, %c0_389] : memref<1x20x20x128xf32, #tpu.memory_space<vmem>>, vector<1x8x8x128xf32>
    %458 = vector.shape_cast %457 : vector<1x8x8x128xf32> to vector<8x8x128xf32>
    %c4_390 = arith.constant 4 : index
    %c5_391 = arith.constant 5 : index
    %c0_392 = arith.constant 0 : index
    %459 = vector.load %arg2[%c4_390, %c5_391, %c0_392] : memref<13x13x128xf32, #tpu.memory_space<vmem>>, vector<1x1x128xf32>
    %460 = vector.shape_cast %459 : vector<1x1x128xf32> to vector<128xf32>
    %461 = vector.shape_cast %460 : vector<128xf32> to vector<1x1x128xf32>
    %462 = vector.broadcast %461 : vector<1x1x128xf32> to vector<8x8x128xf32>
    %463 = arith.mulf %458, %462 : vector<8x8x128xf32>
    %464 = arith.addf %456, %463 : vector<8x8x128xf32>
    %c0_393 = arith.constant 0 : index
    %c4_394 = arith.constant 4 : index
    %c6_395 = arith.constant 6 : index
    %c0_396 = arith.constant 0 : index
    %465 = vector.load %arg1[%c0_393, %c4_394, %c6_395, %c0_396] : memref<1x20x20x128xf32, #tpu.memory_space<vmem>>, vector<1x8x8x128xf32>
    %466 = vector.shape_cast %465 : vector<1x8x8x128xf32> to vector<8x8x128xf32>
    %c4_397 = arith.constant 4 : index
    %c6_398 = arith.constant 6 : index
    %c0_399 = arith.constant 0 : index
    %467 = vector.load %arg2[%c4_397, %c6_398, %c0_399] : memref<13x13x128xf32, #tpu.memory_space<vmem>>, vector<1x1x128xf32>
    %468 = vector.shape_cast %467 : vector<1x1x128xf32> to vector<128xf32>
    %469 = vector.shape_cast %468 : vector<128xf32> to vector<1x1x128xf32>
    %470 = vector.broadcast %469 : vector<1x1x128xf32> to vector<8x8x128xf32>
    %471 = arith.mulf %466, %470 : vector<8x8x128xf32>
    %472 = arith.addf %464, %471 : vector<8x8x128xf32>
    %c0_400 = arith.constant 0 : index
    %c4_401 = arith.constant 4 : index
    %c7_402 = arith.constant 7 : index
    %c0_403 = arith.constant 0 : index
    %473 = vector.load %arg1[%c0_400, %c4_401, %c7_402, %c0_403] : memref<1x20x20x128xf32, #tpu.memory_space<vmem>>, vector<1x8x8x128xf32>
    %474 = vector.shape_cast %473 : vector<1x8x8x128xf32> to vector<8x8x128xf32>
    %c4_404 = arith.constant 4 : index
    %c7_405 = arith.constant 7 : index
    %c0_406 = arith.constant 0 : index
    %475 = vector.load %arg2[%c4_404, %c7_405, %c0_406] : memref<13x13x128xf32, #tpu.memory_space<vmem>>, vector<1x1x128xf32>
    %476 = vector.shape_cast %475 : vector<1x1x128xf32> to vector<128xf32>
    %477 = vector.shape_cast %476 : vector<128xf32> to vector<1x1x128xf32>
    %478 = vector.broadcast %477 : vector<1x1x128xf32> to vector<8x8x128xf32>
    %479 = arith.mulf %474, %478 : vector<8x8x128xf32>
    %480 = arith.addf %472, %479 : vector<8x8x128xf32>
    %c0_407 = arith.constant 0 : index
    %c4_408 = arith.constant 4 : index
    %c8_409 = arith.constant 8 : index
    %c0_410 = arith.constant 0 : index
    %481 = vector.load %arg1[%c0_407, %c4_408, %c8_409, %c0_410] : memref<1x20x20x128xf32, #tpu.memory_space<vmem>>, vector<1x8x8x128xf32>
    %482 = vector.shape_cast %481 : vector<1x8x8x128xf32> to vector<8x8x128xf32>
    %c4_411 = arith.constant 4 : index
    %c8_412 = arith.constant 8 : index
    %c0_413 = arith.constant 0 : index
    %483 = vector.load %arg2[%c4_411, %c8_412, %c0_413] : memref<13x13x128xf32, #tpu.memory_space<vmem>>, vector<1x1x128xf32>
    %484 = vector.shape_cast %483 : vector<1x1x128xf32> to vector<128xf32>
    %485 = vector.shape_cast %484 : vector<128xf32> to vector<1x1x128xf32>
    %486 = vector.broadcast %485 : vector<1x1x128xf32> to vector<8x8x128xf32>
    %487 = arith.mulf %482, %486 : vector<8x8x128xf32>
    %488 = arith.addf %480, %487 : vector<8x8x128xf32>
    %c0_414 = arith.constant 0 : index
    %c4_415 = arith.constant 4 : index
    %c9_416 = arith.constant 9 : index
    %c0_417 = arith.constant 0 : index
    %489 = vector.load %arg1[%c0_414, %c4_415, %c9_416, %c0_417] : memref<1x20x20x128xf32, #tpu.memory_space<vmem>>, vector<1x8x8x128xf32>
    %490 = vector.shape_cast %489 : vector<1x8x8x128xf32> to vector<8x8x128xf32>
    %c4_418 = arith.constant 4 : index
    %c9_419 = arith.constant 9 : index
    %c0_420 = arith.constant 0 : index
    %491 = vector.load %arg2[%c4_418, %c9_419, %c0_420] : memref<13x13x128xf32, #tpu.memory_space<vmem>>, vector<1x1x128xf32>
    %492 = vector.shape_cast %491 : vector<1x1x128xf32> to vector<128xf32>
    %493 = vector.shape_cast %492 : vector<128xf32> to vector<1x1x128xf32>
    %494 = vector.broadcast %493 : vector<1x1x128xf32> to vector<8x8x128xf32>
    %495 = arith.mulf %490, %494 : vector<8x8x128xf32>
    %496 = arith.addf %488, %495 : vector<8x8x128xf32>
    %c0_421 = arith.constant 0 : index
    %c4_422 = arith.constant 4 : index
    %c10_423 = arith.constant 10 : index
    %c0_424 = arith.constant 0 : index
    %497 = vector.load %arg1[%c0_421, %c4_422, %c10_423, %c0_424] : memref<1x20x20x128xf32, #tpu.memory_space<vmem>>, vector<1x8x8x128xf32>
    %498 = vector.shape_cast %497 : vector<1x8x8x128xf32> to vector<8x8x128xf32>
    %c4_425 = arith.constant 4 : index
    %c10_426 = arith.constant 10 : index
    %c0_427 = arith.constant 0 : index
    %499 = vector.load %arg2[%c4_425, %c10_426, %c0_427] : memref<13x13x128xf32, #tpu.memory_space<vmem>>, vector<1x1x128xf32>
    %500 = vector.shape_cast %499 : vector<1x1x128xf32> to vector<128xf32>
    %501 = vector.shape_cast %500 : vector<128xf32> to vector<1x1x128xf32>
    %502 = vector.broadcast %501 : vector<1x1x128xf32> to vector<8x8x128xf32>
    %503 = arith.mulf %498, %502 : vector<8x8x128xf32>
    %504 = arith.addf %496, %503 : vector<8x8x128xf32>
    %c0_428 = arith.constant 0 : index
    %c4_429 = arith.constant 4 : index
    %c11_430 = arith.constant 11 : index
    %c0_431 = arith.constant 0 : index
    %505 = vector.load %arg1[%c0_428, %c4_429, %c11_430, %c0_431] : memref<1x20x20x128xf32, #tpu.memory_space<vmem>>, vector<1x8x8x128xf32>
    %506 = vector.shape_cast %505 : vector<1x8x8x128xf32> to vector<8x8x128xf32>
    %c4_432 = arith.constant 4 : index
    %c11_433 = arith.constant 11 : index
    %c0_434 = arith.constant 0 : index
    %507 = vector.load %arg2[%c4_432, %c11_433, %c0_434] : memref<13x13x128xf32, #tpu.memory_space<vmem>>, vector<1x1x128xf32>
    %508 = vector.shape_cast %507 : vector<1x1x128xf32> to vector<128xf32>
    %509 = vector.shape_cast %508 : vector<128xf32> to vector<1x1x128xf32>
    %510 = vector.broadcast %509 : vector<1x1x128xf32> to vector<8x8x128xf32>
    %511 = arith.mulf %506, %510 : vector<8x8x128xf32>
    %512 = arith.addf %504, %511 : vector<8x8x128xf32>
    %c0_435 = arith.constant 0 : index
    %c4_436 = arith.constant 4 : index
    %c12_437 = arith.constant 12 : index
    %c0_438 = arith.constant 0 : index
    %513 = vector.load %arg1[%c0_435, %c4_436, %c12_437, %c0_438] : memref<1x20x20x128xf32, #tpu.memory_space<vmem>>, vector<1x8x8x128xf32>
    %514 = vector.shape_cast %513 : vector<1x8x8x128xf32> to vector<8x8x128xf32>
    %c4_439 = arith.constant 4 : index
    %c12_440 = arith.constant 12 : index
    %c0_441 = arith.constant 0 : index
    %515 = vector.load %arg2[%c4_439, %c12_440, %c0_441] : memref<13x13x128xf32, #tpu.memory_space<vmem>>, vector<1x1x128xf32>
    %516 = vector.shape_cast %515 : vector<1x1x128xf32> to vector<128xf32>
    %517 = vector.shape_cast %516 : vector<128xf32> to vector<1x1x128xf32>
    %518 = vector.broadcast %517 : vector<1x1x128xf32> to vector<8x8x128xf32>
    %519 = arith.mulf %514, %518 : vector<8x8x128xf32>
    %520 = arith.addf %512, %519 : vector<8x8x128xf32>
    %c0_442 = arith.constant 0 : index
    %c5_443 = arith.constant 5 : index
    %c0_444 = arith.constant 0 : index
    %c0_445 = arith.constant 0 : index
    %521 = vector.load %arg1[%c0_442, %c5_443, %c0_444, %c0_445] : memref<1x20x20x128xf32, #tpu.memory_space<vmem>>, vector<1x8x8x128xf32>
    %522 = vector.shape_cast %521 : vector<1x8x8x128xf32> to vector<8x8x128xf32>
    %c5_446 = arith.constant 5 : index
    %c0_447 = arith.constant 0 : index
    %c0_448 = arith.constant 0 : index
    %523 = vector.load %arg2[%c5_446, %c0_447, %c0_448] : memref<13x13x128xf32, #tpu.memory_space<vmem>>, vector<1x1x128xf32>
    %524 = vector.shape_cast %523 : vector<1x1x128xf32> to vector<128xf32>
    %525 = vector.shape_cast %524 : vector<128xf32> to vector<1x1x128xf32>
    %526 = vector.broadcast %525 : vector<1x1x128xf32> to vector<8x8x128xf32>
    %527 = arith.mulf %522, %526 : vector<8x8x128xf32>
    %528 = arith.addf %520, %527 : vector<8x8x128xf32>
    %c0_449 = arith.constant 0 : index
    %c5_450 = arith.constant 5 : index
    %c1_451 = arith.constant 1 : index
    %c0_452 = arith.constant 0 : index
    %529 = vector.load %arg1[%c0_449, %c5_450, %c1_451, %c0_452] : memref<1x20x20x128xf32, #tpu.memory_space<vmem>>, vector<1x8x8x128xf32>
    %530 = vector.shape_cast %529 : vector<1x8x8x128xf32> to vector<8x8x128xf32>
    %c5_453 = arith.constant 5 : index
    %c1_454 = arith.constant 1 : index
    %c0_455 = arith.constant 0 : index
    %531 = vector.load %arg2[%c5_453, %c1_454, %c0_455] : memref<13x13x128xf32, #tpu.memory_space<vmem>>, vector<1x1x128xf32>
    %532 = vector.shape_cast %531 : vector<1x1x128xf32> to vector<128xf32>
    %533 = vector.shape_cast %532 : vector<128xf32> to vector<1x1x128xf32>
    %534 = vector.broadcast %533 : vector<1x1x128xf32> to vector<8x8x128xf32>
    %535 = arith.mulf %530, %534 : vector<8x8x128xf32>
    %536 = arith.addf %528, %535 : vector<8x8x128xf32>
    %c0_456 = arith.constant 0 : index
    %c5_457 = arith.constant 5 : index
    %c2_458 = arith.constant 2 : index
    %c0_459 = arith.constant 0 : index
    %537 = vector.load %arg1[%c0_456, %c5_457, %c2_458, %c0_459] : memref<1x20x20x128xf32, #tpu.memory_space<vmem>>, vector<1x8x8x128xf32>
    %538 = vector.shape_cast %537 : vector<1x8x8x128xf32> to vector<8x8x128xf32>
    %c5_460 = arith.constant 5 : index
    %c2_461 = arith.constant 2 : index
    %c0_462 = arith.constant 0 : index
    %539 = vector.load %arg2[%c5_460, %c2_461, %c0_462] : memref<13x13x128xf32, #tpu.memory_space<vmem>>, vector<1x1x128xf32>
    %540 = vector.shape_cast %539 : vector<1x1x128xf32> to vector<128xf32>
    %541 = vector.shape_cast %540 : vector<128xf32> to vector<1x1x128xf32>
    %542 = vector.broadcast %541 : vector<1x1x128xf32> to vector<8x8x128xf32>
    %543 = arith.mulf %538, %542 : vector<8x8x128xf32>
    %544 = arith.addf %536, %543 : vector<8x8x128xf32>
    %c0_463 = arith.constant 0 : index
    %c5_464 = arith.constant 5 : index
    %c3_465 = arith.constant 3 : index
    %c0_466 = arith.constant 0 : index
    %545 = vector.load %arg1[%c0_463, %c5_464, %c3_465, %c0_466] : memref<1x20x20x128xf32, #tpu.memory_space<vmem>>, vector<1x8x8x128xf32>
    %546 = vector.shape_cast %545 : vector<1x8x8x128xf32> to vector<8x8x128xf32>
    %c5_467 = arith.constant 5 : index
    %c3_468 = arith.constant 3 : index
    %c0_469 = arith.constant 0 : index
    %547 = vector.load %arg2[%c5_467, %c3_468, %c0_469] : memref<13x13x128xf32, #tpu.memory_space<vmem>>, vector<1x1x128xf32>
    %548 = vector.shape_cast %547 : vector<1x1x128xf32> to vector<128xf32>
    %549 = vector.shape_cast %548 : vector<128xf32> to vector<1x1x128xf32>
    %550 = vector.broadcast %549 : vector<1x1x128xf32> to vector<8x8x128xf32>
    %551 = arith.mulf %546, %550 : vector<8x8x128xf32>
    %552 = arith.addf %544, %551 : vector<8x8x128xf32>
    %c0_470 = arith.constant 0 : index
    %c5_471 = arith.constant 5 : index
    %c4_472 = arith.constant 4 : index
    %c0_473 = arith.constant 0 : index
    %553 = vector.load %arg1[%c0_470, %c5_471, %c4_472, %c0_473] : memref<1x20x20x128xf32, #tpu.memory_space<vmem>>, vector<1x8x8x128xf32>
    %554 = vector.shape_cast %553 : vector<1x8x8x128xf32> to vector<8x8x128xf32>
    %c5_474 = arith.constant 5 : index
    %c4_475 = arith.constant 4 : index
    %c0_476 = arith.constant 0 : index
    %555 = vector.load %arg2[%c5_474, %c4_475, %c0_476] : memref<13x13x128xf32, #tpu.memory_space<vmem>>, vector<1x1x128xf32>
    %556 = vector.shape_cast %555 : vector<1x1x128xf32> to vector<128xf32>
    %557 = vector.shape_cast %556 : vector<128xf32> to vector<1x1x128xf32>
    %558 = vector.broadcast %557 : vector<1x1x128xf32> to vector<8x8x128xf32>
    %559 = arith.mulf %554, %558 : vector<8x8x128xf32>
    %560 = arith.addf %552, %559 : vector<8x8x128xf32>
    %c0_477 = arith.constant 0 : index
    %c5_478 = arith.constant 5 : index
    %c5_479 = arith.constant 5 : index
    %c0_480 = arith.constant 0 : index
    %561 = vector.load %arg1[%c0_477, %c5_478, %c5_479, %c0_480] : memref<1x20x20x128xf32, #tpu.memory_space<vmem>>, vector<1x8x8x128xf32>
    %562 = vector.shape_cast %561 : vector<1x8x8x128xf32> to vector<8x8x128xf32>
    %c5_481 = arith.constant 5 : index
    %c5_482 = arith.constant 5 : index
    %c0_483 = arith.constant 0 : index
    %563 = vector.load %arg2[%c5_481, %c5_482, %c0_483] : memref<13x13x128xf32, #tpu.memory_space<vmem>>, vector<1x1x128xf32>
    %564 = vector.shape_cast %563 : vector<1x1x128xf32> to vector<128xf32>
    %565 = vector.shape_cast %564 : vector<128xf32> to vector<1x1x128xf32>
    %566 = vector.broadcast %565 : vector<1x1x128xf32> to vector<8x8x128xf32>
    %567 = arith.mulf %562, %566 : vector<8x8x128xf32>
    %568 = arith.addf %560, %567 : vector<8x8x128xf32>
    %c0_484 = arith.constant 0 : index
    %c5_485 = arith.constant 5 : index
    %c6_486 = arith.constant 6 : index
    %c0_487 = arith.constant 0 : index
    %569 = vector.load %arg1[%c0_484, %c5_485, %c6_486, %c0_487] : memref<1x20x20x128xf32, #tpu.memory_space<vmem>>, vector<1x8x8x128xf32>
    %570 = vector.shape_cast %569 : vector<1x8x8x128xf32> to vector<8x8x128xf32>
    %c5_488 = arith.constant 5 : index
    %c6_489 = arith.constant 6 : index
    %c0_490 = arith.constant 0 : index
    %571 = vector.load %arg2[%c5_488, %c6_489, %c0_490] : memref<13x13x128xf32, #tpu.memory_space<vmem>>, vector<1x1x128xf32>
    %572 = vector.shape_cast %571 : vector<1x1x128xf32> to vector<128xf32>
    %573 = vector.shape_cast %572 : vector<128xf32> to vector<1x1x128xf32>
    %574 = vector.broadcast %573 : vector<1x1x128xf32> to vector<8x8x128xf32>
    %575 = arith.mulf %570, %574 : vector<8x8x128xf32>
    %576 = arith.addf %568, %575 : vector<8x8x128xf32>
    %c0_491 = arith.constant 0 : index
    %c5_492 = arith.constant 5 : index
    %c7_493 = arith.constant 7 : index
    %c0_494 = arith.constant 0 : index
    %577 = vector.load %arg1[%c0_491, %c5_492, %c7_493, %c0_494] : memref<1x20x20x128xf32, #tpu.memory_space<vmem>>, vector<1x8x8x128xf32>
    %578 = vector.shape_cast %577 : vector<1x8x8x128xf32> to vector<8x8x128xf32>
    %c5_495 = arith.constant 5 : index
    %c7_496 = arith.constant 7 : index
    %c0_497 = arith.constant 0 : index
    %579 = vector.load %arg2[%c5_495, %c7_496, %c0_497] : memref<13x13x128xf32, #tpu.memory_space<vmem>>, vector<1x1x128xf32>
    %580 = vector.shape_cast %579 : vector<1x1x128xf32> to vector<128xf32>
    %581 = vector.shape_cast %580 : vector<128xf32> to vector<1x1x128xf32>
    %582 = vector.broadcast %581 : vector<1x1x128xf32> to vector<8x8x128xf32>
    %583 = arith.mulf %578, %582 : vector<8x8x128xf32>
    %584 = arith.addf %576, %583 : vector<8x8x128xf32>
    %c0_498 = arith.constant 0 : index
    %c5_499 = arith.constant 5 : index
    %c8_500 = arith.constant 8 : index
    %c0_501 = arith.constant 0 : index
    %585 = vector.load %arg1[%c0_498, %c5_499, %c8_500, %c0_501] : memref<1x20x20x128xf32, #tpu.memory_space<vmem>>, vector<1x8x8x128xf32>
    %586 = vector.shape_cast %585 : vector<1x8x8x128xf32> to vector<8x8x128xf32>
    %c5_502 = arith.constant 5 : index
    %c8_503 = arith.constant 8 : index
    %c0_504 = arith.constant 0 : index
    %587 = vector.load %arg2[%c5_502, %c8_503, %c0_504] : memref<13x13x128xf32, #tpu.memory_space<vmem>>, vector<1x1x128xf32>
    %588 = vector.shape_cast %587 : vector<1x1x128xf32> to vector<128xf32>
    %589 = vector.shape_cast %588 : vector<128xf32> to vector<1x1x128xf32>
    %590 = vector.broadcast %589 : vector<1x1x128xf32> to vector<8x8x128xf32>
    %591 = arith.mulf %586, %590 : vector<8x8x128xf32>
    %592 = arith.addf %584, %591 : vector<8x8x128xf32>
    %c0_505 = arith.constant 0 : index
    %c5_506 = arith.constant 5 : index
    %c9_507 = arith.constant 9 : index
    %c0_508 = arith.constant 0 : index
    %593 = vector.load %arg1[%c0_505, %c5_506, %c9_507, %c0_508] : memref<1x20x20x128xf32, #tpu.memory_space<vmem>>, vector<1x8x8x128xf32>
    %594 = vector.shape_cast %593 : vector<1x8x8x128xf32> to vector<8x8x128xf32>
    %c5_509 = arith.constant 5 : index
    %c9_510 = arith.constant 9 : index
    %c0_511 = arith.constant 0 : index
    %595 = vector.load %arg2[%c5_509, %c9_510, %c0_511] : memref<13x13x128xf32, #tpu.memory_space<vmem>>, vector<1x1x128xf32>
    %596 = vector.shape_cast %595 : vector<1x1x128xf32> to vector<128xf32>
    %597 = vector.shape_cast %596 : vector<128xf32> to vector<1x1x128xf32>
    %598 = vector.broadcast %597 : vector<1x1x128xf32> to vector<8x8x128xf32>
    %599 = arith.mulf %594, %598 : vector<8x8x128xf32>
    %600 = arith.addf %592, %599 : vector<8x8x128xf32>
    %c0_512 = arith.constant 0 : index
    %c5_513 = arith.constant 5 : index
    %c10_514 = arith.constant 10 : index
    %c0_515 = arith.constant 0 : index
    %601 = vector.load %arg1[%c0_512, %c5_513, %c10_514, %c0_515] : memref<1x20x20x128xf32, #tpu.memory_space<vmem>>, vector<1x8x8x128xf32>
    %602 = vector.shape_cast %601 : vector<1x8x8x128xf32> to vector<8x8x128xf32>
    %c5_516 = arith.constant 5 : index
    %c10_517 = arith.constant 10 : index
    %c0_518 = arith.constant 0 : index
    %603 = vector.load %arg2[%c5_516, %c10_517, %c0_518] : memref<13x13x128xf32, #tpu.memory_space<vmem>>, vector<1x1x128xf32>
    %604 = vector.shape_cast %603 : vector<1x1x128xf32> to vector<128xf32>
    %605 = vector.shape_cast %604 : vector<128xf32> to vector<1x1x128xf32>
    %606 = vector.broadcast %605 : vector<1x1x128xf32> to vector<8x8x128xf32>
    %607 = arith.mulf %602, %606 : vector<8x8x128xf32>
    %608 = arith.addf %600, %607 : vector<8x8x128xf32>
    %c0_519 = arith.constant 0 : index
    %c5_520 = arith.constant 5 : index
    %c11_521 = arith.constant 11 : index
    %c0_522 = arith.constant 0 : index
    %609 = vector.load %arg1[%c0_519, %c5_520, %c11_521, %c0_522] : memref<1x20x20x128xf32, #tpu.memory_space<vmem>>, vector<1x8x8x128xf32>
    %610 = vector.shape_cast %609 : vector<1x8x8x128xf32> to vector<8x8x128xf32>
    %c5_523 = arith.constant 5 : index
    %c11_524 = arith.constant 11 : index
    %c0_525 = arith.constant 0 : index
    %611 = vector.load %arg2[%c5_523, %c11_524, %c0_525] : memref<13x13x128xf32, #tpu.memory_space<vmem>>, vector<1x1x128xf32>
    %612 = vector.shape_cast %611 : vector<1x1x128xf32> to vector<128xf32>
    %613 = vector.shape_cast %612 : vector<128xf32> to vector<1x1x128xf32>
    %614 = vector.broadcast %613 : vector<1x1x128xf32> to vector<8x8x128xf32>
    %615 = arith.mulf %610, %614 : vector<8x8x128xf32>
    %616 = arith.addf %608, %615 : vector<8x8x128xf32>
    %c0_526 = arith.constant 0 : index
    %c5_527 = arith.constant 5 : index
    %c12_528 = arith.constant 12 : index
    %c0_529 = arith.constant 0 : index
    %617 = vector.load %arg1[%c0_526, %c5_527, %c12_528, %c0_529] : memref<1x20x20x128xf32, #tpu.memory_space<vmem>>, vector<1x8x8x128xf32>
    %618 = vector.shape_cast %617 : vector<1x8x8x128xf32> to vector<8x8x128xf32>
    %c5_530 = arith.constant 5 : index
    %c12_531 = arith.constant 12 : index
    %c0_532 = arith.constant 0 : index
    %619 = vector.load %arg2[%c5_530, %c12_531, %c0_532] : memref<13x13x128xf32, #tpu.memory_space<vmem>>, vector<1x1x128xf32>
    %620 = vector.shape_cast %619 : vector<1x1x128xf32> to vector<128xf32>
    %621 = vector.shape_cast %620 : vector<128xf32> to vector<1x1x128xf32>
    %622 = vector.broadcast %621 : vector<1x1x128xf32> to vector<8x8x128xf32>
    %623 = arith.mulf %618, %622 : vector<8x8x128xf32>
    %624 = arith.addf %616, %623 : vector<8x8x128xf32>
    %c0_533 = arith.constant 0 : index
    %c6_534 = arith.constant 6 : index
    %c0_535 = arith.constant 0 : index
    %c0_536 = arith.constant 0 : index
    %625 = vector.load %arg1[%c0_533, %c6_534, %c0_535, %c0_536] : memref<1x20x20x128xf32, #tpu.memory_space<vmem>>, vector<1x8x8x128xf32>
    %626 = vector.shape_cast %625 : vector<1x8x8x128xf32> to vector<8x8x128xf32>
    %c6_537 = arith.constant 6 : index
    %c0_538 = arith.constant 0 : index
    %c0_539 = arith.constant 0 : index
    %627 = vector.load %arg2[%c6_537, %c0_538, %c0_539] : memref<13x13x128xf32, #tpu.memory_space<vmem>>, vector<1x1x128xf32>
    %628 = vector.shape_cast %627 : vector<1x1x128xf32> to vector<128xf32>
    %629 = vector.shape_cast %628 : vector<128xf32> to vector<1x1x128xf32>
    %630 = vector.broadcast %629 : vector<1x1x128xf32> to vector<8x8x128xf32>
    %631 = arith.mulf %626, %630 : vector<8x8x128xf32>
    %632 = arith.addf %624, %631 : vector<8x8x128xf32>
    %c0_540 = arith.constant 0 : index
    %c6_541 = arith.constant 6 : index
    %c1_542 = arith.constant 1 : index
    %c0_543 = arith.constant 0 : index
    %633 = vector.load %arg1[%c0_540, %c6_541, %c1_542, %c0_543] : memref<1x20x20x128xf32, #tpu.memory_space<vmem>>, vector<1x8x8x128xf32>
    %634 = vector.shape_cast %633 : vector<1x8x8x128xf32> to vector<8x8x128xf32>
    %c6_544 = arith.constant 6 : index
    %c1_545 = arith.constant 1 : index
    %c0_546 = arith.constant 0 : index
    %635 = vector.load %arg2[%c6_544, %c1_545, %c0_546] : memref<13x13x128xf32, #tpu.memory_space<vmem>>, vector<1x1x128xf32>
    %636 = vector.shape_cast %635 : vector<1x1x128xf32> to vector<128xf32>
    %637 = vector.shape_cast %636 : vector<128xf32> to vector<1x1x128xf32>
    %638 = vector.broadcast %637 : vector<1x1x128xf32> to vector<8x8x128xf32>
    %639 = arith.mulf %634, %638 : vector<8x8x128xf32>
    %640 = arith.addf %632, %639 : vector<8x8x128xf32>
    %c0_547 = arith.constant 0 : index
    %c6_548 = arith.constant 6 : index
    %c2_549 = arith.constant 2 : index
    %c0_550 = arith.constant 0 : index
    %641 = vector.load %arg1[%c0_547, %c6_548, %c2_549, %c0_550] : memref<1x20x20x128xf32, #tpu.memory_space<vmem>>, vector<1x8x8x128xf32>
    %642 = vector.shape_cast %641 : vector<1x8x8x128xf32> to vector<8x8x128xf32>
    %c6_551 = arith.constant 6 : index
    %c2_552 = arith.constant 2 : index
    %c0_553 = arith.constant 0 : index
    %643 = vector.load %arg2[%c6_551, %c2_552, %c0_553] : memref<13x13x128xf32, #tpu.memory_space<vmem>>, vector<1x1x128xf32>
    %644 = vector.shape_cast %643 : vector<1x1x128xf32> to vector<128xf32>
    %645 = vector.shape_cast %644 : vector<128xf32> to vector<1x1x128xf32>
    %646 = vector.broadcast %645 : vector<1x1x128xf32> to vector<8x8x128xf32>
    %647 = arith.mulf %642, %646 : vector<8x8x128xf32>
    %648 = arith.addf %640, %647 : vector<8x8x128xf32>
    %c0_554 = arith.constant 0 : index
    %c6_555 = arith.constant 6 : index
    %c3_556 = arith.constant 3 : index
    %c0_557 = arith.constant 0 : index
    %649 = vector.load %arg1[%c0_554, %c6_555, %c3_556, %c0_557] : memref<1x20x20x128xf32, #tpu.memory_space<vmem>>, vector<1x8x8x128xf32>
    %650 = vector.shape_cast %649 : vector<1x8x8x128xf32> to vector<8x8x128xf32>
    %c6_558 = arith.constant 6 : index
    %c3_559 = arith.constant 3 : index
    %c0_560 = arith.constant 0 : index
    %651 = vector.load %arg2[%c6_558, %c3_559, %c0_560] : memref<13x13x128xf32, #tpu.memory_space<vmem>>, vector<1x1x128xf32>
    %652 = vector.shape_cast %651 : vector<1x1x128xf32> to vector<128xf32>
    %653 = vector.shape_cast %652 : vector<128xf32> to vector<1x1x128xf32>
    %654 = vector.broadcast %653 : vector<1x1x128xf32> to vector<8x8x128xf32>
    %655 = arith.mulf %650, %654 : vector<8x8x128xf32>
    %656 = arith.addf %648, %655 : vector<8x8x128xf32>
    %c0_561 = arith.constant 0 : index
    %c6_562 = arith.constant 6 : index
    %c4_563 = arith.constant 4 : index
    %c0_564 = arith.constant 0 : index
    %657 = vector.load %arg1[%c0_561, %c6_562, %c4_563, %c0_564] : memref<1x20x20x128xf32, #tpu.memory_space<vmem>>, vector<1x8x8x128xf32>
    %658 = vector.shape_cast %657 : vector<1x8x8x128xf32> to vector<8x8x128xf32>
    %c6_565 = arith.constant 6 : index
    %c4_566 = arith.constant 4 : index
    %c0_567 = arith.constant 0 : index
    %659 = vector.load %arg2[%c6_565, %c4_566, %c0_567] : memref<13x13x128xf32, #tpu.memory_space<vmem>>, vector<1x1x128xf32>
    %660 = vector.shape_cast %659 : vector<1x1x128xf32> to vector<128xf32>
    %661 = vector.shape_cast %660 : vector<128xf32> to vector<1x1x128xf32>
    %662 = vector.broadcast %661 : vector<1x1x128xf32> to vector<8x8x128xf32>
    %663 = arith.mulf %658, %662 : vector<8x8x128xf32>
    %664 = arith.addf %656, %663 : vector<8x8x128xf32>
    %c0_568 = arith.constant 0 : index
    %c6_569 = arith.constant 6 : index
    %c5_570 = arith.constant 5 : index
    %c0_571 = arith.constant 0 : index
    %665 = vector.load %arg1[%c0_568, %c6_569, %c5_570, %c0_571] : memref<1x20x20x128xf32, #tpu.memory_space<vmem>>, vector<1x8x8x128xf32>
    %666 = vector.shape_cast %665 : vector<1x8x8x128xf32> to vector<8x8x128xf32>
    %c6_572 = arith.constant 6 : index
    %c5_573 = arith.constant 5 : index
    %c0_574 = arith.constant 0 : index
    %667 = vector.load %arg2[%c6_572, %c5_573, %c0_574] : memref<13x13x128xf32, #tpu.memory_space<vmem>>, vector<1x1x128xf32>
    %668 = vector.shape_cast %667 : vector<1x1x128xf32> to vector<128xf32>
    %669 = vector.shape_cast %668 : vector<128xf32> to vector<1x1x128xf32>
    %670 = vector.broadcast %669 : vector<1x1x128xf32> to vector<8x8x128xf32>
    %671 = arith.mulf %666, %670 : vector<8x8x128xf32>
    %672 = arith.addf %664, %671 : vector<8x8x128xf32>
    %c0_575 = arith.constant 0 : index
    %c6_576 = arith.constant 6 : index
    %c6_577 = arith.constant 6 : index
    %c0_578 = arith.constant 0 : index
    %673 = vector.load %arg1[%c0_575, %c6_576, %c6_577, %c0_578] : memref<1x20x20x128xf32, #tpu.memory_space<vmem>>, vector<1x8x8x128xf32>
    %674 = vector.shape_cast %673 : vector<1x8x8x128xf32> to vector<8x8x128xf32>
    %c6_579 = arith.constant 6 : index
    %c6_580 = arith.constant 6 : index
    %c0_581 = arith.constant 0 : index
    %675 = vector.load %arg2[%c6_579, %c6_580, %c0_581] : memref<13x13x128xf32, #tpu.memory_space<vmem>>, vector<1x1x128xf32>
    %676 = vector.shape_cast %675 : vector<1x1x128xf32> to vector<128xf32>
    %677 = vector.shape_cast %676 : vector<128xf32> to vector<1x1x128xf32>
    %678 = vector.broadcast %677 : vector<1x1x128xf32> to vector<8x8x128xf32>
    %679 = arith.mulf %674, %678 : vector<8x8x128xf32>
    %680 = arith.addf %672, %679 : vector<8x8x128xf32>
    %c0_582 = arith.constant 0 : index
    %c6_583 = arith.constant 6 : index
    %c7_584 = arith.constant 7 : index
    %c0_585 = arith.constant 0 : index
    %681 = vector.load %arg1[%c0_582, %c6_583, %c7_584, %c0_585] : memref<1x20x20x128xf32, #tpu.memory_space<vmem>>, vector<1x8x8x128xf32>
    %682 = vector.shape_cast %681 : vector<1x8x8x128xf32> to vector<8x8x128xf32>
    %c6_586 = arith.constant 6 : index
    %c7_587 = arith.constant 7 : index
    %c0_588 = arith.constant 0 : index
    %683 = vector.load %arg2[%c6_586, %c7_587, %c0_588] : memref<13x13x128xf32, #tpu.memory_space<vmem>>, vector<1x1x128xf32>
    %684 = vector.shape_cast %683 : vector<1x1x128xf32> to vector<128xf32>
    %685 = vector.shape_cast %684 : vector<128xf32> to vector<1x1x128xf32>
    %686 = vector.broadcast %685 : vector<1x1x128xf32> to vector<8x8x128xf32>
    %687 = arith.mulf %682, %686 : vector<8x8x128xf32>
    %688 = arith.addf %680, %687 : vector<8x8x128xf32>
    %c0_589 = arith.constant 0 : index
    %c6_590 = arith.constant 6 : index
    %c8_591 = arith.constant 8 : index
    %c0_592 = arith.constant 0 : index
    %689 = vector.load %arg1[%c0_589, %c6_590, %c8_591, %c0_592] : memref<1x20x20x128xf32, #tpu.memory_space<vmem>>, vector<1x8x8x128xf32>
    %690 = vector.shape_cast %689 : vector<1x8x8x128xf32> to vector<8x8x128xf32>
    %c6_593 = arith.constant 6 : index
    %c8_594 = arith.constant 8 : index
    %c0_595 = arith.constant 0 : index
    %691 = vector.load %arg2[%c6_593, %c8_594, %c0_595] : memref<13x13x128xf32, #tpu.memory_space<vmem>>, vector<1x1x128xf32>
    %692 = vector.shape_cast %691 : vector<1x1x128xf32> to vector<128xf32>
    %693 = vector.shape_cast %692 : vector<128xf32> to vector<1x1x128xf32>
    %694 = vector.broadcast %693 : vector<1x1x128xf32> to vector<8x8x128xf32>
    %695 = arith.mulf %690, %694 : vector<8x8x128xf32>
    %696 = arith.addf %688, %695 : vector<8x8x128xf32>
    %c0_596 = arith.constant 0 : index
    %c6_597 = arith.constant 6 : index
    %c9_598 = arith.constant 9 : index
    %c0_599 = arith.constant 0 : index
    %697 = vector.load %arg1[%c0_596, %c6_597, %c9_598, %c0_599] : memref<1x20x20x128xf32, #tpu.memory_space<vmem>>, vector<1x8x8x128xf32>
    %698 = vector.shape_cast %697 : vector<1x8x8x128xf32> to vector<8x8x128xf32>
    %c6_600 = arith.constant 6 : index
    %c9_601 = arith.constant 9 : index
    %c0_602 = arith.constant 0 : index
    %699 = vector.load %arg2[%c6_600, %c9_601, %c0_602] : memref<13x13x128xf32, #tpu.memory_space<vmem>>, vector<1x1x128xf32>
    %700 = vector.shape_cast %699 : vector<1x1x128xf32> to vector<128xf32>
    %701 = vector.shape_cast %700 : vector<128xf32> to vector<1x1x128xf32>
    %702 = vector.broadcast %701 : vector<1x1x128xf32> to vector<8x8x128xf32>
    %703 = arith.mulf %698, %702 : vector<8x8x128xf32>
    %704 = arith.addf %696, %703 : vector<8x8x128xf32>
    %c0_603 = arith.constant 0 : index
    %c6_604 = arith.constant 6 : index
    %c10_605 = arith.constant 10 : index
    %c0_606 = arith.constant 0 : index
    %705 = vector.load %arg1[%c0_603, %c6_604, %c10_605, %c0_606] : memref<1x20x20x128xf32, #tpu.memory_space<vmem>>, vector<1x8x8x128xf32>
    %706 = vector.shape_cast %705 : vector<1x8x8x128xf32> to vector<8x8x128xf32>
    %c6_607 = arith.constant 6 : index
    %c10_608 = arith.constant 10 : index
    %c0_609 = arith.constant 0 : index
    %707 = vector.load %arg2[%c6_607, %c10_608, %c0_609] : memref<13x13x128xf32, #tpu.memory_space<vmem>>, vector<1x1x128xf32>
    %708 = vector.shape_cast %707 : vector<1x1x128xf32> to vector<128xf32>
    %709 = vector.shape_cast %708 : vector<128xf32> to vector<1x1x128xf32>
    %710 = vector.broadcast %709 : vector<1x1x128xf32> to vector<8x8x128xf32>
    %711 = arith.mulf %706, %710 : vector<8x8x128xf32>
    %712 = arith.addf %704, %711 : vector<8x8x128xf32>
    %c0_610 = arith.constant 0 : index
    %c6_611 = arith.constant 6 : index
    %c11_612 = arith.constant 11 : index
    %c0_613 = arith.constant 0 : index
    %713 = vector.load %arg1[%c0_610, %c6_611, %c11_612, %c0_613] : memref<1x20x20x128xf32, #tpu.memory_space<vmem>>, vector<1x8x8x128xf32>
    %714 = vector.shape_cast %713 : vector<1x8x8x128xf32> to vector<8x8x128xf32>
    %c6_614 = arith.constant 6 : index
    %c11_615 = arith.constant 11 : index
    %c0_616 = arith.constant 0 : index
    %715 = vector.load %arg2[%c6_614, %c11_615, %c0_616] : memref<13x13x128xf32, #tpu.memory_space<vmem>>, vector<1x1x128xf32>
    %716 = vector.shape_cast %715 : vector<1x1x128xf32> to vector<128xf32>
    %717 = vector.shape_cast %716 : vector<128xf32> to vector<1x1x128xf32>
    %718 = vector.broadcast %717 : vector<1x1x128xf32> to vector<8x8x128xf32>
    %719 = arith.mulf %714, %718 : vector<8x8x128xf32>
    %720 = arith.addf %712, %719 : vector<8x8x128xf32>
    %c0_617 = arith.constant 0 : index
    %c6_618 = arith.constant 6 : index
    %c12_619 = arith.constant 12 : index
    %c0_620 = arith.constant 0 : index
    %721 = vector.load %arg1[%c0_617, %c6_618, %c12_619, %c0_620] : memref<1x20x20x128xf32, #tpu.memory_space<vmem>>, vector<1x8x8x128xf32>
    %722 = vector.shape_cast %721 : vector<1x8x8x128xf32> to vector<8x8x128xf32>
    %c6_621 = arith.constant 6 : index
    %c12_622 = arith.constant 12 : index
    %c0_623 = arith.constant 0 : index
    %723 = vector.load %arg2[%c6_621, %c12_622, %c0_623] : memref<13x13x128xf32, #tpu.memory_space<vmem>>, vector<1x1x128xf32>
    %724 = vector.shape_cast %723 : vector<1x1x128xf32> to vector<128xf32>
    %725 = vector.shape_cast %724 : vector<128xf32> to vector<1x1x128xf32>
    %726 = vector.broadcast %725 : vector<1x1x128xf32> to vector<8x8x128xf32>
    %727 = arith.mulf %722, %726 : vector<8x8x128xf32>
    %728 = arith.addf %720, %727 : vector<8x8x128xf32>
    %c0_624 = arith.constant 0 : index
    %c7_625 = arith.constant 7 : index
    %c0_626 = arith.constant 0 : index
    %c0_627 = arith.constant 0 : index
    %729 = vector.load %arg1[%c0_624, %c7_625, %c0_626, %c0_627] : memref<1x20x20x128xf32, #tpu.memory_space<vmem>>, vector<1x8x8x128xf32>
    %730 = vector.shape_cast %729 : vector<1x8x8x128xf32> to vector<8x8x128xf32>
    %c7_628 = arith.constant 7 : index
    %c0_629 = arith.constant 0 : index
    %c0_630 = arith.constant 0 : index
    %731 = vector.load %arg2[%c7_628, %c0_629, %c0_630] : memref<13x13x128xf32, #tpu.memory_space<vmem>>, vector<1x1x128xf32>
    %732 = vector.shape_cast %731 : vector<1x1x128xf32> to vector<128xf32>
    %733 = vector.shape_cast %732 : vector<128xf32> to vector<1x1x128xf32>
    %734 = vector.broadcast %733 : vector<1x1x128xf32> to vector<8x8x128xf32>
    %735 = arith.mulf %730, %734 : vector<8x8x128xf32>
    %736 = arith.addf %728, %735 : vector<8x8x128xf32>
    %c0_631 = arith.constant 0 : index
    %c7_632 = arith.constant 7 : index
    %c1_633 = arith.constant 1 : index
    %c0_634 = arith.constant 0 : index
    %737 = vector.load %arg1[%c0_631, %c7_632, %c1_633, %c0_634] : memref<1x20x20x128xf32, #tpu.memory_space<vmem>>, vector<1x8x8x128xf32>
    %738 = vector.shape_cast %737 : vector<1x8x8x128xf32> to vector<8x8x128xf32>
    %c7_635 = arith.constant 7 : index
    %c1_636 = arith.constant 1 : index
    %c0_637 = arith.constant 0 : index
    %739 = vector.load %arg2[%c7_635, %c1_636, %c0_637] : memref<13x13x128xf32, #tpu.memory_space<vmem>>, vector<1x1x128xf32>
    %740 = vector.shape_cast %739 : vector<1x1x128xf32> to vector<128xf32>
    %741 = vector.shape_cast %740 : vector<128xf32> to vector<1x1x128xf32>
    %742 = vector.broadcast %741 : vector<1x1x128xf32> to vector<8x8x128xf32>
    %743 = arith.mulf %738, %742 : vector<8x8x128xf32>
    %744 = arith.addf %736, %743 : vector<8x8x128xf32>
    %c0_638 = arith.constant 0 : index
    %c7_639 = arith.constant 7 : index
    %c2_640 = arith.constant 2 : index
    %c0_641 = arith.constant 0 : index
    %745 = vector.load %arg1[%c0_638, %c7_639, %c2_640, %c0_641] : memref<1x20x20x128xf32, #tpu.memory_space<vmem>>, vector<1x8x8x128xf32>
    %746 = vector.shape_cast %745 : vector<1x8x8x128xf32> to vector<8x8x128xf32>
    %c7_642 = arith.constant 7 : index
    %c2_643 = arith.constant 2 : index
    %c0_644 = arith.constant 0 : index
    %747 = vector.load %arg2[%c7_642, %c2_643, %c0_644] : memref<13x13x128xf32, #tpu.memory_space<vmem>>, vector<1x1x128xf32>
    %748 = vector.shape_cast %747 : vector<1x1x128xf32> to vector<128xf32>
    %749 = vector.shape_cast %748 : vector<128xf32> to vector<1x1x128xf32>
    %750 = vector.broadcast %749 : vector<1x1x128xf32> to vector<8x8x128xf32>
    %751 = arith.mulf %746, %750 : vector<8x8x128xf32>
    %752 = arith.addf %744, %751 : vector<8x8x128xf32>
    %c0_645 = arith.constant 0 : index
    %c7_646 = arith.constant 7 : index
    %c3_647 = arith.constant 3 : index
    %c0_648 = arith.constant 0 : index
    %753 = vector.load %arg1[%c0_645, %c7_646, %c3_647, %c0_648] : memref<1x20x20x128xf32, #tpu.memory_space<vmem>>, vector<1x8x8x128xf32>
    %754 = vector.shape_cast %753 : vector<1x8x8x128xf32> to vector<8x8x128xf32>
    %c7_649 = arith.constant 7 : index
    %c3_650 = arith.constant 3 : index
    %c0_651 = arith.constant 0 : index
    %755 = vector.load %arg2[%c7_649, %c3_650, %c0_651] : memref<13x13x128xf32, #tpu.memory_space<vmem>>, vector<1x1x128xf32>
    %756 = vector.shape_cast %755 : vector<1x1x128xf32> to vector<128xf32>
    %757 = vector.shape_cast %756 : vector<128xf32> to vector<1x1x128xf32>
    %758 = vector.broadcast %757 : vector<1x1x128xf32> to vector<8x8x128xf32>
    %759 = arith.mulf %754, %758 : vector<8x8x128xf32>
    %760 = arith.addf %752, %759 : vector<8x8x128xf32>
    %c0_652 = arith.constant 0 : index
    %c7_653 = arith.constant 7 : index
    %c4_654 = arith.constant 4 : index
    %c0_655 = arith.constant 0 : index
    %761 = vector.load %arg1[%c0_652, %c7_653, %c4_654, %c0_655] : memref<1x20x20x128xf32, #tpu.memory_space<vmem>>, vector<1x8x8x128xf32>
    %762 = vector.shape_cast %761 : vector<1x8x8x128xf32> to vector<8x8x128xf32>
    %c7_656 = arith.constant 7 : index
    %c4_657 = arith.constant 4 : index
    %c0_658 = arith.constant 0 : index
    %763 = vector.load %arg2[%c7_656, %c4_657, %c0_658] : memref<13x13x128xf32, #tpu.memory_space<vmem>>, vector<1x1x128xf32>
    %764 = vector.shape_cast %763 : vector<1x1x128xf32> to vector<128xf32>
    %765 = vector.shape_cast %764 : vector<128xf32> to vector<1x1x128xf32>
    %766 = vector.broadcast %765 : vector<1x1x128xf32> to vector<8x8x128xf32>
    %767 = arith.mulf %762, %766 : vector<8x8x128xf32>
    %768 = arith.addf %760, %767 : vector<8x8x128xf32>
    %c0_659 = arith.constant 0 : index
    %c7_660 = arith.constant 7 : index
    %c5_661 = arith.constant 5 : index
    %c0_662 = arith.constant 0 : index
    %769 = vector.load %arg1[%c0_659, %c7_660, %c5_661, %c0_662] : memref<1x20x20x128xf32, #tpu.memory_space<vmem>>, vector<1x8x8x128xf32>
    %770 = vector.shape_cast %769 : vector<1x8x8x128xf32> to vector<8x8x128xf32>
    %c7_663 = arith.constant 7 : index
    %c5_664 = arith.constant 5 : index
    %c0_665 = arith.constant 0 : index
    %771 = vector.load %arg2[%c7_663, %c5_664, %c0_665] : memref<13x13x128xf32, #tpu.memory_space<vmem>>, vector<1x1x128xf32>
    %772 = vector.shape_cast %771 : vector<1x1x128xf32> to vector<128xf32>
    %773 = vector.shape_cast %772 : vector<128xf32> to vector<1x1x128xf32>
    %774 = vector.broadcast %773 : vector<1x1x128xf32> to vector<8x8x128xf32>
    %775 = arith.mulf %770, %774 : vector<8x8x128xf32>
    %776 = arith.addf %768, %775 : vector<8x8x128xf32>
    %c0_666 = arith.constant 0 : index
    %c7_667 = arith.constant 7 : index
    %c6_668 = arith.constant 6 : index
    %c0_669 = arith.constant 0 : index
    %777 = vector.load %arg1[%c0_666, %c7_667, %c6_668, %c0_669] : memref<1x20x20x128xf32, #tpu.memory_space<vmem>>, vector<1x8x8x128xf32>
    %778 = vector.shape_cast %777 : vector<1x8x8x128xf32> to vector<8x8x128xf32>
    %c7_670 = arith.constant 7 : index
    %c6_671 = arith.constant 6 : index
    %c0_672 = arith.constant 0 : index
    %779 = vector.load %arg2[%c7_670, %c6_671, %c0_672] : memref<13x13x128xf32, #tpu.memory_space<vmem>>, vector<1x1x128xf32>
    %780 = vector.shape_cast %779 : vector<1x1x128xf32> to vector<128xf32>
    %781 = vector.shape_cast %780 : vector<128xf32> to vector<1x1x128xf32>
    %782 = vector.broadcast %781 : vector<1x1x128xf32> to vector<8x8x128xf32>
    %783 = arith.mulf %778, %782 : vector<8x8x128xf32>
    %784 = arith.addf %776, %783 : vector<8x8x128xf32>
    %c0_673 = arith.constant 0 : index
    %c7_674 = arith.constant 7 : index
    %c7_675 = arith.constant 7 : index
    %c0_676 = arith.constant 0 : index
    %785 = vector.load %arg1[%c0_673, %c7_674, %c7_675, %c0_676] : memref<1x20x20x128xf32, #tpu.memory_space<vmem>>, vector<1x8x8x128xf32>
    %786 = vector.shape_cast %785 : vector<1x8x8x128xf32> to vector<8x8x128xf32>
    %c7_677 = arith.constant 7 : index
    %c7_678 = arith.constant 7 : index
    %c0_679 = arith.constant 0 : index
    %787 = vector.load %arg2[%c7_677, %c7_678, %c0_679] : memref<13x13x128xf32, #tpu.memory_space<vmem>>, vector<1x1x128xf32>
    %788 = vector.shape_cast %787 : vector<1x1x128xf32> to vector<128xf32>
    %789 = vector.shape_cast %788 : vector<128xf32> to vector<1x1x128xf32>
    %790 = vector.broadcast %789 : vector<1x1x128xf32> to vector<8x8x128xf32>
    %791 = arith.mulf %786, %790 : vector<8x8x128xf32>
    %792 = arith.addf %784, %791 : vector<8x8x128xf32>
    %c0_680 = arith.constant 0 : index
    %c7_681 = arith.constant 7 : index
    %c8_682 = arith.constant 8 : index
    %c0_683 = arith.constant 0 : index
    %793 = vector.load %arg1[%c0_680, %c7_681, %c8_682, %c0_683] : memref<1x20x20x128xf32, #tpu.memory_space<vmem>>, vector<1x8x8x128xf32>
    %794 = vector.shape_cast %793 : vector<1x8x8x128xf32> to vector<8x8x128xf32>
    %c7_684 = arith.constant 7 : index
    %c8_685 = arith.constant 8 : index
    %c0_686 = arith.constant 0 : index
    %795 = vector.load %arg2[%c7_684, %c8_685, %c0_686] : memref<13x13x128xf32, #tpu.memory_space<vmem>>, vector<1x1x128xf32>
    %796 = vector.shape_cast %795 : vector<1x1x128xf32> to vector<128xf32>
    %797 = vector.shape_cast %796 : vector<128xf32> to vector<1x1x128xf32>
    %798 = vector.broadcast %797 : vector<1x1x128xf32> to vector<8x8x128xf32>
    %799 = arith.mulf %794, %798 : vector<8x8x128xf32>
    %800 = arith.addf %792, %799 : vector<8x8x128xf32>
    %c0_687 = arith.constant 0 : index
    %c7_688 = arith.constant 7 : index
    %c9_689 = arith.constant 9 : index
    %c0_690 = arith.constant 0 : index
    %801 = vector.load %arg1[%c0_687, %c7_688, %c9_689, %c0_690] : memref<1x20x20x128xf32, #tpu.memory_space<vmem>>, vector<1x8x8x128xf32>
    %802 = vector.shape_cast %801 : vector<1x8x8x128xf32> to vector<8x8x128xf32>
    %c7_691 = arith.constant 7 : index
    %c9_692 = arith.constant 9 : index
    %c0_693 = arith.constant 0 : index
    %803 = vector.load %arg2[%c7_691, %c9_692, %c0_693] : memref<13x13x128xf32, #tpu.memory_space<vmem>>, vector<1x1x128xf32>
    %804 = vector.shape_cast %803 : vector<1x1x128xf32> to vector<128xf32>
    %805 = vector.shape_cast %804 : vector<128xf32> to vector<1x1x128xf32>
    %806 = vector.broadcast %805 : vector<1x1x128xf32> to vector<8x8x128xf32>
    %807 = arith.mulf %802, %806 : vector<8x8x128xf32>
    %808 = arith.addf %800, %807 : vector<8x8x128xf32>
    %c0_694 = arith.constant 0 : index
    %c7_695 = arith.constant 7 : index
    %c10_696 = arith.constant 10 : index
    %c0_697 = arith.constant 0 : index
    %809 = vector.load %arg1[%c0_694, %c7_695, %c10_696, %c0_697] : memref<1x20x20x128xf32, #tpu.memory_space<vmem>>, vector<1x8x8x128xf32>
    %810 = vector.shape_cast %809 : vector<1x8x8x128xf32> to vector<8x8x128xf32>
    %c7_698 = arith.constant 7 : index
    %c10_699 = arith.constant 10 : index
    %c0_700 = arith.constant 0 : index
    %811 = vector.load %arg2[%c7_698, %c10_699, %c0_700] : memref<13x13x128xf32, #tpu.memory_space<vmem>>, vector<1x1x128xf32>
    %812 = vector.shape_cast %811 : vector<1x1x128xf32> to vector<128xf32>
    %813 = vector.shape_cast %812 : vector<128xf32> to vector<1x1x128xf32>
    %814 = vector.broadcast %813 : vector<1x1x128xf32> to vector<8x8x128xf32>
    %815 = arith.mulf %810, %814 : vector<8x8x128xf32>
    %816 = arith.addf %808, %815 : vector<8x8x128xf32>
    %c0_701 = arith.constant 0 : index
    %c7_702 = arith.constant 7 : index
    %c11_703 = arith.constant 11 : index
    %c0_704 = arith.constant 0 : index
    %817 = vector.load %arg1[%c0_701, %c7_702, %c11_703, %c0_704] : memref<1x20x20x128xf32, #tpu.memory_space<vmem>>, vector<1x8x8x128xf32>
    %818 = vector.shape_cast %817 : vector<1x8x8x128xf32> to vector<8x8x128xf32>
    %c7_705 = arith.constant 7 : index
    %c11_706 = arith.constant 11 : index
    %c0_707 = arith.constant 0 : index
    %819 = vector.load %arg2[%c7_705, %c11_706, %c0_707] : memref<13x13x128xf32, #tpu.memory_space<vmem>>, vector<1x1x128xf32>
    %820 = vector.shape_cast %819 : vector<1x1x128xf32> to vector<128xf32>
    %821 = vector.shape_cast %820 : vector<128xf32> to vector<1x1x128xf32>
    %822 = vector.broadcast %821 : vector<1x1x128xf32> to vector<8x8x128xf32>
    %823 = arith.mulf %818, %822 : vector<8x8x128xf32>
    %824 = arith.addf %816, %823 : vector<8x8x128xf32>
    %c0_708 = arith.constant 0 : index
    %c7_709 = arith.constant 7 : index
    %c12_710 = arith.constant 12 : index
    %c0_711 = arith.constant 0 : index
    %825 = vector.load %arg1[%c0_708, %c7_709, %c12_710, %c0_711] : memref<1x20x20x128xf32, #tpu.memory_space<vmem>>, vector<1x8x8x128xf32>
    %826 = vector.shape_cast %825 : vector<1x8x8x128xf32> to vector<8x8x128xf32>
    %c7_712 = arith.constant 7 : index
    %c12_713 = arith.constant 12 : index
    %c0_714 = arith.constant 0 : index
    %827 = vector.load %arg2[%c7_712, %c12_713, %c0_714] : memref<13x13x128xf32, #tpu.memory_space<vmem>>, vector<1x1x128xf32>
    %828 = vector.shape_cast %827 : vector<1x1x128xf32> to vector<128xf32>
    %829 = vector.shape_cast %828 : vector<128xf32> to vector<1x1x128xf32>
    %830 = vector.broadcast %829 : vector<1x1x128xf32> to vector<8x8x128xf32>
    %831 = arith.mulf %826, %830 : vector<8x8x128xf32>
    %832 = arith.addf %824, %831 : vector<8x8x128xf32>
    %c0_715 = arith.constant 0 : index
    %c8_716 = arith.constant 8 : index
    %c0_717 = arith.constant 0 : index
    %c0_718 = arith.constant 0 : index
    %833 = vector.load %arg1[%c0_715, %c8_716, %c0_717, %c0_718] : memref<1x20x20x128xf32, #tpu.memory_space<vmem>>, vector<1x8x8x128xf32>
    %834 = vector.shape_cast %833 : vector<1x8x8x128xf32> to vector<8x8x128xf32>
    %c8_719 = arith.constant 8 : index
    %c0_720 = arith.constant 0 : index
    %c0_721 = arith.constant 0 : index
    %835 = vector.load %arg2[%c8_719, %c0_720, %c0_721] : memref<13x13x128xf32, #tpu.memory_space<vmem>>, vector<1x1x128xf32>
    %836 = vector.shape_cast %835 : vector<1x1x128xf32> to vector<128xf32>
    %837 = vector.shape_cast %836 : vector<128xf32> to vector<1x1x128xf32>
    %838 = vector.broadcast %837 : vector<1x1x128xf32> to vector<8x8x128xf32>
    %839 = arith.mulf %834, %838 : vector<8x8x128xf32>
    %840 = arith.addf %832, %839 : vector<8x8x128xf32>
    %c0_722 = arith.constant 0 : index
    %c8_723 = arith.constant 8 : index
    %c1_724 = arith.constant 1 : index
    %c0_725 = arith.constant 0 : index
    %841 = vector.load %arg1[%c0_722, %c8_723, %c1_724, %c0_725] : memref<1x20x20x128xf32, #tpu.memory_space<vmem>>, vector<1x8x8x128xf32>
    %842 = vector.shape_cast %841 : vector<1x8x8x128xf32> to vector<8x8x128xf32>
    %c8_726 = arith.constant 8 : index
    %c1_727 = arith.constant 1 : index
    %c0_728 = arith.constant 0 : index
    %843 = vector.load %arg2[%c8_726, %c1_727, %c0_728] : memref<13x13x128xf32, #tpu.memory_space<vmem>>, vector<1x1x128xf32>
    %844 = vector.shape_cast %843 : vector<1x1x128xf32> to vector<128xf32>
    %845 = vector.shape_cast %844 : vector<128xf32> to vector<1x1x128xf32>
    %846 = vector.broadcast %845 : vector<1x1x128xf32> to vector<8x8x128xf32>
    %847 = arith.mulf %842, %846 : vector<8x8x128xf32>
    %848 = arith.addf %840, %847 : vector<8x8x128xf32>
    %c0_729 = arith.constant 0 : index
    %c8_730 = arith.constant 8 : index
    %c2_731 = arith.constant 2 : index
    %c0_732 = arith.constant 0 : index
    %849 = vector.load %arg1[%c0_729, %c8_730, %c2_731, %c0_732] : memref<1x20x20x128xf32, #tpu.memory_space<vmem>>, vector<1x8x8x128xf32>
    %850 = vector.shape_cast %849 : vector<1x8x8x128xf32> to vector<8x8x128xf32>
    %c8_733 = arith.constant 8 : index
    %c2_734 = arith.constant 2 : index
    %c0_735 = arith.constant 0 : index
    %851 = vector.load %arg2[%c8_733, %c2_734, %c0_735] : memref<13x13x128xf32, #tpu.memory_space<vmem>>, vector<1x1x128xf32>
    %852 = vector.shape_cast %851 : vector<1x1x128xf32> to vector<128xf32>
    %853 = vector.shape_cast %852 : vector<128xf32> to vector<1x1x128xf32>
    %854 = vector.broadcast %853 : vector<1x1x128xf32> to vector<8x8x128xf32>
    %855 = arith.mulf %850, %854 : vector<8x8x128xf32>
    %856 = arith.addf %848, %855 : vector<8x8x128xf32>
    %c0_736 = arith.constant 0 : index
    %c8_737 = arith.constant 8 : index
    %c3_738 = arith.constant 3 : index
    %c0_739 = arith.constant 0 : index
    %857 = vector.load %arg1[%c0_736, %c8_737, %c3_738, %c0_739] : memref<1x20x20x128xf32, #tpu.memory_space<vmem>>, vector<1x8x8x128xf32>
    %858 = vector.shape_cast %857 : vector<1x8x8x128xf32> to vector<8x8x128xf32>
    %c8_740 = arith.constant 8 : index
    %c3_741 = arith.constant 3 : index
    %c0_742 = arith.constant 0 : index
    %859 = vector.load %arg2[%c8_740, %c3_741, %c0_742] : memref<13x13x128xf32, #tpu.memory_space<vmem>>, vector<1x1x128xf32>
    %860 = vector.shape_cast %859 : vector<1x1x128xf32> to vector<128xf32>
    %861 = vector.shape_cast %860 : vector<128xf32> to vector<1x1x128xf32>
    %862 = vector.broadcast %861 : vector<1x1x128xf32> to vector<8x8x128xf32>
    %863 = arith.mulf %858, %862 : vector<8x8x128xf32>
    %864 = arith.addf %856, %863 : vector<8x8x128xf32>
    %c0_743 = arith.constant 0 : index
    %c8_744 = arith.constant 8 : index
    %c4_745 = arith.constant 4 : index
    %c0_746 = arith.constant 0 : index
    %865 = vector.load %arg1[%c0_743, %c8_744, %c4_745, %c0_746] : memref<1x20x20x128xf32, #tpu.memory_space<vmem>>, vector<1x8x8x128xf32>
    %866 = vector.shape_cast %865 : vector<1x8x8x128xf32> to vector<8x8x128xf32>
    %c8_747 = arith.constant 8 : index
    %c4_748 = arith.constant 4 : index
    %c0_749 = arith.constant 0 : index
    %867 = vector.load %arg2[%c8_747, %c4_748, %c0_749] : memref<13x13x128xf32, #tpu.memory_space<vmem>>, vector<1x1x128xf32>
    %868 = vector.shape_cast %867 : vector<1x1x128xf32> to vector<128xf32>
    %869 = vector.shape_cast %868 : vector<128xf32> to vector<1x1x128xf32>
    %870 = vector.broadcast %869 : vector<1x1x128xf32> to vector<8x8x128xf32>
    %871 = arith.mulf %866, %870 : vector<8x8x128xf32>
    %872 = arith.addf %864, %871 : vector<8x8x128xf32>
    %c0_750 = arith.constant 0 : index
    %c8_751 = arith.constant 8 : index
    %c5_752 = arith.constant 5 : index
    %c0_753 = arith.constant 0 : index
    %873 = vector.load %arg1[%c0_750, %c8_751, %c5_752, %c0_753] : memref<1x20x20x128xf32, #tpu.memory_space<vmem>>, vector<1x8x8x128xf32>
    %874 = vector.shape_cast %873 : vector<1x8x8x128xf32> to vector<8x8x128xf32>
    %c8_754 = arith.constant 8 : index
    %c5_755 = arith.constant 5 : index
    %c0_756 = arith.constant 0 : index
    %875 = vector.load %arg2[%c8_754, %c5_755, %c0_756] : memref<13x13x128xf32, #tpu.memory_space<vmem>>, vector<1x1x128xf32>
    %876 = vector.shape_cast %875 : vector<1x1x128xf32> to vector<128xf32>
    %877 = vector.shape_cast %876 : vector<128xf32> to vector<1x1x128xf32>
    %878 = vector.broadcast %877 : vector<1x1x128xf32> to vector<8x8x128xf32>
    %879 = arith.mulf %874, %878 : vector<8x8x128xf32>
    %880 = arith.addf %872, %879 : vector<8x8x128xf32>
    %c0_757 = arith.constant 0 : index
    %c8_758 = arith.constant 8 : index
    %c6_759 = arith.constant 6 : index
    %c0_760 = arith.constant 0 : index
    %881 = vector.load %arg1[%c0_757, %c8_758, %c6_759, %c0_760] : memref<1x20x20x128xf32, #tpu.memory_space<vmem>>, vector<1x8x8x128xf32>
    %882 = vector.shape_cast %881 : vector<1x8x8x128xf32> to vector<8x8x128xf32>
    %c8_761 = arith.constant 8 : index
    %c6_762 = arith.constant 6 : index
    %c0_763 = arith.constant 0 : index
    %883 = vector.load %arg2[%c8_761, %c6_762, %c0_763] : memref<13x13x128xf32, #tpu.memory_space<vmem>>, vector<1x1x128xf32>
    %884 = vector.shape_cast %883 : vector<1x1x128xf32> to vector<128xf32>
    %885 = vector.shape_cast %884 : vector<128xf32> to vector<1x1x128xf32>
    %886 = vector.broadcast %885 : vector<1x1x128xf32> to vector<8x8x128xf32>
    %887 = arith.mulf %882, %886 : vector<8x8x128xf32>
    %888 = arith.addf %880, %887 : vector<8x8x128xf32>
    %c0_764 = arith.constant 0 : index
    %c8_765 = arith.constant 8 : index
    %c7_766 = arith.constant 7 : index
    %c0_767 = arith.constant 0 : index
    %889 = vector.load %arg1[%c0_764, %c8_765, %c7_766, %c0_767] : memref<1x20x20x128xf32, #tpu.memory_space<vmem>>, vector<1x8x8x128xf32>
    %890 = vector.shape_cast %889 : vector<1x8x8x128xf32> to vector<8x8x128xf32>
    %c8_768 = arith.constant 8 : index
    %c7_769 = arith.constant 7 : index
    %c0_770 = arith.constant 0 : index
    %891 = vector.load %arg2[%c8_768, %c7_769, %c0_770] : memref<13x13x128xf32, #tpu.memory_space<vmem>>, vector<1x1x128xf32>
    %892 = vector.shape_cast %891 : vector<1x1x128xf32> to vector<128xf32>
    %893 = vector.shape_cast %892 : vector<128xf32> to vector<1x1x128xf32>
    %894 = vector.broadcast %893 : vector<1x1x128xf32> to vector<8x8x128xf32>
    %895 = arith.mulf %890, %894 : vector<8x8x128xf32>
    %896 = arith.addf %888, %895 : vector<8x8x128xf32>
    %c0_771 = arith.constant 0 : index
    %c8_772 = arith.constant 8 : index
    %c8_773 = arith.constant 8 : index
    %c0_774 = arith.constant 0 : index
    %897 = vector.load %arg1[%c0_771, %c8_772, %c8_773, %c0_774] : memref<1x20x20x128xf32, #tpu.memory_space<vmem>>, vector<1x8x8x128xf32>
    %898 = vector.shape_cast %897 : vector<1x8x8x128xf32> to vector<8x8x128xf32>
    %c8_775 = arith.constant 8 : index
    %c8_776 = arith.constant 8 : index
    %c0_777 = arith.constant 0 : index
    %899 = vector.load %arg2[%c8_775, %c8_776, %c0_777] : memref<13x13x128xf32, #tpu.memory_space<vmem>>, vector<1x1x128xf32>
    %900 = vector.shape_cast %899 : vector<1x1x128xf32> to vector<128xf32>
    %901 = vector.shape_cast %900 : vector<128xf32> to vector<1x1x128xf32>
    %902 = vector.broadcast %901 : vector<1x1x128xf32> to vector<8x8x128xf32>
    %903 = arith.mulf %898, %902 : vector<8x8x128xf32>
    %904 = arith.addf %896, %903 : vector<8x8x128xf32>
    %c0_778 = arith.constant 0 : index
    %c8_779 = arith.constant 8 : index
    %c9_780 = arith.constant 9 : index
    %c0_781 = arith.constant 0 : index
    %905 = vector.load %arg1[%c0_778, %c8_779, %c9_780, %c0_781] : memref<1x20x20x128xf32, #tpu.memory_space<vmem>>, vector<1x8x8x128xf32>
    %906 = vector.shape_cast %905 : vector<1x8x8x128xf32> to vector<8x8x128xf32>
    %c8_782 = arith.constant 8 : index
    %c9_783 = arith.constant 9 : index
    %c0_784 = arith.constant 0 : index
    %907 = vector.load %arg2[%c8_782, %c9_783, %c0_784] : memref<13x13x128xf32, #tpu.memory_space<vmem>>, vector<1x1x128xf32>
    %908 = vector.shape_cast %907 : vector<1x1x128xf32> to vector<128xf32>
    %909 = vector.shape_cast %908 : vector<128xf32> to vector<1x1x128xf32>
    %910 = vector.broadcast %909 : vector<1x1x128xf32> to vector<8x8x128xf32>
    %911 = arith.mulf %906, %910 : vector<8x8x128xf32>
    %912 = arith.addf %904, %911 : vector<8x8x128xf32>
    %c0_785 = arith.constant 0 : index
    %c8_786 = arith.constant 8 : index
    %c10_787 = arith.constant 10 : index
    %c0_788 = arith.constant 0 : index
    %913 = vector.load %arg1[%c0_785, %c8_786, %c10_787, %c0_788] : memref<1x20x20x128xf32, #tpu.memory_space<vmem>>, vector<1x8x8x128xf32>
    %914 = vector.shape_cast %913 : vector<1x8x8x128xf32> to vector<8x8x128xf32>
    %c8_789 = arith.constant 8 : index
    %c10_790 = arith.constant 10 : index
    %c0_791 = arith.constant 0 : index
    %915 = vector.load %arg2[%c8_789, %c10_790, %c0_791] : memref<13x13x128xf32, #tpu.memory_space<vmem>>, vector<1x1x128xf32>
    %916 = vector.shape_cast %915 : vector<1x1x128xf32> to vector<128xf32>
    %917 = vector.shape_cast %916 : vector<128xf32> to vector<1x1x128xf32>
    %918 = vector.broadcast %917 : vector<1x1x128xf32> to vector<8x8x128xf32>
    %919 = arith.mulf %914, %918 : vector<8x8x128xf32>
    %920 = arith.addf %912, %919 : vector<8x8x128xf32>
    %c0_792 = arith.constant 0 : index
    %c8_793 = arith.constant 8 : index
    %c11_794 = arith.constant 11 : index
    %c0_795 = arith.constant 0 : index
    %921 = vector.load %arg1[%c0_792, %c8_793, %c11_794, %c0_795] : memref<1x20x20x128xf32, #tpu.memory_space<vmem>>, vector<1x8x8x128xf32>
    %922 = vector.shape_cast %921 : vector<1x8x8x128xf32> to vector<8x8x128xf32>
    %c8_796 = arith.constant 8 : index
    %c11_797 = arith.constant 11 : index
    %c0_798 = arith.constant 0 : index
    %923 = vector.load %arg2[%c8_796, %c11_797, %c0_798] : memref<13x13x128xf32, #tpu.memory_space<vmem>>, vector<1x1x128xf32>
    %924 = vector.shape_cast %923 : vector<1x1x128xf32> to vector<128xf32>
    %925 = vector.shape_cast %924 : vector<128xf32> to vector<1x1x128xf32>
    %926 = vector.broadcast %925 : vector<1x1x128xf32> to vector<8x8x128xf32>
    %927 = arith.mulf %922, %926 : vector<8x8x128xf32>
    %928 = arith.addf %920, %927 : vector<8x8x128xf32>
    %c0_799 = arith.constant 0 : index
    %c8_800 = arith.constant 8 : index
    %c12_801 = arith.constant 12 : index
    %c0_802 = arith.constant 0 : index
    %929 = vector.load %arg1[%c0_799, %c8_800, %c12_801, %c0_802] : memref<1x20x20x128xf32, #tpu.memory_space<vmem>>, vector<1x8x8x128xf32>
    %930 = vector.shape_cast %929 : vector<1x8x8x128xf32> to vector<8x8x128xf32>
    %c8_803 = arith.constant 8 : index
    %c12_804 = arith.constant 12 : index
    %c0_805 = arith.constant 0 : index
    %931 = vector.load %arg2[%c8_803, %c12_804, %c0_805] : memref<13x13x128xf32, #tpu.memory_space<vmem>>, vector<1x1x128xf32>
    %932 = vector.shape_cast %931 : vector<1x1x128xf32> to vector<128xf32>
    %933 = vector.shape_cast %932 : vector<128xf32> to vector<1x1x128xf32>
    %934 = vector.broadcast %933 : vector<1x1x128xf32> to vector<8x8x128xf32>
    %935 = arith.mulf %930, %934 : vector<8x8x128xf32>
    %936 = arith.addf %928, %935 : vector<8x8x128xf32>
    %c0_806 = arith.constant 0 : index
    %c9_807 = arith.constant 9 : index
    %c0_808 = arith.constant 0 : index
    %c0_809 = arith.constant 0 : index
    %937 = vector.load %arg1[%c0_806, %c9_807, %c0_808, %c0_809] : memref<1x20x20x128xf32, #tpu.memory_space<vmem>>, vector<1x8x8x128xf32>
    %938 = vector.shape_cast %937 : vector<1x8x8x128xf32> to vector<8x8x128xf32>
    %c9_810 = arith.constant 9 : index
    %c0_811 = arith.constant 0 : index
    %c0_812 = arith.constant 0 : index
    %939 = vector.load %arg2[%c9_810, %c0_811, %c0_812] : memref<13x13x128xf32, #tpu.memory_space<vmem>>, vector<1x1x128xf32>
    %940 = vector.shape_cast %939 : vector<1x1x128xf32> to vector<128xf32>
    %941 = vector.shape_cast %940 : vector<128xf32> to vector<1x1x128xf32>
    %942 = vector.broadcast %941 : vector<1x1x128xf32> to vector<8x8x128xf32>
    %943 = arith.mulf %938, %942 : vector<8x8x128xf32>
    %944 = arith.addf %936, %943 : vector<8x8x128xf32>
    %c0_813 = arith.constant 0 : index
    %c9_814 = arith.constant 9 : index
    %c1_815 = arith.constant 1 : index
    %c0_816 = arith.constant 0 : index
    %945 = vector.load %arg1[%c0_813, %c9_814, %c1_815, %c0_816] : memref<1x20x20x128xf32, #tpu.memory_space<vmem>>, vector<1x8x8x128xf32>
    %946 = vector.shape_cast %945 : vector<1x8x8x128xf32> to vector<8x8x128xf32>
    %c9_817 = arith.constant 9 : index
    %c1_818 = arith.constant 1 : index
    %c0_819 = arith.constant 0 : index
    %947 = vector.load %arg2[%c9_817, %c1_818, %c0_819] : memref<13x13x128xf32, #tpu.memory_space<vmem>>, vector<1x1x128xf32>
    %948 = vector.shape_cast %947 : vector<1x1x128xf32> to vector<128xf32>
    %949 = vector.shape_cast %948 : vector<128xf32> to vector<1x1x128xf32>
    %950 = vector.broadcast %949 : vector<1x1x128xf32> to vector<8x8x128xf32>
    %951 = arith.mulf %946, %950 : vector<8x8x128xf32>
    %952 = arith.addf %944, %951 : vector<8x8x128xf32>
    %c0_820 = arith.constant 0 : index
    %c9_821 = arith.constant 9 : index
    %c2_822 = arith.constant 2 : index
    %c0_823 = arith.constant 0 : index
    %953 = vector.load %arg1[%c0_820, %c9_821, %c2_822, %c0_823] : memref<1x20x20x128xf32, #tpu.memory_space<vmem>>, vector<1x8x8x128xf32>
    %954 = vector.shape_cast %953 : vector<1x8x8x128xf32> to vector<8x8x128xf32>
    %c9_824 = arith.constant 9 : index
    %c2_825 = arith.constant 2 : index
    %c0_826 = arith.constant 0 : index
    %955 = vector.load %arg2[%c9_824, %c2_825, %c0_826] : memref<13x13x128xf32, #tpu.memory_space<vmem>>, vector<1x1x128xf32>
    %956 = vector.shape_cast %955 : vector<1x1x128xf32> to vector<128xf32>
    %957 = vector.shape_cast %956 : vector<128xf32> to vector<1x1x128xf32>
    %958 = vector.broadcast %957 : vector<1x1x128xf32> to vector<8x8x128xf32>
    %959 = arith.mulf %954, %958 : vector<8x8x128xf32>
    %960 = arith.addf %952, %959 : vector<8x8x128xf32>
    %c0_827 = arith.constant 0 : index
    %c9_828 = arith.constant 9 : index
    %c3_829 = arith.constant 3 : index
    %c0_830 = arith.constant 0 : index
    %961 = vector.load %arg1[%c0_827, %c9_828, %c3_829, %c0_830] : memref<1x20x20x128xf32, #tpu.memory_space<vmem>>, vector<1x8x8x128xf32>
    %962 = vector.shape_cast %961 : vector<1x8x8x128xf32> to vector<8x8x128xf32>
    %c9_831 = arith.constant 9 : index
    %c3_832 = arith.constant 3 : index
    %c0_833 = arith.constant 0 : index
    %963 = vector.load %arg2[%c9_831, %c3_832, %c0_833] : memref<13x13x128xf32, #tpu.memory_space<vmem>>, vector<1x1x128xf32>
    %964 = vector.shape_cast %963 : vector<1x1x128xf32> to vector<128xf32>
    %965 = vector.shape_cast %964 : vector<128xf32> to vector<1x1x128xf32>
    %966 = vector.broadcast %965 : vector<1x1x128xf32> to vector<8x8x128xf32>
    %967 = arith.mulf %962, %966 : vector<8x8x128xf32>
    %968 = arith.addf %960, %967 : vector<8x8x128xf32>
    %c0_834 = arith.constant 0 : index
    %c9_835 = arith.constant 9 : index
    %c4_836 = arith.constant 4 : index
    %c0_837 = arith.constant 0 : index
    %969 = vector.load %arg1[%c0_834, %c9_835, %c4_836, %c0_837] : memref<1x20x20x128xf32, #tpu.memory_space<vmem>>, vector<1x8x8x128xf32>
    %970 = vector.shape_cast %969 : vector<1x8x8x128xf32> to vector<8x8x128xf32>
    %c9_838 = arith.constant 9 : index
    %c4_839 = arith.constant 4 : index
    %c0_840 = arith.constant 0 : index
    %971 = vector.load %arg2[%c9_838, %c4_839, %c0_840] : memref<13x13x128xf32, #tpu.memory_space<vmem>>, vector<1x1x128xf32>
    %972 = vector.shape_cast %971 : vector<1x1x128xf32> to vector<128xf32>
    %973 = vector.shape_cast %972 : vector<128xf32> to vector<1x1x128xf32>
    %974 = vector.broadcast %973 : vector<1x1x128xf32> to vector<8x8x128xf32>
    %975 = arith.mulf %970, %974 : vector<8x8x128xf32>
    %976 = arith.addf %968, %975 : vector<8x8x128xf32>
    %c0_841 = arith.constant 0 : index
    %c9_842 = arith.constant 9 : index
    %c5_843 = arith.constant 5 : index
    %c0_844 = arith.constant 0 : index
    %977 = vector.load %arg1[%c0_841, %c9_842, %c5_843, %c0_844] : memref<1x20x20x128xf32, #tpu.memory_space<vmem>>, vector<1x8x8x128xf32>
    %978 = vector.shape_cast %977 : vector<1x8x8x128xf32> to vector<8x8x128xf32>
    %c9_845 = arith.constant 9 : index
    %c5_846 = arith.constant 5 : index
    %c0_847 = arith.constant 0 : index
    %979 = vector.load %arg2[%c9_845, %c5_846, %c0_847] : memref<13x13x128xf32, #tpu.memory_space<vmem>>, vector<1x1x128xf32>
    %980 = vector.shape_cast %979 : vector<1x1x128xf32> to vector<128xf32>
    %981 = vector.shape_cast %980 : vector<128xf32> to vector<1x1x128xf32>
    %982 = vector.broadcast %981 : vector<1x1x128xf32> to vector<8x8x128xf32>
    %983 = arith.mulf %978, %982 : vector<8x8x128xf32>
    %984 = arith.addf %976, %983 : vector<8x8x128xf32>
    %c0_848 = arith.constant 0 : index
    %c9_849 = arith.constant 9 : index
    %c6_850 = arith.constant 6 : index
    %c0_851 = arith.constant 0 : index
    %985 = vector.load %arg1[%c0_848, %c9_849, %c6_850, %c0_851] : memref<1x20x20x128xf32, #tpu.memory_space<vmem>>, vector<1x8x8x128xf32>
    %986 = vector.shape_cast %985 : vector<1x8x8x128xf32> to vector<8x8x128xf32>
    %c9_852 = arith.constant 9 : index
    %c6_853 = arith.constant 6 : index
    %c0_854 = arith.constant 0 : index
    %987 = vector.load %arg2[%c9_852, %c6_853, %c0_854] : memref<13x13x128xf32, #tpu.memory_space<vmem>>, vector<1x1x128xf32>
    %988 = vector.shape_cast %987 : vector<1x1x128xf32> to vector<128xf32>
    %989 = vector.shape_cast %988 : vector<128xf32> to vector<1x1x128xf32>
    %990 = vector.broadcast %989 : vector<1x1x128xf32> to vector<8x8x128xf32>
    %991 = arith.mulf %986, %990 : vector<8x8x128xf32>
    %992 = arith.addf %984, %991 : vector<8x8x128xf32>
    %c0_855 = arith.constant 0 : index
    %c9_856 = arith.constant 9 : index
    %c7_857 = arith.constant 7 : index
    %c0_858 = arith.constant 0 : index
    %993 = vector.load %arg1[%c0_855, %c9_856, %c7_857, %c0_858] : memref<1x20x20x128xf32, #tpu.memory_space<vmem>>, vector<1x8x8x128xf32>
    %994 = vector.shape_cast %993 : vector<1x8x8x128xf32> to vector<8x8x128xf32>
    %c9_859 = arith.constant 9 : index
    %c7_860 = arith.constant 7 : index
    %c0_861 = arith.constant 0 : index
    %995 = vector.load %arg2[%c9_859, %c7_860, %c0_861] : memref<13x13x128xf32, #tpu.memory_space<vmem>>, vector<1x1x128xf32>
    %996 = vector.shape_cast %995 : vector<1x1x128xf32> to vector<128xf32>
    %997 = vector.shape_cast %996 : vector<128xf32> to vector<1x1x128xf32>
    %998 = vector.broadcast %997 : vector<1x1x128xf32> to vector<8x8x128xf32>
    %999 = arith.mulf %994, %998 : vector<8x8x128xf32>
    %1000 = arith.addf %992, %999 : vector<8x8x128xf32>
    %c0_862 = arith.constant 0 : index
    %c9_863 = arith.constant 9 : index
    %c8_864 = arith.constant 8 : index
    %c0_865 = arith.constant 0 : index
    %1001 = vector.load %arg1[%c0_862, %c9_863, %c8_864, %c0_865] : memref<1x20x20x128xf32, #tpu.memory_space<vmem>>, vector<1x8x8x128xf32>
    %1002 = vector.shape_cast %1001 : vector<1x8x8x128xf32> to vector<8x8x128xf32>
    %c9_866 = arith.constant 9 : index
    %c8_867 = arith.constant 8 : index
    %c0_868 = arith.constant 0 : index
    %1003 = vector.load %arg2[%c9_866, %c8_867, %c0_868] : memref<13x13x128xf32, #tpu.memory_space<vmem>>, vector<1x1x128xf32>
    %1004 = vector.shape_cast %1003 : vector<1x1x128xf32> to vector<128xf32>
    %1005 = vector.shape_cast %1004 : vector<128xf32> to vector<1x1x128xf32>
    %1006 = vector.broadcast %1005 : vector<1x1x128xf32> to vector<8x8x128xf32>
    %1007 = arith.mulf %1002, %1006 : vector<8x8x128xf32>
    %1008 = arith.addf %1000, %1007 : vector<8x8x128xf32>
    %c0_869 = arith.constant 0 : index
    %c9_870 = arith.constant 9 : index
    %c9_871 = arith.constant 9 : index
    %c0_872 = arith.constant 0 : index
    %1009 = vector.load %arg1[%c0_869, %c9_870, %c9_871, %c0_872] : memref<1x20x20x128xf32, #tpu.memory_space<vmem>>, vector<1x8x8x128xf32>
    %1010 = vector.shape_cast %1009 : vector<1x8x8x128xf32> to vector<8x8x128xf32>
    %c9_873 = arith.constant 9 : index
    %c9_874 = arith.constant 9 : index
    %c0_875 = arith.constant 0 : index
    %1011 = vector.load %arg2[%c9_873, %c9_874, %c0_875] : memref<13x13x128xf32, #tpu.memory_space<vmem>>, vector<1x1x128xf32>
    %1012 = vector.shape_cast %1011 : vector<1x1x128xf32> to vector<128xf32>
    %1013 = vector.shape_cast %1012 : vector<128xf32> to vector<1x1x128xf32>
    %1014 = vector.broadcast %1013 : vector<1x1x128xf32> to vector<8x8x128xf32>
    %1015 = arith.mulf %1010, %1014 : vector<8x8x128xf32>
    %1016 = arith.addf %1008, %1015 : vector<8x8x128xf32>
    %c0_876 = arith.constant 0 : index
    %c9_877 = arith.constant 9 : index
    %c10_878 = arith.constant 10 : index
    %c0_879 = arith.constant 0 : index
    %1017 = vector.load %arg1[%c0_876, %c9_877, %c10_878, %c0_879] : memref<1x20x20x128xf32, #tpu.memory_space<vmem>>, vector<1x8x8x128xf32>
    %1018 = vector.shape_cast %1017 : vector<1x8x8x128xf32> to vector<8x8x128xf32>
    %c9_880 = arith.constant 9 : index
    %c10_881 = arith.constant 10 : index
    %c0_882 = arith.constant 0 : index
    %1019 = vector.load %arg2[%c9_880, %c10_881, %c0_882] : memref<13x13x128xf32, #tpu.memory_space<vmem>>, vector<1x1x128xf32>
    %1020 = vector.shape_cast %1019 : vector<1x1x128xf32> to vector<128xf32>
    %1021 = vector.shape_cast %1020 : vector<128xf32> to vector<1x1x128xf32>
    %1022 = vector.broadcast %1021 : vector<1x1x128xf32> to vector<8x8x128xf32>
    %1023 = arith.mulf %1018, %1022 : vector<8x8x128xf32>
    %1024 = arith.addf %1016, %1023 : vector<8x8x128xf32>
    %c0_883 = arith.constant 0 : index
    %c9_884 = arith.constant 9 : index
    %c11_885 = arith.constant 11 : index
    %c0_886 = arith.constant 0 : index
    %1025 = vector.load %arg1[%c0_883, %c9_884, %c11_885, %c0_886] : memref<1x20x20x128xf32, #tpu.memory_space<vmem>>, vector<1x8x8x128xf32>
    %1026 = vector.shape_cast %1025 : vector<1x8x8x128xf32> to vector<8x8x128xf32>
    %c9_887 = arith.constant 9 : index
    %c11_888 = arith.constant 11 : index
    %c0_889 = arith.constant 0 : index
    %1027 = vector.load %arg2[%c9_887, %c11_888, %c0_889] : memref<13x13x128xf32, #tpu.memory_space<vmem>>, vector<1x1x128xf32>
    %1028 = vector.shape_cast %1027 : vector<1x1x128xf32> to vector<128xf32>
    %1029 = vector.shape_cast %1028 : vector<128xf32> to vector<1x1x128xf32>
    %1030 = vector.broadcast %1029 : vector<1x1x128xf32> to vector<8x8x128xf32>
    %1031 = arith.mulf %1026, %1030 : vector<8x8x128xf32>
    %1032 = arith.addf %1024, %1031 : vector<8x8x128xf32>
    %c0_890 = arith.constant 0 : index
    %c9_891 = arith.constant 9 : index
    %c12_892 = arith.constant 12 : index
    %c0_893 = arith.constant 0 : index
    %1033 = vector.load %arg1[%c0_890, %c9_891, %c12_892, %c0_893] : memref<1x20x20x128xf32, #tpu.memory_space<vmem>>, vector<1x8x8x128xf32>
    %1034 = vector.shape_cast %1033 : vector<1x8x8x128xf32> to vector<8x8x128xf32>
    %c9_894 = arith.constant 9 : index
    %c12_895 = arith.constant 12 : index
    %c0_896 = arith.constant 0 : index
    %1035 = vector.load %arg2[%c9_894, %c12_895, %c0_896] : memref<13x13x128xf32, #tpu.memory_space<vmem>>, vector<1x1x128xf32>
    %1036 = vector.shape_cast %1035 : vector<1x1x128xf32> to vector<128xf32>
    %1037 = vector.shape_cast %1036 : vector<128xf32> to vector<1x1x128xf32>
    %1038 = vector.broadcast %1037 : vector<1x1x128xf32> to vector<8x8x128xf32>
    %1039 = arith.mulf %1034, %1038 : vector<8x8x128xf32>
    %1040 = arith.addf %1032, %1039 : vector<8x8x128xf32>
    %c0_897 = arith.constant 0 : index
    %c10_898 = arith.constant 10 : index
    %c0_899 = arith.constant 0 : index
    %c0_900 = arith.constant 0 : index
    %1041 = vector.load %arg1[%c0_897, %c10_898, %c0_899, %c0_900] : memref<1x20x20x128xf32, #tpu.memory_space<vmem>>, vector<1x8x8x128xf32>
    %1042 = vector.shape_cast %1041 : vector<1x8x8x128xf32> to vector<8x8x128xf32>
    %c10_901 = arith.constant 10 : index
    %c0_902 = arith.constant 0 : index
    %c0_903 = arith.constant 0 : index
    %1043 = vector.load %arg2[%c10_901, %c0_902, %c0_903] : memref<13x13x128xf32, #tpu.memory_space<vmem>>, vector<1x1x128xf32>
    %1044 = vector.shape_cast %1043 : vector<1x1x128xf32> to vector<128xf32>
    %1045 = vector.shape_cast %1044 : vector<128xf32> to vector<1x1x128xf32>
    %1046 = vector.broadcast %1045 : vector<1x1x128xf32> to vector<8x8x128xf32>
    %1047 = arith.mulf %1042, %1046 : vector<8x8x128xf32>
    %1048 = arith.addf %1040, %1047 : vector<8x8x128xf32>
    %c0_904 = arith.constant 0 : index
    %c10_905 = arith.constant 10 : index
    %c1_906 = arith.constant 1 : index
    %c0_907 = arith.constant 0 : index
    %1049 = vector.load %arg1[%c0_904, %c10_905, %c1_906, %c0_907] : memref<1x20x20x128xf32, #tpu.memory_space<vmem>>, vector<1x8x8x128xf32>
    %1050 = vector.shape_cast %1049 : vector<1x8x8x128xf32> to vector<8x8x128xf32>
    %c10_908 = arith.constant 10 : index
    %c1_909 = arith.constant 1 : index
    %c0_910 = arith.constant 0 : index
    %1051 = vector.load %arg2[%c10_908, %c1_909, %c0_910] : memref<13x13x128xf32, #tpu.memory_space<vmem>>, vector<1x1x128xf32>
    %1052 = vector.shape_cast %1051 : vector<1x1x128xf32> to vector<128xf32>
    %1053 = vector.shape_cast %1052 : vector<128xf32> to vector<1x1x128xf32>
    %1054 = vector.broadcast %1053 : vector<1x1x128xf32> to vector<8x8x128xf32>
    %1055 = arith.mulf %1050, %1054 : vector<8x8x128xf32>
    %1056 = arith.addf %1048, %1055 : vector<8x8x128xf32>
    %c0_911 = arith.constant 0 : index
    %c10_912 = arith.constant 10 : index
    %c2_913 = arith.constant 2 : index
    %c0_914 = arith.constant 0 : index
    %1057 = vector.load %arg1[%c0_911, %c10_912, %c2_913, %c0_914] : memref<1x20x20x128xf32, #tpu.memory_space<vmem>>, vector<1x8x8x128xf32>
    %1058 = vector.shape_cast %1057 : vector<1x8x8x128xf32> to vector<8x8x128xf32>
    %c10_915 = arith.constant 10 : index
    %c2_916 = arith.constant 2 : index
    %c0_917 = arith.constant 0 : index
    %1059 = vector.load %arg2[%c10_915, %c2_916, %c0_917] : memref<13x13x128xf32, #tpu.memory_space<vmem>>, vector<1x1x128xf32>
    %1060 = vector.shape_cast %1059 : vector<1x1x128xf32> to vector<128xf32>
    %1061 = vector.shape_cast %1060 : vector<128xf32> to vector<1x1x128xf32>
    %1062 = vector.broadcast %1061 : vector<1x1x128xf32> to vector<8x8x128xf32>
    %1063 = arith.mulf %1058, %1062 : vector<8x8x128xf32>
    %1064 = arith.addf %1056, %1063 : vector<8x8x128xf32>
    %c0_918 = arith.constant 0 : index
    %c10_919 = arith.constant 10 : index
    %c3_920 = arith.constant 3 : index
    %c0_921 = arith.constant 0 : index
    %1065 = vector.load %arg1[%c0_918, %c10_919, %c3_920, %c0_921] : memref<1x20x20x128xf32, #tpu.memory_space<vmem>>, vector<1x8x8x128xf32>
    %1066 = vector.shape_cast %1065 : vector<1x8x8x128xf32> to vector<8x8x128xf32>
    %c10_922 = arith.constant 10 : index
    %c3_923 = arith.constant 3 : index
    %c0_924 = arith.constant 0 : index
    %1067 = vector.load %arg2[%c10_922, %c3_923, %c0_924] : memref<13x13x128xf32, #tpu.memory_space<vmem>>, vector<1x1x128xf32>
    %1068 = vector.shape_cast %1067 : vector<1x1x128xf32> to vector<128xf32>
    %1069 = vector.shape_cast %1068 : vector<128xf32> to vector<1x1x128xf32>
    %1070 = vector.broadcast %1069 : vector<1x1x128xf32> to vector<8x8x128xf32>
    %1071 = arith.mulf %1066, %1070 : vector<8x8x128xf32>
    %1072 = arith.addf %1064, %1071 : vector<8x8x128xf32>
    %c0_925 = arith.constant 0 : index
    %c10_926 = arith.constant 10 : index
    %c4_927 = arith.constant 4 : index
    %c0_928 = arith.constant 0 : index
    %1073 = vector.load %arg1[%c0_925, %c10_926, %c4_927, %c0_928] : memref<1x20x20x128xf32, #tpu.memory_space<vmem>>, vector<1x8x8x128xf32>
    %1074 = vector.shape_cast %1073 : vector<1x8x8x128xf32> to vector<8x8x128xf32>
    %c10_929 = arith.constant 10 : index
    %c4_930 = arith.constant 4 : index
    %c0_931 = arith.constant 0 : index
    %1075 = vector.load %arg2[%c10_929, %c4_930, %c0_931] : memref<13x13x128xf32, #tpu.memory_space<vmem>>, vector<1x1x128xf32>
    %1076 = vector.shape_cast %1075 : vector<1x1x128xf32> to vector<128xf32>
    %1077 = vector.shape_cast %1076 : vector<128xf32> to vector<1x1x128xf32>
    %1078 = vector.broadcast %1077 : vector<1x1x128xf32> to vector<8x8x128xf32>
    %1079 = arith.mulf %1074, %1078 : vector<8x8x128xf32>
    %1080 = arith.addf %1072, %1079 : vector<8x8x128xf32>
    %c0_932 = arith.constant 0 : index
    %c10_933 = arith.constant 10 : index
    %c5_934 = arith.constant 5 : index
    %c0_935 = arith.constant 0 : index
    %1081 = vector.load %arg1[%c0_932, %c10_933, %c5_934, %c0_935] : memref<1x20x20x128xf32, #tpu.memory_space<vmem>>, vector<1x8x8x128xf32>
    %1082 = vector.shape_cast %1081 : vector<1x8x8x128xf32> to vector<8x8x128xf32>
    %c10_936 = arith.constant 10 : index
    %c5_937 = arith.constant 5 : index
    %c0_938 = arith.constant 0 : index
    %1083 = vector.load %arg2[%c10_936, %c5_937, %c0_938] : memref<13x13x128xf32, #tpu.memory_space<vmem>>, vector<1x1x128xf32>
    %1084 = vector.shape_cast %1083 : vector<1x1x128xf32> to vector<128xf32>
    %1085 = vector.shape_cast %1084 : vector<128xf32> to vector<1x1x128xf32>
    %1086 = vector.broadcast %1085 : vector<1x1x128xf32> to vector<8x8x128xf32>
    %1087 = arith.mulf %1082, %1086 : vector<8x8x128xf32>
    %1088 = arith.addf %1080, %1087 : vector<8x8x128xf32>
    %c0_939 = arith.constant 0 : index
    %c10_940 = arith.constant 10 : index
    %c6_941 = arith.constant 6 : index
    %c0_942 = arith.constant 0 : index
    %1089 = vector.load %arg1[%c0_939, %c10_940, %c6_941, %c0_942] : memref<1x20x20x128xf32, #tpu.memory_space<vmem>>, vector<1x8x8x128xf32>
    %1090 = vector.shape_cast %1089 : vector<1x8x8x128xf32> to vector<8x8x128xf32>
    %c10_943 = arith.constant 10 : index
    %c6_944 = arith.constant 6 : index
    %c0_945 = arith.constant 0 : index
    %1091 = vector.load %arg2[%c10_943, %c6_944, %c0_945] : memref<13x13x128xf32, #tpu.memory_space<vmem>>, vector<1x1x128xf32>
    %1092 = vector.shape_cast %1091 : vector<1x1x128xf32> to vector<128xf32>
    %1093 = vector.shape_cast %1092 : vector<128xf32> to vector<1x1x128xf32>
    %1094 = vector.broadcast %1093 : vector<1x1x128xf32> to vector<8x8x128xf32>
    %1095 = arith.mulf %1090, %1094 : vector<8x8x128xf32>
    %1096 = arith.addf %1088, %1095 : vector<8x8x128xf32>
    %c0_946 = arith.constant 0 : index
    %c10_947 = arith.constant 10 : index
    %c7_948 = arith.constant 7 : index
    %c0_949 = arith.constant 0 : index
    %1097 = vector.load %arg1[%c0_946, %c10_947, %c7_948, %c0_949] : memref<1x20x20x128xf32, #tpu.memory_space<vmem>>, vector<1x8x8x128xf32>
    %1098 = vector.shape_cast %1097 : vector<1x8x8x128xf32> to vector<8x8x128xf32>
    %c10_950 = arith.constant 10 : index
    %c7_951 = arith.constant 7 : index
    %c0_952 = arith.constant 0 : index
    %1099 = vector.load %arg2[%c10_950, %c7_951, %c0_952] : memref<13x13x128xf32, #tpu.memory_space<vmem>>, vector<1x1x128xf32>
    %1100 = vector.shape_cast %1099 : vector<1x1x128xf32> to vector<128xf32>
    %1101 = vector.shape_cast %1100 : vector<128xf32> to vector<1x1x128xf32>
    %1102 = vector.broadcast %1101 : vector<1x1x128xf32> to vector<8x8x128xf32>
    %1103 = arith.mulf %1098, %1102 : vector<8x8x128xf32>
    %1104 = arith.addf %1096, %1103 : vector<8x8x128xf32>
    %c0_953 = arith.constant 0 : index
    %c10_954 = arith.constant 10 : index
    %c8_955 = arith.constant 8 : index
    %c0_956 = arith.constant 0 : index
    %1105 = vector.load %arg1[%c0_953, %c10_954, %c8_955, %c0_956] : memref<1x20x20x128xf32, #tpu.memory_space<vmem>>, vector<1x8x8x128xf32>
    %1106 = vector.shape_cast %1105 : vector<1x8x8x128xf32> to vector<8x8x128xf32>
    %c10_957 = arith.constant 10 : index
    %c8_958 = arith.constant 8 : index
    %c0_959 = arith.constant 0 : index
    %1107 = vector.load %arg2[%c10_957, %c8_958, %c0_959] : memref<13x13x128xf32, #tpu.memory_space<vmem>>, vector<1x1x128xf32>
    %1108 = vector.shape_cast %1107 : vector<1x1x128xf32> to vector<128xf32>
    %1109 = vector.shape_cast %1108 : vector<128xf32> to vector<1x1x128xf32>
    %1110 = vector.broadcast %1109 : vector<1x1x128xf32> to vector<8x8x128xf32>
    %1111 = arith.mulf %1106, %1110 : vector<8x8x128xf32>
    %1112 = arith.addf %1104, %1111 : vector<8x8x128xf32>
    %c0_960 = arith.constant 0 : index
    %c10_961 = arith.constant 10 : index
    %c9_962 = arith.constant 9 : index
    %c0_963 = arith.constant 0 : index
    %1113 = vector.load %arg1[%c0_960, %c10_961, %c9_962, %c0_963] : memref<1x20x20x128xf32, #tpu.memory_space<vmem>>, vector<1x8x8x128xf32>
    %1114 = vector.shape_cast %1113 : vector<1x8x8x128xf32> to vector<8x8x128xf32>
    %c10_964 = arith.constant 10 : index
    %c9_965 = arith.constant 9 : index
    %c0_966 = arith.constant 0 : index
    %1115 = vector.load %arg2[%c10_964, %c9_965, %c0_966] : memref<13x13x128xf32, #tpu.memory_space<vmem>>, vector<1x1x128xf32>
    %1116 = vector.shape_cast %1115 : vector<1x1x128xf32> to vector<128xf32>
    %1117 = vector.shape_cast %1116 : vector<128xf32> to vector<1x1x128xf32>
    %1118 = vector.broadcast %1117 : vector<1x1x128xf32> to vector<8x8x128xf32>
    %1119 = arith.mulf %1114, %1118 : vector<8x8x128xf32>
    %1120 = arith.addf %1112, %1119 : vector<8x8x128xf32>
    %c0_967 = arith.constant 0 : index
    %c10_968 = arith.constant 10 : index
    %c10_969 = arith.constant 10 : index
    %c0_970 = arith.constant 0 : index
    %1121 = vector.load %arg1[%c0_967, %c10_968, %c10_969, %c0_970] : memref<1x20x20x128xf32, #tpu.memory_space<vmem>>, vector<1x8x8x128xf32>
    %1122 = vector.shape_cast %1121 : vector<1x8x8x128xf32> to vector<8x8x128xf32>
    %c10_971 = arith.constant 10 : index
    %c10_972 = arith.constant 10 : index
    %c0_973 = arith.constant 0 : index
    %1123 = vector.load %arg2[%c10_971, %c10_972, %c0_973] : memref<13x13x128xf32, #tpu.memory_space<vmem>>, vector<1x1x128xf32>
    %1124 = vector.shape_cast %1123 : vector<1x1x128xf32> to vector<128xf32>
    %1125 = vector.shape_cast %1124 : vector<128xf32> to vector<1x1x128xf32>
    %1126 = vector.broadcast %1125 : vector<1x1x128xf32> to vector<8x8x128xf32>
    %1127 = arith.mulf %1122, %1126 : vector<8x8x128xf32>
    %1128 = arith.addf %1120, %1127 : vector<8x8x128xf32>
    %c0_974 = arith.constant 0 : index
    %c10_975 = arith.constant 10 : index
    %c11_976 = arith.constant 11 : index
    %c0_977 = arith.constant 0 : index
    %1129 = vector.load %arg1[%c0_974, %c10_975, %c11_976, %c0_977] : memref<1x20x20x128xf32, #tpu.memory_space<vmem>>, vector<1x8x8x128xf32>
    %1130 = vector.shape_cast %1129 : vector<1x8x8x128xf32> to vector<8x8x128xf32>
    %c10_978 = arith.constant 10 : index
    %c11_979 = arith.constant 11 : index
    %c0_980 = arith.constant 0 : index
    %1131 = vector.load %arg2[%c10_978, %c11_979, %c0_980] : memref<13x13x128xf32, #tpu.memory_space<vmem>>, vector<1x1x128xf32>
    %1132 = vector.shape_cast %1131 : vector<1x1x128xf32> to vector<128xf32>
    %1133 = vector.shape_cast %1132 : vector<128xf32> to vector<1x1x128xf32>
    %1134 = vector.broadcast %1133 : vector<1x1x128xf32> to vector<8x8x128xf32>
    %1135 = arith.mulf %1130, %1134 : vector<8x8x128xf32>
    %1136 = arith.addf %1128, %1135 : vector<8x8x128xf32>
    %c0_981 = arith.constant 0 : index
    %c10_982 = arith.constant 10 : index
    %c12_983 = arith.constant 12 : index
    %c0_984 = arith.constant 0 : index
    %1137 = vector.load %arg1[%c0_981, %c10_982, %c12_983, %c0_984] : memref<1x20x20x128xf32, #tpu.memory_space<vmem>>, vector<1x8x8x128xf32>
    %1138 = vector.shape_cast %1137 : vector<1x8x8x128xf32> to vector<8x8x128xf32>
    %c10_985 = arith.constant 10 : index
    %c12_986 = arith.constant 12 : index
    %c0_987 = arith.constant 0 : index
    %1139 = vector.load %arg2[%c10_985, %c12_986, %c0_987] : memref<13x13x128xf32, #tpu.memory_space<vmem>>, vector<1x1x128xf32>
    %1140 = vector.shape_cast %1139 : vector<1x1x128xf32> to vector<128xf32>
    %1141 = vector.shape_cast %1140 : vector<128xf32> to vector<1x1x128xf32>
    %1142 = vector.broadcast %1141 : vector<1x1x128xf32> to vector<8x8x128xf32>
    %1143 = arith.mulf %1138, %1142 : vector<8x8x128xf32>
    %1144 = arith.addf %1136, %1143 : vector<8x8x128xf32>
    %c0_988 = arith.constant 0 : index
    %c11_989 = arith.constant 11 : index
    %c0_990 = arith.constant 0 : index
    %c0_991 = arith.constant 0 : index
    %1145 = vector.load %arg1[%c0_988, %c11_989, %c0_990, %c0_991] : memref<1x20x20x128xf32, #tpu.memory_space<vmem>>, vector<1x8x8x128xf32>
    %1146 = vector.shape_cast %1145 : vector<1x8x8x128xf32> to vector<8x8x128xf32>
    %c11_992 = arith.constant 11 : index
    %c0_993 = arith.constant 0 : index
    %c0_994 = arith.constant 0 : index
    %1147 = vector.load %arg2[%c11_992, %c0_993, %c0_994] : memref<13x13x128xf32, #tpu.memory_space<vmem>>, vector<1x1x128xf32>
    %1148 = vector.shape_cast %1147 : vector<1x1x128xf32> to vector<128xf32>
    %1149 = vector.shape_cast %1148 : vector<128xf32> to vector<1x1x128xf32>
    %1150 = vector.broadcast %1149 : vector<1x1x128xf32> to vector<8x8x128xf32>
    %1151 = arith.mulf %1146, %1150 : vector<8x8x128xf32>
    %1152 = arith.addf %1144, %1151 : vector<8x8x128xf32>
    %c0_995 = arith.constant 0 : index
    %c11_996 = arith.constant 11 : index
    %c1_997 = arith.constant 1 : index
    %c0_998 = arith.constant 0 : index
    %1153 = vector.load %arg1[%c0_995, %c11_996, %c1_997, %c0_998] : memref<1x20x20x128xf32, #tpu.memory_space<vmem>>, vector<1x8x8x128xf32>
    %1154 = vector.shape_cast %1153 : vector<1x8x8x128xf32> to vector<8x8x128xf32>
    %c11_999 = arith.constant 11 : index
    %c1_1000 = arith.constant 1 : index
    %c0_1001 = arith.constant 0 : index
    %1155 = vector.load %arg2[%c11_999, %c1_1000, %c0_1001] : memref<13x13x128xf32, #tpu.memory_space<vmem>>, vector<1x1x128xf32>
    %1156 = vector.shape_cast %1155 : vector<1x1x128xf32> to vector<128xf32>
    %1157 = vector.shape_cast %1156 : vector<128xf32> to vector<1x1x128xf32>
    %1158 = vector.broadcast %1157 : vector<1x1x128xf32> to vector<8x8x128xf32>
    %1159 = arith.mulf %1154, %1158 : vector<8x8x128xf32>
    %1160 = arith.addf %1152, %1159 : vector<8x8x128xf32>
    %c0_1002 = arith.constant 0 : index
    %c11_1003 = arith.constant 11 : index
    %c2_1004 = arith.constant 2 : index
    %c0_1005 = arith.constant 0 : index
    %1161 = vector.load %arg1[%c0_1002, %c11_1003, %c2_1004, %c0_1005] : memref<1x20x20x128xf32, #tpu.memory_space<vmem>>, vector<1x8x8x128xf32>
    %1162 = vector.shape_cast %1161 : vector<1x8x8x128xf32> to vector<8x8x128xf32>
    %c11_1006 = arith.constant 11 : index
    %c2_1007 = arith.constant 2 : index
    %c0_1008 = arith.constant 0 : index
    %1163 = vector.load %arg2[%c11_1006, %c2_1007, %c0_1008] : memref<13x13x128xf32, #tpu.memory_space<vmem>>, vector<1x1x128xf32>
    %1164 = vector.shape_cast %1163 : vector<1x1x128xf32> to vector<128xf32>
    %1165 = vector.shape_cast %1164 : vector<128xf32> to vector<1x1x128xf32>
    %1166 = vector.broadcast %1165 : vector<1x1x128xf32> to vector<8x8x128xf32>
    %1167 = arith.mulf %1162, %1166 : vector<8x8x128xf32>
    %1168 = arith.addf %1160, %1167 : vector<8x8x128xf32>
    %c0_1009 = arith.constant 0 : index
    %c11_1010 = arith.constant 11 : index
    %c3_1011 = arith.constant 3 : index
    %c0_1012 = arith.constant 0 : index
    %1169 = vector.load %arg1[%c0_1009, %c11_1010, %c3_1011, %c0_1012] : memref<1x20x20x128xf32, #tpu.memory_space<vmem>>, vector<1x8x8x128xf32>
    %1170 = vector.shape_cast %1169 : vector<1x8x8x128xf32> to vector<8x8x128xf32>
    %c11_1013 = arith.constant 11 : index
    %c3_1014 = arith.constant 3 : index
    %c0_1015 = arith.constant 0 : index
    %1171 = vector.load %arg2[%c11_1013, %c3_1014, %c0_1015] : memref<13x13x128xf32, #tpu.memory_space<vmem>>, vector<1x1x128xf32>
    %1172 = vector.shape_cast %1171 : vector<1x1x128xf32> to vector<128xf32>
    %1173 = vector.shape_cast %1172 : vector<128xf32> to vector<1x1x128xf32>
    %1174 = vector.broadcast %1173 : vector<1x1x128xf32> to vector<8x8x128xf32>
    %1175 = arith.mulf %1170, %1174 : vector<8x8x128xf32>
    %1176 = arith.addf %1168, %1175 : vector<8x8x128xf32>
    %c0_1016 = arith.constant 0 : index
    %c11_1017 = arith.constant 11 : index
    %c4_1018 = arith.constant 4 : index
    %c0_1019 = arith.constant 0 : index
    %1177 = vector.load %arg1[%c0_1016, %c11_1017, %c4_1018, %c0_1019] : memref<1x20x20x128xf32, #tpu.memory_space<vmem>>, vector<1x8x8x128xf32>
    %1178 = vector.shape_cast %1177 : vector<1x8x8x128xf32> to vector<8x8x128xf32>
    %c11_1020 = arith.constant 11 : index
    %c4_1021 = arith.constant 4 : index
    %c0_1022 = arith.constant 0 : index
    %1179 = vector.load %arg2[%c11_1020, %c4_1021, %c0_1022] : memref<13x13x128xf32, #tpu.memory_space<vmem>>, vector<1x1x128xf32>
    %1180 = vector.shape_cast %1179 : vector<1x1x128xf32> to vector<128xf32>
    %1181 = vector.shape_cast %1180 : vector<128xf32> to vector<1x1x128xf32>
    %1182 = vector.broadcast %1181 : vector<1x1x128xf32> to vector<8x8x128xf32>
    %1183 = arith.mulf %1178, %1182 : vector<8x8x128xf32>
    %1184 = arith.addf %1176, %1183 : vector<8x8x128xf32>
    %c0_1023 = arith.constant 0 : index
    %c11_1024 = arith.constant 11 : index
    %c5_1025 = arith.constant 5 : index
    %c0_1026 = arith.constant 0 : index
    %1185 = vector.load %arg1[%c0_1023, %c11_1024, %c5_1025, %c0_1026] : memref<1x20x20x128xf32, #tpu.memory_space<vmem>>, vector<1x8x8x128xf32>
    %1186 = vector.shape_cast %1185 : vector<1x8x8x128xf32> to vector<8x8x128xf32>
    %c11_1027 = arith.constant 11 : index
    %c5_1028 = arith.constant 5 : index
    %c0_1029 = arith.constant 0 : index
    %1187 = vector.load %arg2[%c11_1027, %c5_1028, %c0_1029] : memref<13x13x128xf32, #tpu.memory_space<vmem>>, vector<1x1x128xf32>
    %1188 = vector.shape_cast %1187 : vector<1x1x128xf32> to vector<128xf32>
    %1189 = vector.shape_cast %1188 : vector<128xf32> to vector<1x1x128xf32>
    %1190 = vector.broadcast %1189 : vector<1x1x128xf32> to vector<8x8x128xf32>
    %1191 = arith.mulf %1186, %1190 : vector<8x8x128xf32>
    %1192 = arith.addf %1184, %1191 : vector<8x8x128xf32>
    %c0_1030 = arith.constant 0 : index
    %c11_1031 = arith.constant 11 : index
    %c6_1032 = arith.constant 6 : index
    %c0_1033 = arith.constant 0 : index
    %1193 = vector.load %arg1[%c0_1030, %c11_1031, %c6_1032, %c0_1033] : memref<1x20x20x128xf32, #tpu.memory_space<vmem>>, vector<1x8x8x128xf32>
    %1194 = vector.shape_cast %1193 : vector<1x8x8x128xf32> to vector<8x8x128xf32>
    %c11_1034 = arith.constant 11 : index
    %c6_1035 = arith.constant 6 : index
    %c0_1036 = arith.constant 0 : index
    %1195 = vector.load %arg2[%c11_1034, %c6_1035, %c0_1036] : memref<13x13x128xf32, #tpu.memory_space<vmem>>, vector<1x1x128xf32>
    %1196 = vector.shape_cast %1195 : vector<1x1x128xf32> to vector<128xf32>
    %1197 = vector.shape_cast %1196 : vector<128xf32> to vector<1x1x128xf32>
    %1198 = vector.broadcast %1197 : vector<1x1x128xf32> to vector<8x8x128xf32>
    %1199 = arith.mulf %1194, %1198 : vector<8x8x128xf32>
    %1200 = arith.addf %1192, %1199 : vector<8x8x128xf32>
    %c0_1037 = arith.constant 0 : index
    %c11_1038 = arith.constant 11 : index
    %c7_1039 = arith.constant 7 : index
    %c0_1040 = arith.constant 0 : index
    %1201 = vector.load %arg1[%c0_1037, %c11_1038, %c7_1039, %c0_1040] : memref<1x20x20x128xf32, #tpu.memory_space<vmem>>, vector<1x8x8x128xf32>
    %1202 = vector.shape_cast %1201 : vector<1x8x8x128xf32> to vector<8x8x128xf32>
    %c11_1041 = arith.constant 11 : index
    %c7_1042 = arith.constant 7 : index
    %c0_1043 = arith.constant 0 : index
    %1203 = vector.load %arg2[%c11_1041, %c7_1042, %c0_1043] : memref<13x13x128xf32, #tpu.memory_space<vmem>>, vector<1x1x128xf32>
    %1204 = vector.shape_cast %1203 : vector<1x1x128xf32> to vector<128xf32>
    %1205 = vector.shape_cast %1204 : vector<128xf32> to vector<1x1x128xf32>
    %1206 = vector.broadcast %1205 : vector<1x1x128xf32> to vector<8x8x128xf32>
    %1207 = arith.mulf %1202, %1206 : vector<8x8x128xf32>
    %1208 = arith.addf %1200, %1207 : vector<8x8x128xf32>
    %c0_1044 = arith.constant 0 : index
    %c11_1045 = arith.constant 11 : index
    %c8_1046 = arith.constant 8 : index
    %c0_1047 = arith.constant 0 : index
    %1209 = vector.load %arg1[%c0_1044, %c11_1045, %c8_1046, %c0_1047] : memref<1x20x20x128xf32, #tpu.memory_space<vmem>>, vector<1x8x8x128xf32>
    %1210 = vector.shape_cast %1209 : vector<1x8x8x128xf32> to vector<8x8x128xf32>
    %c11_1048 = arith.constant 11 : index
    %c8_1049 = arith.constant 8 : index
    %c0_1050 = arith.constant 0 : index
    %1211 = vector.load %arg2[%c11_1048, %c8_1049, %c0_1050] : memref<13x13x128xf32, #tpu.memory_space<vmem>>, vector<1x1x128xf32>
    %1212 = vector.shape_cast %1211 : vector<1x1x128xf32> to vector<128xf32>
    %1213 = vector.shape_cast %1212 : vector<128xf32> to vector<1x1x128xf32>
    %1214 = vector.broadcast %1213 : vector<1x1x128xf32> to vector<8x8x128xf32>
    %1215 = arith.mulf %1210, %1214 : vector<8x8x128xf32>
    %1216 = arith.addf %1208, %1215 : vector<8x8x128xf32>
    %c0_1051 = arith.constant 0 : index
    %c11_1052 = arith.constant 11 : index
    %c9_1053 = arith.constant 9 : index
    %c0_1054 = arith.constant 0 : index
    %1217 = vector.load %arg1[%c0_1051, %c11_1052, %c9_1053, %c0_1054] : memref<1x20x20x128xf32, #tpu.memory_space<vmem>>, vector<1x8x8x128xf32>
    %1218 = vector.shape_cast %1217 : vector<1x8x8x128xf32> to vector<8x8x128xf32>
    %c11_1055 = arith.constant 11 : index
    %c9_1056 = arith.constant 9 : index
    %c0_1057 = arith.constant 0 : index
    %1219 = vector.load %arg2[%c11_1055, %c9_1056, %c0_1057] : memref<13x13x128xf32, #tpu.memory_space<vmem>>, vector<1x1x128xf32>
    %1220 = vector.shape_cast %1219 : vector<1x1x128xf32> to vector<128xf32>
    %1221 = vector.shape_cast %1220 : vector<128xf32> to vector<1x1x128xf32>
    %1222 = vector.broadcast %1221 : vector<1x1x128xf32> to vector<8x8x128xf32>
    %1223 = arith.mulf %1218, %1222 : vector<8x8x128xf32>
    %1224 = arith.addf %1216, %1223 : vector<8x8x128xf32>
    %c0_1058 = arith.constant 0 : index
    %c11_1059 = arith.constant 11 : index
    %c10_1060 = arith.constant 10 : index
    %c0_1061 = arith.constant 0 : index
    %1225 = vector.load %arg1[%c0_1058, %c11_1059, %c10_1060, %c0_1061] : memref<1x20x20x128xf32, #tpu.memory_space<vmem>>, vector<1x8x8x128xf32>
    %1226 = vector.shape_cast %1225 : vector<1x8x8x128xf32> to vector<8x8x128xf32>
    %c11_1062 = arith.constant 11 : index
    %c10_1063 = arith.constant 10 : index
    %c0_1064 = arith.constant 0 : index
    %1227 = vector.load %arg2[%c11_1062, %c10_1063, %c0_1064] : memref<13x13x128xf32, #tpu.memory_space<vmem>>, vector<1x1x128xf32>
    %1228 = vector.shape_cast %1227 : vector<1x1x128xf32> to vector<128xf32>
    %1229 = vector.shape_cast %1228 : vector<128xf32> to vector<1x1x128xf32>
    %1230 = vector.broadcast %1229 : vector<1x1x128xf32> to vector<8x8x128xf32>
    %1231 = arith.mulf %1226, %1230 : vector<8x8x128xf32>
    %1232 = arith.addf %1224, %1231 : vector<8x8x128xf32>
    %c0_1065 = arith.constant 0 : index
    %c11_1066 = arith.constant 11 : index
    %c11_1067 = arith.constant 11 : index
    %c0_1068 = arith.constant 0 : index
    %1233 = vector.load %arg1[%c0_1065, %c11_1066, %c11_1067, %c0_1068] : memref<1x20x20x128xf32, #tpu.memory_space<vmem>>, vector<1x8x8x128xf32>
    %1234 = vector.shape_cast %1233 : vector<1x8x8x128xf32> to vector<8x8x128xf32>
    %c11_1069 = arith.constant 11 : index
    %c11_1070 = arith.constant 11 : index
    %c0_1071 = arith.constant 0 : index
    %1235 = vector.load %arg2[%c11_1069, %c11_1070, %c0_1071] : memref<13x13x128xf32, #tpu.memory_space<vmem>>, vector<1x1x128xf32>
    %1236 = vector.shape_cast %1235 : vector<1x1x128xf32> to vector<128xf32>
    %1237 = vector.shape_cast %1236 : vector<128xf32> to vector<1x1x128xf32>
    %1238 = vector.broadcast %1237 : vector<1x1x128xf32> to vector<8x8x128xf32>
    %1239 = arith.mulf %1234, %1238 : vector<8x8x128xf32>
    %1240 = arith.addf %1232, %1239 : vector<8x8x128xf32>
    %c0_1072 = arith.constant 0 : index
    %c11_1073 = arith.constant 11 : index
    %c12_1074 = arith.constant 12 : index
    %c0_1075 = arith.constant 0 : index
    %1241 = vector.load %arg1[%c0_1072, %c11_1073, %c12_1074, %c0_1075] : memref<1x20x20x128xf32, #tpu.memory_space<vmem>>, vector<1x8x8x128xf32>
    %1242 = vector.shape_cast %1241 : vector<1x8x8x128xf32> to vector<8x8x128xf32>
    %c11_1076 = arith.constant 11 : index
    %c12_1077 = arith.constant 12 : index
    %c0_1078 = arith.constant 0 : index
    %1243 = vector.load %arg2[%c11_1076, %c12_1077, %c0_1078] : memref<13x13x128xf32, #tpu.memory_space<vmem>>, vector<1x1x128xf32>
    %1244 = vector.shape_cast %1243 : vector<1x1x128xf32> to vector<128xf32>
    %1245 = vector.shape_cast %1244 : vector<128xf32> to vector<1x1x128xf32>
    %1246 = vector.broadcast %1245 : vector<1x1x128xf32> to vector<8x8x128xf32>
    %1247 = arith.mulf %1242, %1246 : vector<8x8x128xf32>
    %1248 = arith.addf %1240, %1247 : vector<8x8x128xf32>
    %c0_1079 = arith.constant 0 : index
    %c12_1080 = arith.constant 12 : index
    %c0_1081 = arith.constant 0 : index
    %c0_1082 = arith.constant 0 : index
    %1249 = vector.load %arg1[%c0_1079, %c12_1080, %c0_1081, %c0_1082] : memref<1x20x20x128xf32, #tpu.memory_space<vmem>>, vector<1x8x8x128xf32>
    %1250 = vector.shape_cast %1249 : vector<1x8x8x128xf32> to vector<8x8x128xf32>
    %c12_1083 = arith.constant 12 : index
    %c0_1084 = arith.constant 0 : index
    %c0_1085 = arith.constant 0 : index
    %1251 = vector.load %arg2[%c12_1083, %c0_1084, %c0_1085] : memref<13x13x128xf32, #tpu.memory_space<vmem>>, vector<1x1x128xf32>
    %1252 = vector.shape_cast %1251 : vector<1x1x128xf32> to vector<128xf32>
    %1253 = vector.shape_cast %1252 : vector<128xf32> to vector<1x1x128xf32>
    %1254 = vector.broadcast %1253 : vector<1x1x128xf32> to vector<8x8x128xf32>
    %1255 = arith.mulf %1250, %1254 : vector<8x8x128xf32>
    %1256 = arith.addf %1248, %1255 : vector<8x8x128xf32>
    %c0_1086 = arith.constant 0 : index
    %c12_1087 = arith.constant 12 : index
    %c1_1088 = arith.constant 1 : index
    %c0_1089 = arith.constant 0 : index
    %1257 = vector.load %arg1[%c0_1086, %c12_1087, %c1_1088, %c0_1089] : memref<1x20x20x128xf32, #tpu.memory_space<vmem>>, vector<1x8x8x128xf32>
    %1258 = vector.shape_cast %1257 : vector<1x8x8x128xf32> to vector<8x8x128xf32>
    %c12_1090 = arith.constant 12 : index
    %c1_1091 = arith.constant 1 : index
    %c0_1092 = arith.constant 0 : index
    %1259 = vector.load %arg2[%c12_1090, %c1_1091, %c0_1092] : memref<13x13x128xf32, #tpu.memory_space<vmem>>, vector<1x1x128xf32>
    %1260 = vector.shape_cast %1259 : vector<1x1x128xf32> to vector<128xf32>
    %1261 = vector.shape_cast %1260 : vector<128xf32> to vector<1x1x128xf32>
    %1262 = vector.broadcast %1261 : vector<1x1x128xf32> to vector<8x8x128xf32>
    %1263 = arith.mulf %1258, %1262 : vector<8x8x128xf32>
    %1264 = arith.addf %1256, %1263 : vector<8x8x128xf32>
    %c0_1093 = arith.constant 0 : index
    %c12_1094 = arith.constant 12 : index
    %c2_1095 = arith.constant 2 : index
    %c0_1096 = arith.constant 0 : index
    %1265 = vector.load %arg1[%c0_1093, %c12_1094, %c2_1095, %c0_1096] : memref<1x20x20x128xf32, #tpu.memory_space<vmem>>, vector<1x8x8x128xf32>
    %1266 = vector.shape_cast %1265 : vector<1x8x8x128xf32> to vector<8x8x128xf32>
    %c12_1097 = arith.constant 12 : index
    %c2_1098 = arith.constant 2 : index
    %c0_1099 = arith.constant 0 : index
    %1267 = vector.load %arg2[%c12_1097, %c2_1098, %c0_1099] : memref<13x13x128xf32, #tpu.memory_space<vmem>>, vector<1x1x128xf32>
    %1268 = vector.shape_cast %1267 : vector<1x1x128xf32> to vector<128xf32>
    %1269 = vector.shape_cast %1268 : vector<128xf32> to vector<1x1x128xf32>
    %1270 = vector.broadcast %1269 : vector<1x1x128xf32> to vector<8x8x128xf32>
    %1271 = arith.mulf %1266, %1270 : vector<8x8x128xf32>
    %1272 = arith.addf %1264, %1271 : vector<8x8x128xf32>
    %c0_1100 = arith.constant 0 : index
    %c12_1101 = arith.constant 12 : index
    %c3_1102 = arith.constant 3 : index
    %c0_1103 = arith.constant 0 : index
    %1273 = vector.load %arg1[%c0_1100, %c12_1101, %c3_1102, %c0_1103] : memref<1x20x20x128xf32, #tpu.memory_space<vmem>>, vector<1x8x8x128xf32>
    %1274 = vector.shape_cast %1273 : vector<1x8x8x128xf32> to vector<8x8x128xf32>
    %c12_1104 = arith.constant 12 : index
    %c3_1105 = arith.constant 3 : index
    %c0_1106 = arith.constant 0 : index
    %1275 = vector.load %arg2[%c12_1104, %c3_1105, %c0_1106] : memref<13x13x128xf32, #tpu.memory_space<vmem>>, vector<1x1x128xf32>
    %1276 = vector.shape_cast %1275 : vector<1x1x128xf32> to vector<128xf32>
    %1277 = vector.shape_cast %1276 : vector<128xf32> to vector<1x1x128xf32>
    %1278 = vector.broadcast %1277 : vector<1x1x128xf32> to vector<8x8x128xf32>
    %1279 = arith.mulf %1274, %1278 : vector<8x8x128xf32>
    %1280 = arith.addf %1272, %1279 : vector<8x8x128xf32>
    %c0_1107 = arith.constant 0 : index
    %c12_1108 = arith.constant 12 : index
    %c4_1109 = arith.constant 4 : index
    %c0_1110 = arith.constant 0 : index
    %1281 = vector.load %arg1[%c0_1107, %c12_1108, %c4_1109, %c0_1110] : memref<1x20x20x128xf32, #tpu.memory_space<vmem>>, vector<1x8x8x128xf32>
    %1282 = vector.shape_cast %1281 : vector<1x8x8x128xf32> to vector<8x8x128xf32>
    %c12_1111 = arith.constant 12 : index
    %c4_1112 = arith.constant 4 : index
    %c0_1113 = arith.constant 0 : index
    %1283 = vector.load %arg2[%c12_1111, %c4_1112, %c0_1113] : memref<13x13x128xf32, #tpu.memory_space<vmem>>, vector<1x1x128xf32>
    %1284 = vector.shape_cast %1283 : vector<1x1x128xf32> to vector<128xf32>
    %1285 = vector.shape_cast %1284 : vector<128xf32> to vector<1x1x128xf32>
    %1286 = vector.broadcast %1285 : vector<1x1x128xf32> to vector<8x8x128xf32>
    %1287 = arith.mulf %1282, %1286 : vector<8x8x128xf32>
    %1288 = arith.addf %1280, %1287 : vector<8x8x128xf32>
    %c0_1114 = arith.constant 0 : index
    %c12_1115 = arith.constant 12 : index
    %c5_1116 = arith.constant 5 : index
    %c0_1117 = arith.constant 0 : index
    %1289 = vector.load %arg1[%c0_1114, %c12_1115, %c5_1116, %c0_1117] : memref<1x20x20x128xf32, #tpu.memory_space<vmem>>, vector<1x8x8x128xf32>
    %1290 = vector.shape_cast %1289 : vector<1x8x8x128xf32> to vector<8x8x128xf32>
    %c12_1118 = arith.constant 12 : index
    %c5_1119 = arith.constant 5 : index
    %c0_1120 = arith.constant 0 : index
    %1291 = vector.load %arg2[%c12_1118, %c5_1119, %c0_1120] : memref<13x13x128xf32, #tpu.memory_space<vmem>>, vector<1x1x128xf32>
    %1292 = vector.shape_cast %1291 : vector<1x1x128xf32> to vector<128xf32>
    %1293 = vector.shape_cast %1292 : vector<128xf32> to vector<1x1x128xf32>
    %1294 = vector.broadcast %1293 : vector<1x1x128xf32> to vector<8x8x128xf32>
    %1295 = arith.mulf %1290, %1294 : vector<8x8x128xf32>
    %1296 = arith.addf %1288, %1295 : vector<8x8x128xf32>
    %c0_1121 = arith.constant 0 : index
    %c12_1122 = arith.constant 12 : index
    %c6_1123 = arith.constant 6 : index
    %c0_1124 = arith.constant 0 : index
    %1297 = vector.load %arg1[%c0_1121, %c12_1122, %c6_1123, %c0_1124] : memref<1x20x20x128xf32, #tpu.memory_space<vmem>>, vector<1x8x8x128xf32>
    %1298 = vector.shape_cast %1297 : vector<1x8x8x128xf32> to vector<8x8x128xf32>
    %c12_1125 = arith.constant 12 : index
    %c6_1126 = arith.constant 6 : index
    %c0_1127 = arith.constant 0 : index
    %1299 = vector.load %arg2[%c12_1125, %c6_1126, %c0_1127] : memref<13x13x128xf32, #tpu.memory_space<vmem>>, vector<1x1x128xf32>
    %1300 = vector.shape_cast %1299 : vector<1x1x128xf32> to vector<128xf32>
    %1301 = vector.shape_cast %1300 : vector<128xf32> to vector<1x1x128xf32>
    %1302 = vector.broadcast %1301 : vector<1x1x128xf32> to vector<8x8x128xf32>
    %1303 = arith.mulf %1298, %1302 : vector<8x8x128xf32>
    %1304 = arith.addf %1296, %1303 : vector<8x8x128xf32>
    %c0_1128 = arith.constant 0 : index
    %c12_1129 = arith.constant 12 : index
    %c7_1130 = arith.constant 7 : index
    %c0_1131 = arith.constant 0 : index
    %1305 = vector.load %arg1[%c0_1128, %c12_1129, %c7_1130, %c0_1131] : memref<1x20x20x128xf32, #tpu.memory_space<vmem>>, vector<1x8x8x128xf32>
    %1306 = vector.shape_cast %1305 : vector<1x8x8x128xf32> to vector<8x8x128xf32>
    %c12_1132 = arith.constant 12 : index
    %c7_1133 = arith.constant 7 : index
    %c0_1134 = arith.constant 0 : index
    %1307 = vector.load %arg2[%c12_1132, %c7_1133, %c0_1134] : memref<13x13x128xf32, #tpu.memory_space<vmem>>, vector<1x1x128xf32>
    %1308 = vector.shape_cast %1307 : vector<1x1x128xf32> to vector<128xf32>
    %1309 = vector.shape_cast %1308 : vector<128xf32> to vector<1x1x128xf32>
    %1310 = vector.broadcast %1309 : vector<1x1x128xf32> to vector<8x8x128xf32>
    %1311 = arith.mulf %1306, %1310 : vector<8x8x128xf32>
    %1312 = arith.addf %1304, %1311 : vector<8x8x128xf32>
    %c0_1135 = arith.constant 0 : index
    %c12_1136 = arith.constant 12 : index
    %c8_1137 = arith.constant 8 : index
    %c0_1138 = arith.constant 0 : index
    %1313 = vector.load %arg1[%c0_1135, %c12_1136, %c8_1137, %c0_1138] : memref<1x20x20x128xf32, #tpu.memory_space<vmem>>, vector<1x8x8x128xf32>
    %1314 = vector.shape_cast %1313 : vector<1x8x8x128xf32> to vector<8x8x128xf32>
    %c12_1139 = arith.constant 12 : index
    %c8_1140 = arith.constant 8 : index
    %c0_1141 = arith.constant 0 : index
    %1315 = vector.load %arg2[%c12_1139, %c8_1140, %c0_1141] : memref<13x13x128xf32, #tpu.memory_space<vmem>>, vector<1x1x128xf32>
    %1316 = vector.shape_cast %1315 : vector<1x1x128xf32> to vector<128xf32>
    %1317 = vector.shape_cast %1316 : vector<128xf32> to vector<1x1x128xf32>
    %1318 = vector.broadcast %1317 : vector<1x1x128xf32> to vector<8x8x128xf32>
    %1319 = arith.mulf %1314, %1318 : vector<8x8x128xf32>
    %1320 = arith.addf %1312, %1319 : vector<8x8x128xf32>
    %c0_1142 = arith.constant 0 : index
    %c12_1143 = arith.constant 12 : index
    %c9_1144 = arith.constant 9 : index
    %c0_1145 = arith.constant 0 : index
    %1321 = vector.load %arg1[%c0_1142, %c12_1143, %c9_1144, %c0_1145] : memref<1x20x20x128xf32, #tpu.memory_space<vmem>>, vector<1x8x8x128xf32>
    %1322 = vector.shape_cast %1321 : vector<1x8x8x128xf32> to vector<8x8x128xf32>
    %c12_1146 = arith.constant 12 : index
    %c9_1147 = arith.constant 9 : index
    %c0_1148 = arith.constant 0 : index
    %1323 = vector.load %arg2[%c12_1146, %c9_1147, %c0_1148] : memref<13x13x128xf32, #tpu.memory_space<vmem>>, vector<1x1x128xf32>
    %1324 = vector.shape_cast %1323 : vector<1x1x128xf32> to vector<128xf32>
    %1325 = vector.shape_cast %1324 : vector<128xf32> to vector<1x1x128xf32>
    %1326 = vector.broadcast %1325 : vector<1x1x128xf32> to vector<8x8x128xf32>
    %1327 = arith.mulf %1322, %1326 : vector<8x8x128xf32>
    %1328 = arith.addf %1320, %1327 : vector<8x8x128xf32>
    %c0_1149 = arith.constant 0 : index
    %c12_1150 = arith.constant 12 : index
    %c10_1151 = arith.constant 10 : index
    %c0_1152 = arith.constant 0 : index
    %1329 = vector.load %arg1[%c0_1149, %c12_1150, %c10_1151, %c0_1152] : memref<1x20x20x128xf32, #tpu.memory_space<vmem>>, vector<1x8x8x128xf32>
    %1330 = vector.shape_cast %1329 : vector<1x8x8x128xf32> to vector<8x8x128xf32>
    %c12_1153 = arith.constant 12 : index
    %c10_1154 = arith.constant 10 : index
    %c0_1155 = arith.constant 0 : index
    %1331 = vector.load %arg2[%c12_1153, %c10_1154, %c0_1155] : memref<13x13x128xf32, #tpu.memory_space<vmem>>, vector<1x1x128xf32>
    %1332 = vector.shape_cast %1331 : vector<1x1x128xf32> to vector<128xf32>
    %1333 = vector.shape_cast %1332 : vector<128xf32> to vector<1x1x128xf32>
    %1334 = vector.broadcast %1333 : vector<1x1x128xf32> to vector<8x8x128xf32>
    %1335 = arith.mulf %1330, %1334 : vector<8x8x128xf32>
    %1336 = arith.addf %1328, %1335 : vector<8x8x128xf32>
    %c0_1156 = arith.constant 0 : index
    %c12_1157 = arith.constant 12 : index
    %c11_1158 = arith.constant 11 : index
    %c0_1159 = arith.constant 0 : index
    %1337 = vector.load %arg1[%c0_1156, %c12_1157, %c11_1158, %c0_1159] : memref<1x20x20x128xf32, #tpu.memory_space<vmem>>, vector<1x8x8x128xf32>
    %1338 = vector.shape_cast %1337 : vector<1x8x8x128xf32> to vector<8x8x128xf32>
    %c12_1160 = arith.constant 12 : index
    %c11_1161 = arith.constant 11 : index
    %c0_1162 = arith.constant 0 : index
    %1339 = vector.load %arg2[%c12_1160, %c11_1161, %c0_1162] : memref<13x13x128xf32, #tpu.memory_space<vmem>>, vector<1x1x128xf32>
    %1340 = vector.shape_cast %1339 : vector<1x1x128xf32> to vector<128xf32>
    %1341 = vector.shape_cast %1340 : vector<128xf32> to vector<1x1x128xf32>
    %1342 = vector.broadcast %1341 : vector<1x1x128xf32> to vector<8x8x128xf32>
    %1343 = arith.mulf %1338, %1342 : vector<8x8x128xf32>
    %1344 = arith.addf %1336, %1343 : vector<8x8x128xf32>
    %c0_1163 = arith.constant 0 : index
    %c12_1164 = arith.constant 12 : index
    %c12_1165 = arith.constant 12 : index
    %c0_1166 = arith.constant 0 : index
    %1345 = vector.load %arg1[%c0_1163, %c12_1164, %c12_1165, %c0_1166] : memref<1x20x20x128xf32, #tpu.memory_space<vmem>>, vector<1x8x8x128xf32>
    %1346 = vector.shape_cast %1345 : vector<1x8x8x128xf32> to vector<8x8x128xf32>
    %c12_1167 = arith.constant 12 : index
    %c12_1168 = arith.constant 12 : index
    %c0_1169 = arith.constant 0 : index
    %1347 = vector.load %arg2[%c12_1167, %c12_1168, %c0_1169] : memref<13x13x128xf32, #tpu.memory_space<vmem>>, vector<1x1x128xf32>
    %1348 = vector.shape_cast %1347 : vector<1x1x128xf32> to vector<128xf32>
    %1349 = vector.shape_cast %1348 : vector<128xf32> to vector<1x1x128xf32>
    %1350 = vector.broadcast %1349 : vector<1x1x128xf32> to vector<8x8x128xf32>
    %1351 = arith.mulf %1346, %1350 : vector<8x8x128xf32>
    %1352 = arith.addf %1344, %1351 : vector<8x8x128xf32>
    %c0_1170 = arith.constant 0 : index
    %c0_1171 = arith.constant 0 : index
    %1353 = vector.load %arg3[%c0_1170, %c0_1171] : memref<1x128xf32, #tpu.memory_space<vmem>>, vector<1x128xf32>
    %1354 = vector.shape_cast %1353 : vector<1x128xf32> to vector<128xf32>
    %1355 = vector.shape_cast %1354 : vector<128xf32> to vector<1x1x128xf32>
    %1356 = vector.broadcast %1355 : vector<1x1x128xf32> to vector<8x8x128xf32>
    %1357 = arith.addf %1352, %1356 : vector<8x8x128xf32>
    %c0_1172 = arith.constant 0 : index
    %c0_1173 = arith.constant 0 : index
    %c0_1174 = arith.constant 0 : index
    %c0_1175 = arith.constant 0 : index
    %1358 = vector.load %arg4[%c0_1172, %c0_1173, %c0_1174, %c0_1175] : memref<1x8x8x128xf32, #tpu.memory_space<vmem>>, vector<1x8x8x128xf32>
    %1359 = vector.shape_cast %1358 : vector<1x8x8x128xf32> to vector<8x8x128xf32>
    %1360 = vector.shape_cast %1357 : vector<8x8x128xf32> to vector<1x8x8x128xf32>
    tpu.vector_store %arg4[%c0_1172, %c0_1173, %c0_1174, %c0_1175], %1360 {strides = array<i32>} : memref<1x8x8x128xf32, #tpu.memory_space<vmem>>, vector<1x8x8x128xf32>,
    return
  }
  func.func @transform_0(%arg0: i32) -> (i32, i32, i32, i32) {
    %c0_i32 = arith.constant 0 : i32
    %c0_i32_0 = arith.constant 0 : i32
    %c0_i32_1 = arith.constant 0 : i32
    %c0_i32_2 = arith.constant 0 : i32
    return %arg0, %c0_i32, %c0_i32_0, %c0_i32_1 : i32, i32, i32, i32
  }
  func.func @transform_1(%arg0: i32) -> (i32, i32, i32) {
    %c0_i32 = arith.constant 0 : i32
    %c0_i32_0 = arith.constant 0 : i32
    %c0_i32_1 = arith.constant 0 : i32
    %c0_i32_2 = arith.constant 0 : i32
    return %c0_i32, %c0_i32_0, %c0_i32_1 : i32, i32, i32
  }
  func.func @transform_2(%arg0: i32) -> (i32, i32) {
    %c0_i32 = arith.constant 0 : i32
    %c0_i32_0 = arith.constant 0 : i32
    %c0_i32_1 = arith.constant 0 : i32
    return %c0_i32, %c0_i32_0 : i32, i32
  }
  func.func @transform_3(%arg0: i32) -> (i32, i32, i32, i32) {
    %c0_i32 = arith.constant 0 : i32
    %c0_i32_0 = arith.constant 0 : i32
    %c0_i32_1 = arith.constant 0 : i32
    %c0_i32_2 = arith.constant 0 : i32
    return %arg0, %c0_i32, %c0_i32_0, %c0_i32_1 : i32, i32, i32, i32
  }
}

</mosaic_0001>

<llo_original>
// kernel: tpu_custom_call.1
$region0: #{tpu_custom_call.1}
  #allocation0 [shape = 'u32[]', space=smem, size = 0x4, offset = 0x4, fixed_abs, tag = 'smem constant byte address 0x4 - core index']
  #allocation1 [shape = 'u32[144,128]{1,0:T(1,128)}', space=vmem, size = 0x12000, scoped, tag = 'internal scratch']
  %s0 = inlined_call_operand.vmem [shape: f32[2,20,20,128], index: 0, kind: input, shape index: {}]
  %s1 = inlined_call_operand.vmem [shape: f32[13,13,128], index: 1, kind: input, shape index: {}]
  %s2 = inlined_call_operand.vmem [shape: f32[1,128], index: 2, kind: input, shape index: {}]
  %s3 = inlined_call_operand.hbm [shape: f32[2,8,8,128], index: 3, kind: output, shape index: {}]
  %s4 = sld [smem:[#allocation0]]
  $region45: #{tpu_custom_call.1} parent=0
    _
  %s6 = ssub.s32 1, %s4
  %s7 = scalar_select 0, %s6, %s4
  $region1: #{tpu_custom_call.1} parent=0
    #allocation2 [shape = 'u8[65536]{0}', space=vmem, size = 0x10000, scoped, tag = 'output window, operand 0']
    #allocation3 [shape = 's32[2]{0}', space=sflag, size = 0x8, scoped, tag = 'scoped memory for tpu_custom_call.1']
    %8 = vsyncpa [#allocation3], 0
    %s9 = scalar_lea.sflag [#allocation3], 1
    %10 = vsyncpa %s9, 0
    loop: start=0, step=1, limit=4
    $region2: #{tpu_custom_call.1} parent=1 // loop_pre_header
      _
    $region3: #{tpu_custom_call.1} parent=1 // loop_header
      %s12 = sphi 0, %s16
      %p13 = scmp.ge.s32.totalorder %s12, 4
      %s22 = sphi 0, %s24
      %s25 = sphi 0, %s22
      %s26 = sphi 0, %s25
      %s42 = sphi 0, %s26
      %s46 = sphi 0, %s46
      %s48 = sphi 0, %s46
      %s49 = sphi 0, %s48
      %s63 = sphi 0, %s49
      %s67 = sphi 0, %s67
      %s69 = sphi 0, %s67
      %s70 = sphi 0, %s69
      %s84 = sphi 0, %s70
      %s90 = sphi 0, %s92
      %s93 = sphi 0, %s90
      %s94 = sphi 0, %s93
      %s110 = sphi 0, %s94
    $region4: #{tpu_custom_call.1} parent=1 // loop_header_branch
      %15 = sbr.rel (%p13) target = $region8
    $region5: #{tpu_custom_call.1} parent=1 // loop_body
      %s17 = ssub.s32 %s12, 1
      %s18 = ssub.s32 %s12, 2
      %s19 = sadd.s32 %s12, 1
      %s20 = ssub.s32 %s12, %s19
      %p21 = scmp.eq.s32.totalorder %s20, 0
      %s23 = sadd.s32 %s22, 1
      %s24 = scalar_select %p21, %s22, %s23
      %p27 = pneg %p21
      %p28 = scmp.eq.s32.totalorder %s12, 1
      %p29 = por %p27, %p28
      %p30 = scmp.ne.s32.totalorder %s22, %s25
      %p31 = scmp.eq.s32.totalorder %s12, 0
      %p32 = por %p30, %p31
      %p33 = scmp.ne.s32.totalorder %s22, %s25
      %p34 = scmp.eq.s32.totalorder %s17, 1
      %p35 = por %p33, %p34
      %p36 = scmp.ne.s32.totalorder %s25, %s26
      %p37 = scmp.eq.s32.totalorder %s17, 0
      %p38 = por %p36, %p37
      %p39 = scmp.ne.s32.totalorder %s25, %s26
      %p40 = scmp.eq.s32.totalorder %s18, 1
      %p41 = por %p39, %p40
      %p43 = scmp.ne.s32.totalorder %s26, %s42
      %p44 = scmp.eq.s32.totalorder %s18, 0
      %p45 = por %p43, %p44
      %s47 = sadd.s32 %s46, 1
      %p50 = scmp.eq.s32.totalorder %s12, 1
      %p51 = scmp.ne.s32.totalorder %s46, %s48
      %p52 = scmp.eq.s32.totalorder %s12, 0
      %p53 = por %p51, %p52
      %p54 = scmp.ne.s32.totalorder %s46, %s48
      %p55 = scmp.eq.s32.totalorder %s17, 1
      %p56 = por %p54, %p55
      %p57 = scmp.ne.s32.totalorder %s48, %s49
      %p58 = scmp.eq.s32.totalorder %s17, 0
      %p59 = por %p57, %p58
      %p60 = scmp.ne.s32.totalorder %s48, %s49
      %p61 = scmp.eq.s32.totalorder %s18, 1
      %p62 = por %p60, %p61
      %p64 = scmp.ne.s32.totalorder %s49, %s63
      %p65 = scmp.eq.s32.totalorder %s18, 0
      %p66 = por %p64, %p65
      %s68 = sadd.s32 %s67, 1
      %p71 = scmp.eq.s32.totalorder %s12, 1
      %p72 = scmp.ne.s32.totalorder %s67, %s69
      %p73 = scmp.eq.s32.totalorder %s12, 0
      %p74 = por %p72, %p73
      %p75 = scmp.ne.s32.totalorder %s67, %s69
      %p76 = scmp.eq.s32.totalorder %s17, 1
      %p77 = por %p75, %p76
      %p78 = scmp.ne.s32.totalorder %s69, %s70
      %p79 = scmp.eq.s32.totalorder %s17, 0
      %p80 = por %p78, %p79
      %p81 = scmp.ne.s32.totalorder %s69, %s70
      %p82 = scmp.eq.s32.totalorder %s18, 1
      %p83 = por %p81, %p82
      %p85 = scmp.ne.s32.totalorder %s70, %s84
      %p86 = scmp.eq.s32.totalorder %s18, 0
      %p87 = por %p85, %p86
      %s88 = ssub.s32 %s12, %s19
      %p89 = scmp.eq.s32.totalorder %s88, 0
      %s91 = sadd.s32 %s90, 1
      %s92 = scalar_select %p89, %s90, %s91
      %p95 = pneg %p89
      %p96 = scmp.eq.s32.totalorder %s12, 1
      %p97 = por %p95, %p96
      %p98 = scmp.ne.s32.totalorder %s90, %s93
      %p99 = scmp.eq.s32.totalorder %s12, 0
      %p100 = por %p98, %p99
      %p101 = scmp.ne.s32.totalorder %s90, %s93
      %p102 = scmp.eq.s32.totalorder %s17, 1
      %p103 = por %p101, %p102
      %p104 = scmp.ne.s32.totalorder %s93, %s94
      %p105 = scmp.eq.s32.totalorder %s17, 0
      %p106 = por %p104, %p105
      %p107 = scmp.ne.s32.totalorder %s93, %s94
      %p108 = scmp.eq.s32.totalorder %s18, 1
      %p109 = por %p107, %p108
      %p111 = scmp.ne.s32.totalorder %s94, %s110
      %p112 = scmp.eq.s32.totalorder %s18, 0
      %p113 = por %p111, %p112
      %p114 = scmp.le.s32.totalorder 1, %s12
      %p115 = scmp.lt.s32.totalorder %s12, 3
      %p116 = pnand %p114, %p115
      %p117 = pneg %p116
      // Predicated region
      $region9: #{tpu_custom_call.1} parent=5 // pred_check
        _
      $region10: #{tpu_custom_call.1} parent=5 // pred_check_branch
        %119 = sbr.rel (%p116) target = $region12
      $region11: #{tpu_custom_call.1} parent=5 // pred_region
        %s120 = ssub.s32 %s12, 1
        // Predicated region
        $region13: #{tpu_custom_call.1} parent=11 // pred_check
          %p121 = pneg %p59
        $region14: #{tpu_custom_call.1} parent=11 // pred_check_branch
          %123 = sbr.rel (%p121) target = $region16
        $region15: #{tpu_custom_call.1} parent=11 // pred_region
          _
        $region16: #{tpu_custom_call.1} parent=11 // pred_fallthru
          _
        // Predicated region
        $region17: #{tpu_custom_call.1} parent=11 // pred_check
          %p124 = pneg %p80
        $region18: #{tpu_custom_call.1} parent=11 // pred_check_branch
          %126 = sbr.rel (%p124) target = $region20
        $region19: #{tpu_custom_call.1} parent=11 // pred_region
          _
        $region20: #{tpu_custom_call.1} parent=11 // pred_fallthru
          _
      $region12: #{tpu_custom_call.1} parent=5 // pred_fallthru
        _
      %p127 = scmp.lt.s32.totalorder %s12, 2
      // Predicated region
      $region21: #{tpu_custom_call.1} parent=5 // pred_check
        %p128 = pneg %p127
      $region22: #{tpu_custom_call.1} parent=5 // pred_check_branch
        %130 = sbr.rel (%p128) target = $region24
      $region23: #{tpu_custom_call.1} parent=5 // pred_region
        // Predicated region
        $region25: #{tpu_custom_call.1} parent=23 // pred_check
          %p131 = pneg %p32
        $region26: #{tpu_custom_call.1} parent=23 // pred_check_branch
          %133 = sbr.rel (%p131) target = $region28
        $region27: #{tpu_custom_call.1} parent=23 // pred_region
          %p134 = scmp.lt.s32.totalorder %s12, 1
          %s135 = scalar_select %p134, %s12, 1
          %s136 = smul.addr %s135, 60
          %s137 = smul.addr %s136, 8
          %s138 = scalar_lea.vmem %s0, %s137
        $region28: #{tpu_custom_call.1} parent=23 // pred_fallthru
          _
      $region24: #{tpu_custom_call.1} parent=5 // pred_fallthru
        _
      %p139 = scmp.le.s32.totalorder 1, %s12
      %p140 = scmp.lt.s32.totalorder %s12, 3
      %p141 = pnand %p139, %p140
      %p142 = pneg %p141
      // Predicated region
      $region29: #{tpu_custom_call.1} parent=5 // pred_check
        _
      $region30: #{tpu_custom_call.1} parent=5 // pred_check_branch
        %144 = sbr.rel (%p141) target = $region32
      $region31: #{tpu_custom_call.1} parent=5 // pred_region
        %s145 = ssub.s32 %s12, 1
        %p146 = scmp.lt.s32.totalorder %s17, 1
        %s147 = scalar_select %p146, %s17, 1
        %s148 = smul.addr %s147, 60
        %s149 = smul.addr %s148, 8
        %s150 = scalar_lea.vmem %s0, %s149
        %p151 = pneg %p38
        %p152 = pneg %p35
        %p153 = pneg %p59
        %p154 = pneg %p56
        %p155 = pneg %p80
        %p156 = pneg %p77
        %p157 = pneg %p106
        %p158 = pneg %p103
        %s159 = sand.u32 %s93, 1
        %s160 = scalar_lea.sflag [#allocation3], %s159
        %s161 = sand.u32 %s93, 1
        %s162 = smul.addr %s161, 64
        %s163 = scalar_lea.vmem [#allocation2], %s162
        %p164 = scmp.lt.s32.totalorder %s17, 1
        %s165 = scalar_select %p164, %s17, 1
        %s166 = smul.addr %s165, 60
        %s167 = smul.addr %s166, 8
        %s168 = scalar_lea.vmem %s0, %s167
        %v169 = vld [vmem:[%s168] sm:$0xff]
        %v170 = vld [vmem:[%s168 + $0x18] sm:$0xff]
        %v171 = vld [vmem:[%s168 + $0x30] sm:$0xff]
        %v172 = vld [vmem:[%s168 + $0x48] sm:$0xff]
        %v173 = vld [vmem:[%s168 + $0x60] sm:$0xff]
        %v174 = vld [vmem:[%s168 + $0x78] sm:$0xff]
        %v175 = vld [vmem:[%s168 + $0x90] sm:$0xff]
        %v176 = vld [vmem:[%s168 + $0xa8] sm:$0xff]
        %v177 = vld [vmem:[%s1] sm:$0x1]
        %v178 = vlaneseq
        %v179 = vshrl.u32 %v178, 7
        %v180 = vsub.s32 0, %v179
        %v181 = vrot.slane %v177, %v180
        %v182 = vmul.f32 %v169, %v181
        %v183 = vmul.f32 %v170, %v181
        %v184 = vmul.f32 %v171, %v181
        %v185 = vmul.f32 %v172, %v181
        %v186 = vmul.f32 %v173, %v181
        %v187 = vmul.f32 %v174, %v181
        %v188 = vmul.f32 %v175, %v181
        %v189 = vmul.f32 %v176, %v181
        %v190 = vadd.f32 %v182, 0.0
        %v191 = vadd.f32 %v183, 0.0
        %v192 = vadd.f32 %v184, 0.0
        %v193 = vadd.f32 %v185, 0.0
        %v194 = vadd.f32 %v186, 0.0
        %v195 = vadd.f32 %v187, 0.0
        %v196 = vadd.f32 %v188, 0.0
        %v197 = vadd.f32 %v189, 0.0
        %v198 = vld [vmem:[%s168 + $0x1] sm:$0xff]
        %v199 = vld [vmem:[%s168 + $0x19] sm:$0xff]
        %v200 = vld [vmem:[%s168 + $0x31] sm:$0xff]
        %v201 = vld [vmem:[%s168 + $0x49] sm:$0xff]
        %v202 = vld [vmem:[%s168 + $0x61] sm:$0xff]
        %v203 = vld [vmem:[%s168 + $0x79] sm:$0xff]
        %v204 = vld [vmem:[%s168 + $0x91] sm:$0xff]
        %v205 = vld [vmem:[%s168 + $0xa9] sm:$0xff]
        %v206 = vld [vmem:[%s1 + $0x1] sm:$0x1]
        %v207 = vlaneseq
        %v208 = vshrl.u32 %v207, 7
        %v209 = vsub.s32 0, %v208
        %v210 = vrot.slane %v206, %v209
        %v211 = vmul.f32 %v198, %v210
        %v212 = vmul.f32 %v199, %v210
        %v213 = vmul.f32 %v200, %v210
        %v214 = vmul.f32 %v201, %v210
        %v215 = vmul.f32 %v202, %v210
        %v216 = vmul.f32 %v203, %v210
        %v217 = vmul.f32 %v204, %v210
        %v218 = vmul.f32 %v205, %v210
        %v219 = vadd.f32 %v190, %v211
        %v220 = vadd.f32 %v191, %v212
        %v221 = vadd.f32 %v192, %v213
        %v222 = vadd.f32 %v193, %v214
        %v223 = vadd.f32 %v194, %v215
        %v224 = vadd.f32 %v195, %v216
        %v225 = vadd.f32 %v196, %v217
        %v226 = vadd.f32 %v197, %v218
        %v227 = vld [vmem:[%s168 + $0x2] sm:$0xff]
        %v228 = vld [vmem:[%s168 + $0x1a] sm:$0xff]
        %v229 = vld [vmem:[%s168 + $0x32] sm:$0xff]
        %v230 = vld [vmem:[%s168 + $0x4a] sm:$0xff]
        %v231 = vld [vmem:[%s168 + $0x62] sm:$0xff]
        %v232 = vld [vmem:[%s168 + $0x7a] sm:$0xff]
        %v233 = vld [vmem:[%s168 + $0x92] sm:$0xff]
        %v234 = vld [vmem:[%s168 + $0xaa] sm:$0xff]
        %v235 = vld [vmem:[%s1 + $0x2] sm:$0x1]
        %v236 = vlaneseq
        %v237 = vshrl.u32 %v236, 7
        %v238 = vsub.s32 0, %v237
        %v239 = vrot.slane %v235, %v238
        %v240 = vmul.f32 %v227, %v239
        %v241 = vmul.f32 %v228, %v239
        %v242 = vmul.f32 %v229, %v239
        %v243 = vmul.f32 %v230, %v239
        %v244 = vmul.f32 %v231, %v239
        %v245 = vmul.f32 %v232, %v239
        %v246 = vmul.f32 %v233, %v239
        %v247 = vmul.f32 %v234, %v239
        %v248 = vadd.f32 %v219, %v240
        %v249 = vadd.f32 %v220, %v241
        %v250 = vadd.f32 %v221, %v242
        %v251 = vadd.f32 %v222, %v243
        %v252 = vadd.f32 %v223, %v244
        %v253 = vadd.f32 %v224, %v245
        %v254 = vadd.f32 %v225, %v246
        %v255 = vadd.f32 %v226, %v247
        %v256 = vld [vmem:[%s168 + $0x3] sm:$0xff]
        %v257 = vld [vmem:[%s168 + $0x1b] sm:$0xff]
        %v258 = vld [vmem:[%s168 + $0x33] sm:$0xff]
        %v259 = vld [vmem:[%s168 + $0x4b] sm:$0xff]
        %v260 = vld [vmem:[%s168 + $0x63] sm:$0xff]
        %v261 = vld [vmem:[%s168 + $0x7b] sm:$0xff]
        %v262 = vld [vmem:[%s168 + $0x93] sm:$0xff]
        %v263 = vld [vmem:[%s168 + $0xab] sm:$0xff]
        %v264 = vld [vmem:[%s1 + $0x3] sm:$0x1]
        %v265 = vlaneseq
        %v266 = vshrl.u32 %v265, 7
        %v267 = vsub.s32 0, %v266
        %v268 = vrot.slane %v264, %v267
        %v269 = vmul.f32 %v256, %v268
        %v270 = vmul.f32 %v257, %v268
        %v271 = vmul.f32 %v258, %v268
        %v272 = vmul.f32 %v259, %v268
        %v273 = vmul.f32 %v260, %v268
        %v274 = vmul.f32 %v261, %v268
        %v275 = vmul.f32 %v262, %v268
        %v276 = vmul.f32 %v263, %v268
        %v277 = vadd.f32 %v248, %v269
        %v278 = vadd.f32 %v249, %v270
        %v279 = vadd.f32 %v250, %v271
        %v280 = vadd.f32 %v251, %v272
        %v281 = vadd.f32 %v252, %v273
        %v282 = vadd.f32 %v253, %v274
        %v283 = vadd.f32 %v254, %v275
        %v284 = vadd.f32 %v255, %v276
        %v285 = vld [vmem:[%s168 + $0x4] sm:$0xff]
        %v286 = vld [vmem:[%s168 + $0x1c] sm:$0xff]
        %v287 = vld [vmem:[%s168 + $0x34] sm:$0xff]
        %v288 = vld [vmem:[%s168 + $0x4c] sm:$0xff]
        %v289 = vld [vmem:[%s168 + $0x64] sm:$0xff]
        %v290 = vld [vmem:[%s168 + $0x7c] sm:$0xff]
        %v291 = vld [vmem:[%s168 + $0x94] sm:$0xff]
        %v292 = vld [vmem:[%s168 + $0xac] sm:$0xff]
        %v293 = vld [vmem:[%s1 + $0x4] sm:$0x1]
        %v294 = vlaneseq
        %v295 = vshrl.u32 %v294, 7
        %v296 = vsub.s32 0, %v295
        %v297 = vrot.slane %v293, %v296
        %v298 = vmul.f32 %v285, %v297
        %v299 = vmul.f32 %v286, %v297
        %v300 = vmul.f32 %v287, %v297
        %v301 = vmul.f32 %v288, %v297
        %v302 = vmul.f32 %v289, %v297
        %v303 = vmul.f32 %v290, %v297
        %v304 = vmul.f32 %v291, %v297
        %v305 = vmul.f32 %v292, %v297
        %v306 = vadd.f32 %v277, %v298
        %v307 = vadd.f32 %v278, %v299
        %v308 = vadd.f32 %v279, %v300
        %v309 = vadd.f32 %v280, %v301
        %v310 = vadd.f32 %v281, %v302
        %v311 = vadd.f32 %v282, %v303
        %v312 = vadd.f32 %v283, %v304
        %v313 = vadd.f32 %v284, %v305
        %v314 = vld [vmem:[%s168 + $0x5] sm:$0xff]
        %v315 = vld [vmem:[%s168 + $0x1d] sm:$0xff]
        %v316 = vld [vmem:[%s168 + $0x35] sm:$0xff]
        %v317 = vld [vmem:[%s168 + $0x4d] sm:$0xff]
        %v318 = vld [vmem:[%s168 + $0x65] sm:$0xff]
        %v319 = vld [vmem:[%s168 + $0x7d] sm:$0xff]
        %v320 = vld [vmem:[%s168 + $0x95] sm:$0xff]
        %v321 = vld [vmem:[%s168 + $0xad] sm:$0xff]
        %v322 = vld [vmem:[%s1 + $0x5] sm:$0x1]
        %v323 = vlaneseq
        %v324 = vshrl.u32 %v323, 7
        %v325 = vsub.s32 0, %v324
        %v326 = vrot.slane %v322, %v325
        %v327 = vmul.f32 %v314, %v326
        %v328 = vmul.f32 %v315, %v326
        %v329 = vmul.f32 %v316, %v326
        %v330 = vmul.f32 %v317, %v326
        %v331 = vmul.f32 %v318, %v326
        %v332 = vmul.f32 %v319, %v326
        %v333 = vmul.f32 %v320, %v326
        %v334 = vmul.f32 %v321, %v326
        %v335 = vadd.f32 %v306, %v327
        %v336 = vadd.f32 %v307, %v328
        %v337 = vadd.f32 %v308, %v329
        %v338 = vadd.f32 %v309, %v330
        %v339 = vadd.f32 %v310, %v331
        %v340 = vadd.f32 %v311, %v332
        %v341 = vadd.f32 %v312, %v333
        %v342 = vadd.f32 %v313, %v334
        %v343 = vld [vmem:[%s168 + $0x6] sm:$0xff]
        %v344 = vld [vmem:[%s168 + $0x1e] sm:$0xff]
        %v345 = vld [vmem:[%s168 + $0x36] sm:$0xff]
        %v346 = vld [vmem:[%s168 + $0x4e] sm:$0xff]
        %v347 = vld [vmem:[%s168 + $0x66] sm:$0xff]
        %v348 = vld [vmem:[%s168 + $0x7e] sm:$0xff]
        %v349 = vld [vmem:[%s168 + $0x96] sm:$0xff]
        %v350 = vld [vmem:[%s168 + $0xae] sm:$0xff]
        %v351 = vld [vmem:[%s1 + $0x6] sm:$0x1]
        %v352 = vlaneseq
        %v353 = vshrl.u32 %v352, 7
        %v354 = vsub.s32 0, %v353
        %v355 = vrot.slane %v351, %v354
        %v356 = vmul.f32 %v343, %v355
        %v357 = vmul.f32 %v344, %v355
        %v358 = vmul.f32 %v345, %v355
        %v359 = vmul.f32 %v346, %v355
        %v360 = vmul.f32 %v347, %v355
        %v361 = vmul.f32 %v348, %v355
        %v362 = vmul.f32 %v349, %v355
        %v363 = vmul.f32 %v350, %v355
        %v364 = vadd.f32 %v335, %v356
        %v365 = vadd.f32 %v336, %v357
        %v366 = vadd.f32 %v337, %v358
        %v367 = vadd.f32 %v338, %v359
        %v368 = vadd.f32 %v339, %v360
        %v369 = vadd.f32 %v340, %v361
        %v370 = vadd.f32 %v341, %v362
        %v371 = vadd.f32 %v342, %v363
        %v372 = vld [vmem:[%s168 + $0x7] sm:$0xff]
        %v373 = vld [vmem:[%s168 + $0x1f] sm:$0xff]
        %v374 = vld [vmem:[%s168 + $0x37] sm:$0xff]
        %v375 = vld [vmem:[%s168 + $0x4f] sm:$0xff]
        %v376 = vld [vmem:[%s168 + $0x67] sm:$0xff]
        %v377 = vld [vmem:[%s168 + $0x7f] sm:$0xff]
        %v378 = vld [vmem:[%s168 + $0x97] sm:$0xff]
        %v379 = vld [vmem:[%s168 + $0xaf] sm:$0xff]
        %v380 = vld [vmem:[%s1 + $0x7] sm:$0x1]
        %v381 = vlaneseq
        %v382 = vshrl.u32 %v381, 7
        %v383 = vsub.s32 0, %v382
        %v384 = vrot.slane %v380, %v383
        %v385 = vmul.f32 %v372, %v384
        %v386 = vmul.f32 %v373, %v384
        %v387 = vmul.f32 %v374, %v384
        %v388 = vmul.f32 %v375, %v384
        %v389 = vmul.f32 %v376, %v384
        %v390 = vmul.f32 %v377, %v384
        %v391 = vmul.f32 %v378, %v384
        %v392 = vmul.f32 %v379, %v384
        %v393 = vadd.f32 %v364, %v385
        %v394 = vadd.f32 %v365, %v386
        %v395 = vadd.f32 %v366, %v387
        %v396 = vadd.f32 %v367, %v388
        %v397 = vadd.f32 %v368, %v389
        %v398 = vadd.f32 %v369, %v390
        %v399 = vadd.f32 %v370, %v391
        %v400 = vadd.f32 %v371, %v392
        %v401 = vld [vmem:[%s168 + $0x8] sm:$0xff]
        %v402 = vld [vmem:[%s168 + $0x20] sm:$0xff]
        %v403 = vld [vmem:[%s168 + $0x38] sm:$0xff]
        %v404 = vld [vmem:[%s168 + $0x50] sm:$0xff]
        %v405 = vld [vmem:[%s168 + $0x68] sm:$0xff]
        %v406 = vld [vmem:[%s168 + $0x80] sm:$0xff]
        %v407 = vld [vmem:[%s168 + $0x98] sm:$0xff]
        %v408 = vld [vmem:[%s168 + $0xb0] sm:$0xff]
        %v409 = vld [vmem:[%s1 + $0x8] sm:$0x1]
        %v410 = vlaneseq
        %v411 = vshrl.u32 %v410, 7
        %v412 = vsub.s32 0, %v411
        %v413 = vrot.slane %v409, %v412
        %v414 = vmul.f32 %v401, %v413
        %v415 = vmul.f32 %v402, %v413
        %v416 = vmul.f32 %v403, %v413
        %v417 = vmul.f32 %v404, %v413
        %v418 = vmul.f32 %v405, %v413
        %v419 = vmul.f32 %v406, %v413
        %v420 = vmul.f32 %v407, %v413
        %v421 = vmul.f32 %v408, %v413
        %v422 = vadd.f32 %v393, %v414
        %v423 = vadd.f32 %v394, %v415
        %v424 = vadd.f32 %v395, %v416
        %v425 = vadd.f32 %v396, %v417
        %v426 = vadd.f32 %v397, %v418
        %v427 = vadd.f32 %v398, %v419
        %v428 = vadd.f32 %v399, %v420
        %v429 = vadd.f32 %v400, %v421
        %v430 = vld [vmem:[%s168 + $0x9] sm:$0xff]
        %v431 = vld [vmem:[%s168 + $0x21] sm:$0xff]
        %v432 = vld [vmem:[%s168 + $0x39] sm:$0xff]
        %v433 = vld [vmem:[%s168 + $0x51] sm:$0xff]
        %v434 = vld [vmem:[%s168 + $0x69] sm:$0xff]
        %v435 = vld [vmem:[%s168 + $0x81] sm:$0xff]
        %v436 = vld [vmem:[%s168 + $0x99] sm:$0xff]
        %v437 = vld [vmem:[%s168 + $0xb1] sm:$0xff]
        %v438 = vld [vmem:[%s1 + $0x9] sm:$0x1]
        %v439 = vlaneseq
        %v440 = vshrl.u32 %v439, 7
        %v441 = vsub.s32 0, %v440
        %v442 = vrot.slane %v438, %v441
        %v443 = vmul.f32 %v430, %v442
        %v444 = vmul.f32 %v431, %v442
        %v445 = vmul.f32 %v432, %v442
        %v446 = vmul.f32 %v433, %v442
        %v447 = vmul.f32 %v434, %v442
        %v448 = vmul.f32 %v435, %v442
        %v449 = vmul.f32 %v436, %v442
        %v450 = vmul.f32 %v437, %v442
        %v451 = vadd.f32 %v422, %v443
        %v452 = vadd.f32 %v423, %v444
        %v453 = vadd.f32 %v424, %v445
        %v454 = vadd.f32 %v425, %v446
        %v455 = vadd.f32 %v426, %v447
        %v456 = vadd.f32 %v427, %v448
        %v457 = vadd.f32 %v428, %v449
        %v458 = vadd.f32 %v429, %v450
        %v459 = vld [vmem:[%s168 + $0xa] sm:$0xff]
        %v460 = vld [vmem:[%s168 + $0x22] sm:$0xff]
        %v461 = vld [vmem:[%s168 + $0x3a] sm:$0xff]
        %v462 = vld [vmem:[%s168 + $0x52] sm:$0xff]
        %v463 = vld [vmem:[%s168 + $0x6a] sm:$0xff]
        %v464 = vld [vmem:[%s168 + $0x82] sm:$0xff]
        %v465 = vld [vmem:[%s168 + $0x9a] sm:$0xff]
        %v466 = vld [vmem:[%s168 + $0xb2] sm:$0xff]
        %v467 = vld [vmem:[%s1 + $0xa] sm:$0x1]
        %v468 = vlaneseq
        %v469 = vshrl.u32 %v468, 7
        %v470 = vsub.s32 0, %v469
        %v471 = vrot.slane %v467, %v470
        %v472 = vmul.f32 %v459, %v471
        %v473 = vmul.f32 %v460, %v471
        %v474 = vmul.f32 %v461, %v471
        %v475 = vmul.f32 %v462, %v471
        %v476 = vmul.f32 %v463, %v471
        %v477 = vmul.f32 %v464, %v471
        %v478 = vmul.f32 %v465, %v471
        %v479 = vmul.f32 %v466, %v471
        %v480 = vadd.f32 %v451, %v472
        %v481 = vadd.f32 %v452, %v473
        %v482 = vadd.f32 %v453, %v474
        %v483 = vadd.f32 %v454, %v475
        %v484 = vadd.f32 %v455, %v476
        %v485 = vadd.f32 %v456, %v477
        %v486 = vadd.f32 %v457, %v478
        %v487 = vadd.f32 %v458, %v479
        %v488 = vld [vmem:[%s168 + $0xb] sm:$0xff]
        %v489 = vld [vmem:[%s168 + $0x23] sm:$0xff]
        %v490 = vld [vmem:[%s168 + $0x3b] sm:$0xff]
        %v491 = vld [vmem:[%s168 + $0x53] sm:$0xff]
        %v492 = vld [vmem:[%s168 + $0x6b] sm:$0xff]
        %v493 = vld [vmem:[%s168 + $0x83] sm:$0xff]
        %v494 = vld [vmem:[%s168 + $0x9b] sm:$0xff]
        %v495 = vld [vmem:[%s168 + $0xb3] sm:$0xff]
        %v496 = vld [vmem:[%s1 + $0xb] sm:$0x1]
        %v497 = vlaneseq
        %v498 = vshrl.u32 %v497, 7
        %v499 = vsub.s32 0, %v498
        %v500 = vrot.slane %v496, %v499
        %v501 = vmul.f32 %v488, %v500
        %v502 = vmul.f32 %v489, %v500
        %v503 = vmul.f32 %v490, %v500
        %v504 = vmul.f32 %v491, %v500
        %v505 = vmul.f32 %v492, %v500
        %v506 = vmul.f32 %v493, %v500
        %v507 = vmul.f32 %v494, %v500
        %v508 = vmul.f32 %v495, %v500
        %v509 = vadd.f32 %v480, %v501
        %v510 = vadd.f32 %v481, %v502
        %v511 = vadd.f32 %v482, %v503
        %v512 = vadd.f32 %v483, %v504
        %v513 = vadd.f32 %v484, %v505
        %v514 = vadd.f32 %v485, %v506
        %v515 = vadd.f32 %v486, %v507
        %v516 = vadd.f32 %v487, %v508
        %v517 = vld [vmem:[%s168 + $0xc] sm:$0xff]
        %v518 = vld [vmem:[%s168 + $0x24] sm:$0xff]
        %v519 = vld [vmem:[%s168 + $0x3c] sm:$0xff]
        %v520 = vld [vmem:[%s168 + $0x54] sm:$0xff]
        %v521 = vld [vmem:[%s168 + $0x6c] sm:$0xff]
        %v522 = vld [vmem:[%s168 + $0x84] sm:$0xff]
        %v523 = vld [vmem:[%s168 + $0x9c] sm:$0xff]
        %v524 = vld [vmem:[%s168 + $0xb4] sm:$0xff]
        %v525 = vld [vmem:[%s1 + $0xc] sm:$0x1]
        %v526 = vlaneseq
        %v527 = vshrl.u32 %v526, 7
        %v528 = vsub.s32 0, %v527
        %v529 = vrot.slane %v525, %v528
        %v530 = vmul.f32 %v517, %v529
        %v531 = vmul.f32 %v518, %v529
        %v532 = vmul.f32 %v519, %v529
        %v533 = vmul.f32 %v520, %v529
        %v534 = vmul.f32 %v521, %v529
        %v535 = vmul.f32 %v522, %v529
        %v536 = vmul.f32 %v523, %v529
        %v537 = vmul.f32 %v524, %v529
        %v538 = vadd.f32 %v509, %v530
        %v539 = vadd.f32 %v510, %v531
        %v540 = vadd.f32 %v511, %v532
        %v541 = vadd.f32 %v512, %v533
        %v542 = vadd.f32 %v513, %v534
        %v543 = vadd.f32 %v514, %v535
        %v544 = vadd.f32 %v515, %v536
        %v545 = vadd.f32 %v516, %v537
        %s546 = scalar_lea.vmem %s168, 24
        %v547 = vld [vmem:[%s546] sm:$0xff]
        %v548 = vld [vmem:[%s546 + $0x18] sm:$0xff]
        %v549 = vld [vmem:[%s546 + $0x30] sm:$0xff]
        %v550 = vld [vmem:[%s546 + $0x48] sm:$0xff]
        %v551 = vld [vmem:[%s546 + $0x60] sm:$0xff]
        %v552 = vld [vmem:[%s546 + $0x78] sm:$0xff]
        %v553 = vld [vmem:[%s546 + $0x90] sm:$0xff]
        %v554 = vld [vmem:[%s546 + $0xa8] sm:$0xff]
        %s555 = scalar_lea.vmem %s1, 16
        %v556 = vld [vmem:[%s555] sm:$0x1]
        %v557 = vlaneseq
        %v558 = vshrl.u32 %v557, 7
        %v559 = vsub.s32 0, %v558
        %v560 = vrot.slane %v556, %v559
        %v561 = vmul.f32 %v547, %v560
        %v562 = vmul.f32 %v548, %v560
        %v563 = vmul.f32 %v549, %v560
        %v564 = vmul.f32 %v550, %v560
        %v565 = vmul.f32 %v551, %v560
        %v566 = vmul.f32 %v552, %v560
        %v567 = vmul.f32 %v553, %v560
        %v568 = vmul.f32 %v554, %v560
        %v569 = vadd.f32 %v538, %v561
        %v570 = vadd.f32 %v539, %v562
        %v571 = vadd.f32 %v540, %v563
        %v572 = vadd.f32 %v541, %v564
        %v573 = vadd.f32 %v542, %v565
        %v574 = vadd.f32 %v543, %v566
        %v575 = vadd.f32 %v544, %v567
        %v576 = vadd.f32 %v545, %v568
        %v577 = vld [vmem:[%s546 + $0x1] sm:$0xff]
        %v578 = vld [vmem:[%s546 + $0x19] sm:$0xff]
        %v579 = vld [vmem:[%s546 + $0x31] sm:$0xff]
        %v580 = vld [vmem:[%s546 + $0x49] sm:$0xff]
        %v581 = vld [vmem:[%s546 + $0x61] sm:$0xff]
        %v582 = vld [vmem:[%s546 + $0x79] sm:$0xff]
        %v583 = vld [vmem:[%s546 + $0x91] sm:$0xff]
        %v584 = vld [vmem:[%s546 + $0xa9] sm:$0xff]
        %v585 = vld [vmem:[%s555 + $0x1] sm:$0x1]
        %v586 = vlaneseq
        %v587 = vshrl.u32 %v586, 7
        %v588 = vsub.s32 0, %v587
        %v589 = vrot.slane %v585, %v588
        %v590 = vmul.f32 %v577, %v589
        %v591 = vmul.f32 %v578, %v589
        %v592 = vmul.f32 %v579, %v589
        %v593 = vmul.f32 %v580, %v589
        %v594 = vmul.f32 %v581, %v589
        %v595 = vmul.f32 %v582, %v589
        %v596 = vmul.f32 %v583, %v589
        %v597 = vmul.f32 %v584, %v589
        %v598 = vadd.f32 %v569, %v590
        %v599 = vadd.f32 %v570, %v591
        %v600 = vadd.f32 %v571, %v592
        %v601 = vadd.f32 %v572, %v593
        %v602 = vadd.f32 %v573, %v594
        %v603 = vadd.f32 %v574, %v595
        %v604 = vadd.f32 %v575, %v596
        %v605 = vadd.f32 %v576, %v597
        %v606 = vld [vmem:[%s546 + $0x2] sm:$0xff]
        %v607 = vld [vmem:[%s546 + $0x1a] sm:$0xff]
        %v608 = vld [vmem:[%s546 + $0x32] sm:$0xff]
        %v609 = vld [vmem:[%s546 + $0x4a] sm:$0xff]
        %v610 = vld [vmem:[%s546 + $0x62] sm:$0xff]
        %v611 = vld [vmem:[%s546 + $0x7a] sm:$0xff]
        %v612 = vld [vmem:[%s546 + $0x92] sm:$0xff]
        %v613 = vld [vmem:[%s546 + $0xaa] sm:$0xff]
        %v614 = vld [vmem:[%s555 + $0x2] sm:$0x1]
        %v615 = vlaneseq
        %v616 = vshrl.u32 %v615, 7
        %v617 = vsub.s32 0, %v616
        %v618 = vrot.slane %v614, %v617
        %v619 = vmul.f32 %v606, %v618
        %v620 = vmul.f32 %v607, %v618
        %v621 = vmul.f32 %v608, %v618
        %v622 = vmul.f32 %v609, %v618
        %v623 = vmul.f32 %v610, %v618
        %v624 = vmul.f32 %v611, %v618
        %v625 = vmul.f32 %v612, %v618
        %v626 = vmul.f32 %v613, %v618
        %v627 = vadd.f32 %v598, %v619
        %v628 = vadd.f32 %v599, %v620
        %v629 = vadd.f32 %v600, %v621
        %v630 = vadd.f32 %v601, %v622
        %v631 = vadd.f32 %v602, %v623
        %v632 = vadd.f32 %v603, %v624
        %v633 = vadd.f32 %v604, %v625
        %v634 = vadd.f32 %v605, %v626
        %v635 = vld [vmem:[%s546 + $0x3] sm:$0xff]
        %v636 = vld [vmem:[%s546 + $0x1b] sm:$0xff]
        %v637 = vld [vmem:[%s546 + $0x33] sm:$0xff]
        %v638 = vld [vmem:[%s546 + $0x4b] sm:$0xff]
        %v639 = vld [vmem:[%s546 + $0x63] sm:$0xff]
        %v640 = vld [vmem:[%s546 + $0x7b] sm:$0xff]
        %v641 = vld [vmem:[%s546 + $0x93] sm:$0xff]
        %v642 = vld [vmem:[%s546 + $0xab] sm:$0xff]
        %v643 = vld [vmem:[%s555 + $0x3] sm:$0x1]
        %v644 = vlaneseq
        %v645 = vshrl.u32 %v644, 7
        %v646 = vsub.s32 0, %v645
        %v647 = vrot.slane %v643, %v646
        %v648 = vmul.f32 %v635, %v647
        %v649 = vmul.f32 %v636, %v647
        %v650 = vmul.f32 %v637, %v647
        %v651 = vmul.f32 %v638, %v647
        %v652 = vmul.f32 %v639, %v647
        %v653 = vmul.f32 %v640, %v647
        %v654 = vmul.f32 %v641, %v647
        %v655 = vmul.f32 %v642, %v647
        %v656 = vadd.f32 %v627, %v648
        %v657 = vadd.f32 %v628, %v649
        %v658 = vadd.f32 %v629, %v650
        %v659 = vadd.f32 %v630, %v651
        %v660 = vadd.f32 %v631, %v652
        %v661 = vadd.f32 %v632, %v653
        %v662 = vadd.f32 %v633, %v654
        %v663 = vadd.f32 %v634, %v655
        %v664 = vld [vmem:[%s546 + $0x4] sm:$0xff]
        %v665 = vld [vmem:[%s546 + $0x1c] sm:$0xff]
        %v666 = vld [vmem:[%s546 + $0x34] sm:$0xff]
        %v667 = vld [vmem:[%s546 + $0x4c] sm:$0xff]
        %v668 = vld [vmem:[%s546 + $0x64] sm:$0xff]
        %v669 = vld [vmem:[%s546 + $0x7c] sm:$0xff]
        %v670 = vld [vmem:[%s546 + $0x94] sm:$0xff]
        %v671 = vld [vmem:[%s546 + $0xac] sm:$0xff]
        %v672 = vld [vmem:[%s555 + $0x4] sm:$0x1]
        %v673 = vlaneseq
        %v674 = vshrl.u32 %v673, 7
        %v675 = vsub.s32 0, %v674
        %v676 = vrot.slane %v672, %v675
        %v677 = vmul.f32 %v664, %v676
        %v678 = vmul.f32 %v665, %v676
        %v679 = vmul.f32 %v666, %v676
        %v680 = vmul.f32 %v667, %v676
        %v681 = vmul.f32 %v668, %v676
        %v682 = vmul.f32 %v669, %v676
        %v683 = vmul.f32 %v670, %v676
        %v684 = vmul.f32 %v671, %v676
        %v685 = vadd.f32 %v656, %v677
        %v686 = vadd.f32 %v657, %v678
        %v687 = vadd.f32 %v658, %v679
        %v688 = vadd.f32 %v659, %v680
        %v689 = vadd.f32 %v660, %v681
        %v690 = vadd.f32 %v661, %v682
        %v691 = vadd.f32 %v662, %v683
        %v692 = vadd.f32 %v663, %v684
        %v693 = vld [vmem:[%s546 + $0x5] sm:$0xff]
        %v694 = vld [vmem:[%s546 + $0x1d] sm:$0xff]
        %v695 = vld [vmem:[%s546 + $0x35] sm:$0xff]
        %v696 = vld [vmem:[%s546 + $0x4d] sm:$0xff]
        %v697 = vld [vmem:[%s546 + $0x65] sm:$0xff]
        %v698 = vld [vmem:[%s546 + $0x7d] sm:$0xff]
        %v699 = vld [vmem:[%s546 + $0x95] sm:$0xff]
        %v700 = vld [vmem:[%s546 + $0xad] sm:$0xff]
        %v701 = vld [vmem:[%s555 + $0x5] sm:$0x1]
        %v702 = vlaneseq
        %v703 = vshrl.u32 %v702, 7
        %v704 = vsub.s32 0, %v703
        %v705 = vrot.slane %v701, %v704
        %v706 = vmul.f32 %v693, %v705
        %v707 = vmul.f32 %v694, %v705
        %v708 = vmul.f32 %v695, %v705
        %v709 = vmul.f32 %v696, %v705
        %v710 = vmul.f32 %v697, %v705
        %v711 = vmul.f32 %v698, %v705
        %v712 = vmul.f32 %v699, %v705
        %v713 = vmul.f32 %v700, %v705
        %v714 = vadd.f32 %v685, %v706
        %v715 = vadd.f32 %v686, %v707
        %v716 = vadd.f32 %v687, %v708
        %v717 = vadd.f32 %v688, %v709
        %v718 = vadd.f32 %v689, %v710
        %v719 = vadd.f32 %v690, %v711
        %v720 = vadd.f32 %v691, %v712
        %v721 = vadd.f32 %v692, %v713
        %v722 = vld [vmem:[%s546 + $0x6] sm:$0xff]
        %v723 = vld [vmem:[%s546 + $0x1e] sm:$0xff]
        %v724 = vld [vmem:[%s546 + $0x36] sm:$0xff]
        %v725 = vld [vmem:[%s546 + $0x4e] sm:$0xff]
        %v726 = vld [vmem:[%s546 + $0x66] sm:$0xff]
        %v727 = vld [vmem:[%s546 + $0x7e] sm:$0xff]
        %v728 = vld [vmem:[%s546 + $0x96] sm:$0xff]
        %v729 = vld [vmem:[%s546 + $0xae] sm:$0xff]
        %v730 = vld [vmem:[%s555 + $0x6] sm:$0x1]
        %v731 = vlaneseq
        %v732 = vshrl.u32 %v731, 7
        %v733 = vsub.s32 0, %v732
        %v734 = vrot.slane %v730, %v733
        %v735 = vmul.f32 %v722, %v734
        %v736 = vmul.f32 %v723, %v734
        %v737 = vmul.f32 %v724, %v734
        %v738 = vmul.f32 %v725, %v734
        %v739 = vmul.f32 %v726, %v734
        %v740 = vmul.f32 %v727, %v734
        %v741 = vmul.f32 %v728, %v734
        %v742 = vmul.f32 %v729, %v734
        %v743 = vadd.f32 %v714, %v735
        %v744 = vadd.f32 %v715, %v736
        %v745 = vadd.f32 %v716, %v737
        %v746 = vadd.f32 %v717, %v738
        %v747 = vadd.f32 %v718, %v739
        %v748 = vadd.f32 %v719, %v740
        %v749 = vadd.f32 %v720, %v741
        %v750 = vadd.f32 %v721, %v742
        %v751 = vld [vmem:[%s546 + $0x7] sm:$0xff]
        %v752 = vld [vmem:[%s546 + $0x1f] sm:$0xff]
        %v753 = vld [vmem:[%s546 + $0x37] sm:$0xff]
        %v754 = vld [vmem:[%s546 + $0x4f] sm:$0xff]
        %v755 = vld [vmem:[%s546 + $0x67] sm:$0xff]
        %v756 = vld [vmem:[%s546 + $0x7f] sm:$0xff]
        %v757 = vld [vmem:[%s546 + $0x97] sm:$0xff]
        %v758 = vld [vmem:[%s546 + $0xaf] sm:$0xff]
        %v759 = vld [vmem:[%s555 + $0x7] sm:$0x1]
        %v760 = vlaneseq
        %v761 = vshrl.u32 %v760, 7
        %v762 = vsub.s32 0, %v761
        %v763 = vrot.slane %v759, %v762
        %v764 = vmul.f32 %v751, %v763
        %v765 = vmul.f32 %v752, %v763
        %v766 = vmul.f32 %v753, %v763
        %v767 = vmul.f32 %v754, %v763
        %v768 = vmul.f32 %v755, %v763
        %v769 = vmul.f32 %v756, %v763
        %v770 = vmul.f32 %v757, %v763
        %v771 = vmul.f32 %v758, %v763
        %v772 = vadd.f32 %v743, %v764
        %v773 = vadd.f32 %v744, %v765
        %v774 = vadd.f32 %v745, %v766
        %v775 = vadd.f32 %v746, %v767
        %v776 = vadd.f32 %v747, %v768
        %v777 = vadd.f32 %v748, %v769
        %v778 = vadd.f32 %v749, %v770
        %v779 = vadd.f32 %v750, %v771
        %v780 = vld [vmem:[%s546 + $0x8] sm:$0xff]
        %v781 = vld [vmem:[%s546 + $0x20] sm:$0xff]
        %v782 = vld [vmem:[%s546 + $0x38] sm:$0xff]
        %v783 = vld [vmem:[%s546 + $0x50] sm:$0xff]
        %v784 = vld [vmem:[%s546 + $0x68] sm:$0xff]
        %v785 = vld [vmem:[%s546 + $0x80] sm:$0xff]
        %v786 = vld [vmem:[%s546 + $0x98] sm:$0xff]
        %v787 = vld [vmem:[%s546 + $0xb0] sm:$0xff]
        %v788 = vld [vmem:[%s555 + $0x8] sm:$0x1]
        %v789 = vlaneseq
        %v790 = vshrl.u32 %v789, 7
        %v791 = vsub.s32 0, %v790
        %v792 = vrot.slane %v788, %v791
        %v793 = vmul.f32 %v780, %v792
        %v794 = vmul.f32 %v781, %v792
        %v795 = vmul.f32 %v782, %v792
        %v796 = vmul.f32 %v783, %v792
        %v797 = vmul.f32 %v784, %v792
        %v798 = vmul.f32 %v785, %v792
        %v799 = vmul.f32 %v786, %v792
        %v800 = vmul.f32 %v787, %v792
        %v801 = vadd.f32 %v772, %v793
        %v802 = vadd.f32 %v773, %v794
        %v803 = vadd.f32 %v774, %v795
        %v804 = vadd.f32 %v775, %v796
        %v805 = vadd.f32 %v776, %v797
        %v806 = vadd.f32 %v777, %v798
        %v807 = vadd.f32 %v778, %v799
        %v808 = vadd.f32 %v779, %v800
        %v809 = vld [vmem:[%s546 + $0x9] sm:$0xff]
        %v810 = vld [vmem:[%s546 + $0x21] sm:$0xff]
        %v811 = vld [vmem:[%s546 + $0x39] sm:$0xff]
        %v812 = vld [vmem:[%s546 + $0x51] sm:$0xff]
        %v813 = vld [vmem:[%s546 + $0x69] sm:$0xff]
        %v814 = vld [vmem:[%s546 + $0x81] sm:$0xff]
        %v815 = vld [vmem:[%s546 + $0x99] sm:$0xff]
        %v816 = vld [vmem:[%s546 + $0xb1] sm:$0xff]
        %v817 = vld [vmem:[%s555 + $0x9] sm:$0x1]
        %v818 = vlaneseq
        %v819 = vshrl.u32 %v818, 7
        %v820 = vsub.s32 0, %v819
        %v821 = vrot.slane %v817, %v820
        %v822 = vmul.f32 %v809, %v821
        %v823 = vmul.f32 %v810, %v821
        %v824 = vmul.f32 %v811, %v821
        %v825 = vmul.f32 %v812, %v821
        %v826 = vmul.f32 %v813, %v821
        %v827 = vmul.f32 %v814, %v821
        %v828 = vmul.f32 %v815, %v821
        %v829 = vmul.f32 %v816, %v821
        %v830 = vadd.f32 %v801, %v822
        %v831 = vadd.f32 %v802, %v823
        %v832 = vadd.f32 %v803, %v824
        %v833 = vadd.f32 %v804, %v825
        %v834 = vadd.f32 %v805, %v826
        %v835 = vadd.f32 %v806, %v827
        %v836 = vadd.f32 %v807, %v828
        %v837 = vadd.f32 %v808, %v829
        %v838 = vld [vmem:[%s546 + $0xa] sm:$0xff]
        %v839 = vld [vmem:[%s546 + $0x22] sm:$0xff]
        %v840 = vld [vmem:[%s546 + $0x3a] sm:$0xff]
        %v841 = vld [vmem:[%s546 + $0x52] sm:$0xff]
        %v842 = vld [vmem:[%s546 + $0x6a] sm:$0xff]
        %v843 = vld [vmem:[%s546 + $0x82] sm:$0xff]
        %v844 = vld [vmem:[%s546 + $0x9a] sm:$0xff]
        %v845 = vld [vmem:[%s546 + $0xb2] sm:$0xff]
        %v846 = vld [vmem:[%s555 + $0xa] sm:$0x1]
        %v847 = vlaneseq
        %v848 = vshrl.u32 %v847, 7
        %v849 = vsub.s32 0, %v848
        %v850 = vrot.slane %v846, %v849
        %v851 = vmul.f32 %v838, %v850
        %v852 = vmul.f32 %v839, %v850
        %v853 = vmul.f32 %v840, %v850
        %v854 = vmul.f32 %v841, %v850
        %v855 = vmul.f32 %v842, %v850
        %v856 = vmul.f32 %v843, %v850
        %v857 = vmul.f32 %v844, %v850
        %v858 = vmul.f32 %v845, %v850
        %v859 = vadd.f32 %v830, %v851
        %v860 = vadd.f32 %v831, %v852
        %v861 = vadd.f32 %v832, %v853
        %v862 = vadd.f32 %v833, %v854
        %v863 = vadd.f32 %v834, %v855
        %v864 = vadd.f32 %v835, %v856
        %v865 = vadd.f32 %v836, %v857
        %v866 = vadd.f32 %v837, %v858
        %v867 = vld [vmem:[%s546 + $0xb] sm:$0xff]
        %v868 = vld [vmem:[%s546 + $0x23] sm:$0xff]
        %v869 = vld [vmem:[%s546 + $0x3b] sm:$0xff]
        %v870 = vld [vmem:[%s546 + $0x53] sm:$0xff]
        %v871 = vld [vmem:[%s546 + $0x6b] sm:$0xff]
        %v872 = vld [vmem:[%s546 + $0x83] sm:$0xff]
        %v873 = vld [vmem:[%s546 + $0x9b] sm:$0xff]
        %v874 = vld [vmem:[%s546 + $0xb3] sm:$0xff]
        %v875 = vld [vmem:[%s555 + $0xb] sm:$0x1]
        %v876 = vlaneseq
        %v877 = vshrl.u32 %v876, 7
        %v878 = vsub.s32 0, %v877
        %v879 = vrot.slane %v875, %v878
        %v880 = vmul.f32 %v867, %v879
        %v881 = vmul.f32 %v868, %v879
        %v882 = vmul.f32 %v869, %v879
        %v883 = vmul.f32 %v870, %v879
        %v884 = vmul.f32 %v871, %v879
        %v885 = vmul.f32 %v872, %v879
        %v886 = vmul.f32 %v873, %v879
        %v887 = vmul.f32 %v874, %v879
        %v888 = vadd.f32 %v859, %v880
        %v889 = vadd.f32 %v860, %v881
        %v890 = vadd.f32 %v861, %v882
        %v891 = vadd.f32 %v862, %v883
        %v892 = vadd.f32 %v863, %v884
        %v893 = vadd.f32 %v864, %v885
        %v894 = vadd.f32 %v865, %v886
        %v895 = vadd.f32 %v866, %v887
        %v896 = vld [vmem:[%s546 + $0xc] sm:$0xff]
        %v897 = vld [vmem:[%s546 + $0x24] sm:$0xff]
        %v898 = vld [vmem:[%s546 + $0x3c] sm:$0xff]
        %v899 = vld [vmem:[%s546 + $0x54] sm:$0xff]
        %v900 = vld [vmem:[%s546 + $0x6c] sm:$0xff]
        %v901 = vld [vmem:[%s546 + $0x84] sm:$0xff]
        %v902 = vld [vmem:[%s546 + $0x9c] sm:$0xff]
        %v903 = vld [vmem:[%s546 + $0xb4] sm:$0xff]
        %v904 = vld [vmem:[%s555 + $0xc] sm:$0x1]
        %v905 = vlaneseq
        %v906 = vshrl.u32 %v905, 7
        %v907 = vsub.s32 0, %v906
        %v908 = vrot.slane %v904, %v907
        %v909 = vmul.f32 %v896, %v908
        %v910 = vmul.f32 %v897, %v908
        %v911 = vmul.f32 %v898, %v908
        %v912 = vmul.f32 %v899, %v908
        %v913 = vmul.f32 %v900, %v908
        %v914 = vmul.f32 %v901, %v908
        %v915 = vmul.f32 %v902, %v908
        %v916 = vmul.f32 %v903, %v908
        %v917 = vadd.f32 %v888, %v909
        %v918 = vadd.f32 %v889, %v910
        %v919 = vadd.f32 %v890, %v911
        %v920 = vadd.f32 %v891, %v912
        %v921 = vadd.f32 %v892, %v913
        %v922 = vadd.f32 %v893, %v914
        %v923 = vadd.f32 %v894, %v915
        %v924 = vadd.f32 %v895, %v916
        %s925 = scalar_lea.vmem %s168, 48
        %v926 = vld [vmem:[%s925] sm:$0xff]
        %v927 = vld [vmem:[%s925 + $0x18] sm:$0xff]
        %v928 = vld [vmem:[%s925 + $0x30] sm:$0xff]
        %v929 = vld [vmem:[%s925 + $0x48] sm:$0xff]
        %v930 = vld [vmem:[%s925 + $0x60] sm:$0xff]
        %v931 = vld [vmem:[%s925 + $0x78] sm:$0xff]
        %v932 = vld [vmem:[%s925 + $0x90] sm:$0xff]
        %v933 = vld [vmem:[%s925 + $0xa8] sm:$0xff]
        %s934 = scalar_lea.vmem %s1, 32
        %v935 = vld [vmem:[%s934] sm:$0x1]
        %v936 = vlaneseq
        %v937 = vshrl.u32 %v936, 7
        %v938 = vsub.s32 0, %v937
        %v939 = vrot.slane %v935, %v938
        %v940 = vmul.f32 %v926, %v939
        %v941 = vmul.f32 %v927, %v939
        %v942 = vmul.f32 %v928, %v939
        %v943 = vmul.f32 %v929, %v939
        %v944 = vmul.f32 %v930, %v939
        %v945 = vmul.f32 %v931, %v939
        %v946 = vmul.f32 %v932, %v939
        %v947 = vmul.f32 %v933, %v939
        %v948 = vadd.f32 %v917, %v940
        %v949 = vadd.f32 %v918, %v941
        %v950 = vadd.f32 %v919, %v942
        %v951 = vadd.f32 %v920, %v943
        %v952 = vadd.f32 %v921, %v944
        %v953 = vadd.f32 %v922, %v945
        %v954 = vadd.f32 %v923, %v946
        %v955 = vadd.f32 %v924, %v947
        %v956 = vld [vmem:[%s925 + $0x1] sm:$0xff]
        %v957 = vld [vmem:[%s925 + $0x19] sm:$0xff]
        %v958 = vld [vmem:[%s925 + $0x31] sm:$0xff]
        %v959 = vld [vmem:[%s925 + $0x49] sm:$0xff]
        %v960 = vld [vmem:[%s925 + $0x61] sm:$0xff]
        %v961 = vld [vmem:[%s925 + $0x79] sm:$0xff]
        %v962 = vld [vmem:[%s925 + $0x91] sm:$0xff]
        %v963 = vld [vmem:[%s925 + $0xa9] sm:$0xff]
        %v964 = vld [vmem:[%s934 + $0x1] sm:$0x1]
        %v965 = vlaneseq
        %v966 = vshrl.u32 %v965, 7
        %v967 = vsub.s32 0, %v966
        %v968 = vrot.slane %v964, %v967
        %v969 = vmul.f32 %v956, %v968
        %v970 = vmul.f32 %v957, %v968
        %v971 = vmul.f32 %v958, %v968
        %v972 = vmul.f32 %v959, %v968
        %v973 = vmul.f32 %v960, %v968
        %v974 = vmul.f32 %v961, %v968
        %v975 = vmul.f32 %v962, %v968
        %v976 = vmul.f32 %v963, %v968
        %v977 = vadd.f32 %v948, %v969
        %v978 = vadd.f32 %v949, %v970
        %v979 = vadd.f32 %v950, %v971
        %v980 = vadd.f32 %v951, %v972
        %v981 = vadd.f32 %v952, %v973
        %v982 = vadd.f32 %v953, %v974
        %v983 = vadd.f32 %v954, %v975
        %v984 = vadd.f32 %v955, %v976
        %v985 = vld [vmem:[%s925 + $0x2] sm:$0xff]
        %v986 = vld [vmem:[%s925 + $0x1a] sm:$0xff]
        %v987 = vld [vmem:[%s925 + $0x32] sm:$0xff]
        %v988 = vld [vmem:[%s925 + $0x4a] sm:$0xff]
        %v989 = vld [vmem:[%s925 + $0x62] sm:$0xff]
        %v990 = vld [vmem:[%s925 + $0x7a] sm:$0xff]
        %v991 = vld [vmem:[%s925 + $0x92] sm:$0xff]
        %v992 = vld [vmem:[%s925 + $0xaa] sm:$0xff]
        %v993 = vld [vmem:[%s934 + $0x2] sm:$0x1]
        %v994 = vlaneseq
        %v995 = vshrl.u32 %v994, 7
        %v996 = vsub.s32 0, %v995
        %v997 = vrot.slane %v993, %v996
        %v998 = vmul.f32 %v985, %v997
        %v999 = vmul.f32 %v986, %v997
        %v1000 = vmul.f32 %v987, %v997
        %v1001 = vmul.f32 %v988, %v997
        %v1002 = vmul.f32 %v989, %v997
        %v1003 = vmul.f32 %v990, %v997
        %v1004 = vmul.f32 %v991, %v997
        %v1005 = vmul.f32 %v992, %v997
        %v1006 = vadd.f32 %v977, %v998
        %v1007 = vadd.f32 %v978, %v999
        %v1008 = vadd.f32 %v979, %v1000
        %v1009 = vadd.f32 %v980, %v1001
        %v1010 = vadd.f32 %v981, %v1002
        %v1011 = vadd.f32 %v982, %v1003
        %v1012 = vadd.f32 %v983, %v1004
        %v1013 = vadd.f32 %v984, %v1005
        %v1014 = vld [vmem:[%s925 + $0x3] sm:$0xff]
        %v1015 = vld [vmem:[%s925 + $0x1b] sm:$0xff]
        %v1016 = vld [vmem:[%s925 + $0x33] sm:$0xff]
        %v1017 = vld [vmem:[%s925 + $0x4b] sm:$0xff]
        %v1018 = vld [vmem:[%s925 + $0x63] sm:$0xff]
        %v1019 = vld [vmem:[%s925 + $0x7b] sm:$0xff]
        %v1020 = vld [vmem:[%s925 + $0x93] sm:$0xff]
        %v1021 = vld [vmem:[%s925 + $0xab] sm:$0xff]
        %v1022 = vld [vmem:[%s934 + $0x3] sm:$0x1]
        %v1023 = vlaneseq
        %v1024 = vshrl.u32 %v1023, 7
        %v1025 = vsub.s32 0, %v1024
        %v1026 = vrot.slane %v1022, %v1025
        %v1027 = vmul.f32 %v1014, %v1026
        %v1028 = vmul.f32 %v1015, %v1026
        %v1029 = vmul.f32 %v1016, %v1026
        %v1030 = vmul.f32 %v1017, %v1026
        %v1031 = vmul.f32 %v1018, %v1026
        %v1032 = vmul.f32 %v1019, %v1026
        %v1033 = vmul.f32 %v1020, %v1026
        %v1034 = vmul.f32 %v1021, %v1026
        %v1035 = vadd.f32 %v1006, %v1027
        %v1036 = vadd.f32 %v1007, %v1028
        %v1037 = vadd.f32 %v1008, %v1029
        %v1038 = vadd.f32 %v1009, %v1030
        %v1039 = vadd.f32 %v1010, %v1031
        %v1040 = vadd.f32 %v1011, %v1032
        %v1041 = vadd.f32 %v1012, %v1033
        %v1042 = vadd.f32 %v1013, %v1034
        %v1043 = vld [vmem:[%s925 + $0x4] sm:$0xff]
        %v1044 = vld [vmem:[%s925 + $0x1c] sm:$0xff]
        %v1045 = vld [vmem:[%s925 + $0x34] sm:$0xff]
        %v1046 = vld [vmem:[%s925 + $0x4c] sm:$0xff]
        %v1047 = vld [vmem:[%s925 + $0x64] sm:$0xff]
        %v1048 = vld [vmem:[%s925 + $0x7c] sm:$0xff]
        %v1049 = vld [vmem:[%s925 + $0x94] sm:$0xff]
        %v1050 = vld [vmem:[%s925 + $0xac] sm:$0xff]
        %v1051 = vld [vmem:[%s934 + $0x4] sm:$0x1]
        %v1052 = vlaneseq
        %v1053 = vshrl.u32 %v1052, 7
        %v1054 = vsub.s32 0, %v1053
        %v1055 = vrot.slane %v1051, %v1054
        %v1056 = vmul.f32 %v1043, %v1055
        %v1057 = vmul.f32 %v1044, %v1055
        %v1058 = vmul.f32 %v1045, %v1055
        %v1059 = vmul.f32 %v1046, %v1055
        %v1060 = vmul.f32 %v1047, %v1055
        %v1061 = vmul.f32 %v1048, %v1055
        %v1062 = vmul.f32 %v1049, %v1055
        %v1063 = vmul.f32 %v1050, %v1055
        %v1064 = vadd.f32 %v1035, %v1056
        %v1065 = vadd.f32 %v1036, %v1057
        %v1066 = vadd.f32 %v1037, %v1058
        %v1067 = vadd.f32 %v1038, %v1059
        %v1068 = vadd.f32 %v1039, %v1060
        %v1069 = vadd.f32 %v1040, %v1061
        %v1070 = vadd.f32 %v1041, %v1062
        %v1071 = vadd.f32 %v1042, %v1063
        %v1072 = vld [vmem:[%s925 + $0x5] sm:$0xff]
        %v1073 = vld [vmem:[%s925 + $0x1d] sm:$0xff]
        %v1074 = vld [vmem:[%s925 + $0x35] sm:$0xff]
        %v1075 = vld [vmem:[%s925 + $0x4d] sm:$0xff]
        %v1076 = vld [vmem:[%s925 + $0x65] sm:$0xff]
        %v1077 = vld [vmem:[%s925 + $0x7d] sm:$0xff]
        %v1078 = vld [vmem:[%s925 + $0x95] sm:$0xff]
        %v1079 = vld [vmem:[%s925 + $0xad] sm:$0xff]
        %v1080 = vld [vmem:[%s934 + $0x5] sm:$0x1]
        %v1081 = vlaneseq
        %v1082 = vshrl.u32 %v1081, 7
        %v1083 = vsub.s32 0, %v1082
        %v1084 = vrot.slane %v1080, %v1083
        %v1085 = vmul.f32 %v1072, %v1084
        %v1086 = vmul.f32 %v1073, %v1084
        %v1087 = vmul.f32 %v1074, %v1084
        %v1088 = vmul.f32 %v1075, %v1084
        %v1089 = vmul.f32 %v1076, %v1084
        %v1090 = vmul.f32 %v1077, %v1084
        %v1091 = vmul.f32 %v1078, %v1084
        %v1092 = vmul.f32 %v1079, %v1084
        %v1093 = vadd.f32 %v1064, %v1085
        %v1094 = vadd.f32 %v1065, %v1086
        %v1095 = vadd.f32 %v1066, %v1087
        %v1096 = vadd.f32 %v1067, %v1088
        %v1097 = vadd.f32 %v1068, %v1089
        %v1098 = vadd.f32 %v1069, %v1090
        %v1099 = vadd.f32 %v1070, %v1091
        %v1100 = vadd.f32 %v1071, %v1092
        %v1101 = vld [vmem:[%s925 + $0x6] sm:$0xff]
        %v1102 = vld [vmem:[%s925 + $0x1e] sm:$0xff]
        %v1103 = vld [vmem:[%s925 + $0x36] sm:$0xff]
        %v1104 = vld [vmem:[%s925 + $0x4e] sm:$0xff]
        %v1105 = vld [vmem:[%s925 + $0x66] sm:$0xff]
        %v1106 = vld [vmem:[%s925 + $0x7e] sm:$0xff]
        %v1107 = vld [vmem:[%s925 + $0x96] sm:$0xff]
        %v1108 = vld [vmem:[%s925 + $0xae] sm:$0xff]
        %v1109 = vld [vmem:[%s934 + $0x6] sm:$0x1]
        %v1110 = vlaneseq
        %v1111 = vshrl.u32 %v1110, 7
        %v1112 = vsub.s32 0, %v1111
        %v1113 = vrot.slane %v1109, %v1112
        %v1114 = vmul.f32 %v1101, %v1113
        %v1115 = vmul.f32 %v1102, %v1113
        %v1116 = vmul.f32 %v1103, %v1113
        %v1117 = vmul.f32 %v1104, %v1113
        %v1118 = vmul.f32 %v1105, %v1113
        %v1119 = vmul.f32 %v1106, %v1113
        %v1120 = vmul.f32 %v1107, %v1113
        %v1121 = vmul.f32 %v1108, %v1113
        %v1122 = vadd.f32 %v1093, %v1114
        %v1123 = vadd.f32 %v1094, %v1115
        %v1124 = vadd.f32 %v1095, %v1116
        %v1125 = vadd.f32 %v1096, %v1117
        %v1126 = vadd.f32 %v1097, %v1118
        %v1127 = vadd.f32 %v1098, %v1119
        %v1128 = vadd.f32 %v1099, %v1120
        %v1129 = vadd.f32 %v1100, %v1121
        %v1130 = vld [vmem:[%s925 + $0x7] sm:$0xff]
        %v1131 = vld [vmem:[%s925 + $0x1f] sm:$0xff]
        %v1132 = vld [vmem:[%s925 + $0x37] sm:$0xff]
        %v1133 = vld [vmem:[%s925 + $0x4f] sm:$0xff]
        %v1134 = vld [vmem:[%s925 + $0x67] sm:$0xff]
        %v1135 = vld [vmem:[%s925 + $0x7f] sm:$0xff]
        %v1136 = vld [vmem:[%s925 + $0x97] sm:$0xff]
        %v1137 = vld [vmem:[%s925 + $0xaf] sm:$0xff]
        %v1138 = vld [vmem:[%s934 + $0x7] sm:$0x1]
        %v1139 = vlaneseq
        %v1140 = vshrl.u32 %v1139, 7
        %v1141 = vsub.s32 0, %v1140
        %v1142 = vrot.slane %v1138, %v1141
        %v1143 = vmul.f32 %v1130, %v1142
        %v1144 = vmul.f32 %v1131, %v1142
        %v1145 = vmul.f32 %v1132, %v1142
        %v1146 = vmul.f32 %v1133, %v1142
        %v1147 = vmul.f32 %v1134, %v1142
        %v1148 = vmul.f32 %v1135, %v1142
        %v1149 = vmul.f32 %v1136, %v1142
        %v1150 = vmul.f32 %v1137, %v1142
        %v1151 = vadd.f32 %v1122, %v1143
        %v1152 = vadd.f32 %v1123, %v1144
        %v1153 = vadd.f32 %v1124, %v1145
        %v1154 = vadd.f32 %v1125, %v1146
        %v1155 = vadd.f32 %v1126, %v1147
        %v1156 = vadd.f32 %v1127, %v1148
        %v1157 = vadd.f32 %v1128, %v1149
        %v1158 = vadd.f32 %v1129, %v1150
        %v1159 = vld [vmem:[%s925 + $0x8] sm:$0xff]
        %v1160 = vld [vmem:[%s925 + $0x20] sm:$0xff]
        %v1161 = vld [vmem:[%s925 + $0x38] sm:$0xff]
        %v1162 = vld [vmem:[%s925 + $0x50] sm:$0xff]
        %v1163 = vld [vmem:[%s925 + $0x68] sm:$0xff]
        %v1164 = vld [vmem:[%s925 + $0x80] sm:$0xff]
        %v1165 = vld [vmem:[%s925 + $0x98] sm:$0xff]
        %v1166 = vld [vmem:[%s925 + $0xb0] sm:$0xff]
        %v1167 = vld [vmem:[%s934 + $0x8] sm:$0x1]
        %v1168 = vlaneseq
        %v1169 = vshrl.u32 %v1168, 7
        %v1170 = vsub.s32 0, %v1169
        %v1171 = vrot.slane %v1167, %v1170
        %v1172 = vmul.f32 %v1159, %v1171
        %v1173 = vmul.f32 %v1160, %v1171
        %v1174 = vmul.f32 %v1161, %v1171
        %v1175 = vmul.f32 %v1162, %v1171
        %v1176 = vmul.f32 %v1163, %v1171
        %v1177 = vmul.f32 %v1164, %v1171
        %v1178 = vmul.f32 %v1165, %v1171
        %v1179 = vmul.f32 %v1166, %v1171
        %v1180 = vadd.f32 %v1151, %v1172
        %v1181 = vadd.f32 %v1152, %v1173
        %v1182 = vadd.f32 %v1153, %v1174
        %v1183 = vadd.f32 %v1154, %v1175
        %v1184 = vadd.f32 %v1155, %v1176
        %v1185 = vadd.f32 %v1156, %v1177
        %v1186 = vadd.f32 %v1157, %v1178
        %v1187 = vadd.f32 %v1158, %v1179
        %v1188 = vld [vmem:[%s925 + $0x9] sm:$0xff]
        %v1189 = vld [vmem:[%s925 + $0x21] sm:$0xff]
        %v1190 = vld [vmem:[%s925 + $0x39] sm:$0xff]
        %v1191 = vld [vmem:[%s925 + $0x51] sm:$0xff]
        %v1192 = vld [vmem:[%s925 + $0x69] sm:$0xff]
        %v1193 = vld [vmem:[%s925 + $0x81] sm:$0xff]
        %v1194 = vld [vmem:[%s925 + $0x99] sm:$0xff]
        %v1195 = vld [vmem:[%s925 + $0xb1] sm:$0xff]
        %v1196 = vld [vmem:[%s934 + $0x9] sm:$0x1]
        %v1197 = vlaneseq
        %v1198 = vshrl.u32 %v1197, 7
        %v1199 = vsub.s32 0, %v1198
        %v1200 = vrot.slane %v1196, %v1199
        %v1201 = vmul.f32 %v1188, %v1200
        %v1202 = vmul.f32 %v1189, %v1200
        %v1203 = vmul.f32 %v1190, %v1200
        %v1204 = vmul.f32 %v1191, %v1200
        %v1205 = vmul.f32 %v1192, %v1200
        %v1206 = vmul.f32 %v1193, %v1200
        %v1207 = vmul.f32 %v1194, %v1200
        %v1208 = vmul.f32 %v1195, %v1200
        %v1209 = vadd.f32 %v1180, %v1201
        %v1210 = vadd.f32 %v1181, %v1202
        %v1211 = vadd.f32 %v1182, %v1203
        %v1212 = vadd.f32 %v1183, %v1204
        %v1213 = vadd.f32 %v1184, %v1205
        %v1214 = vadd.f32 %v1185, %v1206
        %v1215 = vadd.f32 %v1186, %v1207
        %v1216 = vadd.f32 %v1187, %v1208
        %v1217 = vld [vmem:[%s925 + $0xa] sm:$0xff]
        %v1218 = vld [vmem:[%s925 + $0x22] sm:$0xff]
        %v1219 = vld [vmem:[%s925 + $0x3a] sm:$0xff]
        %v1220 = vld [vmem:[%s925 + $0x52] sm:$0xff]
        %v1221 = vld [vmem:[%s925 + $0x6a] sm:$0xff]
        %v1222 = vld [vmem:[%s925 + $0x82] sm:$0xff]
        %v1223 = vld [vmem:[%s925 + $0x9a] sm:$0xff]
        %v1224 = vld [vmem:[%s925 + $0xb2] sm:$0xff]
        %v1225 = vld [vmem:[%s934 + $0xa] sm:$0x1]
        %v1226 = vlaneseq
        %v1227 = vshrl.u32 %v1226, 7
        %v1228 = vsub.s32 0, %v1227
        %v1229 = vrot.slane %v1225, %v1228
        %v1230 = vmul.f32 %v1217, %v1229
        %v1231 = vmul.f32 %v1218, %v1229
        %v1232 = vmul.f32 %v1219, %v1229
        %v1233 = vmul.f32 %v1220, %v1229
        %v1234 = vmul.f32 %v1221, %v1229
        %v1235 = vmul.f32 %v1222, %v1229
        %v1236 = vmul.f32 %v1223, %v1229
        %v1237 = vmul.f32 %v1224, %v1229
        %v1238 = vadd.f32 %v1209, %v1230
        %v1239 = vadd.f32 %v1210, %v1231
        %v1240 = vadd.f32 %v1211, %v1232
        %v1241 = vadd.f32 %v1212, %v1233
        %v1242 = vadd.f32 %v1213, %v1234
        %v1243 = vadd.f32 %v1214, %v1235
        %v1244 = vadd.f32 %v1215, %v1236
        %v1245 = vadd.f32 %v1216, %v1237
        %v1246 = vld [vmem:[%s925 + $0xb] sm:$0xff]
        %v1247 = vld [vmem:[%s925 + $0x23] sm:$0xff]
        %v1248 = vld [vmem:[%s925 + $0x3b] sm:$0xff]
        %v1249 = vld [vmem:[%s925 + $0x53] sm:$0xff]
        %v1250 = vld [vmem:[%s925 + $0x6b] sm:$0xff]
        %v1251 = vld [vmem:[%s925 + $0x83] sm:$0xff]
        %v1252 = vld [vmem:[%s925 + $0x9b] sm:$0xff]
        %v1253 = vld [vmem:[%s925 + $0xb3] sm:$0xff]
        %v1254 = vld [vmem:[%s934 + $0xb] sm:$0x1]
        %v1255 = vlaneseq
        %v1256 = vshrl.u32 %v1255, 7
        %v1257 = vsub.s32 0, %v1256
        %v1258 = vrot.slane %v1254, %v1257
        %v1259 = vmul.f32 %v1246, %v1258
        %v1260 = vmul.f32 %v1247, %v1258
        %v1261 = vmul.f32 %v1248, %v1258
        %v1262 = vmul.f32 %v1249, %v1258
        %v1263 = vmul.f32 %v1250, %v1258
        %v1264 = vmul.f32 %v1251, %v1258
        %v1265 = vmul.f32 %v1252, %v1258
        %v1266 = vmul.f32 %v1253, %v1258
        %v1267 = vadd.f32 %v1238, %v1259
        %v1268 = vadd.f32 %v1239, %v1260
        %v1269 = vadd.f32 %v1240, %v1261
        %v1270 = vadd.f32 %v1241, %v1262
        %v1271 = vadd.f32 %v1242, %v1263
        %v1272 = vadd.f32 %v1243, %v1264
        %v1273 = vadd.f32 %v1244, %v1265
        %v1274 = vadd.f32 %v1245, %v1266
        %v1275 = vld [vmem:[%s925 + $0xc] sm:$0xff]
        %v1276 = vld [vmem:[%s925 + $0x24] sm:$0xff]
        %v1277 = vld [vmem:[%s925 + $0x3c] sm:$0xff]
        %v1278 = vld [vmem:[%s925 + $0x54] sm:$0xff]
        %v1279 = vld [vmem:[%s925 + $0x6c] sm:$0xff]
        %v1280 = vld [vmem:[%s925 + $0x84] sm:$0xff]
        %v1281 = vld [vmem:[%s925 + $0x9c] sm:$0xff]
        %v1282 = vld [vmem:[%s925 + $0xb4] sm:$0xff]
        %v1283 = vld [vmem:[%s934 + $0xc] sm:$0x1]
        %v1284 = vlaneseq
        %v1285 = vshrl.u32 %v1284, 7
        %v1286 = vsub.s32 0, %v1285
        %v1287 = vrot.slane %v1283, %v1286
        %v1288 = vmul.f32 %v1275, %v1287
        %v1289 = vmul.f32 %v1276, %v1287
        %v1290 = vmul.f32 %v1277, %v1287
        %v1291 = vmul.f32 %v1278, %v1287
        %v1292 = vmul.f32 %v1279, %v1287
        %v1293 = vmul.f32 %v1280, %v1287
        %v1294 = vmul.f32 %v1281, %v1287
        %v1295 = vmul.f32 %v1282, %v1287
        %v1296 = vadd.f32 %v1267, %v1288
        %v1297 = vadd.f32 %v1268, %v1289
        %v1298 = vadd.f32 %v1269, %v1290
        %v1299 = vadd.f32 %v1270, %v1291
        %v1300 = vadd.f32 %v1271, %v1292
        %v1301 = vadd.f32 %v1272, %v1293
        %v1302 = vadd.f32 %v1273, %v1294
        %v1303 = vadd.f32 %v1274, %v1295
        %s1304 = scalar_lea.vmem %s168, 72
        %v1305 = vld [vmem:[%s1304] sm:$0xff]
        %v1306 = vld [vmem:[%s1304 + $0x18] sm:$0xff]
        %v1307 = vld [vmem:[%s1304 + $0x30] sm:$0xff]
        %v1308 = vld [vmem:[%s1304 + $0x48] sm:$0xff]
        %v1309 = vld [vmem:[%s1304 + $0x60] sm:$0xff]
        %v1310 = vld [vmem:[%s1304 + $0x78] sm:$0xff]
        %v1311 = vld [vmem:[%s1304 + $0x90] sm:$0xff]
        %v1312 = vld [vmem:[%s1304 + $0xa8] sm:$0xff]
        %s1313 = scalar_lea.vmem %s1, 48
        %v1314 = vld [vmem:[%s1313] sm:$0x1]
        %v1315 = vlaneseq
        %v1316 = vshrl.u32 %v1315, 7
        %v1317 = vsub.s32 0, %v1316
        %v1318 = vrot.slane %v1314, %v1317
        %v1319 = vmul.f32 %v1305, %v1318
        %v1320 = vmul.f32 %v1306, %v1318
        %v1321 = vmul.f32 %v1307, %v1318
        %v1322 = vmul.f32 %v1308, %v1318
        %v1323 = vmul.f32 %v1309, %v1318
        %v1324 = vmul.f32 %v1310, %v1318
        %v1325 = vmul.f32 %v1311, %v1318
        %v1326 = vmul.f32 %v1312, %v1318
        %v1327 = vadd.f32 %v1296, %v1319
        %v1328 = vadd.f32 %v1297, %v1320
        %v1329 = vadd.f32 %v1298, %v1321
        %v1330 = vadd.f32 %v1299, %v1322
        %v1331 = vadd.f32 %v1300, %v1323
        %v1332 = vadd.f32 %v1301, %v1324
        %v1333 = vadd.f32 %v1302, %v1325
        %v1334 = vadd.f32 %v1303, %v1326
        %v1335 = vld [vmem:[%s1304 + $0x1] sm:$0xff]
        %v1336 = vld [vmem:[%s1304 + $0x19] sm:$0xff]
        %v1337 = vld [vmem:[%s1304 + $0x31] sm:$0xff]
        %v1338 = vld [vmem:[%s1304 + $0x49] sm:$0xff]
        %v1339 = vld [vmem:[%s1304 + $0x61] sm:$0xff]
        %v1340 = vld [vmem:[%s1304 + $0x79] sm:$0xff]
        %v1341 = vld [vmem:[%s1304 + $0x91] sm:$0xff]
        %v1342 = vld [vmem:[%s1304 + $0xa9] sm:$0xff]
        %v1343 = vld [vmem:[%s1313 + $0x1] sm:$0x1]
        %v1344 = vlaneseq
        %v1345 = vshrl.u32 %v1344, 7
        %v1346 = vsub.s32 0, %v1345
        %v1347 = vrot.slane %v1343, %v1346
        %v1348 = vmul.f32 %v1335, %v1347
        %v1349 = vmul.f32 %v1336, %v1347
        %v1350 = vmul.f32 %v1337, %v1347
        %v1351 = vmul.f32 %v1338, %v1347
        %v1352 = vmul.f32 %v1339, %v1347
        %v1353 = vmul.f32 %v1340, %v1347
        %v1354 = vmul.f32 %v1341, %v1347
        %v1355 = vmul.f32 %v1342, %v1347
        %v1356 = vadd.f32 %v1327, %v1348
        %v1357 = vadd.f32 %v1328, %v1349
        %v1358 = vadd.f32 %v1329, %v1350
        %v1359 = vadd.f32 %v1330, %v1351
        %v1360 = vadd.f32 %v1331, %v1352
        %v1361 = vadd.f32 %v1332, %v1353
        %v1362 = vadd.f32 %v1333, %v1354
        %v1363 = vadd.f32 %v1334, %v1355
        %v1364 = vld [vmem:[%s1304 + $0x2] sm:$0xff]
        %v1365 = vld [vmem:[%s1304 + $0x1a] sm:$0xff]
        %v1366 = vld [vmem:[%s1304 + $0x32] sm:$0xff]
        %v1367 = vld [vmem:[%s1304 + $0x4a] sm:$0xff]
        %v1368 = vld [vmem:[%s1304 + $0x62] sm:$0xff]
        %v1369 = vld [vmem:[%s1304 + $0x7a] sm:$0xff]
        %v1370 = vld [vmem:[%s1304 + $0x92] sm:$0xff]
        %v1371 = vld [vmem:[%s1304 + $0xaa] sm:$0xff]
        %v1372 = vld [vmem:[%s1313 + $0x2] sm:$0x1]
        %v1373 = vlaneseq
        %v1374 = vshrl.u32 %v1373, 7
        %v1375 = vsub.s32 0, %v1374
        %v1376 = vrot.slane %v1372, %v1375
        %v1377 = vmul.f32 %v1364, %v1376
        %v1378 = vmul.f32 %v1365, %v1376
        %v1379 = vmul.f32 %v1366, %v1376
        %v1380 = vmul.f32 %v1367, %v1376
        %v1381 = vmul.f32 %v1368, %v1376
        %v1382 = vmul.f32 %v1369, %v1376
        %v1383 = vmul.f32 %v1370, %v1376
        %v1384 = vmul.f32 %v1371, %v1376
        %v1385 = vadd.f32 %v1356, %v1377
        %v1386 = vadd.f32 %v1357, %v1378
        %v1387 = vadd.f32 %v1358, %v1379
        %v1388 = vadd.f32 %v1359, %v1380
        %v1389 = vadd.f32 %v1360, %v1381
        %v1390 = vadd.f32 %v1361, %v1382
        %v1391 = vadd.f32 %v1362, %v1383
        %v1392 = vadd.f32 %v1363, %v1384
        %v1393 = vld [vmem:[%s1304 + $0x3] sm:$0xff]
        %v1394 = vld [vmem:[%s1304 + $0x1b] sm:$0xff]
        %v1395 = vld [vmem:[%s1304 + $0x33] sm:$0xff]
        %v1396 = vld [vmem:[%s1304 + $0x4b] sm:$0xff]
        %v1397 = vld [vmem:[%s1304 + $0x63] sm:$0xff]
        %v1398 = vld [vmem:[%s1304 + $0x7b] sm:$0xff]
        %v1399 = vld [vmem:[%s1304 + $0x93] sm:$0xff]
        %v1400 = vld [vmem:[%s1304 + $0xab] sm:$0xff]
        %v1401 = vld [vmem:[%s1313 + $0x3] sm:$0x1]
        %v1402 = vlaneseq
        %v1403 = vshrl.u32 %v1402, 7
        %v1404 = vsub.s32 0, %v1403
        %v1405 = vrot.slane %v1401, %v1404
        %v1406 = vmul.f32 %v1393, %v1405
        %v1407 = vmul.f32 %v1394, %v1405
        %v1408 = vmul.f32 %v1395, %v1405
        %v1409 = vmul.f32 %v1396, %v1405
        %v1410 = vmul.f32 %v1397, %v1405
        %v1411 = vmul.f32 %v1398, %v1405
        %v1412 = vmul.f32 %v1399, %v1405
        %v1413 = vmul.f32 %v1400, %v1405
        %v1414 = vadd.f32 %v1385, %v1406
        %v1415 = vadd.f32 %v1386, %v1407
        %v1416 = vadd.f32 %v1387, %v1408
        %v1417 = vadd.f32 %v1388, %v1409
        %v1418 = vadd.f32 %v1389, %v1410
        %v1419 = vadd.f32 %v1390, %v1411
        %v1420 = vadd.f32 %v1391, %v1412
        %v1421 = vadd.f32 %v1392, %v1413
        %v1422 = vld [vmem:[%s1304 + $0x4] sm:$0xff]
        %v1423 = vld [vmem:[%s1304 + $0x1c] sm:$0xff]
        %v1424 = vld [vmem:[%s1304 + $0x34] sm:$0xff]
        %v1425 = vld [vmem:[%s1304 + $0x4c] sm:$0xff]
        %v1426 = vld [vmem:[%s1304 + $0x64] sm:$0xff]
        %v1427 = vld [vmem:[%s1304 + $0x7c] sm:$0xff]
        %v1428 = vld [vmem:[%s1304 + $0x94] sm:$0xff]
        %v1429 = vld [vmem:[%s1304 + $0xac] sm:$0xff]
        %v1430 = vld [vmem:[%s1313 + $0x4] sm:$0x1]
        %v1431 = vlaneseq
        %v1432 = vshrl.u32 %v1431, 7
        %v1433 = vsub.s32 0, %v1432
        %v1434 = vrot.slane %v1430, %v1433
        %v1435 = vmul.f32 %v1422, %v1434
        %v1436 = vmul.f32 %v1423, %v1434
        %v1437 = vmul.f32 %v1424, %v1434
        %v1438 = vmul.f32 %v1425, %v1434
        %v1439 = vmul.f32 %v1426, %v1434
        %v1440 = vmul.f32 %v1427, %v1434
        %v1441 = vmul.f32 %v1428, %v1434
        %v1442 = vmul.f32 %v1429, %v1434
        %v1443 = vadd.f32 %v1414, %v1435
        %v1444 = vadd.f32 %v1415, %v1436
        %v1445 = vadd.f32 %v1416, %v1437
        %v1446 = vadd.f32 %v1417, %v1438
        %v1447 = vadd.f32 %v1418, %v1439
        %v1448 = vadd.f32 %v1419, %v1440
        %v1449 = vadd.f32 %v1420, %v1441
        %v1450 = vadd.f32 %v1421, %v1442
        %v1451 = vld [vmem:[%s1304 + $0x5] sm:$0xff]
        %v1452 = vld [vmem:[%s1304 + $0x1d] sm:$0xff]
        %v1453 = vld [vmem:[%s1304 + $0x35] sm:$0xff]
        %v1454 = vld [vmem:[%s1304 + $0x4d] sm:$0xff]
        %v1455 = vld [vmem:[%s1304 + $0x65] sm:$0xff]
        %v1456 = vld [vmem:[%s1304 + $0x7d] sm:$0xff]
        %v1457 = vld [vmem:[%s1304 + $0x95] sm:$0xff]
        %v1458 = vld [vmem:[%s1304 + $0xad] sm:$0xff]
        %v1459 = vld [vmem:[%s1313 + $0x5] sm:$0x1]
        %v1460 = vlaneseq
        %v1461 = vshrl.u32 %v1460, 7
        %v1462 = vsub.s32 0, %v1461
        %v1463 = vrot.slane %v1459, %v1462
        %v1464 = vmul.f32 %v1451, %v1463
        %v1465 = vmul.f32 %v1452, %v1463
        %v1466 = vmul.f32 %v1453, %v1463
        %v1467 = vmul.f32 %v1454, %v1463
        %v1468 = vmul.f32 %v1455, %v1463
        %v1469 = vmul.f32 %v1456, %v1463
        %v1470 = vmul.f32 %v1457, %v1463
        %v1471 = vmul.f32 %v1458, %v1463
        %v1472 = vadd.f32 %v1443, %v1464
        %v1473 = vadd.f32 %v1444, %v1465
        %v1474 = vadd.f32 %v1445, %v1466
        %v1475 = vadd.f32 %v1446, %v1467
        %v1476 = vadd.f32 %v1447, %v1468
        %v1477 = vadd.f32 %v1448, %v1469
        %v1478 = vadd.f32 %v1449, %v1470
        %v1479 = vadd.f32 %v1450, %v1471
        %v1480 = vld [vmem:[%s1304 + $0x6] sm:$0xff]
        %v1481 = vld [vmem:[%s1304 + $0x1e] sm:$0xff]
        %v1482 = vld [vmem:[%s1304 + $0x36] sm:$0xff]
        %v1483 = vld [vmem:[%s1304 + $0x4e] sm:$0xff]
        %v1484 = vld [vmem:[%s1304 + $0x66] sm:$0xff]
        %v1485 = vld [vmem:[%s1304 + $0x7e] sm:$0xff]
        %v1486 = vld [vmem:[%s1304 + $0x96] sm:$0xff]
        %v1487 = vld [vmem:[%s1304 + $0xae] sm:$0xff]
        %v1488 = vld [vmem:[%s1313 + $0x6] sm:$0x1]
        %v1489 = vlaneseq
        %v1490 = vshrl.u32 %v1489, 7
        %v1491 = vsub.s32 0, %v1490
        %v1492 = vrot.slane %v1488, %v1491
        %v1493 = vmul.f32 %v1480, %v1492
        %v1494 = vmul.f32 %v1481, %v1492
        %v1495 = vmul.f32 %v1482, %v1492
        %v1496 = vmul.f32 %v1483, %v1492
        %v1497 = vmul.f32 %v1484, %v1492
        %v1498 = vmul.f32 %v1485, %v1492
        %v1499 = vmul.f32 %v1486, %v1492
        %v1500 = vmul.f32 %v1487, %v1492
        %v1501 = vadd.f32 %v1472, %v1493
        %v1502 = vadd.f32 %v1473, %v1494
        %v1503 = vadd.f32 %v1474, %v1495
        %v1504 = vadd.f32 %v1475, %v1496
        %v1505 = vadd.f32 %v1476, %v1497
        %v1506 = vadd.f32 %v1477, %v1498
        %v1507 = vadd.f32 %v1478, %v1499
        %v1508 = vadd.f32 %v1479, %v1500
        %v1509 = vld [vmem:[%s1304 + $0x7] sm:$0xff]
        %v1510 = vld [vmem:[%s1304 + $0x1f] sm:$0xff]
        %v1511 = vld [vmem:[%s1304 + $0x37] sm:$0xff]
        %v1512 = vld [vmem:[%s1304 + $0x4f] sm:$0xff]
        %v1513 = vld [vmem:[%s1304 + $0x67] sm:$0xff]
        %v1514 = vld [vmem:[%s1304 + $0x7f] sm:$0xff]
        %v1515 = vld [vmem:[%s1304 + $0x97] sm:$0xff]
        %v1516 = vld [vmem:[%s1304 + $0xaf] sm:$0xff]
        %v1517 = vld [vmem:[%s1313 + $0x7] sm:$0x1]
        %v1518 = vlaneseq
        %v1519 = vshrl.u32 %v1518, 7
        %v1520 = vsub.s32 0, %v1519
        %v1521 = vrot.slane %v1517, %v1520
        %v1522 = vmul.f32 %v1509, %v1521
        %v1523 = vmul.f32 %v1510, %v1521
        %v1524 = vmul.f32 %v1511, %v1521
        %v1525 = vmul.f32 %v1512, %v1521
        %v1526 = vmul.f32 %v1513, %v1521
        %v1527 = vmul.f32 %v1514, %v1521
        %v1528 = vmul.f32 %v1515, %v1521
        %v1529 = vmul.f32 %v1516, %v1521
        %v1530 = vadd.f32 %v1501, %v1522
        %v1531 = vadd.f32 %v1502, %v1523
        %v1532 = vadd.f32 %v1503, %v1524
        %v1533 = vadd.f32 %v1504, %v1525
        %v1534 = vadd.f32 %v1505, %v1526
        %v1535 = vadd.f32 %v1506, %v1527
        %v1536 = vadd.f32 %v1507, %v1528
        %v1537 = vadd.f32 %v1508, %v1529
        %v1538 = vld [vmem:[%s1304 + $0x8] sm:$0xff]
        %v1539 = vld [vmem:[%s1304 + $0x20] sm:$0xff]
        %v1540 = vld [vmem:[%s1304 + $0x38] sm:$0xff]
        %v1541 = vld [vmem:[%s1304 + $0x50] sm:$0xff]
        %v1542 = vld [vmem:[%s1304 + $0x68] sm:$0xff]
        %v1543 = vld [vmem:[%s1304 + $0x80] sm:$0xff]
        %v1544 = vld [vmem:[%s1304 + $0x98] sm:$0xff]
        %v1545 = vld [vmem:[%s1304 + $0xb0] sm:$0xff]
        %v1546 = vld [vmem:[%s1313 + $0x8] sm:$0x1]
        %v1547 = vlaneseq
        %v1548 = vshrl.u32 %v1547, 7
        %v1549 = vsub.s32 0, %v1548
        %v1550 = vrot.slane %v1546, %v1549
        %v1551 = vmul.f32 %v1538, %v1550
        %v1552 = vmul.f32 %v1539, %v1550
        %v1553 = vmul.f32 %v1540, %v1550
        %v1554 = vmul.f32 %v1541, %v1550
        %v1555 = vmul.f32 %v1542, %v1550
        %v1556 = vmul.f32 %v1543, %v1550
        %v1557 = vmul.f32 %v1544, %v1550
        %v1558 = vmul.f32 %v1545, %v1550
        %v1559 = vadd.f32 %v1530, %v1551
        %v1560 = vadd.f32 %v1531, %v1552
        %v1561 = vadd.f32 %v1532, %v1553
        %v1562 = vadd.f32 %v1533, %v1554
        %v1563 = vadd.f32 %v1534, %v1555
        %v1564 = vadd.f32 %v1535, %v1556
        %v1565 = vadd.f32 %v1536, %v1557
        %v1566 = vadd.f32 %v1537, %v1558
        %v1567 = vld [vmem:[%s1304 + $0x9] sm:$0xff]
        %v1568 = vld [vmem:[%s1304 + $0x21] sm:$0xff]
        %v1569 = vld [vmem:[%s1304 + $0x39] sm:$0xff]
        %v1570 = vld [vmem:[%s1304 + $0x51] sm:$0xff]
        %v1571 = vld [vmem:[%s1304 + $0x69] sm:$0xff]
        %v1572 = vld [vmem:[%s1304 + $0x81] sm:$0xff]
        %v1573 = vld [vmem:[%s1304 + $0x99] sm:$0xff]
        %v1574 = vld [vmem:[%s1304 + $0xb1] sm:$0xff]
        %v1575 = vld [vmem:[%s1313 + $0x9] sm:$0x1]
        %v1576 = vlaneseq
        %v1577 = vshrl.u32 %v1576, 7
        %v1578 = vsub.s32 0, %v1577
        %v1579 = vrot.slane %v1575, %v1578
        %v1580 = vmul.f32 %v1567, %v1579
        %v1581 = vmul.f32 %v1568, %v1579
        %v1582 = vmul.f32 %v1569, %v1579
        %v1583 = vmul.f32 %v1570, %v1579
        %v1584 = vmul.f32 %v1571, %v1579
        %v1585 = vmul.f32 %v1572, %v1579
        %v1586 = vmul.f32 %v1573, %v1579
        %v1587 = vmul.f32 %v1574, %v1579
        %v1588 = vadd.f32 %v1559, %v1580
        %v1589 = vadd.f32 %v1560, %v1581
        %v1590 = vadd.f32 %v1561, %v1582
        %v1591 = vadd.f32 %v1562, %v1583
        %v1592 = vadd.f32 %v1563, %v1584
        %v1593 = vadd.f32 %v1564, %v1585
        %v1594 = vadd.f32 %v1565, %v1586
        %v1595 = vadd.f32 %v1566, %v1587
        %v1596 = vld [vmem:[%s1304 + $0xa] sm:$0xff]
        %v1597 = vld [vmem:[%s1304 + $0x22] sm:$0xff]
        %v1598 = vld [vmem:[%s1304 + $0x3a] sm:$0xff]
        %v1599 = vld [vmem:[%s1304 + $0x52] sm:$0xff]
        %v1600 = vld [vmem:[%s1304 + $0x6a] sm:$0xff]
        %v1601 = vld [vmem:[%s1304 + $0x82] sm:$0xff]
        %v1602 = vld [vmem:[%s1304 + $0x9a] sm:$0xff]
        %v1603 = vld [vmem:[%s1304 + $0xb2] sm:$0xff]
        %v1604 = vld [vmem:[%s1313 + $0xa] sm:$0x1]
        %v1605 = vlaneseq
        %v1606 = vshrl.u32 %v1605, 7
        %v1607 = vsub.s32 0, %v1606
        %v1608 = vrot.slane %v1604, %v1607
        %v1609 = vmul.f32 %v1596, %v1608
        %v1610 = vmul.f32 %v1597, %v1608
        %v1611 = vmul.f32 %v1598, %v1608
        %v1612 = vmul.f32 %v1599, %v1608
        %v1613 = vmul.f32 %v1600, %v1608
        %v1614 = vmul.f32 %v1601, %v1608
        %v1615 = vmul.f32 %v1602, %v1608
        %v1616 = vmul.f32 %v1603, %v1608
        %v1617 = vadd.f32 %v1588, %v1609
        %v1618 = vadd.f32 %v1589, %v1610
        %v1619 = vadd.f32 %v1590, %v1611
        %v1620 = vadd.f32 %v1591, %v1612
        %v1621 = vadd.f32 %v1592, %v1613
        %v1622 = vadd.f32 %v1593, %v1614
        %v1623 = vadd.f32 %v1594, %v1615
        %v1624 = vadd.f32 %v1595, %v1616
        %v1625 = vld [vmem:[%s1304 + $0xb] sm:$0xff]
        %v1626 = vld [vmem:[%s1304 + $0x23] sm:$0xff]
        %v1627 = vld [vmem:[%s1304 + $0x3b] sm:$0xff]
        %v1628 = vld [vmem:[%s1304 + $0x53] sm:$0xff]
        %v1629 = vld [vmem:[%s1304 + $0x6b] sm:$0xff]
        %v1630 = vld [vmem:[%s1304 + $0x83] sm:$0xff]
        %v1631 = vld [vmem:[%s1304 + $0x9b] sm:$0xff]
        %v1632 = vld [vmem:[%s1304 + $0xb3] sm:$0xff]
        %v1633 = vld [vmem:[%s1313 + $0xb] sm:$0x1]
        %v1634 = vlaneseq
        %v1635 = vshrl.u32 %v1634, 7
        %v1636 = vsub.s32 0, %v1635
        %v1637 = vrot.slane %v1633, %v1636
        %v1638 = vmul.f32 %v1625, %v1637
        %v1639 = vmul.f32 %v1626, %v1637
        %v1640 = vmul.f32 %v1627, %v1637
        %v1641 = vmul.f32 %v1628, %v1637
        %v1642 = vmul.f32 %v1629, %v1637
        %v1643 = vmul.f32 %v1630, %v1637
        %v1644 = vmul.f32 %v1631, %v1637
        %v1645 = vmul.f32 %v1632, %v1637
        %v1646 = vadd.f32 %v1617, %v1638
        %v1647 = vadd.f32 %v1618, %v1639
        %v1648 = vadd.f32 %v1619, %v1640
        %v1649 = vadd.f32 %v1620, %v1641
        %v1650 = vadd.f32 %v1621, %v1642
        %v1651 = vadd.f32 %v1622, %v1643
        %v1652 = vadd.f32 %v1623, %v1644
        %v1653 = vadd.f32 %v1624, %v1645
        %v1654 = vld [vmem:[%s1304 + $0xc] sm:$0xff]
        %v1655 = vld [vmem:[%s1304 + $0x24] sm:$0xff]
        %v1656 = vld [vmem:[%s1304 + $0x3c] sm:$0xff]
        %v1657 = vld [vmem:[%s1304 + $0x54] sm:$0xff]
        %v1658 = vld [vmem:[%s1304 + $0x6c] sm:$0xff]
        %v1659 = vld [vmem:[%s1304 + $0x84] sm:$0xff]
        %v1660 = vld [vmem:[%s1304 + $0x9c] sm:$0xff]
        %v1661 = vld [vmem:[%s1304 + $0xb4] sm:$0xff]
        %v1662 = vld [vmem:[%s1313 + $0xc] sm:$0x1]
        %v1663 = vlaneseq
        %v1664 = vshrl.u32 %v1663, 7
        %v1665 = vsub.s32 0, %v1664
        %v1666 = vrot.slane %v1662, %v1665
        %v1667 = vmul.f32 %v1654, %v1666
        %v1668 = vmul.f32 %v1655, %v1666
        %v1669 = vmul.f32 %v1656, %v1666
        %v1670 = vmul.f32 %v1657, %v1666
        %v1671 = vmul.f32 %v1658, %v1666
        %v1672 = vmul.f32 %v1659, %v1666
        %v1673 = vmul.f32 %v1660, %v1666
        %v1674 = vmul.f32 %v1661, %v1666
        %v1675 = vadd.f32 %v1646, %v1667
        %v1676 = vadd.f32 %v1647, %v1668
        %v1677 = vadd.f32 %v1648, %v1669
        %v1678 = vadd.f32 %v1649, %v1670
        %v1679 = vadd.f32 %v1650, %v1671
        %v1680 = vadd.f32 %v1651, %v1672
        %v1681 = vadd.f32 %v1652, %v1673
        %v1682 = vadd.f32 %v1653, %v1674
        %s1683 = scalar_lea.vmem %s168, 96
        %v1684 = vld [vmem:[%s1683] sm:$0xff]
        %v1685 = vld [vmem:[%s1683 + $0x18] sm:$0xff]
        %v1686 = vld [vmem:[%s1683 + $0x30] sm:$0xff]
        %v1687 = vld [vmem:[%s1683 + $0x48] sm:$0xff]
        %v1688 = vld [vmem:[%s1683 + $0x60] sm:$0xff]
        %v1689 = vld [vmem:[%s1683 + $0x78] sm:$0xff]
        %v1690 = vld [vmem:[%s1683 + $0x90] sm:$0xff]
        %v1691 = vld [vmem:[%s1683 + $0xa8] sm:$0xff]
        %s1692 = scalar_lea.vmem %s1, 64
        %v1693 = vld [vmem:[%s1692] sm:$0x1]
        %v1694 = vlaneseq
        %v1695 = vshrl.u32 %v1694, 7
        %v1696 = vsub.s32 0, %v1695
        %v1697 = vrot.slane %v1693, %v1696
        %v1698 = vmul.f32 %v1684, %v1697
        %v1699 = vmul.f32 %v1685, %v1697
        %v1700 = vmul.f32 %v1686, %v1697
        %v1701 = vmul.f32 %v1687, %v1697
        %v1702 = vmul.f32 %v1688, %v1697
        %v1703 = vmul.f32 %v1689, %v1697
        %v1704 = vmul.f32 %v1690, %v1697
        %v1705 = vmul.f32 %v1691, %v1697
        %v1706 = vadd.f32 %v1675, %v1698
        %v1707 = vadd.f32 %v1676, %v1699
        %v1708 = vadd.f32 %v1677, %v1700
        %v1709 = vadd.f32 %v1678, %v1701
        %v1710 = vadd.f32 %v1679, %v1702
        %v1711 = vadd.f32 %v1680, %v1703
        %v1712 = vadd.f32 %v1681, %v1704
        %v1713 = vadd.f32 %v1682, %v1705
        %v1714 = vld [vmem:[%s1683 + $0x1] sm:$0xff]
        %v1715 = vld [vmem:[%s1683 + $0x19] sm:$0xff]
        %v1716 = vld [vmem:[%s1683 + $0x31] sm:$0xff]
        %v1717 = vld [vmem:[%s1683 + $0x49] sm:$0xff]
        %v1718 = vld [vmem:[%s1683 + $0x61] sm:$0xff]
        %v1719 = vld [vmem:[%s1683 + $0x79] sm:$0xff]
        %v1720 = vld [vmem:[%s1683 + $0x91] sm:$0xff]
        %v1721 = vld [vmem:[%s1683 + $0xa9] sm:$0xff]
        %v1722 = vld [vmem:[%s1692 + $0x1] sm:$0x1]
        %v1723 = vlaneseq
        %v1724 = vshrl.u32 %v1723, 7
        %v1725 = vsub.s32 0, %v1724
        %v1726 = vrot.slane %v1722, %v1725
        %v1727 = vmul.f32 %v1714, %v1726
        %v1728 = vmul.f32 %v1715, %v1726
        %v1729 = vmul.f32 %v1716, %v1726
        %v1730 = vmul.f32 %v1717, %v1726
        %v1731 = vmul.f32 %v1718, %v1726
        %v1732 = vmul.f32 %v1719, %v1726
        %v1733 = vmul.f32 %v1720, %v1726
        %v1734 = vmul.f32 %v1721, %v1726
        %v1735 = vadd.f32 %v1706, %v1727
        %v1736 = vadd.f32 %v1707, %v1728
        %v1737 = vadd.f32 %v1708, %v1729
        %v1738 = vadd.f32 %v1709, %v1730
        %v1739 = vadd.f32 %v1710, %v1731
        %v1740 = vadd.f32 %v1711, %v1732
        %v1741 = vadd.f32 %v1712, %v1733
        %v1742 = vadd.f32 %v1713, %v1734
        %v1743 = vld [vmem:[%s1683 + $0x2] sm:$0xff]
        %v1744 = vld [vmem:[%s1683 + $0x1a] sm:$0xff]
        %v1745 = vld [vmem:[%s1683 + $0x32] sm:$0xff]
        %v1746 = vld [vmem:[%s1683 + $0x4a] sm:$0xff]
        %v1747 = vld [vmem:[%s1683 + $0x62] sm:$0xff]
        %v1748 = vld [vmem:[%s1683 + $0x7a] sm:$0xff]
        %v1749 = vld [vmem:[%s1683 + $0x92] sm:$0xff]
        %v1750 = vld [vmem:[%s1683 + $0xaa] sm:$0xff]
        %v1751 = vld [vmem:[%s1692 + $0x2] sm:$0x1]
        %v1752 = vlaneseq
        %v1753 = vshrl.u32 %v1752, 7
        %v1754 = vsub.s32 0, %v1753
        %v1755 = vrot.slane %v1751, %v1754
        %v1756 = vmul.f32 %v1743, %v1755
        %v1757 = vmul.f32 %v1744, %v1755
        %v1758 = vmul.f32 %v1745, %v1755
        %v1759 = vmul.f32 %v1746, %v1755
        %v1760 = vmul.f32 %v1747, %v1755
        %v1761 = vmul.f32 %v1748, %v1755
        %v1762 = vmul.f32 %v1749, %v1755
        %v1763 = vmul.f32 %v1750, %v1755
        %v1764 = vadd.f32 %v1735, %v1756
        %v1765 = vadd.f32 %v1736, %v1757
        %v1766 = vadd.f32 %v1737, %v1758
        %v1767 = vadd.f32 %v1738, %v1759
        %v1768 = vadd.f32 %v1739, %v1760
        %v1769 = vadd.f32 %v1740, %v1761
        %v1770 = vadd.f32 %v1741, %v1762
        %v1771 = vadd.f32 %v1742, %v1763
        %v1772 = vld [vmem:[%s1683 + $0x3] sm:$0xff]
        %v1773 = vld [vmem:[%s1683 + $0x1b] sm:$0xff]
        %v1774 = vld [vmem:[%s1683 + $0x33] sm:$0xff]
        %v1775 = vld [vmem:[%s1683 + $0x4b] sm:$0xff]
        %v1776 = vld [vmem:[%s1683 + $0x63] sm:$0xff]
        %v1777 = vld [vmem:[%s1683 + $0x7b] sm:$0xff]
        %v1778 = vld [vmem:[%s1683 + $0x93] sm:$0xff]
        %v1779 = vld [vmem:[%s1683 + $0xab] sm:$0xff]
        %v1780 = vld [vmem:[%s1692 + $0x3] sm:$0x1]
        %v1781 = vlaneseq
        %v1782 = vshrl.u32 %v1781, 7
        %v1783 = vsub.s32 0, %v1782
        %v1784 = vrot.slane %v1780, %v1783
        %v1785 = vmul.f32 %v1772, %v1784
        %v1786 = vmul.f32 %v1773, %v1784
        %v1787 = vmul.f32 %v1774, %v1784
        %v1788 = vmul.f32 %v1775, %v1784
        %v1789 = vmul.f32 %v1776, %v1784
        %v1790 = vmul.f32 %v1777, %v1784
        %v1791 = vmul.f32 %v1778, %v1784
        %v1792 = vmul.f32 %v1779, %v1784
        %v1793 = vadd.f32 %v1764, %v1785
        %v1794 = vadd.f32 %v1765, %v1786
        %v1795 = vadd.f32 %v1766, %v1787
        %v1796 = vadd.f32 %v1767, %v1788
        %v1797 = vadd.f32 %v1768, %v1789
        %v1798 = vadd.f32 %v1769, %v1790
        %v1799 = vadd.f32 %v1770, %v1791
        %v1800 = vadd.f32 %v1771, %v1792
        %v1801 = vld [vmem:[%s1683 + $0x4] sm:$0xff]
        %v1802 = vld [vmem:[%s1683 + $0x1c] sm:$0xff]
        %v1803 = vld [vmem:[%s1683 + $0x34] sm:$0xff]
        %v1804 = vld [vmem:[%s1683 + $0x4c] sm:$0xff]
        %v1805 = vld [vmem:[%s1683 + $0x64] sm:$0xff]
        %v1806 = vld [vmem:[%s1683 + $0x7c] sm:$0xff]
        %v1807 = vld [vmem:[%s1683 + $0x94] sm:$0xff]
        %v1808 = vld [vmem:[%s1683 + $0xac] sm:$0xff]
        %v1809 = vld [vmem:[%s1692 + $0x4] sm:$0x1]
        %v1810 = vlaneseq
        %v1811 = vshrl.u32 %v1810, 7
        %v1812 = vsub.s32 0, %v1811
        %v1813 = vrot.slane %v1809, %v1812
        %v1814 = vmul.f32 %v1801, %v1813
        %v1815 = vmul.f32 %v1802, %v1813
        %v1816 = vmul.f32 %v1803, %v1813
        %v1817 = vmul.f32 %v1804, %v1813
        %v1818 = vmul.f32 %v1805, %v1813
        %v1819 = vmul.f32 %v1806, %v1813
        %v1820 = vmul.f32 %v1807, %v1813
        %v1821 = vmul.f32 %v1808, %v1813
        %v1822 = vadd.f32 %v1793, %v1814
        %v1823 = vadd.f32 %v1794, %v1815
        %v1824 = vadd.f32 %v1795, %v1816
        %v1825 = vadd.f32 %v1796, %v1817
        %v1826 = vadd.f32 %v1797, %v1818
        %v1827 = vadd.f32 %v1798, %v1819
        %v1828 = vadd.f32 %v1799, %v1820
        %v1829 = vadd.f32 %v1800, %v1821
        %v1830 = vld [vmem:[%s1683 + $0x5] sm:$0xff]
        %v1831 = vld [vmem:[%s1683 + $0x1d] sm:$0xff]
        %v1832 = vld [vmem:[%s1683 + $0x35] sm:$0xff]
        %v1833 = vld [vmem:[%s1683 + $0x4d] sm:$0xff]
        %v1834 = vld [vmem:[%s1683 + $0x65] sm:$0xff]
        %v1835 = vld [vmem:[%s1683 + $0x7d] sm:$0xff]
        %v1836 = vld [vmem:[%s1683 + $0x95] sm:$0xff]
        %v1837 = vld [vmem:[%s1683 + $0xad] sm:$0xff]
        %v1838 = vld [vmem:[%s1692 + $0x5] sm:$0x1]
        %v1839 = vlaneseq
        %v1840 = vshrl.u32 %v1839, 7
        %v1841 = vsub.s32 0, %v1840
        %v1842 = vrot.slane %v1838, %v1841
        %v1843 = vmul.f32 %v1830, %v1842
        %v1844 = vmul.f32 %v1831, %v1842
        %v1845 = vmul.f32 %v1832, %v1842
        %v1846 = vmul.f32 %v1833, %v1842
        %v1847 = vmul.f32 %v1834, %v1842
        %v1848 = vmul.f32 %v1835, %v1842
        %v1849 = vmul.f32 %v1836, %v1842
        %v1850 = vmul.f32 %v1837, %v1842
        %v1851 = vadd.f32 %v1822, %v1843
        %v1852 = vadd.f32 %v1823, %v1844
        %v1853 = vadd.f32 %v1824, %v1845
        %v1854 = vadd.f32 %v1825, %v1846
        %v1855 = vadd.f32 %v1826, %v1847
        %v1856 = vadd.f32 %v1827, %v1848
        %v1857 = vadd.f32 %v1828, %v1849
        %v1858 = vadd.f32 %v1829, %v1850
        %v1859 = vld [vmem:[%s1683 + $0x6] sm:$0xff]
        %v1860 = vld [vmem:[%s1683 + $0x1e] sm:$0xff]
        %v1861 = vld [vmem:[%s1683 + $0x36] sm:$0xff]
        %v1862 = vld [vmem:[%s1683 + $0x4e] sm:$0xff]
        %v1863 = vld [vmem:[%s1683 + $0x66] sm:$0xff]
        %v1864 = vld [vmem:[%s1683 + $0x7e] sm:$0xff]
        %v1865 = vld [vmem:[%s1683 + $0x96] sm:$0xff]
        %v1866 = vld [vmem:[%s1683 + $0xae] sm:$0xff]
        %v1867 = vld [vmem:[%s1692 + $0x6] sm:$0x1]
        %v1868 = vlaneseq
        %v1869 = vshrl.u32 %v1868, 7
        %v1870 = vsub.s32 0, %v1869
        %v1871 = vrot.slane %v1867, %v1870
        %v1872 = vmul.f32 %v1859, %v1871
        %v1873 = vmul.f32 %v1860, %v1871
        %v1874 = vmul.f32 %v1861, %v1871
        %v1875 = vmul.f32 %v1862, %v1871
        %v1876 = vmul.f32 %v1863, %v1871
        %v1877 = vmul.f32 %v1864, %v1871
        %v1878 = vmul.f32 %v1865, %v1871
        %v1879 = vmul.f32 %v1866, %v1871
        %v1880 = vadd.f32 %v1851, %v1872
        %v1881 = vadd.f32 %v1852, %v1873
        %v1882 = vadd.f32 %v1853, %v1874
        %v1883 = vadd.f32 %v1854, %v1875
        %v1884 = vadd.f32 %v1855, %v1876
        %v1885 = vadd.f32 %v1856, %v1877
        %v1886 = vadd.f32 %v1857, %v1878
        %v1887 = vadd.f32 %v1858, %v1879
        %v1888 = vld [vmem:[%s1683 + $0x7] sm:$0xff]
        %v1889 = vld [vmem:[%s1683 + $0x1f] sm:$0xff]
        %v1890 = vld [vmem:[%s1683 + $0x37] sm:$0xff]
        %v1891 = vld [vmem:[%s1683 + $0x4f] sm:$0xff]
        %v1892 = vld [vmem:[%s1683 + $0x67] sm:$0xff]
        %v1893 = vld [vmem:[%s1683 + $0x7f] sm:$0xff]
        %v1894 = vld [vmem:[%s1683 + $0x97] sm:$0xff]
        %v1895 = vld [vmem:[%s1683 + $0xaf] sm:$0xff]
        %v1896 = vld [vmem:[%s1692 + $0x7] sm:$0x1]
        %v1897 = vlaneseq
        %v1898 = vshrl.u32 %v1897, 7
        %v1899 = vsub.s32 0, %v1898
        %v1900 = vrot.slane %v1896, %v1899
        %v1901 = vmul.f32 %v1888, %v1900
        %v1902 = vmul.f32 %v1889, %v1900
        %v1903 = vmul.f32 %v1890, %v1900
        %v1904 = vmul.f32 %v1891, %v1900
        %v1905 = vmul.f32 %v1892, %v1900
        %v1906 = vmul.f32 %v1893, %v1900
        %v1907 = vmul.f32 %v1894, %v1900
        %v1908 = vmul.f32 %v1895, %v1900
        %v1909 = vadd.f32 %v1880, %v1901
        %v1910 = vadd.f32 %v1881, %v1902
        %v1911 = vadd.f32 %v1882, %v1903
        %v1912 = vadd.f32 %v1883, %v1904
        %v1913 = vadd.f32 %v1884, %v1905
        %v1914 = vadd.f32 %v1885, %v1906
        %v1915 = vadd.f32 %v1886, %v1907
        %v1916 = vadd.f32 %v1887, %v1908
        %v1917 = vld [vmem:[%s1683 + $0x8] sm:$0xff]
        %v1918 = vld [vmem:[%s1683 + $0x20] sm:$0xff]
        %v1919 = vld [vmem:[%s1683 + $0x38] sm:$0xff]
        %v1920 = vld [vmem:[%s1683 + $0x50] sm:$0xff]
        %v1921 = vld [vmem:[%s1683 + $0x68] sm:$0xff]
        %v1922 = vld [vmem:[%s1683 + $0x80] sm:$0xff]
        %v1923 = vld [vmem:[%s1683 + $0x98] sm:$0xff]
        %v1924 = vld [vmem:[%s1683 + $0xb0] sm:$0xff]
        %v1925 = vld [vmem:[%s1692 + $0x8] sm:$0x1]
        %v1926 = vlaneseq
        %v1927 = vshrl.u32 %v1926, 7
        %v1928 = vsub.s32 0, %v1927
        %v1929 = vrot.slane %v1925, %v1928
        %v1930 = vmul.f32 %v1917, %v1929
        %v1931 = vmul.f32 %v1918, %v1929
        %v1932 = vmul.f32 %v1919, %v1929
        %v1933 = vmul.f32 %v1920, %v1929
        %v1934 = vmul.f32 %v1921, %v1929
        %v1935 = vmul.f32 %v1922, %v1929
        %v1936 = vmul.f32 %v1923, %v1929
        %v1937 = vmul.f32 %v1924, %v1929
        %v1938 = vadd.f32 %v1909, %v1930
        %v1939 = vadd.f32 %v1910, %v1931
        %v1940 = vadd.f32 %v1911, %v1932
        %v1941 = vadd.f32 %v1912, %v1933
        %v1942 = vadd.f32 %v1913, %v1934
        %v1943 = vadd.f32 %v1914, %v1935
        %v1944 = vadd.f32 %v1915, %v1936
        %v1945 = vadd.f32 %v1916, %v1937
        %v1946 = vld [vmem:[%s1683 + $0x9] sm:$0xff]
        %v1947 = vld [vmem:[%s1683 + $0x21] sm:$0xff]
        %v1948 = vld [vmem:[%s1683 + $0x39] sm:$0xff]
        %v1949 = vld [vmem:[%s1683 + $0x51] sm:$0xff]
        %v1950 = vld [vmem:[%s1683 + $0x69] sm:$0xff]
        %v1951 = vld [vmem:[%s1683 + $0x81] sm:$0xff]
        %v1952 = vld [vmem:[%s1683 + $0x99] sm:$0xff]
        %v1953 = vld [vmem:[%s1683 + $0xb1] sm:$0xff]
        %v1954 = vld [vmem:[%s1692 + $0x9] sm:$0x1]
        %v1955 = vlaneseq
        %v1956 = vshrl.u32 %v1955, 7
        %v1957 = vsub.s32 0, %v1956
        %v1958 = vrot.slane %v1954, %v1957
        %v1959 = vmul.f32 %v1946, %v1958
        %v1960 = vmul.f32 %v1947, %v1958
        %v1961 = vmul.f32 %v1948, %v1958
        %v1962 = vmul.f32 %v1949, %v1958
        %v1963 = vmul.f32 %v1950, %v1958
        %v1964 = vmul.f32 %v1951, %v1958
        %v1965 = vmul.f32 %v1952, %v1958
        %v1966 = vmul.f32 %v1953, %v1958
        %v1967 = vadd.f32 %v1938, %v1959
        %v1968 = vadd.f32 %v1939, %v1960
        %v1969 = vadd.f32 %v1940, %v1961
        %v1970 = vadd.f32 %v1941, %v1962
        %v1971 = vadd.f32 %v1942, %v1963
        %v1972 = vadd.f32 %v1943, %v1964
        %v1973 = vadd.f32 %v1944, %v1965
        %v1974 = vadd.f32 %v1945, %v1966
        %v1975 = vld [vmem:[%s1683 + $0xa] sm:$0xff]
        %v1976 = vld [vmem:[%s1683 + $0x22] sm:$0xff]
        %v1977 = vld [vmem:[%s1683 + $0x3a] sm:$0xff]
        %v1978 = vld [vmem:[%s1683 + $0x52] sm:$0xff]
        %v1979 = vld [vmem:[%s1683 + $0x6a] sm:$0xff]
        %v1980 = vld [vmem:[%s1683 + $0x82] sm:$0xff]
        %v1981 = vld [vmem:[%s1683 + $0x9a] sm:$0xff]
        %v1982 = vld [vmem:[%s1683 + $0xb2] sm:$0xff]
        %v1983 = vld [vmem:[%s1692 + $0xa] sm:$0x1]
        %v1984 = vlaneseq
        %v1985 = vshrl.u32 %v1984, 7
        %v1986 = vsub.s32 0, %v1985
        %v1987 = vrot.slane %v1983, %v1986
        %v1988 = vmul.f32 %v1975, %v1987
        %v1989 = vmul.f32 %v1976, %v1987
        %v1990 = vmul.f32 %v1977, %v1987
        %v1991 = vmul.f32 %v1978, %v1987
        %v1992 = vmul.f32 %v1979, %v1987
        %v1993 = vmul.f32 %v1980, %v1987
        %v1994 = vmul.f32 %v1981, %v1987
        %v1995 = vmul.f32 %v1982, %v1987
        %v1996 = vadd.f32 %v1967, %v1988
        %v1997 = vadd.f32 %v1968, %v1989
        %v1998 = vadd.f32 %v1969, %v1990
        %v1999 = vadd.f32 %v1970, %v1991
        %v2000 = vadd.f32 %v1971, %v1992
        %v2001 = vadd.f32 %v1972, %v1993
        %v2002 = vadd.f32 %v1973, %v1994
        %v2003 = vadd.f32 %v1974, %v1995
        %v2004 = vld [vmem:[%s1683 + $0xb] sm:$0xff]
        %v2005 = vld [vmem:[%s1683 + $0x23] sm:$0xff]
        %v2006 = vld [vmem:[%s1683 + $0x3b] sm:$0xff]
        %v2007 = vld [vmem:[%s1683 + $0x53] sm:$0xff]
        %v2008 = vld [vmem:[%s1683 + $0x6b] sm:$0xff]
        %v2009 = vld [vmem:[%s1683 + $0x83] sm:$0xff]
        %v2010 = vld [vmem:[%s1683 + $0x9b] sm:$0xff]
        %v2011 = vld [vmem:[%s1683 + $0xb3] sm:$0xff]
        %v2012 = vld [vmem:[%s1692 + $0xb] sm:$0x1]
        %v2013 = vlaneseq
        %v2014 = vshrl.u32 %v2013, 7
        %v2015 = vsub.s32 0, %v2014
        %v2016 = vrot.slane %v2012, %v2015
        %v2017 = vmul.f32 %v2004, %v2016
        %v2018 = vmul.f32 %v2005, %v2016
        %v2019 = vmul.f32 %v2006, %v2016
        %v2020 = vmul.f32 %v2007, %v2016
        %v2021 = vmul.f32 %v2008, %v2016
        %v2022 = vmul.f32 %v2009, %v2016
        %v2023 = vmul.f32 %v2010, %v2016
        %v2024 = vmul.f32 %v2011, %v2016
        %v2025 = vadd.f32 %v1996, %v2017
        %v2026 = vadd.f32 %v1997, %v2018
        %v2027 = vadd.f32 %v1998, %v2019
        %v2028 = vadd.f32 %v1999, %v2020
        %v2029 = vadd.f32 %v2000, %v2021
        %v2030 = vadd.f32 %v2001, %v2022
        %v2031 = vadd.f32 %v2002, %v2023
        %v2032 = vadd.f32 %v2003, %v2024
        %v2033 = vld [vmem:[%s1683 + $0xc] sm:$0xff]
        %v2034 = vld [vmem:[%s1683 + $0x24] sm:$0xff]
        %v2035 = vld [vmem:[%s1683 + $0x3c] sm:$0xff]
        %v2036 = vld [vmem:[%s1683 + $0x54] sm:$0xff]
        %v2037 = vld [vmem:[%s1683 + $0x6c] sm:$0xff]
        %v2038 = vld [vmem:[%s1683 + $0x84] sm:$0xff]
        %v2039 = vld [vmem:[%s1683 + $0x9c] sm:$0xff]
        %v2040 = vld [vmem:[%s1683 + $0xb4] sm:$0xff]
        %v2041 = vld [vmem:[%s1692 + $0xc] sm:$0x1]
        %v2042 = vlaneseq
        %v2043 = vshrl.u32 %v2042, 7
        %v2044 = vsub.s32 0, %v2043
        %v2045 = vrot.slane %v2041, %v2044
        %v2046 = vmul.f32 %v2033, %v2045
        %v2047 = vmul.f32 %v2034, %v2045
        %v2048 = vmul.f32 %v2035, %v2045
        %v2049 = vmul.f32 %v2036, %v2045
        %v2050 = vmul.f32 %v2037, %v2045
        %v2051 = vmul.f32 %v2038, %v2045
        %v2052 = vmul.f32 %v2039, %v2045
        %v2053 = vmul.f32 %v2040, %v2045
        %v2054 = vadd.f32 %v2025, %v2046
        %v2055 = vadd.f32 %v2026, %v2047
        %v2056 = vadd.f32 %v2027, %v2048
        %v2057 = vadd.f32 %v2028, %v2049
        %v2058 = vadd.f32 %v2029, %v2050
        %v2059 = vadd.f32 %v2030, %v2051
        %v2060 = vadd.f32 %v2031, %v2052
        %v2061 = vadd.f32 %v2032, %v2053
        %s2062 = scalar_lea.vmem %s168, 120
        %v2063 = vld [vmem:[%s2062] sm:$0xff]
        %v2064 = vld [vmem:[%s2062 + $0x18] sm:$0xff]
        %v2065 = vld [vmem:[%s2062 + $0x30] sm:$0xff]
        %v2066 = vld [vmem:[%s2062 + $0x48] sm:$0xff]
        %v2067 = vld [vmem:[%s2062 + $0x60] sm:$0xff]
        %v2068 = vld [vmem:[%s2062 + $0x78] sm:$0xff]
        %v2069 = vld [vmem:[%s2062 + $0x90] sm:$0xff]
        %v2070 = vld [vmem:[%s2062 + $0xa8] sm:$0xff]
        %s2071 = scalar_lea.vmem %s1, 80
        %v2072 = vld [vmem:[%s2071] sm:$0x1]
        %v2073 = vlaneseq
        %v2074 = vshrl.u32 %v2073, 7
        %v2075 = vsub.s32 0, %v2074
        %v2076 = vrot.slane %v2072, %v2075
        %v2077 = vmul.f32 %v2063, %v2076
        %v2078 = vmul.f32 %v2064, %v2076
        %v2079 = vmul.f32 %v2065, %v2076
        %v2080 = vmul.f32 %v2066, %v2076
        %v2081 = vmul.f32 %v2067, %v2076
        %v2082 = vmul.f32 %v2068, %v2076
        %v2083 = vmul.f32 %v2069, %v2076
        %v2084 = vmul.f32 %v2070, %v2076
        %v2085 = vadd.f32 %v2054, %v2077
        %v2086 = vadd.f32 %v2055, %v2078
        %v2087 = vadd.f32 %v2056, %v2079
        %v2088 = vadd.f32 %v2057, %v2080
        %v2089 = vadd.f32 %v2058, %v2081
        %v2090 = vadd.f32 %v2059, %v2082
        %v2091 = vadd.f32 %v2060, %v2083
        %v2092 = vadd.f32 %v2061, %v2084
        %v2093 = vld [vmem:[%s2062 + $0x1] sm:$0xff]
        %v2094 = vld [vmem:[%s2062 + $0x19] sm:$0xff]
        %v2095 = vld [vmem:[%s2062 + $0x31] sm:$0xff]
        %v2096 = vld [vmem:[%s2062 + $0x49] sm:$0xff]
        %v2097 = vld [vmem:[%s2062 + $0x61] sm:$0xff]
        %v2098 = vld [vmem:[%s2062 + $0x79] sm:$0xff]
        %v2099 = vld [vmem:[%s2062 + $0x91] sm:$0xff]
        %v2100 = vld [vmem:[%s2062 + $0xa9] sm:$0xff]
        %v2101 = vld [vmem:[%s2071 + $0x1] sm:$0x1]
        %v2102 = vlaneseq
        %v2103 = vshrl.u32 %v2102, 7
        %v2104 = vsub.s32 0, %v2103
        %v2105 = vrot.slane %v2101, %v2104
        %v2106 = vmul.f32 %v2093, %v2105
        %v2107 = vmul.f32 %v2094, %v2105
        %v2108 = vmul.f32 %v2095, %v2105
        %v2109 = vmul.f32 %v2096, %v2105
        %v2110 = vmul.f32 %v2097, %v2105
        %v2111 = vmul.f32 %v2098, %v2105
        %v2112 = vmul.f32 %v2099, %v2105
        %v2113 = vmul.f32 %v2100, %v2105
        %v2114 = vadd.f32 %v2085, %v2106
        %v2115 = vadd.f32 %v2086, %v2107
        %v2116 = vadd.f32 %v2087, %v2108
        %v2117 = vadd.f32 %v2088, %v2109
        %v2118 = vadd.f32 %v2089, %v2110
        %v2119 = vadd.f32 %v2090, %v2111
        %v2120 = vadd.f32 %v2091, %v2112
        %v2121 = vadd.f32 %v2092, %v2113
        %v2122 = vld [vmem:[%s2062 + $0x2] sm:$0xff]
        %v2123 = vld [vmem:[%s2062 + $0x1a] sm:$0xff]
        %v2124 = vld [vmem:[%s2062 + $0x32] sm:$0xff]
        %v2125 = vld [vmem:[%s2062 + $0x4a] sm:$0xff]
        %v2126 = vld [vmem:[%s2062 + $0x62] sm:$0xff]
        %v2127 = vld [vmem:[%s2062 + $0x7a] sm:$0xff]
        %v2128 = vld [vmem:[%s2062 + $0x92] sm:$0xff]
        %v2129 = vld [vmem:[%s2062 + $0xaa] sm:$0xff]
        %v2130 = vld [vmem:[%s2071 + $0x2] sm:$0x1]
        %v2131 = vlaneseq
        %v2132 = vshrl.u32 %v2131, 7
        %v2133 = vsub.s32 0, %v2132
        %v2134 = vrot.slane %v2130, %v2133
        %v2135 = vmul.f32 %v2122, %v2134
        %v2136 = vmul.f32 %v2123, %v2134
        %v2137 = vmul.f32 %v2124, %v2134
        %v2138 = vmul.f32 %v2125, %v2134
        %v2139 = vmul.f32 %v2126, %v2134
        %v2140 = vmul.f32 %v2127, %v2134
        %v2141 = vmul.f32 %v2128, %v2134
        %v2142 = vmul.f32 %v2129, %v2134
        %v2143 = vadd.f32 %v2114, %v2135
        %v2144 = vadd.f32 %v2115, %v2136
        %v2145 = vadd.f32 %v2116, %v2137
        %v2146 = vadd.f32 %v2117, %v2138
        %v2147 = vadd.f32 %v2118, %v2139
        %v2148 = vadd.f32 %v2119, %v2140
        %v2149 = vadd.f32 %v2120, %v2141
        %v2150 = vadd.f32 %v2121, %v2142
        %v2151 = vld [vmem:[%s2062 + $0x3] sm:$0xff]
        %v2152 = vld [vmem:[%s2062 + $0x1b] sm:$0xff]
        %v2153 = vld [vmem:[%s2062 + $0x33] sm:$0xff]
        %v2154 = vld [vmem:[%s2062 + $0x4b] sm:$0xff]
        %v2155 = vld [vmem:[%s2062 + $0x63] sm:$0xff]
        %v2156 = vld [vmem:[%s2062 + $0x7b] sm:$0xff]
        %v2157 = vld [vmem:[%s2062 + $0x93] sm:$0xff]
        %v2158 = vld [vmem:[%s2062 + $0xab] sm:$0xff]
        %v2159 = vld [vmem:[%s2071 + $0x3] sm:$0x1]
        %v2160 = vlaneseq
        %v2161 = vshrl.u32 %v2160, 7
        %v2162 = vsub.s32 0, %v2161
        %v2163 = vrot.slane %v2159, %v2162
        %v2164 = vmul.f32 %v2151, %v2163
        %v2165 = vmul.f32 %v2152, %v2163
        %v2166 = vmul.f32 %v2153, %v2163
        %v2167 = vmul.f32 %v2154, %v2163
        %v2168 = vmul.f32 %v2155, %v2163
        %v2169 = vmul.f32 %v2156, %v2163
        %v2170 = vmul.f32 %v2157, %v2163
        %v2171 = vmul.f32 %v2158, %v2163
        %v2172 = vadd.f32 %v2143, %v2164
        %v2173 = vadd.f32 %v2144, %v2165
        %v2174 = vadd.f32 %v2145, %v2166
        %v2175 = vadd.f32 %v2146, %v2167
        %v2176 = vadd.f32 %v2147, %v2168
        %v2177 = vadd.f32 %v2148, %v2169
        %v2178 = vadd.f32 %v2149, %v2170
        %v2179 = vadd.f32 %v2150, %v2171
        %v2180 = vld [vmem:[%s2062 + $0x4] sm:$0xff]
        %v2181 = vld [vmem:[%s2062 + $0x1c] sm:$0xff]
        %v2182 = vld [vmem:[%s2062 + $0x34] sm:$0xff]
        %v2183 = vld [vmem:[%s2062 + $0x4c] sm:$0xff]
        %v2184 = vld [vmem:[%s2062 + $0x64] sm:$0xff]
        %v2185 = vld [vmem:[%s2062 + $0x7c] sm:$0xff]
        %v2186 = vld [vmem:[%s2062 + $0x94] sm:$0xff]
        %v2187 = vld [vmem:[%s2062 + $0xac] sm:$0xff]
        %v2188 = vld [vmem:[%s2071 + $0x4] sm:$0x1]
        %v2189 = vlaneseq
        %v2190 = vshrl.u32 %v2189, 7
        %v2191 = vsub.s32 0, %v2190
        %v2192 = vrot.slane %v2188, %v2191
        %v2193 = vmul.f32 %v2180, %v2192
        %v2194 = vmul.f32 %v2181, %v2192
        %v2195 = vmul.f32 %v2182, %v2192
        %v2196 = vmul.f32 %v2183, %v2192
        %v2197 = vmul.f32 %v2184, %v2192
        %v2198 = vmul.f32 %v2185, %v2192
        %v2199 = vmul.f32 %v2186, %v2192
        %v2200 = vmul.f32 %v2187, %v2192
        %v2201 = vadd.f32 %v2172, %v2193
        %v2202 = vadd.f32 %v2173, %v2194
        %v2203 = vadd.f32 %v2174, %v2195
        %v2204 = vadd.f32 %v2175, %v2196
        %v2205 = vadd.f32 %v2176, %v2197
        %v2206 = vadd.f32 %v2177, %v2198
        %v2207 = vadd.f32 %v2178, %v2199
        %v2208 = vadd.f32 %v2179, %v2200
        %v2209 = vld [vmem:[%s2062 + $0x5] sm:$0xff]
        %v2210 = vld [vmem:[%s2062 + $0x1d] sm:$0xff]
        %v2211 = vld [vmem:[%s2062 + $0x35] sm:$0xff]
        %v2212 = vld [vmem:[%s2062 + $0x4d] sm:$0xff]
        %v2213 = vld [vmem:[%s2062 + $0x65] sm:$0xff]
        %v2214 = vld [vmem:[%s2062 + $0x7d] sm:$0xff]
        %v2215 = vld [vmem:[%s2062 + $0x95] sm:$0xff]
        %v2216 = vld [vmem:[%s2062 + $0xad] sm:$0xff]
        %v2217 = vld [vmem:[%s2071 + $0x5] sm:$0x1]
        %v2218 = vlaneseq
        %v2219 = vshrl.u32 %v2218, 7
        %v2220 = vsub.s32 0, %v2219
        %v2221 = vrot.slane %v2217, %v2220
        %v2222 = vmul.f32 %v2209, %v2221
        %v2223 = vmul.f32 %v2210, %v2221
        %v2224 = vmul.f32 %v2211, %v2221
        %v2225 = vmul.f32 %v2212, %v2221
        %v2226 = vmul.f32 %v2213, %v2221
        %v2227 = vmul.f32 %v2214, %v2221
        %v2228 = vmul.f32 %v2215, %v2221
        %v2229 = vmul.f32 %v2216, %v2221
        %v2230 = vadd.f32 %v2201, %v2222
        %v2231 = vadd.f32 %v2202, %v2223
        %v2232 = vadd.f32 %v2203, %v2224
        %v2233 = vadd.f32 %v2204, %v2225
        %v2234 = vadd.f32 %v2205, %v2226
        %v2235 = vadd.f32 %v2206, %v2227
        %v2236 = vadd.f32 %v2207, %v2228
        %v2237 = vadd.f32 %v2208, %v2229
        %v2238 = vld [vmem:[%s2062 + $0x6] sm:$0xff]
        %v2239 = vld [vmem:[%s2062 + $0x1e] sm:$0xff]
        %v2240 = vld [vmem:[%s2062 + $0x36] sm:$0xff]
        %v2241 = vld [vmem:[%s2062 + $0x4e] sm:$0xff]
        %v2242 = vld [vmem:[%s2062 + $0x66] sm:$0xff]
        %v2243 = vld [vmem:[%s2062 + $0x7e] sm:$0xff]
        %v2244 = vld [vmem:[%s2062 + $0x96] sm:$0xff]
        %v2245 = vld [vmem:[%s2062 + $0xae] sm:$0xff]
        %v2246 = vld [vmem:[%s2071 + $0x6] sm:$0x1]
        %v2247 = vlaneseq
        %v2248 = vshrl.u32 %v2247, 7
        %v2249 = vsub.s32 0, %v2248
        %v2250 = vrot.slane %v2246, %v2249
        %v2251 = vmul.f32 %v2238, %v2250
        %v2252 = vmul.f32 %v2239, %v2250
        %v2253 = vmul.f32 %v2240, %v2250
        %v2254 = vmul.f32 %v2241, %v2250
        %v2255 = vmul.f32 %v2242, %v2250
        %v2256 = vmul.f32 %v2243, %v2250
        %v2257 = vmul.f32 %v2244, %v2250
        %v2258 = vmul.f32 %v2245, %v2250
        %v2259 = vadd.f32 %v2230, %v2251
        %v2260 = vadd.f32 %v2231, %v2252
        %v2261 = vadd.f32 %v2232, %v2253
        %v2262 = vadd.f32 %v2233, %v2254
        %v2263 = vadd.f32 %v2234, %v2255
        %v2264 = vadd.f32 %v2235, %v2256
        %v2265 = vadd.f32 %v2236, %v2257
        %v2266 = vadd.f32 %v2237, %v2258
        %v2267 = vld [vmem:[%s2062 + $0x7] sm:$0xff]
        %v2268 = vld [vmem:[%s2062 + $0x1f] sm:$0xff]
        %v2269 = vld [vmem:[%s2062 + $0x37] sm:$0xff]
        %v2270 = vld [vmem:[%s2062 + $0x4f] sm:$0xff]
        %v2271 = vld [vmem:[%s2062 + $0x67] sm:$0xff]
        %v2272 = vld [vmem:[%s2062 + $0x7f] sm:$0xff]
        %v2273 = vld [vmem:[%s2062 + $0x97] sm:$0xff]
        %v2274 = vld [vmem:[%s2062 + $0xaf] sm:$0xff]
        %v2275 = vld [vmem:[%s2071 + $0x7] sm:$0x1]
        %v2276 = vlaneseq
        %v2277 = vshrl.u32 %v2276, 7
        %v2278 = vsub.s32 0, %v2277
        %v2279 = vrot.slane %v2275, %v2278
        %v2280 = vmul.f32 %v2267, %v2279
        %v2281 = vmul.f32 %v2268, %v2279
        %v2282 = vmul.f32 %v2269, %v2279
        %v2283 = vmul.f32 %v2270, %v2279
        %v2284 = vmul.f32 %v2271, %v2279
        %v2285 = vmul.f32 %v2272, %v2279
        %v2286 = vmul.f32 %v2273, %v2279
        %v2287 = vmul.f32 %v2274, %v2279
        %v2288 = vadd.f32 %v2259, %v2280
        %v2289 = vadd.f32 %v2260, %v2281
        %v2290 = vadd.f32 %v2261, %v2282
        %v2291 = vadd.f32 %v2262, %v2283
        %v2292 = vadd.f32 %v2263, %v2284
        %v2293 = vadd.f32 %v2264, %v2285
        %v2294 = vadd.f32 %v2265, %v2286
        %v2295 = vadd.f32 %v2266, %v2287
        %v2296 = vld [vmem:[%s2062 + $0x8] sm:$0xff]
        %v2297 = vld [vmem:[%s2062 + $0x20] sm:$0xff]
        %v2298 = vld [vmem:[%s2062 + $0x38] sm:$0xff]
        %v2299 = vld [vmem:[%s2062 + $0x50] sm:$0xff]
        %v2300 = vld [vmem:[%s2062 + $0x68] sm:$0xff]
        %v2301 = vld [vmem:[%s2062 + $0x80] sm:$0xff]
        %v2302 = vld [vmem:[%s2062 + $0x98] sm:$0xff]
        %v2303 = vld [vmem:[%s2062 + $0xb0] sm:$0xff]
        %v2304 = vld [vmem:[%s2071 + $0x8] sm:$0x1]
        %v2305 = vlaneseq
        %v2306 = vshrl.u32 %v2305, 7
        %v2307 = vsub.s32 0, %v2306
        %v2308 = vrot.slane %v2304, %v2307
        %v2309 = vmul.f32 %v2296, %v2308
        %v2310 = vmul.f32 %v2297, %v2308
        %v2311 = vmul.f32 %v2298, %v2308
        %v2312 = vmul.f32 %v2299, %v2308
        %v2313 = vmul.f32 %v2300, %v2308
        %v2314 = vmul.f32 %v2301, %v2308
        %v2315 = vmul.f32 %v2302, %v2308
        %v2316 = vmul.f32 %v2303, %v2308
        %v2317 = vadd.f32 %v2288, %v2309
        %v2318 = vadd.f32 %v2289, %v2310
        %v2319 = vadd.f32 %v2290, %v2311
        %v2320 = vadd.f32 %v2291, %v2312
        %v2321 = vadd.f32 %v2292, %v2313
        %v2322 = vadd.f32 %v2293, %v2314
        %v2323 = vadd.f32 %v2294, %v2315
        %v2324 = vadd.f32 %v2295, %v2316
        %v2325 = vld [vmem:[%s2062 + $0x9] sm:$0xff]
        %v2326 = vld [vmem:[%s2062 + $0x21] sm:$0xff]
        %v2327 = vld [vmem:[%s2062 + $0x39] sm:$0xff]
        %v2328 = vld [vmem:[%s2062 + $0x51] sm:$0xff]
        %v2329 = vld [vmem:[%s2062 + $0x69] sm:$0xff]
        %v2330 = vld [vmem:[%s2062 + $0x81] sm:$0xff]
        %v2331 = vld [vmem:[%s2062 + $0x99] sm:$0xff]
        %v2332 = vld [vmem:[%s2062 + $0xb1] sm:$0xff]
        %v2333 = vld [vmem:[%s2071 + $0x9] sm:$0x1]
        %v2334 = vlaneseq
        %v2335 = vshrl.u32 %v2334, 7
        %v2336 = vsub.s32 0, %v2335
        %v2337 = vrot.slane %v2333, %v2336
        %v2338 = vmul.f32 %v2325, %v2337
        %v2339 = vmul.f32 %v2326, %v2337
        %v2340 = vmul.f32 %v2327, %v2337
        %v2341 = vmul.f32 %v2328, %v2337
        %v2342 = vmul.f32 %v2329, %v2337
        %v2343 = vmul.f32 %v2330, %v2337
        %v2344 = vmul.f32 %v2331, %v2337
        %v2345 = vmul.f32 %v2332, %v2337
        %v2346 = vadd.f32 %v2317, %v2338
        %v2347 = vadd.f32 %v2318, %v2339
        %v2348 = vadd.f32 %v2319, %v2340
        %v2349 = vadd.f32 %v2320, %v2341
        %v2350 = vadd.f32 %v2321, %v2342
        %v2351 = vadd.f32 %v2322, %v2343
        %v2352 = vadd.f32 %v2323, %v2344
        %v2353 = vadd.f32 %v2324, %v2345
        %v2354 = vld [vmem:[%s2062 + $0xa] sm:$0xff]
        %v2355 = vld [vmem:[%s2062 + $0x22] sm:$0xff]
        %v2356 = vld [vmem:[%s2062 + $0x3a] sm:$0xff]
        %v2357 = vld [vmem:[%s2062 + $0x52] sm:$0xff]
        %v2358 = vld [vmem:[%s2062 + $0x6a] sm:$0xff]
        %v2359 = vld [vmem:[%s2062 + $0x82] sm:$0xff]
        %v2360 = vld [vmem:[%s2062 + $0x9a] sm:$0xff]
        %v2361 = vld [vmem:[%s2062 + $0xb2] sm:$0xff]
        %v2362 = vld [vmem:[%s2071 + $0xa] sm:$0x1]
        %v2363 = vlaneseq
        %v2364 = vshrl.u32 %v2363, 7
        %v2365 = vsub.s32 0, %v2364
        %v2366 = vrot.slane %v2362, %v2365
        %v2367 = vmul.f32 %v2354, %v2366
        %v2368 = vmul.f32 %v2355, %v2366
        %v2369 = vmul.f32 %v2356, %v2366
        %v2370 = vmul.f32 %v2357, %v2366
        %v2371 = vmul.f32 %v2358, %v2366
        %v2372 = vmul.f32 %v2359, %v2366
        %v2373 = vmul.f32 %v2360, %v2366
        %v2374 = vmul.f32 %v2361, %v2366
        %v2375 = vadd.f32 %v2346, %v2367
        %v2376 = vadd.f32 %v2347, %v2368
        %v2377 = vadd.f32 %v2348, %v2369
        %v2378 = vadd.f32 %v2349, %v2370
        %v2379 = vadd.f32 %v2350, %v2371
        %v2380 = vadd.f32 %v2351, %v2372
        %v2381 = vadd.f32 %v2352, %v2373
        %v2382 = vadd.f32 %v2353, %v2374
        %v2383 = vld [vmem:[%s2062 + $0xb] sm:$0xff]
        %v2384 = vld [vmem:[%s2062 + $0x23] sm:$0xff]
        %v2385 = vld [vmem:[%s2062 + $0x3b] sm:$0xff]
        %v2386 = vld [vmem:[%s2062 + $0x53] sm:$0xff]
        %v2387 = vld [vmem:[%s2062 + $0x6b] sm:$0xff]
        %v2388 = vld [vmem:[%s2062 + $0x83] sm:$0xff]
        %v2389 = vld [vmem:[%s2062 + $0x9b] sm:$0xff]
        %v2390 = vld [vmem:[%s2062 + $0xb3] sm:$0xff]
        %v2391 = vld [vmem:[%s2071 + $0xb] sm:$0x1]
        %v2392 = vlaneseq
        %v2393 = vshrl.u32 %v2392, 7
        %v2394 = vsub.s32 0, %v2393
        %v2395 = vrot.slane %v2391, %v2394
        %v2396 = vmul.f32 %v2383, %v2395
        %v2397 = vmul.f32 %v2384, %v2395
        %v2398 = vmul.f32 %v2385, %v2395
        %v2399 = vmul.f32 %v2386, %v2395
        %v2400 = vmul.f32 %v2387, %v2395
        %v2401 = vmul.f32 %v2388, %v2395
        %v2402 = vmul.f32 %v2389, %v2395
        %v2403 = vmul.f32 %v2390, %v2395
        %v2404 = vadd.f32 %v2375, %v2396
        %v2405 = vadd.f32 %v2376, %v2397
        %v2406 = vadd.f32 %v2377, %v2398
        %v2407 = vadd.f32 %v2378, %v2399
        %v2408 = vadd.f32 %v2379, %v2400
        %v2409 = vadd.f32 %v2380, %v2401
        %v2410 = vadd.f32 %v2381, %v2402
        %v2411 = vadd.f32 %v2382, %v2403
        %v2412 = vld [vmem:[%s2062 + $0xc] sm:$0xff]
        %v2413 = vld [vmem:[%s2062 + $0x24] sm:$0xff]
        %v2414 = vld [vmem:[%s2062 + $0x3c] sm:$0xff]
        %v2415 = vld [vmem:[%s2062 + $0x54] sm:$0xff]
        %v2416 = vld [vmem:[%s2062 + $0x6c] sm:$0xff]
        %v2417 = vld [vmem:[%s2062 + $0x84] sm:$0xff]
        %v2418 = vld [vmem:[%s2062 + $0x9c] sm:$0xff]
        %v2419 = vld [vmem:[%s2062 + $0xb4] sm:$0xff]
        %v2420 = vld [vmem:[%s2071 + $0xc] sm:$0x1]
        %v2421 = vlaneseq
        %v2422 = vshrl.u32 %v2421, 7
        %v2423 = vsub.s32 0, %v2422
        %v2424 = vrot.slane %v2420, %v2423
        %v2425 = vmul.f32 %v2412, %v2424
        %v2426 = vmul.f32 %v2413, %v2424
        %v2427 = vmul.f32 %v2414, %v2424
        %v2428 = vmul.f32 %v2415, %v2424
        %v2429 = vmul.f32 %v2416, %v2424
        %v2430 = vmul.f32 %v2417, %v2424
        %v2431 = vmul.f32 %v2418, %v2424
        %v2432 = vmul.f32 %v2419, %v2424
        %v2433 = vadd.f32 %v2404, %v2425
        %v2434 = vadd.f32 %v2405, %v2426
        %v2435 = vadd.f32 %v2406, %v2427
        %v2436 = vadd.f32 %v2407, %v2428
        %v2437 = vadd.f32 %v2408, %v2429
        %v2438 = vadd.f32 %v2409, %v2430
        %v2439 = vadd.f32 %v2410, %v2431
        %v2440 = vadd.f32 %v2411, %v2432
        %s2441 = scalar_lea.vmem %s168, 144
        %v2442 = vld [vmem:[%s2441] sm:$0xff]
        %v2443 = vld [vmem:[%s2441 + $0x18] sm:$0xff]
        %v2444 = vld [vmem:[%s2441 + $0x30] sm:$0xff]
        %v2445 = vld [vmem:[%s2441 + $0x48] sm:$0xff]
        %v2446 = vld [vmem:[%s2441 + $0x60] sm:$0xff]
        %v2447 = vld [vmem:[%s2441 + $0x78] sm:$0xff]
        %v2448 = vld [vmem:[%s2441 + $0x90] sm:$0xff]
        %v2449 = vld [vmem:[%s2441 + $0xa8] sm:$0xff]
        %s2450 = scalar_lea.vmem %s1, 96
        %v2451 = vld [vmem:[%s2450] sm:$0x1]
        %v2452 = vlaneseq
        %v2453 = vshrl.u32 %v2452, 7
        %v2454 = vsub.s32 0, %v2453
        %v2455 = vrot.slane %v2451, %v2454
        %v2456 = vmul.f32 %v2442, %v2455
        %v2457 = vmul.f32 %v2443, %v2455
        %v2458 = vmul.f32 %v2444, %v2455
        %v2459 = vmul.f32 %v2445, %v2455
        %v2460 = vmul.f32 %v2446, %v2455
        %v2461 = vmul.f32 %v2447, %v2455
        %v2462 = vmul.f32 %v2448, %v2455
        %v2463 = vmul.f32 %v2449, %v2455
        %v2464 = vadd.f32 %v2433, %v2456
        %v2465 = vadd.f32 %v2434, %v2457
        %v2466 = vadd.f32 %v2435, %v2458
        %v2467 = vadd.f32 %v2436, %v2459
        %v2468 = vadd.f32 %v2437, %v2460
        %v2469 = vadd.f32 %v2438, %v2461
        %v2470 = vadd.f32 %v2439, %v2462
        %v2471 = vadd.f32 %v2440, %v2463
        %v2472 = vld [vmem:[%s2441 + $0x1] sm:$0xff]
        %v2473 = vld [vmem:[%s2441 + $0x19] sm:$0xff]
        %v2474 = vld [vmem:[%s2441 + $0x31] sm:$0xff]
        %v2475 = vld [vmem:[%s2441 + $0x49] sm:$0xff]
        %v2476 = vld [vmem:[%s2441 + $0x61] sm:$0xff]
        %v2477 = vld [vmem:[%s2441 + $0x79] sm:$0xff]
        %v2478 = vld [vmem:[%s2441 + $0x91] sm:$0xff]
        %v2479 = vld [vmem:[%s2441 + $0xa9] sm:$0xff]
        %v2480 = vld [vmem:[%s2450 + $0x1] sm:$0x1]
        %v2481 = vlaneseq
        %v2482 = vshrl.u32 %v2481, 7
        %v2483 = vsub.s32 0, %v2482
        %v2484 = vrot.slane %v2480, %v2483
        %v2485 = vmul.f32 %v2472, %v2484
        %v2486 = vmul.f32 %v2473, %v2484
        %v2487 = vmul.f32 %v2474, %v2484
        %v2488 = vmul.f32 %v2475, %v2484
        %v2489 = vmul.f32 %v2476, %v2484
        %v2490 = vmul.f32 %v2477, %v2484
        %v2491 = vmul.f32 %v2478, %v2484
        %v2492 = vmul.f32 %v2479, %v2484
        %v2493 = vadd.f32 %v2464, %v2485
        %v2494 = vadd.f32 %v2465, %v2486
        %v2495 = vadd.f32 %v2466, %v2487
        %v2496 = vadd.f32 %v2467, %v2488
        %v2497 = vadd.f32 %v2468, %v2489
        %v2498 = vadd.f32 %v2469, %v2490
        %v2499 = vadd.f32 %v2470, %v2491
        %v2500 = vadd.f32 %v2471, %v2492
        %v2501 = vld [vmem:[%s2441 + $0x2] sm:$0xff]
        %v2502 = vld [vmem:[%s2441 + $0x1a] sm:$0xff]
        %v2503 = vld [vmem:[%s2441 + $0x32] sm:$0xff]
        %v2504 = vld [vmem:[%s2441 + $0x4a] sm:$0xff]
        %v2505 = vld [vmem:[%s2441 + $0x62] sm:$0xff]
        %v2506 = vld [vmem:[%s2441 + $0x7a] sm:$0xff]
        %v2507 = vld [vmem:[%s2441 + $0x92] sm:$0xff]
        %v2508 = vld [vmem:[%s2441 + $0xaa] sm:$0xff]
        %v2509 = vld [vmem:[%s2450 + $0x2] sm:$0x1]
        %v2510 = vlaneseq
        %v2511 = vshrl.u32 %v2510, 7
        %v2512 = vsub.s32 0, %v2511
        %v2513 = vrot.slane %v2509, %v2512
        %v2514 = vmul.f32 %v2501, %v2513
        %v2515 = vmul.f32 %v2502, %v2513
        %v2516 = vmul.f32 %v2503, %v2513
        %v2517 = vmul.f32 %v2504, %v2513
        %v2518 = vmul.f32 %v2505, %v2513
        %v2519 = vmul.f32 %v2506, %v2513
        %v2520 = vmul.f32 %v2507, %v2513
        %v2521 = vmul.f32 %v2508, %v2513
        %v2522 = vadd.f32 %v2493, %v2514
        %v2523 = vadd.f32 %v2494, %v2515
        %v2524 = vadd.f32 %v2495, %v2516
        %v2525 = vadd.f32 %v2496, %v2517
        %v2526 = vadd.f32 %v2497, %v2518
        %v2527 = vadd.f32 %v2498, %v2519
        %v2528 = vadd.f32 %v2499, %v2520
        %v2529 = vadd.f32 %v2500, %v2521
        %v2530 = vld [vmem:[%s2441 + $0x3] sm:$0xff]
        %v2531 = vld [vmem:[%s2441 + $0x1b] sm:$0xff]
        %v2532 = vld [vmem:[%s2441 + $0x33] sm:$0xff]
        %v2533 = vld [vmem:[%s2441 + $0x4b] sm:$0xff]
        %v2534 = vld [vmem:[%s2441 + $0x63] sm:$0xff]
        %v2535 = vld [vmem:[%s2441 + $0x7b] sm:$0xff]
        %v2536 = vld [vmem:[%s2441 + $0x93] sm:$0xff]
        %v2537 = vld [vmem:[%s2441 + $0xab] sm:$0xff]
        %v2538 = vld [vmem:[%s2450 + $0x3] sm:$0x1]
        %v2539 = vlaneseq
        %v2540 = vshrl.u32 %v2539, 7
        %v2541 = vsub.s32 0, %v2540
        %v2542 = vrot.slane %v2538, %v2541
        %v2543 = vmul.f32 %v2530, %v2542
        %v2544 = vmul.f32 %v2531, %v2542
        %v2545 = vmul.f32 %v2532, %v2542
        %v2546 = vmul.f32 %v2533, %v2542
        %v2547 = vmul.f32 %v2534, %v2542
        %v2548 = vmul.f32 %v2535, %v2542
        %v2549 = vmul.f32 %v2536, %v2542
        %v2550 = vmul.f32 %v2537, %v2542
        %v2551 = vadd.f32 %v2522, %v2543
        %v2552 = vadd.f32 %v2523, %v2544
        %v2553 = vadd.f32 %v2524, %v2545
        %v2554 = vadd.f32 %v2525, %v2546
        %v2555 = vadd.f32 %v2526, %v2547
        %v2556 = vadd.f32 %v2527, %v2548
        %v2557 = vadd.f32 %v2528, %v2549
        %v2558 = vadd.f32 %v2529, %v2550
        %v2559 = vld [vmem:[%s2441 + $0x4] sm:$0xff]
        %v2560 = vld [vmem:[%s2441 + $0x1c] sm:$0xff]
        %v2561 = vld [vmem:[%s2441 + $0x34] sm:$0xff]
        %v2562 = vld [vmem:[%s2441 + $0x4c] sm:$0xff]
        %v2563 = vld [vmem:[%s2441 + $0x64] sm:$0xff]
        %v2564 = vld [vmem:[%s2441 + $0x7c] sm:$0xff]
        %v2565 = vld [vmem:[%s2441 + $0x94] sm:$0xff]
        %v2566 = vld [vmem:[%s2441 + $0xac] sm:$0xff]
        %v2567 = vld [vmem:[%s2450 + $0x4] sm:$0x1]
        %v2568 = vlaneseq
        %v2569 = vshrl.u32 %v2568, 7
        %v2570 = vsub.s32 0, %v2569
        %v2571 = vrot.slane %v2567, %v2570
        %v2572 = vmul.f32 %v2559, %v2571
        %v2573 = vmul.f32 %v2560, %v2571
        %v2574 = vmul.f32 %v2561, %v2571
        %v2575 = vmul.f32 %v2562, %v2571
        %v2576 = vmul.f32 %v2563, %v2571
        %v2577 = vmul.f32 %v2564, %v2571
        %v2578 = vmul.f32 %v2565, %v2571
        %v2579 = vmul.f32 %v2566, %v2571
        %v2580 = vadd.f32 %v2551, %v2572
        %v2581 = vadd.f32 %v2552, %v2573
        %v2582 = vadd.f32 %v2553, %v2574
        %v2583 = vadd.f32 %v2554, %v2575
        %v2584 = vadd.f32 %v2555, %v2576
        %v2585 = vadd.f32 %v2556, %v2577
        %v2586 = vadd.f32 %v2557, %v2578
        %v2587 = vadd.f32 %v2558, %v2579
        %v2588 = vld [vmem:[%s2441 + $0x5] sm:$0xff]
        %v2589 = vld [vmem:[%s2441 + $0x1d] sm:$0xff]
        %v2590 = vld [vmem:[%s2441 + $0x35] sm:$0xff]
        %v2591 = vld [vmem:[%s2441 + $0x4d] sm:$0xff]
        %v2592 = vld [vmem:[%s2441 + $0x65] sm:$0xff]
        %v2593 = vld [vmem:[%s2441 + $0x7d] sm:$0xff]
        %v2594 = vld [vmem:[%s2441 + $0x95] sm:$0xff]
        %v2595 = vld [vmem:[%s2441 + $0xad] sm:$0xff]
        %v2596 = vld [vmem:[%s2450 + $0x5] sm:$0x1]
        %v2597 = vlaneseq
        %v2598 = vshrl.u32 %v2597, 7
        %v2599 = vsub.s32 0, %v2598
        %v2600 = vrot.slane %v2596, %v2599
        %v2601 = vmul.f32 %v2588, %v2600
        %v2602 = vmul.f32 %v2589, %v2600
        %v2603 = vmul.f32 %v2590, %v2600
        %v2604 = vmul.f32 %v2591, %v2600
        %v2605 = vmul.f32 %v2592, %v2600
        %v2606 = vmul.f32 %v2593, %v2600
        %v2607 = vmul.f32 %v2594, %v2600
        %v2608 = vmul.f32 %v2595, %v2600
        %v2609 = vadd.f32 %v2580, %v2601
        %v2610 = vadd.f32 %v2581, %v2602
        %v2611 = vadd.f32 %v2582, %v2603
        %v2612 = vadd.f32 %v2583, %v2604
        %v2613 = vadd.f32 %v2584, %v2605
        %v2614 = vadd.f32 %v2585, %v2606
        %v2615 = vadd.f32 %v2586, %v2607
        %v2616 = vadd.f32 %v2587, %v2608
        %v2617 = vld [vmem:[%s2441 + $0x6] sm:$0xff]
        %v2618 = vld [vmem:[%s2441 + $0x1e] sm:$0xff]
        %v2619 = vld [vmem:[%s2441 + $0x36] sm:$0xff]
        %v2620 = vld [vmem:[%s2441 + $0x4e] sm:$0xff]
        %v2621 = vld [vmem:[%s2441 + $0x66] sm:$0xff]
        %v2622 = vld [vmem:[%s2441 + $0x7e] sm:$0xff]
        %v2623 = vld [vmem:[%s2441 + $0x96] sm:$0xff]
        %v2624 = vld [vmem:[%s2441 + $0xae] sm:$0xff]
        %v2625 = vld [vmem:[%s2450 + $0x6] sm:$0x1]
        %v2626 = vlaneseq
        %v2627 = vshrl.u32 %v2626, 7
        %v2628 = vsub.s32 0, %v2627
        %v2629 = vrot.slane %v2625, %v2628
        %v2630 = vmul.f32 %v2617, %v2629
        %v2631 = vmul.f32 %v2618, %v2629
        %v2632 = vmul.f32 %v2619, %v2629
        %v2633 = vmul.f32 %v2620, %v2629
        %v2634 = vmul.f32 %v2621, %v2629
        %v2635 = vmul.f32 %v2622, %v2629
        %v2636 = vmul.f32 %v2623, %v2629
        %v2637 = vmul.f32 %v2624, %v2629
        %v2638 = vadd.f32 %v2609, %v2630
        %v2639 = vadd.f32 %v2610, %v2631
        %v2640 = vadd.f32 %v2611, %v2632
        %v2641 = vadd.f32 %v2612, %v2633
        %v2642 = vadd.f32 %v2613, %v2634
        %v2643 = vadd.f32 %v2614, %v2635
        %v2644 = vadd.f32 %v2615, %v2636
        %v2645 = vadd.f32 %v2616, %v2637
        %v2646 = vld [vmem:[%s2441 + $0x7] sm:$0xff]
        %v2647 = vld [vmem:[%s2441 + $0x1f] sm:$0xff]
        %v2648 = vld [vmem:[%s2441 + $0x37] sm:$0xff]
        %v2649 = vld [vmem:[%s2441 + $0x4f] sm:$0xff]
        %v2650 = vld [vmem:[%s2441 + $0x67] sm:$0xff]
        %v2651 = vld [vmem:[%s2441 + $0x7f] sm:$0xff]
        %v2652 = vld [vmem:[%s2441 + $0x97] sm:$0xff]
        %v2653 = vld [vmem:[%s2441 + $0xaf] sm:$0xff]
        %v2654 = vld [vmem:[%s2450 + $0x7] sm:$0x1]
        %v2655 = vlaneseq
        %v2656 = vshrl.u32 %v2655, 7
        %v2657 = vsub.s32 0, %v2656
        %v2658 = vrot.slane %v2654, %v2657
        %v2659 = vmul.f32 %v2646, %v2658
        %v2660 = vmul.f32 %v2647, %v2658
        %v2661 = vmul.f32 %v2648, %v2658
        %v2662 = vmul.f32 %v2649, %v2658
        %v2663 = vmul.f32 %v2650, %v2658
        %v2664 = vmul.f32 %v2651, %v2658
        %v2665 = vmul.f32 %v2652, %v2658
        %v2666 = vmul.f32 %v2653, %v2658
        %v2667 = vadd.f32 %v2638, %v2659
        %v2668 = vadd.f32 %v2639, %v2660
        %v2669 = vadd.f32 %v2640, %v2661
        %v2670 = vadd.f32 %v2641, %v2662
        %v2671 = vadd.f32 %v2642, %v2663
        %v2672 = vadd.f32 %v2643, %v2664
        %v2673 = vadd.f32 %v2644, %v2665
        %v2674 = vadd.f32 %v2645, %v2666
        %v2675 = vld [vmem:[%s2441 + $0x8] sm:$0xff]
        %v2676 = vld [vmem:[%s2441 + $0x20] sm:$0xff]
        %v2677 = vld [vmem:[%s2441 + $0x38] sm:$0xff]
        %v2678 = vld [vmem:[%s2441 + $0x50] sm:$0xff]
        %v2679 = vld [vmem:[%s2441 + $0x68] sm:$0xff]
        %v2680 = vld [vmem:[%s2441 + $0x80] sm:$0xff]
        %v2681 = vld [vmem:[%s2441 + $0x98] sm:$0xff]
        %v2682 = vld [vmem:[%s2441 + $0xb0] sm:$0xff]
        %v2683 = vld [vmem:[%s2450 + $0x8] sm:$0x1]
        %v2684 = vlaneseq
        %v2685 = vshrl.u32 %v2684, 7
        %v2686 = vsub.s32 0, %v2685
        %v2687 = vrot.slane %v2683, %v2686
        %v2688 = vmul.f32 %v2675, %v2687
        %v2689 = vmul.f32 %v2676, %v2687
        %v2690 = vmul.f32 %v2677, %v2687
        %v2691 = vmul.f32 %v2678, %v2687
        %v2692 = vmul.f32 %v2679, %v2687
        %v2693 = vmul.f32 %v2680, %v2687
        %v2694 = vmul.f32 %v2681, %v2687
        %v2695 = vmul.f32 %v2682, %v2687
        %v2696 = vadd.f32 %v2667, %v2688
        %v2697 = vadd.f32 %v2668, %v2689
        %v2698 = vadd.f32 %v2669, %v2690
        %v2699 = vadd.f32 %v2670, %v2691
        %v2700 = vadd.f32 %v2671, %v2692
        %v2701 = vadd.f32 %v2672, %v2693
        %v2702 = vadd.f32 %v2673, %v2694
        %v2703 = vadd.f32 %v2674, %v2695
        %v2704 = vld [vmem:[%s2441 + $0x9] sm:$0xff]
        %v2705 = vld [vmem:[%s2441 + $0x21] sm:$0xff]
        %v2706 = vld [vmem:[%s2441 + $0x39] sm:$0xff]
        %v2707 = vld [vmem:[%s2441 + $0x51] sm:$0xff]
        %v2708 = vld [vmem:[%s2441 + $0x69] sm:$0xff]
        %v2709 = vld [vmem:[%s2441 + $0x81] sm:$0xff]
        %v2710 = vld [vmem:[%s2441 + $0x99] sm:$0xff]
        %v2711 = vld [vmem:[%s2441 + $0xb1] sm:$0xff]
        %v2712 = vld [vmem:[%s2450 + $0x9] sm:$0x1]
        %v2713 = vlaneseq
        %v2714 = vshrl.u32 %v2713, 7
        %v2715 = vsub.s32 0, %v2714
        %v2716 = vrot.slane %v2712, %v2715
        %v2717 = vmul.f32 %v2704, %v2716
        %v2718 = vmul.f32 %v2705, %v2716
        %v2719 = vmul.f32 %v2706, %v2716
        %v2720 = vmul.f32 %v2707, %v2716
        %v2721 = vmul.f32 %v2708, %v2716
        %v2722 = vmul.f32 %v2709, %v2716
        %v2723 = vmul.f32 %v2710, %v2716
        %v2724 = vmul.f32 %v2711, %v2716
        %v2725 = vadd.f32 %v2696, %v2717
        %v2726 = vadd.f32 %v2697, %v2718
        %v2727 = vadd.f32 %v2698, %v2719
        %v2728 = vadd.f32 %v2699, %v2720
        %v2729 = vadd.f32 %v2700, %v2721
        %v2730 = vadd.f32 %v2701, %v2722
        %v2731 = vadd.f32 %v2702, %v2723
        %v2732 = vadd.f32 %v2703, %v2724
        %v2733 = vld [vmem:[%s2441 + $0xa] sm:$0xff]
        %v2734 = vld [vmem:[%s2441 + $0x22] sm:$0xff]
        %v2735 = vld [vmem:[%s2441 + $0x3a] sm:$0xff]
        %v2736 = vld [vmem:[%s2441 + $0x52] sm:$0xff]
        %v2737 = vld [vmem:[%s2441 + $0x6a] sm:$0xff]
        %v2738 = vld [vmem:[%s2441 + $0x82] sm:$0xff]
        %v2739 = vld [vmem:[%s2441 + $0x9a] sm:$0xff]
        %v2740 = vld [vmem:[%s2441 + $0xb2] sm:$0xff]
        %v2741 = vld [vmem:[%s2450 + $0xa] sm:$0x1]
        %v2742 = vlaneseq
        %v2743 = vshrl.u32 %v2742, 7
        %v2744 = vsub.s32 0, %v2743
        %v2745 = vrot.slane %v2741, %v2744
        %v2746 = vmul.f32 %v2733, %v2745
        %v2747 = vmul.f32 %v2734, %v2745
        %v2748 = vmul.f32 %v2735, %v2745
        %v2749 = vmul.f32 %v2736, %v2745
        %v2750 = vmul.f32 %v2737, %v2745
        %v2751 = vmul.f32 %v2738, %v2745
        %v2752 = vmul.f32 %v2739, %v2745
        %v2753 = vmul.f32 %v2740, %v2745
        %v2754 = vadd.f32 %v2725, %v2746
        %v2755 = vadd.f32 %v2726, %v2747
        %v2756 = vadd.f32 %v2727, %v2748
        %v2757 = vadd.f32 %v2728, %v2749
        %v2758 = vadd.f32 %v2729, %v2750
        %v2759 = vadd.f32 %v2730, %v2751
        %v2760 = vadd.f32 %v2731, %v2752
        %v2761 = vadd.f32 %v2732, %v2753
        %v2762 = vld [vmem:[%s2441 + $0xb] sm:$0xff]
        %v2763 = vld [vmem:[%s2441 + $0x23] sm:$0xff]
        %v2764 = vld [vmem:[%s2441 + $0x3b] sm:$0xff]
        %v2765 = vld [vmem:[%s2441 + $0x53] sm:$0xff]
        %v2766 = vld [vmem:[%s2441 + $0x6b] sm:$0xff]
        %v2767 = vld [vmem:[%s2441 + $0x83] sm:$0xff]
        %v2768 = vld [vmem:[%s2441 + $0x9b] sm:$0xff]
        %v2769 = vld [vmem:[%s2441 + $0xb3] sm:$0xff]
        %v2770 = vld [vmem:[%s2450 + $0xb] sm:$0x1]
        %v2771 = vlaneseq
        %v2772 = vshrl.u32 %v2771, 7
        %v2773 = vsub.s32 0, %v2772
        %v2774 = vrot.slane %v2770, %v2773
        %v2775 = vmul.f32 %v2762, %v2774
        %v2776 = vmul.f32 %v2763, %v2774
        %v2777 = vmul.f32 %v2764, %v2774
        %v2778 = vmul.f32 %v2765, %v2774
        %v2779 = vmul.f32 %v2766, %v2774
        %v2780 = vmul.f32 %v2767, %v2774
        %v2781 = vmul.f32 %v2768, %v2774
        %v2782 = vmul.f32 %v2769, %v2774
        %v2783 = vadd.f32 %v2754, %v2775
        %v2784 = vadd.f32 %v2755, %v2776
        %v2785 = vadd.f32 %v2756, %v2777
        %v2786 = vadd.f32 %v2757, %v2778
        %v2787 = vadd.f32 %v2758, %v2779
        %v2788 = vadd.f32 %v2759, %v2780
        %v2789 = vadd.f32 %v2760, %v2781
        %v2790 = vadd.f32 %v2761, %v2782
        %v2791 = vld [vmem:[%s2441 + $0xc] sm:$0xff]
        %v2792 = vld [vmem:[%s2441 + $0x24] sm:$0xff]
        %v2793 = vld [vmem:[%s2441 + $0x3c] sm:$0xff]
        %v2794 = vld [vmem:[%s2441 + $0x54] sm:$0xff]
        %v2795 = vld [vmem:[%s2441 + $0x6c] sm:$0xff]
        %v2796 = vld [vmem:[%s2441 + $0x84] sm:$0xff]
        %v2797 = vld [vmem:[%s2441 + $0x9c] sm:$0xff]
        %v2798 = vld [vmem:[%s2441 + $0xb4] sm:$0xff]
        %v2799 = vld [vmem:[%s2450 + $0xc] sm:$0x1]
        %v2800 = vlaneseq
        %v2801 = vshrl.u32 %v2800, 7
        %v2802 = vsub.s32 0, %v2801
        %v2803 = vrot.slane %v2799, %v2802
        %v2804 = vmul.f32 %v2791, %v2803
        %v2805 = vmul.f32 %v2792, %v2803
        %v2806 = vmul.f32 %v2793, %v2803
        %v2807 = vmul.f32 %v2794, %v2803
        %v2808 = vmul.f32 %v2795, %v2803
        %v2809 = vmul.f32 %v2796, %v2803
        %v2810 = vmul.f32 %v2797, %v2803
        %v2811 = vmul.f32 %v2798, %v2803
        %v2812 = vadd.f32 %v2783, %v2804
        %v2813 = vadd.f32 %v2784, %v2805
        %v2814 = vadd.f32 %v2785, %v2806
        %v2815 = vadd.f32 %v2786, %v2807
        %v2816 = vadd.f32 %v2787, %v2808
        %v2817 = vadd.f32 %v2788, %v2809
        %v2818 = vadd.f32 %v2789, %v2810
        %v2819 = vadd.f32 %v2790, %v2811
        %s2820 = scalar_lea.vmem %s168, 168
        %v2821 = vld [vmem:[%s2820] sm:$0xff]
        %v2822 = vld [vmem:[%s2820 + $0x18] sm:$0xff]
        %v2823 = vld [vmem:[%s2820 + $0x30] sm:$0xff]
        %v2824 = vld [vmem:[%s2820 + $0x48] sm:$0xff]
        %v2825 = vld [vmem:[%s2820 + $0x60] sm:$0xff]
        %v2826 = vld [vmem:[%s2820 + $0x78] sm:$0xff]
        %v2827 = vld [vmem:[%s2820 + $0x90] sm:$0xff]
        %v2828 = vld [vmem:[%s2820 + $0xa8] sm:$0xff]
        %s2829 = scalar_lea.vmem %s1, 112
        %v2830 = vld [vmem:[%s2829] sm:$0x1]
        %v2831 = vlaneseq
        %v2832 = vshrl.u32 %v2831, 7
        %v2833 = vsub.s32 0, %v2832
        %v2834 = vrot.slane %v2830, %v2833
        %v2835 = vmul.f32 %v2821, %v2834
        %v2836 = vmul.f32 %v2822, %v2834
        %v2837 = vmul.f32 %v2823, %v2834
        %v2838 = vmul.f32 %v2824, %v2834
        %v2839 = vmul.f32 %v2825, %v2834
        %v2840 = vmul.f32 %v2826, %v2834
        %v2841 = vmul.f32 %v2827, %v2834
        %v2842 = vmul.f32 %v2828, %v2834
        %v2843 = vadd.f32 %v2812, %v2835
        %v2844 = vadd.f32 %v2813, %v2836
        %v2845 = vadd.f32 %v2814, %v2837
        %v2846 = vadd.f32 %v2815, %v2838
        %v2847 = vadd.f32 %v2816, %v2839
        %v2848 = vadd.f32 %v2817, %v2840
        %v2849 = vadd.f32 %v2818, %v2841
        %v2850 = vadd.f32 %v2819, %v2842
        %v2851 = vld [vmem:[%s2820 + $0x1] sm:$0xff]
        %v2852 = vld [vmem:[%s2820 + $0x19] sm:$0xff]
        %v2853 = vld [vmem:[%s2820 + $0x31] sm:$0xff]
        %v2854 = vld [vmem:[%s2820 + $0x49] sm:$0xff]
        %v2855 = vld [vmem:[%s2820 + $0x61] sm:$0xff]
        %v2856 = vld [vmem:[%s2820 + $0x79] sm:$0xff]
        %v2857 = vld [vmem:[%s2820 + $0x91] sm:$0xff]
        %v2858 = vld [vmem:[%s2820 + $0xa9] sm:$0xff]
        %v2859 = vld [vmem:[%s2829 + $0x1] sm:$0x1]
        %v2860 = vlaneseq
        %v2861 = vshrl.u32 %v2860, 7
        %v2862 = vsub.s32 0, %v2861
        %v2863 = vrot.slane %v2859, %v2862
        %v2864 = vmul.f32 %v2851, %v2863
        %v2865 = vmul.f32 %v2852, %v2863
        %v2866 = vmul.f32 %v2853, %v2863
        %v2867 = vmul.f32 %v2854, %v2863
        %v2868 = vmul.f32 %v2855, %v2863
        %v2869 = vmul.f32 %v2856, %v2863
        %v2870 = vmul.f32 %v2857, %v2863
        %v2871 = vmul.f32 %v2858, %v2863
        %v2872 = vadd.f32 %v2843, %v2864
        %v2873 = vadd.f32 %v2844, %v2865
        %v2874 = vadd.f32 %v2845, %v2866
        %v2875 = vadd.f32 %v2846, %v2867
        %v2876 = vadd.f32 %v2847, %v2868
        %v2877 = vadd.f32 %v2848, %v2869
        %v2878 = vadd.f32 %v2849, %v2870
        %v2879 = vadd.f32 %v2850, %v2871
        %v2880 = vld [vmem:[%s2820 + $0x2] sm:$0xff]
        %v2881 = vld [vmem:[%s2820 + $0x1a] sm:$0xff]
        %v2882 = vld [vmem:[%s2820 + $0x32] sm:$0xff]
        %v2883 = vld [vmem:[%s2820 + $0x4a] sm:$0xff]
        %v2884 = vld [vmem:[%s2820 + $0x62] sm:$0xff]
        %v2885 = vld [vmem:[%s2820 + $0x7a] sm:$0xff]
        %v2886 = vld [vmem:[%s2820 + $0x92] sm:$0xff]
        %v2887 = vld [vmem:[%s2820 + $0xaa] sm:$0xff]
        %v2888 = vld [vmem:[%s2829 + $0x2] sm:$0x1]
        %v2889 = vlaneseq
        %v2890 = vshrl.u32 %v2889, 7
        %v2891 = vsub.s32 0, %v2890
        %v2892 = vrot.slane %v2888, %v2891
        %v2893 = vmul.f32 %v2880, %v2892
        %v2894 = vmul.f32 %v2881, %v2892
        %v2895 = vmul.f32 %v2882, %v2892
        %v2896 = vmul.f32 %v2883, %v2892
        %v2897 = vmul.f32 %v2884, %v2892
        %v2898 = vmul.f32 %v2885, %v2892
        %v2899 = vmul.f32 %v2886, %v2892
        %v2900 = vmul.f32 %v2887, %v2892
        %v2901 = vadd.f32 %v2872, %v2893
        %v2902 = vadd.f32 %v2873, %v2894
        %v2903 = vadd.f32 %v2874, %v2895
        %v2904 = vadd.f32 %v2875, %v2896
        %v2905 = vadd.f32 %v2876, %v2897
        %v2906 = vadd.f32 %v2877, %v2898
        %v2907 = vadd.f32 %v2878, %v2899
        %v2908 = vadd.f32 %v2879, %v2900
        %v2909 = vld [vmem:[%s2820 + $0x3] sm:$0xff]
        %v2910 = vld [vmem:[%s2820 + $0x1b] sm:$0xff]
        %v2911 = vld [vmem:[%s2820 + $0x33] sm:$0xff]
        %v2912 = vld [vmem:[%s2820 + $0x4b] sm:$0xff]
        %v2913 = vld [vmem:[%s2820 + $0x63] sm:$0xff]
        %v2914 = vld [vmem:[%s2820 + $0x7b] sm:$0xff]
        %v2915 = vld [vmem:[%s2820 + $0x93] sm:$0xff]
        %v2916 = vld [vmem:[%s2820 + $0xab] sm:$0xff]
        %v2917 = vld [vmem:[%s2829 + $0x3] sm:$0x1]
        %v2918 = vlaneseq
        %v2919 = vshrl.u32 %v2918, 7
        %v2920 = vsub.s32 0, %v2919
        %v2921 = vrot.slane %v2917, %v2920
        %v2922 = vmul.f32 %v2909, %v2921
        %v2923 = vmul.f32 %v2910, %v2921
        %v2924 = vmul.f32 %v2911, %v2921
        %v2925 = vmul.f32 %v2912, %v2921
        %v2926 = vmul.f32 %v2913, %v2921
        %v2927 = vmul.f32 %v2914, %v2921
        %v2928 = vmul.f32 %v2915, %v2921
        %v2929 = vmul.f32 %v2916, %v2921
        %v2930 = vadd.f32 %v2901, %v2922
        %v2931 = vadd.f32 %v2902, %v2923
        %v2932 = vadd.f32 %v2903, %v2924
        %v2933 = vadd.f32 %v2904, %v2925
        %v2934 = vadd.f32 %v2905, %v2926
        %v2935 = vadd.f32 %v2906, %v2927
        %v2936 = vadd.f32 %v2907, %v2928
        %v2937 = vadd.f32 %v2908, %v2929
        %v2938 = vld [vmem:[%s2820 + $0x4] sm:$0xff]
        %v2939 = vld [vmem:[%s2820 + $0x1c] sm:$0xff]
        %v2940 = vld [vmem:[%s2820 + $0x34] sm:$0xff]
        %v2941 = vld [vmem:[%s2820 + $0x4c] sm:$0xff]
        %v2942 = vld [vmem:[%s2820 + $0x64] sm:$0xff]
        %v2943 = vld [vmem:[%s2820 + $0x7c] sm:$0xff]
        %v2944 = vld [vmem:[%s2820 + $0x94] sm:$0xff]
        %v2945 = vld [vmem:[%s2820 + $0xac] sm:$0xff]
        %v2946 = vld [vmem:[%s2829 + $0x4] sm:$0x1]
        %v2947 = vlaneseq
        %v2948 = vshrl.u32 %v2947, 7
        %v2949 = vsub.s32 0, %v2948
        %v2950 = vrot.slane %v2946, %v2949
        %v2951 = vmul.f32 %v2938, %v2950
        %v2952 = vmul.f32 %v2939, %v2950
        %v2953 = vmul.f32 %v2940, %v2950
        %v2954 = vmul.f32 %v2941, %v2950
        %v2955 = vmul.f32 %v2942, %v2950
        %v2956 = vmul.f32 %v2943, %v2950
        %v2957 = vmul.f32 %v2944, %v2950
        %v2958 = vmul.f32 %v2945, %v2950
        %v2959 = vadd.f32 %v2930, %v2951
        %v2960 = vadd.f32 %v2931, %v2952
        %v2961 = vadd.f32 %v2932, %v2953
        %v2962 = vadd.f32 %v2933, %v2954
        %v2963 = vadd.f32 %v2934, %v2955
        %v2964 = vadd.f32 %v2935, %v2956
        %v2965 = vadd.f32 %v2936, %v2957
        %v2966 = vadd.f32 %v2937, %v2958
        %v2967 = vld [vmem:[%s2820 + $0x5] sm:$0xff]
        %v2968 = vld [vmem:[%s2820 + $0x1d] sm:$0xff]
        %v2969 = vld [vmem:[%s2820 + $0x35] sm:$0xff]
        %v2970 = vld [vmem:[%s2820 + $0x4d] sm:$0xff]
        %v2971 = vld [vmem:[%s2820 + $0x65] sm:$0xff]
        %v2972 = vld [vmem:[%s2820 + $0x7d] sm:$0xff]
        %v2973 = vld [vmem:[%s2820 + $0x95] sm:$0xff]
        %v2974 = vld [vmem:[%s2820 + $0xad] sm:$0xff]
        %v2975 = vld [vmem:[%s2829 + $0x5] sm:$0x1]
        %v2976 = vlaneseq
        %v2977 = vshrl.u32 %v2976, 7
        %v2978 = vsub.s32 0, %v2977
        %v2979 = vrot.slane %v2975, %v2978
        %v2980 = vmul.f32 %v2967, %v2979
        %v2981 = vmul.f32 %v2968, %v2979
        %v2982 = vmul.f32 %v2969, %v2979
        %v2983 = vmul.f32 %v2970, %v2979
        %v2984 = vmul.f32 %v2971, %v2979
        %v2985 = vmul.f32 %v2972, %v2979
        %v2986 = vmul.f32 %v2973, %v2979
        %v2987 = vmul.f32 %v2974, %v2979
        %v2988 = vadd.f32 %v2959, %v2980
        %v2989 = vadd.f32 %v2960, %v2981
        %v2990 = vadd.f32 %v2961, %v2982
        %v2991 = vadd.f32 %v2962, %v2983
        %v2992 = vadd.f32 %v2963, %v2984
        %v2993 = vadd.f32 %v2964, %v2985
        %v2994 = vadd.f32 %v2965, %v2986
        %v2995 = vadd.f32 %v2966, %v2987
        %v2996 = vld [vmem:[%s2820 + $0x6] sm:$0xff]
        %v2997 = vld [vmem:[%s2820 + $0x1e] sm:$0xff]
        %v2998 = vld [vmem:[%s2820 + $0x36] sm:$0xff]
        %v2999 = vld [vmem:[%s2820 + $0x4e] sm:$0xff]
        %v3000 = vld [vmem:[%s2820 + $0x66] sm:$0xff]
        %v3001 = vld [vmem:[%s2820 + $0x7e] sm:$0xff]
        %v3002 = vld [vmem:[%s2820 + $0x96] sm:$0xff]
        %v3003 = vld [vmem:[%s2820 + $0xae] sm:$0xff]
        %v3004 = vld [vmem:[%s2829 + $0x6] sm:$0x1]
        %v3005 = vlaneseq
        %v3006 = vshrl.u32 %v3005, 7
        %v3007 = vsub.s32 0, %v3006
        %v3008 = vrot.slane %v3004, %v3007
        %v3009 = vmul.f32 %v2996, %v3008
        %v3010 = vmul.f32 %v2997, %v3008
        %v3011 = vmul.f32 %v2998, %v3008
        %v3012 = vmul.f32 %v2999, %v3008
        %v3013 = vmul.f32 %v3000, %v3008
        %v3014 = vmul.f32 %v3001, %v3008
        %v3015 = vmul.f32 %v3002, %v3008
        %v3016 = vmul.f32 %v3003, %v3008
        %v3017 = vadd.f32 %v2988, %v3009
        %v3018 = vadd.f32 %v2989, %v3010
        %v3019 = vadd.f32 %v2990, %v3011
        %v3020 = vadd.f32 %v2991, %v3012
        %v3021 = vadd.f32 %v2992, %v3013
        %v3022 = vadd.f32 %v2993, %v3014
        %v3023 = vadd.f32 %v2994, %v3015
        %v3024 = vadd.f32 %v2995, %v3016
        %v3025 = vld [vmem:[%s2820 + $0x7] sm:$0xff]
        %v3026 = vld [vmem:[%s2820 + $0x1f] sm:$0xff]
        %v3027 = vld [vmem:[%s2820 + $0x37] sm:$0xff]
        %v3028 = vld [vmem:[%s2820 + $0x4f] sm:$0xff]
        %v3029 = vld [vmem:[%s2820 + $0x67] sm:$0xff]
        %v3030 = vld [vmem:[%s2820 + $0x7f] sm:$0xff]
        %v3031 = vld [vmem:[%s2820 + $0x97] sm:$0xff]
        %v3032 = vld [vmem:[%s2820 + $0xaf] sm:$0xff]
        %v3033 = vld [vmem:[%s2829 + $0x7] sm:$0x1]
        %v3034 = vlaneseq
        %v3035 = vshrl.u32 %v3034, 7
        %v3036 = vsub.s32 0, %v3035
        %v3037 = vrot.slane %v3033, %v3036
        %v3038 = vmul.f32 %v3025, %v3037
        %v3039 = vmul.f32 %v3026, %v3037
        %v3040 = vmul.f32 %v3027, %v3037
        %v3041 = vmul.f32 %v3028, %v3037
        %v3042 = vmul.f32 %v3029, %v3037
        %v3043 = vmul.f32 %v3030, %v3037
        %v3044 = vmul.f32 %v3031, %v3037
        %v3045 = vmul.f32 %v3032, %v3037
        %v3046 = vadd.f32 %v3017, %v3038
        %v3047 = vadd.f32 %v3018, %v3039
        %v3048 = vadd.f32 %v3019, %v3040
        %v3049 = vadd.f32 %v3020, %v3041
        %v3050 = vadd.f32 %v3021, %v3042
        %v3051 = vadd.f32 %v3022, %v3043
        %v3052 = vadd.f32 %v3023, %v3044
        %v3053 = vadd.f32 %v3024, %v3045
        %v3054 = vld [vmem:[%s2820 + $0x8] sm:$0xff]
        %v3055 = vld [vmem:[%s2820 + $0x20] sm:$0xff]
        %v3056 = vld [vmem:[%s2820 + $0x38] sm:$0xff]
        %v3057 = vld [vmem:[%s2820 + $0x50] sm:$0xff]
        %v3058 = vld [vmem:[%s2820 + $0x68] sm:$0xff]
        %v3059 = vld [vmem:[%s2820 + $0x80] sm:$0xff]
        %v3060 = vld [vmem:[%s2820 + $0x98] sm:$0xff]
        %v3061 = vld [vmem:[%s2820 + $0xb0] sm:$0xff]
        %v3062 = vld [vmem:[%s2829 + $0x8] sm:$0x1]
        %v3063 = vlaneseq
        %v3064 = vshrl.u32 %v3063, 7
        %v3065 = vsub.s32 0, %v3064
        %v3066 = vrot.slane %v3062, %v3065
        %v3067 = vmul.f32 %v3054, %v3066
        %v3068 = vmul.f32 %v3055, %v3066
        %v3069 = vmul.f32 %v3056, %v3066
        %v3070 = vmul.f32 %v3057, %v3066
        %v3071 = vmul.f32 %v3058, %v3066
        %v3072 = vmul.f32 %v3059, %v3066
        %v3073 = vmul.f32 %v3060, %v3066
        %v3074 = vmul.f32 %v3061, %v3066
        %v3075 = vadd.f32 %v3046, %v3067
        %v3076 = vadd.f32 %v3047, %v3068
        %v3077 = vadd.f32 %v3048, %v3069
        %v3078 = vadd.f32 %v3049, %v3070
        %v3079 = vadd.f32 %v3050, %v3071
        %v3080 = vadd.f32 %v3051, %v3072
        %v3081 = vadd.f32 %v3052, %v3073
        %v3082 = vadd.f32 %v3053, %v3074
        %v3083 = vld [vmem:[%s2820 + $0x9] sm:$0xff]
        %v3084 = vld [vmem:[%s2820 + $0x21] sm:$0xff]
        %v3085 = vld [vmem:[%s2820 + $0x39] sm:$0xff]
        %v3086 = vld [vmem:[%s2820 + $0x51] sm:$0xff]
        %v3087 = vld [vmem:[%s2820 + $0x69] sm:$0xff]
        %v3088 = vld [vmem:[%s2820 + $0x81] sm:$0xff]
        %v3089 = vld [vmem:[%s2820 + $0x99] sm:$0xff]
        %v3090 = vld [vmem:[%s2820 + $0xb1] sm:$0xff]
        %v3091 = vld [vmem:[%s2829 + $0x9] sm:$0x1]
        %v3092 = vlaneseq
        %v3093 = vshrl.u32 %v3092, 7
        %v3094 = vsub.s32 0, %v3093
        %v3095 = vrot.slane %v3091, %v3094
        %v3096 = vmul.f32 %v3083, %v3095
        %v3097 = vmul.f32 %v3084, %v3095
        %v3098 = vmul.f32 %v3085, %v3095
        %v3099 = vmul.f32 %v3086, %v3095
        %v3100 = vmul.f32 %v3087, %v3095
        %v3101 = vmul.f32 %v3088, %v3095
        %v3102 = vmul.f32 %v3089, %v3095
        %v3103 = vmul.f32 %v3090, %v3095
        %v3104 = vadd.f32 %v3075, %v3096
        %v3105 = vadd.f32 %v3076, %v3097
        %v3106 = vadd.f32 %v3077, %v3098
        %v3107 = vadd.f32 %v3078, %v3099
        %v3108 = vadd.f32 %v3079, %v3100
        %v3109 = vadd.f32 %v3080, %v3101
        %v3110 = vadd.f32 %v3081, %v3102
        %v3111 = vadd.f32 %v3082, %v3103
        %v3112 = vld [vmem:[%s2820 + $0xa] sm:$0xff]
        %v3113 = vld [vmem:[%s2820 + $0x22] sm:$0xff]
        %v3114 = vld [vmem:[%s2820 + $0x3a] sm:$0xff]
        %v3115 = vld [vmem:[%s2820 + $0x52] sm:$0xff]
        %v3116 = vld [vmem:[%s2820 + $0x6a] sm:$0xff]
        %v3117 = vld [vmem:[%s2820 + $0x82] sm:$0xff]
        %v3118 = vld [vmem:[%s2820 + $0x9a] sm:$0xff]
        %v3119 = vld [vmem:[%s2820 + $0xb2] sm:$0xff]
        %v3120 = vld [vmem:[%s2829 + $0xa] sm:$0x1]
        %v3121 = vlaneseq
        %v3122 = vshrl.u32 %v3121, 7
        %v3123 = vsub.s32 0, %v3122
        %v3124 = vrot.slane %v3120, %v3123
        %v3125 = vmul.f32 %v3112, %v3124
        %v3126 = vmul.f32 %v3113, %v3124
        %v3127 = vmul.f32 %v3114, %v3124
        %v3128 = vmul.f32 %v3115, %v3124
        %v3129 = vmul.f32 %v3116, %v3124
        %v3130 = vmul.f32 %v3117, %v3124
        %v3131 = vmul.f32 %v3118, %v3124
        %v3132 = vmul.f32 %v3119, %v3124
        %v3133 = vadd.f32 %v3104, %v3125
        %v3134 = vadd.f32 %v3105, %v3126
        %v3135 = vadd.f32 %v3106, %v3127
        %v3136 = vadd.f32 %v3107, %v3128
        %v3137 = vadd.f32 %v3108, %v3129
        %v3138 = vadd.f32 %v3109, %v3130
        %v3139 = vadd.f32 %v3110, %v3131
        %v3140 = vadd.f32 %v3111, %v3132
        %v3141 = vld [vmem:[%s2820 + $0xb] sm:$0xff]
        %v3142 = vld [vmem:[%s2820 + $0x23] sm:$0xff]
        %v3143 = vld [vmem:[%s2820 + $0x3b] sm:$0xff]
        %v3144 = vld [vmem:[%s2820 + $0x53] sm:$0xff]
        %v3145 = vld [vmem:[%s2820 + $0x6b] sm:$0xff]
        %v3146 = vld [vmem:[%s2820 + $0x83] sm:$0xff]
        %v3147 = vld [vmem:[%s2820 + $0x9b] sm:$0xff]
        %v3148 = vld [vmem:[%s2820 + $0xb3] sm:$0xff]
        %v3149 = vld [vmem:[%s2829 + $0xb] sm:$0x1]
        %v3150 = vlaneseq
        %v3151 = vshrl.u32 %v3150, 7
        %v3152 = vsub.s32 0, %v3151
        %v3153 = vrot.slane %v3149, %v3152
        %v3154 = vmul.f32 %v3141, %v3153
        %v3155 = vmul.f32 %v3142, %v3153
        %v3156 = vmul.f32 %v3143, %v3153
        %v3157 = vmul.f32 %v3144, %v3153
        %v3158 = vmul.f32 %v3145, %v3153
        %v3159 = vmul.f32 %v3146, %v3153
        %v3160 = vmul.f32 %v3147, %v3153
        %v3161 = vmul.f32 %v3148, %v3153
        %v3162 = vadd.f32 %v3133, %v3154
        %v3163 = vadd.f32 %v3134, %v3155
        %v3164 = vadd.f32 %v3135, %v3156
        %v3165 = vadd.f32 %v3136, %v3157
        %v3166 = vadd.f32 %v3137, %v3158
        %v3167 = vadd.f32 %v3138, %v3159
        %v3168 = vadd.f32 %v3139, %v3160
        %v3169 = vadd.f32 %v3140, %v3161
        %v3170 = vld [vmem:[%s2820 + $0xc] sm:$0xff]
        %v3171 = vld [vmem:[%s2820 + $0x24] sm:$0xff]
        %v3172 = vld [vmem:[%s2820 + $0x3c] sm:$0xff]
        %v3173 = vld [vmem:[%s2820 + $0x54] sm:$0xff]
        %v3174 = vld [vmem:[%s2820 + $0x6c] sm:$0xff]
        %v3175 = vld [vmem:[%s2820 + $0x84] sm:$0xff]
        %v3176 = vld [vmem:[%s2820 + $0x9c] sm:$0xff]
        %v3177 = vld [vmem:[%s2820 + $0xb4] sm:$0xff]
        %v3178 = vld [vmem:[%s2829 + $0xc] sm:$0x1]
        %v3179 = vlaneseq
        %v3180 = vshrl.u32 %v3179, 7
        %v3181 = vsub.s32 0, %v3180
        %v3182 = vrot.slane %v3178, %v3181
        %v3183 = vmul.f32 %v3170, %v3182
        %v3184 = vmul.f32 %v3171, %v3182
        %v3185 = vmul.f32 %v3172, %v3182
        %v3186 = vmul.f32 %v3173, %v3182
        %v3187 = vmul.f32 %v3174, %v3182
        %v3188 = vmul.f32 %v3175, %v3182
        %v3189 = vmul.f32 %v3176, %v3182
        %v3190 = vmul.f32 %v3177, %v3182
        %v3191 = vadd.f32 %v3162, %v3183
        %v3192 = vadd.f32 %v3163, %v3184
        %v3193 = vadd.f32 %v3164, %v3185
        %v3194 = vadd.f32 %v3165, %v3186
        %v3195 = vadd.f32 %v3166, %v3187
        %v3196 = vadd.f32 %v3167, %v3188
        %v3197 = vadd.f32 %v3168, %v3189
        %v3198 = vadd.f32 %v3169, %v3190
        %s3199 = scalar_lea.vmem %s168, 192
        %v3200 = vld [vmem:[%s3199] sm:$0xff]
        %v3201 = vld [vmem:[%s3199 + $0x18] sm:$0xff]
        %v3202 = vld [vmem:[%s3199 + $0x30] sm:$0xff]
        %v3203 = vld [vmem:[%s3199 + $0x48] sm:$0xff]
        %v3204 = vld [vmem:[%s3199 + $0x60] sm:$0xff]
        %v3205 = vld [vmem:[%s3199 + $0x78] sm:$0xff]
        %v3206 = vld [vmem:[%s3199 + $0x90] sm:$0xff]
        %v3207 = vld [vmem:[%s3199 + $0xa8] sm:$0xff]
        %s3208 = scalar_lea.vmem %s1, 128
        %v3209 = vld [vmem:[%s3208] sm:$0x1]
        %v3210 = vlaneseq
        %v3211 = vshrl.u32 %v3210, 7
        %v3212 = vsub.s32 0, %v3211
        %v3213 = vrot.slane %v3209, %v3212
        %v3214 = vmul.f32 %v3200, %v3213
        %v3215 = vmul.f32 %v3201, %v3213
        %v3216 = vmul.f32 %v3202, %v3213
        %v3217 = vmul.f32 %v3203, %v3213
        %v3218 = vmul.f32 %v3204, %v3213
        %v3219 = vmul.f32 %v3205, %v3213
        %v3220 = vmul.f32 %v3206, %v3213
        %v3221 = vmul.f32 %v3207, %v3213
        %v3222 = vadd.f32 %v3191, %v3214
        %v3223 = vadd.f32 %v3192, %v3215
        %v3224 = vadd.f32 %v3193, %v3216
        %v3225 = vadd.f32 %v3194, %v3217
        %v3226 = vadd.f32 %v3195, %v3218
        %v3227 = vadd.f32 %v3196, %v3219
        %v3228 = vadd.f32 %v3197, %v3220
        %v3229 = vadd.f32 %v3198, %v3221
        %v3230 = vld [vmem:[%s3199 + $0x1] sm:$0xff]
        %v3231 = vld [vmem:[%s3199 + $0x19] sm:$0xff]
        %v3232 = vld [vmem:[%s3199 + $0x31] sm:$0xff]
        %v3233 = vld [vmem:[%s3199 + $0x49] sm:$0xff]
        %v3234 = vld [vmem:[%s3199 + $0x61] sm:$0xff]
        %v3235 = vld [vmem:[%s3199 + $0x79] sm:$0xff]
        %v3236 = vld [vmem:[%s3199 + $0x91] sm:$0xff]
        %v3237 = vld [vmem:[%s3199 + $0xa9] sm:$0xff]
        %v3238 = vld [vmem:[%s3208 + $0x1] sm:$0x1]
        %v3239 = vlaneseq
        %v3240 = vshrl.u32 %v3239, 7
        %v3241 = vsub.s32 0, %v3240
        %v3242 = vrot.slane %v3238, %v3241
        %v3243 = vmul.f32 %v3230, %v3242
        %v3244 = vmul.f32 %v3231, %v3242
        %v3245 = vmul.f32 %v3232, %v3242
        %v3246 = vmul.f32 %v3233, %v3242
        %v3247 = vmul.f32 %v3234, %v3242
        %v3248 = vmul.f32 %v3235, %v3242
        %v3249 = vmul.f32 %v3236, %v3242
        %v3250 = vmul.f32 %v3237, %v3242
        %v3251 = vadd.f32 %v3222, %v3243
        %v3252 = vadd.f32 %v3223, %v3244
        %v3253 = vadd.f32 %v3224, %v3245
        %v3254 = vadd.f32 %v3225, %v3246
        %v3255 = vadd.f32 %v3226, %v3247
        %v3256 = vadd.f32 %v3227, %v3248
        %v3257 = vadd.f32 %v3228, %v3249
        %v3258 = vadd.f32 %v3229, %v3250
        %v3259 = vld [vmem:[%s3199 + $0x2] sm:$0xff]
        %v3260 = vld [vmem:[%s3199 + $0x1a] sm:$0xff]
        %v3261 = vld [vmem:[%s3199 + $0x32] sm:$0xff]
        %v3262 = vld [vmem:[%s3199 + $0x4a] sm:$0xff]
        %v3263 = vld [vmem:[%s3199 + $0x62] sm:$0xff]
        %v3264 = vld [vmem:[%s3199 + $0x7a] sm:$0xff]
        %v3265 = vld [vmem:[%s3199 + $0x92] sm:$0xff]
        %v3266 = vld [vmem:[%s3199 + $0xaa] sm:$0xff]
        %v3267 = vld [vmem:[%s3208 + $0x2] sm:$0x1]
        %v3268 = vlaneseq
        %v3269 = vshrl.u32 %v3268, 7
        %v3270 = vsub.s32 0, %v3269
        %v3271 = vrot.slane %v3267, %v3270
        %v3272 = vmul.f32 %v3259, %v3271
        %v3273 = vmul.f32 %v3260, %v3271
        %v3274 = vmul.f32 %v3261, %v3271
        %v3275 = vmul.f32 %v3262, %v3271
        %v3276 = vmul.f32 %v3263, %v3271
        %v3277 = vmul.f32 %v3264, %v3271
        %v3278 = vmul.f32 %v3265, %v3271
        %v3279 = vmul.f32 %v3266, %v3271
        %v3280 = vadd.f32 %v3251, %v3272
        %v3281 = vadd.f32 %v3252, %v3273
        %v3282 = vadd.f32 %v3253, %v3274
        %v3283 = vadd.f32 %v3254, %v3275
        %v3284 = vadd.f32 %v3255, %v3276
        %v3285 = vadd.f32 %v3256, %v3277
        %v3286 = vadd.f32 %v3257, %v3278
        %v3287 = vadd.f32 %v3258, %v3279
        %v3288 = vld [vmem:[%s3199 + $0x3] sm:$0xff]
        %v3289 = vld [vmem:[%s3199 + $0x1b] sm:$0xff]
        %v3290 = vld [vmem:[%s3199 + $0x33] sm:$0xff]
        %v3291 = vld [vmem:[%s3199 + $0x4b] sm:$0xff]
        %v3292 = vld [vmem:[%s3199 + $0x63] sm:$0xff]
        %v3293 = vld [vmem:[%s3199 + $0x7b] sm:$0xff]
        %v3294 = vld [vmem:[%s3199 + $0x93] sm:$0xff]
        %v3295 = vld [vmem:[%s3199 + $0xab] sm:$0xff]
        %v3296 = vld [vmem:[%s3208 + $0x3] sm:$0x1]
        %v3297 = vlaneseq
        %v3298 = vshrl.u32 %v3297, 7
        %v3299 = vsub.s32 0, %v3298
        %v3300 = vrot.slane %v3296, %v3299
        %v3301 = vmul.f32 %v3288, %v3300
        %v3302 = vmul.f32 %v3289, %v3300
        %v3303 = vmul.f32 %v3290, %v3300
        %v3304 = vmul.f32 %v3291, %v3300
        %v3305 = vmul.f32 %v3292, %v3300
        %v3306 = vmul.f32 %v3293, %v3300
        %v3307 = vmul.f32 %v3294, %v3300
        %v3308 = vmul.f32 %v3295, %v3300
        %v3309 = vadd.f32 %v3280, %v3301
        %v3310 = vadd.f32 %v3281, %v3302
        %v3311 = vadd.f32 %v3282, %v3303
        %v3312 = vadd.f32 %v3283, %v3304
        %v3313 = vadd.f32 %v3284, %v3305
        %v3314 = vadd.f32 %v3285, %v3306
        %v3315 = vadd.f32 %v3286, %v3307
        %v3316 = vadd.f32 %v3287, %v3308
        %v3317 = vld [vmem:[%s3199 + $0x4] sm:$0xff]
        %v3318 = vld [vmem:[%s3199 + $0x1c] sm:$0xff]
        %v3319 = vld [vmem:[%s3199 + $0x34] sm:$0xff]
        %v3320 = vld [vmem:[%s3199 + $0x4c] sm:$0xff]
        %v3321 = vld [vmem:[%s3199 + $0x64] sm:$0xff]
        %v3322 = vld [vmem:[%s3199 + $0x7c] sm:$0xff]
        %v3323 = vld [vmem:[%s3199 + $0x94] sm:$0xff]
        %v3324 = vld [vmem:[%s3199 + $0xac] sm:$0xff]
        %v3325 = vld [vmem:[%s3208 + $0x4] sm:$0x1]
        %v3326 = vlaneseq
        %v3327 = vshrl.u32 %v3326, 7
        %v3328 = vsub.s32 0, %v3327
        %v3329 = vrot.slane %v3325, %v3328
        %v3330 = vmul.f32 %v3317, %v3329
        %v3331 = vmul.f32 %v3318, %v3329
        %v3332 = vmul.f32 %v3319, %v3329
        %v3333 = vmul.f32 %v3320, %v3329
        %v3334 = vmul.f32 %v3321, %v3329
        %v3335 = vmul.f32 %v3322, %v3329
        %v3336 = vmul.f32 %v3323, %v3329
        %v3337 = vmul.f32 %v3324, %v3329
        %v3338 = vadd.f32 %v3309, %v3330
        %v3339 = vadd.f32 %v3310, %v3331
        %v3340 = vadd.f32 %v3311, %v3332
        %v3341 = vadd.f32 %v3312, %v3333
        %v3342 = vadd.f32 %v3313, %v3334
        %v3343 = vadd.f32 %v3314, %v3335
        %v3344 = vadd.f32 %v3315, %v3336
        %v3345 = vadd.f32 %v3316, %v3337
        %v3346 = vld [vmem:[%s3199 + $0x5] sm:$0xff]
        %v3347 = vld [vmem:[%s3199 + $0x1d] sm:$0xff]
        %v3348 = vld [vmem:[%s3199 + $0x35] sm:$0xff]
        %v3349 = vld [vmem:[%s3199 + $0x4d] sm:$0xff]
        %v3350 = vld [vmem:[%s3199 + $0x65] sm:$0xff]
        %v3351 = vld [vmem:[%s3199 + $0x7d] sm:$0xff]
        %v3352 = vld [vmem:[%s3199 + $0x95] sm:$0xff]
        %v3353 = vld [vmem:[%s3199 + $0xad] sm:$0xff]
        %v3354 = vld [vmem:[%s3208 + $0x5] sm:$0x1]
        %v3355 = vlaneseq
        %v3356 = vshrl.u32 %v3355, 7
        %v3357 = vsub.s32 0, %v3356
        %v3358 = vrot.slane %v3354, %v3357
        %v3359 = vmul.f32 %v3346, %v3358
        %v3360 = vmul.f32 %v3347, %v3358
        %v3361 = vmul.f32 %v3348, %v3358
        %v3362 = vmul.f32 %v3349, %v3358
        %v3363 = vmul.f32 %v3350, %v3358
        %v3364 = vmul.f32 %v3351, %v3358
        %v3365 = vmul.f32 %v3352, %v3358
        %v3366 = vmul.f32 %v3353, %v3358
        %v3367 = vadd.f32 %v3338, %v3359
        %v3368 = vadd.f32 %v3339, %v3360
        %v3369 = vadd.f32 %v3340, %v3361
        %v3370 = vadd.f32 %v3341, %v3362
        %v3371 = vadd.f32 %v3342, %v3363
        %v3372 = vadd.f32 %v3343, %v3364
        %v3373 = vadd.f32 %v3344, %v3365
        %v3374 = vadd.f32 %v3345, %v3366
        %v3375 = vld [vmem:[%s3199 + $0x6] sm:$0xff]
        %v3376 = vld [vmem:[%s3199 + $0x1e] sm:$0xff]
        %v3377 = vld [vmem:[%s3199 + $0x36] sm:$0xff]
        %v3378 = vld [vmem:[%s3199 + $0x4e] sm:$0xff]
        %v3379 = vld [vmem:[%s3199 + $0x66] sm:$0xff]
        %v3380 = vld [vmem:[%s3199 + $0x7e] sm:$0xff]
        %v3381 = vld [vmem:[%s3199 + $0x96] sm:$0xff]
        %v3382 = vld [vmem:[%s3199 + $0xae] sm:$0xff]
        %v3383 = vld [vmem:[%s3208 + $0x6] sm:$0x1]
        %v3384 = vlaneseq
        %v3385 = vshrl.u32 %v3384, 7
        %v3386 = vsub.s32 0, %v3385
        %v3387 = vrot.slane %v3383, %v3386
        %v3388 = vmul.f32 %v3375, %v3387
        %v3389 = vmul.f32 %v3376, %v3387
        %v3390 = vmul.f32 %v3377, %v3387
        %v3391 = vmul.f32 %v3378, %v3387
        %v3392 = vmul.f32 %v3379, %v3387
        %v3393 = vmul.f32 %v3380, %v3387
        %v3394 = vmul.f32 %v3381, %v3387
        %v3395 = vmul.f32 %v3382, %v3387
        %v3396 = vadd.f32 %v3367, %v3388
        %v3397 = vadd.f32 %v3368, %v3389
        %v3398 = vadd.f32 %v3369, %v3390
        %v3399 = vadd.f32 %v3370, %v3391
        %v3400 = vadd.f32 %v3371, %v3392
        %v3401 = vadd.f32 %v3372, %v3393
        %v3402 = vadd.f32 %v3373, %v3394
        %v3403 = vadd.f32 %v3374, %v3395
        %v3404 = vld [vmem:[%s3199 + $0x7] sm:$0xff]
        %v3405 = vld [vmem:[%s3199 + $0x1f] sm:$0xff]
        %v3406 = vld [vmem:[%s3199 + $0x37] sm:$0xff]
        %v3407 = vld [vmem:[%s3199 + $0x4f] sm:$0xff]
        %v3408 = vld [vmem:[%s3199 + $0x67] sm:$0xff]
        %v3409 = vld [vmem:[%s3199 + $0x7f] sm:$0xff]
        %v3410 = vld [vmem:[%s3199 + $0x97] sm:$0xff]
        %v3411 = vld [vmem:[%s3199 + $0xaf] sm:$0xff]
        %v3412 = vld [vmem:[%s3208 + $0x7] sm:$0x1]
        %v3413 = vlaneseq
        %v3414 = vshrl.u32 %v3413, 7
        %v3415 = vsub.s32 0, %v3414
        %v3416 = vrot.slane %v3412, %v3415
        %v3417 = vmul.f32 %v3404, %v3416
        %v3418 = vmul.f32 %v3405, %v3416
        %v3419 = vmul.f32 %v3406, %v3416
        %v3420 = vmul.f32 %v3407, %v3416
        %v3421 = vmul.f32 %v3408, %v3416
        %v3422 = vmul.f32 %v3409, %v3416
        %v3423 = vmul.f32 %v3410, %v3416
        %v3424 = vmul.f32 %v3411, %v3416
        %v3425 = vadd.f32 %v3396, %v3417
        %v3426 = vadd.f32 %v3397, %v3418
        %v3427 = vadd.f32 %v3398, %v3419
        %v3428 = vadd.f32 %v3399, %v3420
        %v3429 = vadd.f32 %v3400, %v3421
        %v3430 = vadd.f32 %v3401, %v3422
        %v3431 = vadd.f32 %v3402, %v3423
        %v3432 = vadd.f32 %v3403, %v3424
        %v3433 = vld [vmem:[%s3199 + $0x8] sm:$0xff]
        %v3434 = vld [vmem:[%s3199 + $0x20] sm:$0xff]
        %v3435 = vld [vmem:[%s3199 + $0x38] sm:$0xff]
        %v3436 = vld [vmem:[%s3199 + $0x50] sm:$0xff]
        %v3437 = vld [vmem:[%s3199 + $0x68] sm:$0xff]
        %v3438 = vld [vmem:[%s3199 + $0x80] sm:$0xff]
        %v3439 = vld [vmem:[%s3199 + $0x98] sm:$0xff]
        %v3440 = vld [vmem:[%s3199 + $0xb0] sm:$0xff]
        %v3441 = vld [vmem:[%s3208 + $0x8] sm:$0x1]
        %v3442 = vlaneseq
        %v3443 = vshrl.u32 %v3442, 7
        %v3444 = vsub.s32 0, %v3443
        %v3445 = vrot.slane %v3441, %v3444
        %v3446 = vmul.f32 %v3433, %v3445
        %v3447 = vmul.f32 %v3434, %v3445
        %v3448 = vmul.f32 %v3435, %v3445
        %v3449 = vmul.f32 %v3436, %v3445
        %v3450 = vmul.f32 %v3437, %v3445
        %v3451 = vmul.f32 %v3438, %v3445
        %v3452 = vmul.f32 %v3439, %v3445
        %v3453 = vmul.f32 %v3440, %v3445
        %v3454 = vadd.f32 %v3425, %v3446
        %v3455 = vadd.f32 %v3426, %v3447
        %v3456 = vadd.f32 %v3427, %v3448
        %v3457 = vadd.f32 %v3428, %v3449
        %v3458 = vadd.f32 %v3429, %v3450
        %v3459 = vadd.f32 %v3430, %v3451
        %v3460 = vadd.f32 %v3431, %v3452
        %v3461 = vadd.f32 %v3432, %v3453
        %v3462 = vld [vmem:[%s3199 + $0x9] sm:$0xff]
        %v3463 = vld [vmem:[%s3199 + $0x21] sm:$0xff]
        %v3464 = vld [vmem:[%s3199 + $0x39] sm:$0xff]
        %v3465 = vld [vmem:[%s3199 + $0x51] sm:$0xff]
        %v3466 = vld [vmem:[%s3199 + $0x69] sm:$0xff]
        %v3467 = vld [vmem:[%s3199 + $0x81] sm:$0xff]
        %v3468 = vld [vmem:[%s3199 + $0x99] sm:$0xff]
        %v3469 = vld [vmem:[%s3199 + $0xb1] sm:$0xff]
        %v3470 = vld [vmem:[%s3208 + $0x9] sm:$0x1]
        %v3471 = vlaneseq
        %v3472 = vshrl.u32 %v3471, 7
        %v3473 = vsub.s32 0, %v3472
        %v3474 = vrot.slane %v3470, %v3473
        %v3475 = vmul.f32 %v3462, %v3474
        %v3476 = vmul.f32 %v3463, %v3474
        %v3477 = vmul.f32 %v3464, %v3474
        %v3478 = vmul.f32 %v3465, %v3474
        %v3479 = vmul.f32 %v3466, %v3474
        %v3480 = vmul.f32 %v3467, %v3474
        %v3481 = vmul.f32 %v3468, %v3474
        %v3482 = vmul.f32 %v3469, %v3474
        %v3483 = vadd.f32 %v3454, %v3475
        %v3484 = vadd.f32 %v3455, %v3476
        %v3485 = vadd.f32 %v3456, %v3477
        %v3486 = vadd.f32 %v3457, %v3478
        %v3487 = vadd.f32 %v3458, %v3479
        %v3488 = vadd.f32 %v3459, %v3480
        %v3489 = vadd.f32 %v3460, %v3481
        %v3490 = vadd.f32 %v3461, %v3482
        %v3491 = vld [vmem:[%s3199 + $0xa] sm:$0xff]
        %v3492 = vld [vmem:[%s3199 + $0x22] sm:$0xff]
        %v3493 = vld [vmem:[%s3199 + $0x3a] sm:$0xff]
        %v3494 = vld [vmem:[%s3199 + $0x52] sm:$0xff]
        %v3495 = vld [vmem:[%s3199 + $0x6a] sm:$0xff]
        %v3496 = vld [vmem:[%s3199 + $0x82] sm:$0xff]
        %v3497 = vld [vmem:[%s3199 + $0x9a] sm:$0xff]
        %v3498 = vld [vmem:[%s3199 + $0xb2] sm:$0xff]
        %v3499 = vld [vmem:[%s3208 + $0xa] sm:$0x1]
        %v3500 = vlaneseq
        %v3501 = vshrl.u32 %v3500, 7
        %v3502 = vsub.s32 0, %v3501
        %v3503 = vrot.slane %v3499, %v3502
        %v3504 = vmul.f32 %v3491, %v3503
        %v3505 = vmul.f32 %v3492, %v3503
        %v3506 = vmul.f32 %v3493, %v3503
        %v3507 = vmul.f32 %v3494, %v3503
        %v3508 = vmul.f32 %v3495, %v3503
        %v3509 = vmul.f32 %v3496, %v3503
        %v3510 = vmul.f32 %v3497, %v3503
        %v3511 = vmul.f32 %v3498, %v3503
        %v3512 = vadd.f32 %v3483, %v3504
        %v3513 = vadd.f32 %v3484, %v3505
        %v3514 = vadd.f32 %v3485, %v3506
        %v3515 = vadd.f32 %v3486, %v3507
        %v3516 = vadd.f32 %v3487, %v3508
        %v3517 = vadd.f32 %v3488, %v3509
        %v3518 = vadd.f32 %v3489, %v3510
        %v3519 = vadd.f32 %v3490, %v3511
        %v3520 = vld [vmem:[%s3199 + $0xb] sm:$0xff]
        %v3521 = vld [vmem:[%s3199 + $0x23] sm:$0xff]
        %v3522 = vld [vmem:[%s3199 + $0x3b] sm:$0xff]
        %v3523 = vld [vmem:[%s3199 + $0x53] sm:$0xff]
        %v3524 = vld [vmem:[%s3199 + $0x6b] sm:$0xff]
        %v3525 = vld [vmem:[%s3199 + $0x83] sm:$0xff]
        %v3526 = vld [vmem:[%s3199 + $0x9b] sm:$0xff]
        %v3527 = vld [vmem:[%s3199 + $0xb3] sm:$0xff]
        %v3528 = vld [vmem:[%s3208 + $0xb] sm:$0x1]
        %v3529 = vlaneseq
        %v3530 = vshrl.u32 %v3529, 7
        %v3531 = vsub.s32 0, %v3530
        %v3532 = vrot.slane %v3528, %v3531
        %v3533 = vmul.f32 %v3520, %v3532
        %v3534 = vmul.f32 %v3521, %v3532
        %v3535 = vmul.f32 %v3522, %v3532
        %v3536 = vmul.f32 %v3523, %v3532
        %v3537 = vmul.f32 %v3524, %v3532
        %v3538 = vmul.f32 %v3525, %v3532
        %v3539 = vmul.f32 %v3526, %v3532
        %v3540 = vmul.f32 %v3527, %v3532
        %v3541 = vadd.f32 %v3512, %v3533
        %v3542 = vadd.f32 %v3513, %v3534
        %v3543 = vadd.f32 %v3514, %v3535
        %v3544 = vadd.f32 %v3515, %v3536
        %v3545 = vadd.f32 %v3516, %v3537
        %v3546 = vadd.f32 %v3517, %v3538
        %v3547 = vadd.f32 %v3518, %v3539
        %v3548 = vadd.f32 %v3519, %v3540
        %v3549 = vld [vmem:[%s3199 + $0xc] sm:$0xff]
        %v3550 = vld [vmem:[%s3199 + $0x24] sm:$0xff]
        %v3551 = vld [vmem:[%s3199 + $0x3c] sm:$0xff]
        %v3552 = vld [vmem:[%s3199 + $0x54] sm:$0xff]
        %v3553 = vld [vmem:[%s3199 + $0x6c] sm:$0xff]
        %v3554 = vld [vmem:[%s3199 + $0x84] sm:$0xff]
        %v3555 = vld [vmem:[%s3199 + $0x9c] sm:$0xff]
        %v3556 = vld [vmem:[%s3199 + $0xb4] sm:$0xff]
        %v3557 = vld [vmem:[%s3208 + $0xc] sm:$0x1]
        %v3558 = vlaneseq
        %v3559 = vshrl.u32 %v3558, 7
        %v3560 = vsub.s32 0, %v3559
        %v3561 = vrot.slane %v3557, %v3560
        %v3562 = vmul.f32 %v3549, %v3561
        %v3563 = vmul.f32 %v3550, %v3561
        %v3564 = vmul.f32 %v3551, %v3561
        %v3565 = vmul.f32 %v3552, %v3561
        %v3566 = vmul.f32 %v3553, %v3561
        %v3567 = vmul.f32 %v3554, %v3561
        %v3568 = vmul.f32 %v3555, %v3561
        %v3569 = vmul.f32 %v3556, %v3561
        %v3570 = vadd.f32 %v3541, %v3562
        %v3571 = vadd.f32 %v3542, %v3563
        %v3572 = vadd.f32 %v3543, %v3564
        %v3573 = vadd.f32 %v3544, %v3565
        %v3574 = vadd.f32 %v3545, %v3566
        %v3575 = vadd.f32 %v3546, %v3567
        %v3576 = vadd.f32 %v3547, %v3568
        %v3577 = vadd.f32 %v3548, %v3569
        %s3578 = scalar_lea.vmem %s168, 216
        %v3579 = vld [vmem:[%s3578] sm:$0xff]
        %v3580 = vld [vmem:[%s3578 + $0x18] sm:$0xff]
        %v3581 = vld [vmem:[%s3578 + $0x30] sm:$0xff]
        %v3582 = vld [vmem:[%s3578 + $0x48] sm:$0xff]
        %v3583 = vld [vmem:[%s3578 + $0x60] sm:$0xff]
        %v3584 = vld [vmem:[%s3578 + $0x78] sm:$0xff]
        %v3585 = vld [vmem:[%s3578 + $0x90] sm:$0xff]
        %v3586 = vld [vmem:[%s3578 + $0xa8] sm:$0xff]
        %s3587 = scalar_lea.vmem %s1, 144
        %v3588 = vld [vmem:[%s3587] sm:$0x1]
        %v3589 = vlaneseq
        %v3590 = vshrl.u32 %v3589, 7
        %v3591 = vsub.s32 0, %v3590
        %v3592 = vrot.slane %v3588, %v3591
        %v3593 = vmul.f32 %v3579, %v3592
        %v3594 = vmul.f32 %v3580, %v3592
        %v3595 = vmul.f32 %v3581, %v3592
        %v3596 = vmul.f32 %v3582, %v3592
        %v3597 = vmul.f32 %v3583, %v3592
        %v3598 = vmul.f32 %v3584, %v3592
        %v3599 = vmul.f32 %v3585, %v3592
        %v3600 = vmul.f32 %v3586, %v3592
        %v3601 = vadd.f32 %v3570, %v3593
        %v3602 = vadd.f32 %v3571, %v3594
        %v3603 = vadd.f32 %v3572, %v3595
        %v3604 = vadd.f32 %v3573, %v3596
        %v3605 = vadd.f32 %v3574, %v3597
        %v3606 = vadd.f32 %v3575, %v3598
        %v3607 = vadd.f32 %v3576, %v3599
        %v3608 = vadd.f32 %v3577, %v3600
        %v3609 = vld [vmem:[%s3578 + $0x1] sm:$0xff]
        %v3610 = vld [vmem:[%s3578 + $0x19] sm:$0xff]
        %v3611 = vld [vmem:[%s3578 + $0x31] sm:$0xff]
        %v3612 = vld [vmem:[%s3578 + $0x49] sm:$0xff]
        %v3613 = vld [vmem:[%s3578 + $0x61] sm:$0xff]
        %v3614 = vld [vmem:[%s3578 + $0x79] sm:$0xff]
        %v3615 = vld [vmem:[%s3578 + $0x91] sm:$0xff]
        %v3616 = vld [vmem:[%s3578 + $0xa9] sm:$0xff]
        %v3617 = vld [vmem:[%s3587 + $0x1] sm:$0x1]
        %v3618 = vlaneseq
        %v3619 = vshrl.u32 %v3618, 7
        %v3620 = vsub.s32 0, %v3619
        %v3621 = vrot.slane %v3617, %v3620
        %v3622 = vmul.f32 %v3609, %v3621
        %v3623 = vmul.f32 %v3610, %v3621
        %v3624 = vmul.f32 %v3611, %v3621
        %v3625 = vmul.f32 %v3612, %v3621
        %v3626 = vmul.f32 %v3613, %v3621
        %v3627 = vmul.f32 %v3614, %v3621
        %v3628 = vmul.f32 %v3615, %v3621
        %v3629 = vmul.f32 %v3616, %v3621
        %v3630 = vadd.f32 %v3601, %v3622
        %v3631 = vadd.f32 %v3602, %v3623
        %v3632 = vadd.f32 %v3603, %v3624
        %v3633 = vadd.f32 %v3604, %v3625
        %v3634 = vadd.f32 %v3605, %v3626
        %v3635 = vadd.f32 %v3606, %v3627
        %v3636 = vadd.f32 %v3607, %v3628
        %v3637 = vadd.f32 %v3608, %v3629
        %v3638 = vld [vmem:[%s3578 + $0x2] sm:$0xff]
        %v3639 = vld [vmem:[%s3578 + $0x1a] sm:$0xff]
        %v3640 = vld [vmem:[%s3578 + $0x32] sm:$0xff]
        %v3641 = vld [vmem:[%s3578 + $0x4a] sm:$0xff]
        %v3642 = vld [vmem:[%s3578 + $0x62] sm:$0xff]
        %v3643 = vld [vmem:[%s3578 + $0x7a] sm:$0xff]
        %v3644 = vld [vmem:[%s3578 + $0x92] sm:$0xff]
        %v3645 = vld [vmem:[%s3578 + $0xaa] sm:$0xff]
        %v3646 = vld [vmem:[%s3587 + $0x2] sm:$0x1]
        %v3647 = vlaneseq
        %v3648 = vshrl.u32 %v3647, 7
        %v3649 = vsub.s32 0, %v3648
        %v3650 = vrot.slane %v3646, %v3649
        %v3651 = vmul.f32 %v3638, %v3650
        %v3652 = vmul.f32 %v3639, %v3650
        %v3653 = vmul.f32 %v3640, %v3650
        %v3654 = vmul.f32 %v3641, %v3650
        %v3655 = vmul.f32 %v3642, %v3650
        %v3656 = vmul.f32 %v3643, %v3650
        %v3657 = vmul.f32 %v3644, %v3650
        %v3658 = vmul.f32 %v3645, %v3650
        %v3659 = vadd.f32 %v3630, %v3651
        %v3660 = vadd.f32 %v3631, %v3652
        %v3661 = vadd.f32 %v3632, %v3653
        %v3662 = vadd.f32 %v3633, %v3654
        %v3663 = vadd.f32 %v3634, %v3655
        %v3664 = vadd.f32 %v3635, %v3656
        %v3665 = vadd.f32 %v3636, %v3657
        %v3666 = vadd.f32 %v3637, %v3658
        %v3667 = vld [vmem:[%s3578 + $0x3] sm:$0xff]
        %v3668 = vld [vmem:[%s3578 + $0x1b] sm:$0xff]
        %v3669 = vld [vmem:[%s3578 + $0x33] sm:$0xff]
        %v3670 = vld [vmem:[%s3578 + $0x4b] sm:$0xff]
        %v3671 = vld [vmem:[%s3578 + $0x63] sm:$0xff]
        %v3672 = vld [vmem:[%s3578 + $0x7b] sm:$0xff]
        %v3673 = vld [vmem:[%s3578 + $0x93] sm:$0xff]
        %v3674 = vld [vmem:[%s3578 + $0xab] sm:$0xff]
        %v3675 = vld [vmem:[%s3587 + $0x3] sm:$0x1]
        %v3676 = vlaneseq
        %v3677 = vshrl.u32 %v3676, 7
        %v3678 = vsub.s32 0, %v3677
        %v3679 = vrot.slane %v3675, %v3678
        %v3680 = vmul.f32 %v3667, %v3679
        %v3681 = vmul.f32 %v3668, %v3679
        %v3682 = vmul.f32 %v3669, %v3679
        %v3683 = vmul.f32 %v3670, %v3679
        %v3684 = vmul.f32 %v3671, %v3679
        %v3685 = vmul.f32 %v3672, %v3679
        %v3686 = vmul.f32 %v3673, %v3679
        %v3687 = vmul.f32 %v3674, %v3679
        %v3688 = vadd.f32 %v3659, %v3680
        %v3689 = vadd.f32 %v3660, %v3681
        %v3690 = vadd.f32 %v3661, %v3682
        %v3691 = vadd.f32 %v3662, %v3683
        %v3692 = vadd.f32 %v3663, %v3684
        %v3693 = vadd.f32 %v3664, %v3685
        %v3694 = vadd.f32 %v3665, %v3686
        %v3695 = vadd.f32 %v3666, %v3687
        %v3696 = vld [vmem:[%s3578 + $0x4] sm:$0xff]
        %v3697 = vld [vmem:[%s3578 + $0x1c] sm:$0xff]
        %v3698 = vld [vmem:[%s3578 + $0x34] sm:$0xff]
        %v3699 = vld [vmem:[%s3578 + $0x4c] sm:$0xff]
        %v3700 = vld [vmem:[%s3578 + $0x64] sm:$0xff]
        %v3701 = vld [vmem:[%s3578 + $0x7c] sm:$0xff]
        %v3702 = vld [vmem:[%s3578 + $0x94] sm:$0xff]
        %v3703 = vld [vmem:[%s3578 + $0xac] sm:$0xff]
        %v3704 = vld [vmem:[%s3587 + $0x4] sm:$0x1]
        %v3705 = vlaneseq
        %v3706 = vshrl.u32 %v3705, 7
        %v3707 = vsub.s32 0, %v3706
        %v3708 = vrot.slane %v3704, %v3707
        %v3709 = vmul.f32 %v3696, %v3708
        %v3710 = vmul.f32 %v3697, %v3708
        %v3711 = vmul.f32 %v3698, %v3708
        %v3712 = vmul.f32 %v3699, %v3708
        %v3713 = vmul.f32 %v3700, %v3708
        %v3714 = vmul.f32 %v3701, %v3708
        %v3715 = vmul.f32 %v3702, %v3708
        %v3716 = vmul.f32 %v3703, %v3708
        %v3717 = vadd.f32 %v3688, %v3709
        %v3718 = vadd.f32 %v3689, %v3710
        %v3719 = vadd.f32 %v3690, %v3711
        %v3720 = vadd.f32 %v3691, %v3712
        %v3721 = vadd.f32 %v3692, %v3713
        %v3722 = vadd.f32 %v3693, %v3714
        %v3723 = vadd.f32 %v3694, %v3715
        %v3724 = vadd.f32 %v3695, %v3716
        %v3725 = vld [vmem:[%s3578 + $0x5] sm:$0xff]
        %v3726 = vld [vmem:[%s3578 + $0x1d] sm:$0xff]
        %v3727 = vld [vmem:[%s3578 + $0x35] sm:$0xff]
        %v3728 = vld [vmem:[%s3578 + $0x4d] sm:$0xff]
        %v3729 = vld [vmem:[%s3578 + $0x65] sm:$0xff]
        %v3730 = vld [vmem:[%s3578 + $0x7d] sm:$0xff]
        %v3731 = vld [vmem:[%s3578 + $0x95] sm:$0xff]
        %v3732 = vld [vmem:[%s3578 + $0xad] sm:$0xff]
        %v3733 = vld [vmem:[%s3587 + $0x5] sm:$0x1]
        %v3734 = vlaneseq
        %v3735 = vshrl.u32 %v3734, 7
        %v3736 = vsub.s32 0, %v3735
        %v3737 = vrot.slane %v3733, %v3736
        %v3738 = vmul.f32 %v3725, %v3737
        %v3739 = vmul.f32 %v3726, %v3737
        %v3740 = vmul.f32 %v3727, %v3737
        %v3741 = vmul.f32 %v3728, %v3737
        %v3742 = vmul.f32 %v3729, %v3737
        %v3743 = vmul.f32 %v3730, %v3737
        %v3744 = vmul.f32 %v3731, %v3737
        %v3745 = vmul.f32 %v3732, %v3737
        %v3746 = vadd.f32 %v3717, %v3738
        %v3747 = vadd.f32 %v3718, %v3739
        %v3748 = vadd.f32 %v3719, %v3740
        %v3749 = vadd.f32 %v3720, %v3741
        %v3750 = vadd.f32 %v3721, %v3742
        %v3751 = vadd.f32 %v3722, %v3743
        %v3752 = vadd.f32 %v3723, %v3744
        %v3753 = vadd.f32 %v3724, %v3745
        %v3754 = vld [vmem:[%s3578 + $0x6] sm:$0xff]
        %v3755 = vld [vmem:[%s3578 + $0x1e] sm:$0xff]
        %v3756 = vld [vmem:[%s3578 + $0x36] sm:$0xff]
        %v3757 = vld [vmem:[%s3578 + $0x4e] sm:$0xff]
        %v3758 = vld [vmem:[%s3578 + $0x66] sm:$0xff]
        %v3759 = vld [vmem:[%s3578 + $0x7e] sm:$0xff]
        %v3760 = vld [vmem:[%s3578 + $0x96] sm:$0xff]
        %v3761 = vld [vmem:[%s3578 + $0xae] sm:$0xff]
        %v3762 = vld [vmem:[%s3587 + $0x6] sm:$0x1]
        %v3763 = vlaneseq
        %v3764 = vshrl.u32 %v3763, 7
        %v3765 = vsub.s32 0, %v3764
        %v3766 = vrot.slane %v3762, %v3765
        %v3767 = vmul.f32 %v3754, %v3766
        %v3768 = vmul.f32 %v3755, %v3766
        %v3769 = vmul.f32 %v3756, %v3766
        %v3770 = vmul.f32 %v3757, %v3766
        %v3771 = vmul.f32 %v3758, %v3766
        %v3772 = vmul.f32 %v3759, %v3766
        %v3773 = vmul.f32 %v3760, %v3766
        %v3774 = vmul.f32 %v3761, %v3766
        %v3775 = vadd.f32 %v3746, %v3767
        %v3776 = vadd.f32 %v3747, %v3768
        %v3777 = vadd.f32 %v3748, %v3769
        %v3778 = vadd.f32 %v3749, %v3770
        %v3779 = vadd.f32 %v3750, %v3771
        %v3780 = vadd.f32 %v3751, %v3772
        %v3781 = vadd.f32 %v3752, %v3773
        %v3782 = vadd.f32 %v3753, %v3774
        %v3783 = vld [vmem:[%s3578 + $0x7] sm:$0xff]
        %v3784 = vld [vmem:[%s3578 + $0x1f] sm:$0xff]
        %v3785 = vld [vmem:[%s3578 + $0x37] sm:$0xff]
        %v3786 = vld [vmem:[%s3578 + $0x4f] sm:$0xff]
        %v3787 = vld [vmem:[%s3578 + $0x67] sm:$0xff]
        %v3788 = vld [vmem:[%s3578 + $0x7f] sm:$0xff]
        %v3789 = vld [vmem:[%s3578 + $0x97] sm:$0xff]
        %v3790 = vld [vmem:[%s3578 + $0xaf] sm:$0xff]
        %v3791 = vld [vmem:[%s3587 + $0x7] sm:$0x1]
        %v3792 = vlaneseq
        %v3793 = vshrl.u32 %v3792, 7
        %v3794 = vsub.s32 0, %v3793
        %v3795 = vrot.slane %v3791, %v3794
        %v3796 = vmul.f32 %v3783, %v3795
        %v3797 = vmul.f32 %v3784, %v3795
        %v3798 = vmul.f32 %v3785, %v3795
        %v3799 = vmul.f32 %v3786, %v3795
        %v3800 = vmul.f32 %v3787, %v3795
        %v3801 = vmul.f32 %v3788, %v3795
        %v3802 = vmul.f32 %v3789, %v3795
        %v3803 = vmul.f32 %v3790, %v3795
        %v3804 = vadd.f32 %v3775, %v3796
        %v3805 = vadd.f32 %v3776, %v3797
        %v3806 = vadd.f32 %v3777, %v3798
        %v3807 = vadd.f32 %v3778, %v3799
        %v3808 = vadd.f32 %v3779, %v3800
        %v3809 = vadd.f32 %v3780, %v3801
        %v3810 = vadd.f32 %v3781, %v3802
        %v3811 = vadd.f32 %v3782, %v3803
        %v3812 = vld [vmem:[%s3578 + $0x8] sm:$0xff]
        %v3813 = vld [vmem:[%s3578 + $0x20] sm:$0xff]
        %v3814 = vld [vmem:[%s3578 + $0x38] sm:$0xff]
        %v3815 = vld [vmem:[%s3578 + $0x50] sm:$0xff]
        %v3816 = vld [vmem:[%s3578 + $0x68] sm:$0xff]
        %v3817 = vld [vmem:[%s3578 + $0x80] sm:$0xff]
        %v3818 = vld [vmem:[%s3578 + $0x98] sm:$0xff]
        %v3819 = vld [vmem:[%s3578 + $0xb0] sm:$0xff]
        %v3820 = vld [vmem:[%s3587 + $0x8] sm:$0x1]
        %v3821 = vlaneseq
        %v3822 = vshrl.u32 %v3821, 7
        %v3823 = vsub.s32 0, %v3822
        %v3824 = vrot.slane %v3820, %v3823
        %v3825 = vmul.f32 %v3812, %v3824
        %v3826 = vmul.f32 %v3813, %v3824
        %v3827 = vmul.f32 %v3814, %v3824
        %v3828 = vmul.f32 %v3815, %v3824
        %v3829 = vmul.f32 %v3816, %v3824
        %v3830 = vmul.f32 %v3817, %v3824
        %v3831 = vmul.f32 %v3818, %v3824
        %v3832 = vmul.f32 %v3819, %v3824
        %v3833 = vadd.f32 %v3804, %v3825
        %v3834 = vadd.f32 %v3805, %v3826
        %v3835 = vadd.f32 %v3806, %v3827
        %v3836 = vadd.f32 %v3807, %v3828
        %v3837 = vadd.f32 %v3808, %v3829
        %v3838 = vadd.f32 %v3809, %v3830
        %v3839 = vadd.f32 %v3810, %v3831
        %v3840 = vadd.f32 %v3811, %v3832
        %v3841 = vld [vmem:[%s3578 + $0x9] sm:$0xff]
        %v3842 = vld [vmem:[%s3578 + $0x21] sm:$0xff]
        %v3843 = vld [vmem:[%s3578 + $0x39] sm:$0xff]
        %v3844 = vld [vmem:[%s3578 + $0x51] sm:$0xff]
        %v3845 = vld [vmem:[%s3578 + $0x69] sm:$0xff]
        %v3846 = vld [vmem:[%s3578 + $0x81] sm:$0xff]
        %v3847 = vld [vmem:[%s3578 + $0x99] sm:$0xff]
        %v3848 = vld [vmem:[%s3578 + $0xb1] sm:$0xff]
        %v3849 = vld [vmem:[%s3587 + $0x9] sm:$0x1]
        %v3850 = vlaneseq
        %v3851 = vshrl.u32 %v3850, 7
        %v3852 = vsub.s32 0, %v3851
        %v3853 = vrot.slane %v3849, %v3852
        %v3854 = vmul.f32 %v3841, %v3853
        %v3855 = vmul.f32 %v3842, %v3853
        %v3856 = vmul.f32 %v3843, %v3853
        %v3857 = vmul.f32 %v3844, %v3853
        %v3858 = vmul.f32 %v3845, %v3853
        %v3859 = vmul.f32 %v3846, %v3853
        %v3860 = vmul.f32 %v3847, %v3853
        %v3861 = vmul.f32 %v3848, %v3853
        %v3862 = vadd.f32 %v3833, %v3854
        %v3863 = vadd.f32 %v3834, %v3855
        %v3864 = vadd.f32 %v3835, %v3856
        %v3865 = vadd.f32 %v3836, %v3857
        %v3866 = vadd.f32 %v3837, %v3858
        %v3867 = vadd.f32 %v3838, %v3859
        %v3868 = vadd.f32 %v3839, %v3860
        %v3869 = vadd.f32 %v3840, %v3861
        %v3870 = vld [vmem:[%s3578 + $0xa] sm:$0xff]
        %v3871 = vld [vmem:[%s3578 + $0x22] sm:$0xff]
        %v3872 = vld [vmem:[%s3578 + $0x3a] sm:$0xff]
        %v3873 = vld [vmem:[%s3578 + $0x52] sm:$0xff]
        %v3874 = vld [vmem:[%s3578 + $0x6a] sm:$0xff]
        %v3875 = vld [vmem:[%s3578 + $0x82] sm:$0xff]
        %v3876 = vld [vmem:[%s3578 + $0x9a] sm:$0xff]
        %v3877 = vld [vmem:[%s3578 + $0xb2] sm:$0xff]
        %v3878 = vld [vmem:[%s3587 + $0xa] sm:$0x1]
        %v3879 = vlaneseq
        %v3880 = vshrl.u32 %v3879, 7
        %v3881 = vsub.s32 0, %v3880
        %v3882 = vrot.slane %v3878, %v3881
        %v3883 = vmul.f32 %v3870, %v3882
        %v3884 = vmul.f32 %v3871, %v3882
        %v3885 = vmul.f32 %v3872, %v3882
        %v3886 = vmul.f32 %v3873, %v3882
        %v3887 = vmul.f32 %v3874, %v3882
        %v3888 = vmul.f32 %v3875, %v3882
        %v3889 = vmul.f32 %v3876, %v3882
        %v3890 = vmul.f32 %v3877, %v3882
        %v3891 = vadd.f32 %v3862, %v3883
        %v3892 = vadd.f32 %v3863, %v3884
        %v3893 = vadd.f32 %v3864, %v3885
        %v3894 = vadd.f32 %v3865, %v3886
        %v3895 = vadd.f32 %v3866, %v3887
        %v3896 = vadd.f32 %v3867, %v3888
        %v3897 = vadd.f32 %v3868, %v3889
        %v3898 = vadd.f32 %v3869, %v3890
        %v3899 = vld [vmem:[%s3578 + $0xb] sm:$0xff]
        %v3900 = vld [vmem:[%s3578 + $0x23] sm:$0xff]
        %v3901 = vld [vmem:[%s3578 + $0x3b] sm:$0xff]
        %v3902 = vld [vmem:[%s3578 + $0x53] sm:$0xff]
        %v3903 = vld [vmem:[%s3578 + $0x6b] sm:$0xff]
        %v3904 = vld [vmem:[%s3578 + $0x83] sm:$0xff]
        %v3905 = vld [vmem:[%s3578 + $0x9b] sm:$0xff]
        %v3906 = vld [vmem:[%s3578 + $0xb3] sm:$0xff]
        %v3907 = vld [vmem:[%s3587 + $0xb] sm:$0x1]
        %v3908 = vlaneseq
        %v3909 = vshrl.u32 %v3908, 7
        %v3910 = vsub.s32 0, %v3909
        %v3911 = vrot.slane %v3907, %v3910
        %v3912 = vmul.f32 %v3899, %v3911
        %v3913 = vmul.f32 %v3900, %v3911
        %v3914 = vmul.f32 %v3901, %v3911
        %v3915 = vmul.f32 %v3902, %v3911
        %v3916 = vmul.f32 %v3903, %v3911
        %v3917 = vmul.f32 %v3904, %v3911
        %v3918 = vmul.f32 %v3905, %v3911
        %v3919 = vmul.f32 %v3906, %v3911
        %v3920 = vadd.f32 %v3891, %v3912
        %v3921 = vadd.f32 %v3892, %v3913
        %v3922 = vadd.f32 %v3893, %v3914
        %v3923 = vadd.f32 %v3894, %v3915
        %v3924 = vadd.f32 %v3895, %v3916
        %v3925 = vadd.f32 %v3896, %v3917
        %v3926 = vadd.f32 %v3897, %v3918
        %v3927 = vadd.f32 %v3898, %v3919
        %v3928 = vld [vmem:[%s3578 + $0xc] sm:$0xff]
        %v3929 = vld [vmem:[%s3578 + $0x24] sm:$0xff]
        %v3930 = vld [vmem:[%s3578 + $0x3c] sm:$0xff]
        %v3931 = vld [vmem:[%s3578 + $0x54] sm:$0xff]
        %v3932 = vld [vmem:[%s3578 + $0x6c] sm:$0xff]
        %v3933 = vld [vmem:[%s3578 + $0x84] sm:$0xff]
        %v3934 = vld [vmem:[%s3578 + $0x9c] sm:$0xff]
        %v3935 = vld [vmem:[%s3578 + $0xb4] sm:$0xff]
        %v3936 = vld [vmem:[%s3587 + $0xc] sm:$0x1]
        %v3937 = vlaneseq
        %v3938 = vshrl.u32 %v3937, 7
        %v3939 = vsub.s32 0, %v3938
        %v3940 = vrot.slane %v3936, %v3939
        %v3941 = vmul.f32 %v3928, %v3940
        %v3942 = vmul.f32 %v3929, %v3940
        %v3943 = vmul.f32 %v3930, %v3940
        %v3944 = vmul.f32 %v3931, %v3940
        %v3945 = vmul.f32 %v3932, %v3940
        %v3946 = vmul.f32 %v3933, %v3940
        %v3947 = vmul.f32 %v3934, %v3940
        %v3948 = vmul.f32 %v3935, %v3940
        %v3949 = vadd.f32 %v3920, %v3941
        %v3950 = vadd.f32 %v3921, %v3942
        %v3951 = vadd.f32 %v3922, %v3943
        %v3952 = vadd.f32 %v3923, %v3944
        %v3953 = vadd.f32 %v3924, %v3945
        %v3954 = vadd.f32 %v3925, %v3946
        %v3955 = vadd.f32 %v3926, %v3947
        %v3956 = vadd.f32 %v3927, %v3948
        %s3957 = scalar_lea.vmem %s168, 240
        %v3958 = vld [vmem:[%s3957] sm:$0xff]
        %v3959 = vld [vmem:[%s3957 + $0x18] sm:$0xff]
        %v3960 = vld [vmem:[%s3957 + $0x30] sm:$0xff]
        %v3961 = vld [vmem:[%s3957 + $0x48] sm:$0xff]
        %v3962 = vld [vmem:[%s3957 + $0x60] sm:$0xff]
        %v3963 = vld [vmem:[%s3957 + $0x78] sm:$0xff]
        %v3964 = vld [vmem:[%s3957 + $0x90] sm:$0xff]
        %v3965 = vld [vmem:[%s3957 + $0xa8] sm:$0xff]
        %s3966 = scalar_lea.vmem %s1, 160
        %v3967 = vld [vmem:[%s3966] sm:$0x1]
        %v3968 = vlaneseq
        %v3969 = vshrl.u32 %v3968, 7
        %v3970 = vsub.s32 0, %v3969
        %v3971 = vrot.slane %v3967, %v3970
        %v3972 = vmul.f32 %v3958, %v3971
        %v3973 = vmul.f32 %v3959, %v3971
        %v3974 = vmul.f32 %v3960, %v3971
        %v3975 = vmul.f32 %v3961, %v3971
        %v3976 = vmul.f32 %v3962, %v3971
        %v3977 = vmul.f32 %v3963, %v3971
        %v3978 = vmul.f32 %v3964, %v3971
        %v3979 = vmul.f32 %v3965, %v3971
        %v3980 = vadd.f32 %v3949, %v3972
        %v3981 = vadd.f32 %v3950, %v3973
        %v3982 = vadd.f32 %v3951, %v3974
        %v3983 = vadd.f32 %v3952, %v3975
        %v3984 = vadd.f32 %v3953, %v3976
        %v3985 = vadd.f32 %v3954, %v3977
        %v3986 = vadd.f32 %v3955, %v3978
        %v3987 = vadd.f32 %v3956, %v3979
        %v3988 = vld [vmem:[%s3957 + $0x1] sm:$0xff]
        %v3989 = vld [vmem:[%s3957 + $0x19] sm:$0xff]
        %v3990 = vld [vmem:[%s3957 + $0x31] sm:$0xff]
        %v3991 = vld [vmem:[%s3957 + $0x49] sm:$0xff]
        %v3992 = vld [vmem:[%s3957 + $0x61] sm:$0xff]
        %v3993 = vld [vmem:[%s3957 + $0x79] sm:$0xff]
        %v3994 = vld [vmem:[%s3957 + $0x91] sm:$0xff]
        %v3995 = vld [vmem:[%s3957 + $0xa9] sm:$0xff]
        %v3996 = vld [vmem:[%s3966 + $0x1] sm:$0x1]
        %v3997 = vlaneseq
        %v3998 = vshrl.u32 %v3997, 7
        %v3999 = vsub.s32 0, %v3998
        %v4000 = vrot.slane %v3996, %v3999
        %v4001 = vmul.f32 %v3988, %v4000
        %v4002 = vmul.f32 %v3989, %v4000
        %v4003 = vmul.f32 %v3990, %v4000
        %v4004 = vmul.f32 %v3991, %v4000
        %v4005 = vmul.f32 %v3992, %v4000
        %v4006 = vmul.f32 %v3993, %v4000
        %v4007 = vmul.f32 %v3994, %v4000
        %v4008 = vmul.f32 %v3995, %v4000
        %v4009 = vadd.f32 %v3980, %v4001
        %v4010 = vadd.f32 %v3981, %v4002
        %v4011 = vadd.f32 %v3982, %v4003
        %v4012 = vadd.f32 %v3983, %v4004
        %v4013 = vadd.f32 %v3984, %v4005
        %v4014 = vadd.f32 %v3985, %v4006
        %v4015 = vadd.f32 %v3986, %v4007
        %v4016 = vadd.f32 %v3987, %v4008
        %v4017 = vld [vmem:[%s3957 + $0x2] sm:$0xff]
        %v4018 = vld [vmem:[%s3957 + $0x1a] sm:$0xff]
        %v4019 = vld [vmem:[%s3957 + $0x32] sm:$0xff]
        %v4020 = vld [vmem:[%s3957 + $0x4a] sm:$0xff]
        %v4021 = vld [vmem:[%s3957 + $0x62] sm:$0xff]
        %v4022 = vld [vmem:[%s3957 + $0x7a] sm:$0xff]
        %v4023 = vld [vmem:[%s3957 + $0x92] sm:$0xff]
        %v4024 = vld [vmem:[%s3957 + $0xaa] sm:$0xff]
        %v4025 = vld [vmem:[%s3966 + $0x2] sm:$0x1]
        %v4026 = vlaneseq
        %v4027 = vshrl.u32 %v4026, 7
        %v4028 = vsub.s32 0, %v4027
        %v4029 = vrot.slane %v4025, %v4028
        %v4030 = vmul.f32 %v4017, %v4029
        %v4031 = vmul.f32 %v4018, %v4029
        %v4032 = vmul.f32 %v4019, %v4029
        %v4033 = vmul.f32 %v4020, %v4029
        %v4034 = vmul.f32 %v4021, %v4029
        %v4035 = vmul.f32 %v4022, %v4029
        %v4036 = vmul.f32 %v4023, %v4029
        %v4037 = vmul.f32 %v4024, %v4029
        %v4038 = vadd.f32 %v4009, %v4030
        %v4039 = vadd.f32 %v4010, %v4031
        %v4040 = vadd.f32 %v4011, %v4032
        %v4041 = vadd.f32 %v4012, %v4033
        %v4042 = vadd.f32 %v4013, %v4034
        %v4043 = vadd.f32 %v4014, %v4035
        %v4044 = vadd.f32 %v4015, %v4036
        %v4045 = vadd.f32 %v4016, %v4037
        %v4046 = vld [vmem:[%s3957 + $0x3] sm:$0xff]
        %v4047 = vld [vmem:[%s3957 + $0x1b] sm:$0xff]
        %v4048 = vld [vmem:[%s3957 + $0x33] sm:$0xff]
        %v4049 = vld [vmem:[%s3957 + $0x4b] sm:$0xff]
        %v4050 = vld [vmem:[%s3957 + $0x63] sm:$0xff]
        %v4051 = vld [vmem:[%s3957 + $0x7b] sm:$0xff]
        %v4052 = vld [vmem:[%s3957 + $0x93] sm:$0xff]
        %v4053 = vld [vmem:[%s3957 + $0xab] sm:$0xff]
        %v4054 = vld [vmem:[%s3966 + $0x3] sm:$0x1]
        %v4055 = vlaneseq
        %v4056 = vshrl.u32 %v4055, 7
        %v4057 = vsub.s32 0, %v4056
        %v4058 = vrot.slane %v4054, %v4057
        %v4059 = vmul.f32 %v4046, %v4058
        %v4060 = vmul.f32 %v4047, %v4058
        %v4061 = vmul.f32 %v4048, %v4058
        %v4062 = vmul.f32 %v4049, %v4058
        %v4063 = vmul.f32 %v4050, %v4058
        %v4064 = vmul.f32 %v4051, %v4058
        %v4065 = vmul.f32 %v4052, %v4058
        %v4066 = vmul.f32 %v4053, %v4058
        %v4067 = vadd.f32 %v4038, %v4059
        %v4068 = vadd.f32 %v4039, %v4060
        %v4069 = vadd.f32 %v4040, %v4061
        %v4070 = vadd.f32 %v4041, %v4062
        %v4071 = vadd.f32 %v4042, %v4063
        %v4072 = vadd.f32 %v4043, %v4064
        %v4073 = vadd.f32 %v4044, %v4065
        %v4074 = vadd.f32 %v4045, %v4066
        %v4075 = vld [vmem:[%s3957 + $0x4] sm:$0xff]
        %v4076 = vld [vmem:[%s3957 + $0x1c] sm:$0xff]
        %v4077 = vld [vmem:[%s3957 + $0x34] sm:$0xff]
        %v4078 = vld [vmem:[%s3957 + $0x4c] sm:$0xff]
        %v4079 = vld [vmem:[%s3957 + $0x64] sm:$0xff]
        %v4080 = vld [vmem:[%s3957 + $0x7c] sm:$0xff]
        %v4081 = vld [vmem:[%s3957 + $0x94] sm:$0xff]
        %v4082 = vld [vmem:[%s3957 + $0xac] sm:$0xff]
        %v4083 = vld [vmem:[%s3966 + $0x4] sm:$0x1]
        %v4084 = vlaneseq
        %v4085 = vshrl.u32 %v4084, 7
        %v4086 = vsub.s32 0, %v4085
        %v4087 = vrot.slane %v4083, %v4086
        %v4088 = vmul.f32 %v4075, %v4087
        %v4089 = vmul.f32 %v4076, %v4087
        %v4090 = vmul.f32 %v4077, %v4087
        %v4091 = vmul.f32 %v4078, %v4087
        %v4092 = vmul.f32 %v4079, %v4087
        %v4093 = vmul.f32 %v4080, %v4087
        %v4094 = vmul.f32 %v4081, %v4087
        %v4095 = vmul.f32 %v4082, %v4087
        %v4096 = vadd.f32 %v4067, %v4088
        %v4097 = vadd.f32 %v4068, %v4089
        %v4098 = vadd.f32 %v4069, %v4090
        %v4099 = vadd.f32 %v4070, %v4091
        %v4100 = vadd.f32 %v4071, %v4092
        %v4101 = vadd.f32 %v4072, %v4093
        %v4102 = vadd.f32 %v4073, %v4094
        %v4103 = vadd.f32 %v4074, %v4095
        %v4104 = vld [vmem:[%s3957 + $0x5] sm:$0xff]
        %v4105 = vld [vmem:[%s3957 + $0x1d] sm:$0xff]
        %v4106 = vld [vmem:[%s3957 + $0x35] sm:$0xff]
        %v4107 = vld [vmem:[%s3957 + $0x4d] sm:$0xff]
        %v4108 = vld [vmem:[%s3957 + $0x65] sm:$0xff]
        %v4109 = vld [vmem:[%s3957 + $0x7d] sm:$0xff]
        %v4110 = vld [vmem:[%s3957 + $0x95] sm:$0xff]
        %v4111 = vld [vmem:[%s3957 + $0xad] sm:$0xff]
        %v4112 = vld [vmem:[%s3966 + $0x5] sm:$0x1]
        %v4113 = vlaneseq
        %v4114 = vshrl.u32 %v4113, 7
        %v4115 = vsub.s32 0, %v4114
        %v4116 = vrot.slane %v4112, %v4115
        %v4117 = vmul.f32 %v4104, %v4116
        %v4118 = vmul.f32 %v4105, %v4116
        %v4119 = vmul.f32 %v4106, %v4116
        %v4120 = vmul.f32 %v4107, %v4116
        %v4121 = vmul.f32 %v4108, %v4116
        %v4122 = vmul.f32 %v4109, %v4116
        %v4123 = vmul.f32 %v4110, %v4116
        %v4124 = vmul.f32 %v4111, %v4116
        %v4125 = vadd.f32 %v4096, %v4117
        %v4126 = vadd.f32 %v4097, %v4118
        %v4127 = vadd.f32 %v4098, %v4119
        %v4128 = vadd.f32 %v4099, %v4120
        %v4129 = vadd.f32 %v4100, %v4121
        %v4130 = vadd.f32 %v4101, %v4122
        %v4131 = vadd.f32 %v4102, %v4123
        %v4132 = vadd.f32 %v4103, %v4124
        %v4133 = vld [vmem:[%s3957 + $0x6] sm:$0xff]
        %v4134 = vld [vmem:[%s3957 + $0x1e] sm:$0xff]
        %v4135 = vld [vmem:[%s3957 + $0x36] sm:$0xff]
        %v4136 = vld [vmem:[%s3957 + $0x4e] sm:$0xff]
        %v4137 = vld [vmem:[%s3957 + $0x66] sm:$0xff]
        %v4138 = vld [vmem:[%s3957 + $0x7e] sm:$0xff]
        %v4139 = vld [vmem:[%s3957 + $0x96] sm:$0xff]
        %v4140 = vld [vmem:[%s3957 + $0xae] sm:$0xff]
        %v4141 = vld [vmem:[%s3966 + $0x6] sm:$0x1]
        %v4142 = vlaneseq
        %v4143 = vshrl.u32 %v4142, 7
        %v4144 = vsub.s32 0, %v4143
        %v4145 = vrot.slane %v4141, %v4144
        %v4146 = vmul.f32 %v4133, %v4145
        %v4147 = vmul.f32 %v4134, %v4145
        %v4148 = vmul.f32 %v4135, %v4145
        %v4149 = vmul.f32 %v4136, %v4145
        %v4150 = vmul.f32 %v4137, %v4145
        %v4151 = vmul.f32 %v4138, %v4145
        %v4152 = vmul.f32 %v4139, %v4145
        %v4153 = vmul.f32 %v4140, %v4145
        %v4154 = vadd.f32 %v4125, %v4146
        %v4155 = vadd.f32 %v4126, %v4147
        %v4156 = vadd.f32 %v4127, %v4148
        %v4157 = vadd.f32 %v4128, %v4149
        %v4158 = vadd.f32 %v4129, %v4150
        %v4159 = vadd.f32 %v4130, %v4151
        %v4160 = vadd.f32 %v4131, %v4152
        %v4161 = vadd.f32 %v4132, %v4153
        %v4162 = vld [vmem:[%s3957 + $0x7] sm:$0xff]
        %v4163 = vld [vmem:[%s3957 + $0x1f] sm:$0xff]
        %v4164 = vld [vmem:[%s3957 + $0x37] sm:$0xff]
        %v4165 = vld [vmem:[%s3957 + $0x4f] sm:$0xff]
        %v4166 = vld [vmem:[%s3957 + $0x67] sm:$0xff]
        %v4167 = vld [vmem:[%s3957 + $0x7f] sm:$0xff]
        %v4168 = vld [vmem:[%s3957 + $0x97] sm:$0xff]
        %v4169 = vld [vmem:[%s3957 + $0xaf] sm:$0xff]
        %v4170 = vld [vmem:[%s3966 + $0x7] sm:$0x1]
        %v4171 = vlaneseq
        %v4172 = vshrl.u32 %v4171, 7
        %v4173 = vsub.s32 0, %v4172
        %v4174 = vrot.slane %v4170, %v4173
        %v4175 = vmul.f32 %v4162, %v4174
        %v4176 = vmul.f32 %v4163, %v4174
        %v4177 = vmul.f32 %v4164, %v4174
        %v4178 = vmul.f32 %v4165, %v4174
        %v4179 = vmul.f32 %v4166, %v4174
        %v4180 = vmul.f32 %v4167, %v4174
        %v4181 = vmul.f32 %v4168, %v4174
        %v4182 = vmul.f32 %v4169, %v4174
        %v4183 = vadd.f32 %v4154, %v4175
        %v4184 = vadd.f32 %v4155, %v4176
        %v4185 = vadd.f32 %v4156, %v4177
        %v4186 = vadd.f32 %v4157, %v4178
        %v4187 = vadd.f32 %v4158, %v4179
        %v4188 = vadd.f32 %v4159, %v4180
        %v4189 = vadd.f32 %v4160, %v4181
        %v4190 = vadd.f32 %v4161, %v4182
        %v4191 = vld [vmem:[%s3957 + $0x8] sm:$0xff]
        %v4192 = vld [vmem:[%s3957 + $0x20] sm:$0xff]
        %v4193 = vld [vmem:[%s3957 + $0x38] sm:$0xff]
        %v4194 = vld [vmem:[%s3957 + $0x50] sm:$0xff]
        %v4195 = vld [vmem:[%s3957 + $0x68] sm:$0xff]
        %v4196 = vld [vmem:[%s3957 + $0x80] sm:$0xff]
        %v4197 = vld [vmem:[%s3957 + $0x98] sm:$0xff]
        %v4198 = vld [vmem:[%s3957 + $0xb0] sm:$0xff]
        %v4199 = vld [vmem:[%s3966 + $0x8] sm:$0x1]
        %v4200 = vlaneseq
        %v4201 = vshrl.u32 %v4200, 7
        %v4202 = vsub.s32 0, %v4201
        %v4203 = vrot.slane %v4199, %v4202
        %v4204 = vmul.f32 %v4191, %v4203
        %v4205 = vmul.f32 %v4192, %v4203
        %v4206 = vmul.f32 %v4193, %v4203
        %v4207 = vmul.f32 %v4194, %v4203
        %v4208 = vmul.f32 %v4195, %v4203
        %v4209 = vmul.f32 %v4196, %v4203
        %v4210 = vmul.f32 %v4197, %v4203
        %v4211 = vmul.f32 %v4198, %v4203
        %v4212 = vadd.f32 %v4183, %v4204
        %v4213 = vadd.f32 %v4184, %v4205
        %v4214 = vadd.f32 %v4185, %v4206
        %v4215 = vadd.f32 %v4186, %v4207
        %v4216 = vadd.f32 %v4187, %v4208
        %v4217 = vadd.f32 %v4188, %v4209
        %v4218 = vadd.f32 %v4189, %v4210
        %v4219 = vadd.f32 %v4190, %v4211
        %v4220 = vld [vmem:[%s3957 + $0x9] sm:$0xff]
        %v4221 = vld [vmem:[%s3957 + $0x21] sm:$0xff]
        %v4222 = vld [vmem:[%s3957 + $0x39] sm:$0xff]
        %v4223 = vld [vmem:[%s3957 + $0x51] sm:$0xff]
        %v4224 = vld [vmem:[%s3957 + $0x69] sm:$0xff]
        %v4225 = vld [vmem:[%s3957 + $0x81] sm:$0xff]
        %v4226 = vld [vmem:[%s3957 + $0x99] sm:$0xff]
        %v4227 = vld [vmem:[%s3957 + $0xb1] sm:$0xff]
        %v4228 = vld [vmem:[%s3966 + $0x9] sm:$0x1]
        %v4229 = vlaneseq
        %v4230 = vshrl.u32 %v4229, 7
        %v4231 = vsub.s32 0, %v4230
        %v4232 = vrot.slane %v4228, %v4231
        %v4233 = vmul.f32 %v4220, %v4232
        %v4234 = vmul.f32 %v4221, %v4232
        %v4235 = vmul.f32 %v4222, %v4232
        %v4236 = vmul.f32 %v4223, %v4232
        %v4237 = vmul.f32 %v4224, %v4232
        %v4238 = vmul.f32 %v4225, %v4232
        %v4239 = vmul.f32 %v4226, %v4232
        %v4240 = vmul.f32 %v4227, %v4232
        %v4241 = vadd.f32 %v4212, %v4233
        %v4242 = vadd.f32 %v4213, %v4234
        %v4243 = vadd.f32 %v4214, %v4235
        %v4244 = vadd.f32 %v4215, %v4236
        %v4245 = vadd.f32 %v4216, %v4237
        %v4246 = vadd.f32 %v4217, %v4238
        %v4247 = vadd.f32 %v4218, %v4239
        %v4248 = vadd.f32 %v4219, %v4240
        %v4249 = vld [vmem:[%s3957 + $0xa] sm:$0xff]
        %v4250 = vld [vmem:[%s3957 + $0x22] sm:$0xff]
        %v4251 = vld [vmem:[%s3957 + $0x3a] sm:$0xff]
        %v4252 = vld [vmem:[%s3957 + $0x52] sm:$0xff]
        %v4253 = vld [vmem:[%s3957 + $0x6a] sm:$0xff]
        %v4254 = vld [vmem:[%s3957 + $0x82] sm:$0xff]
        %v4255 = vld [vmem:[%s3957 + $0x9a] sm:$0xff]
        %v4256 = vld [vmem:[%s3957 + $0xb2] sm:$0xff]
        %v4257 = vld [vmem:[%s3966 + $0xa] sm:$0x1]
        %v4258 = vlaneseq
        %v4259 = vshrl.u32 %v4258, 7
        %v4260 = vsub.s32 0, %v4259
        %v4261 = vrot.slane %v4257, %v4260
        %v4262 = vmul.f32 %v4249, %v4261
        %v4263 = vmul.f32 %v4250, %v4261
        %v4264 = vmul.f32 %v4251, %v4261
        %v4265 = vmul.f32 %v4252, %v4261
        %v4266 = vmul.f32 %v4253, %v4261
        %v4267 = vmul.f32 %v4254, %v4261
        %v4268 = vmul.f32 %v4255, %v4261
        %v4269 = vmul.f32 %v4256, %v4261
        %v4270 = vadd.f32 %v4241, %v4262
        %v4271 = vadd.f32 %v4242, %v4263
        %v4272 = vadd.f32 %v4243, %v4264
        %v4273 = vadd.f32 %v4244, %v4265
        %v4274 = vadd.f32 %v4245, %v4266
        %v4275 = vadd.f32 %v4246, %v4267
        %v4276 = vadd.f32 %v4247, %v4268
        %v4277 = vadd.f32 %v4248, %v4269
        %v4278 = vld [vmem:[%s3957 + $0xb] sm:$0xff]
        %v4279 = vld [vmem:[%s3957 + $0x23] sm:$0xff]
        %v4280 = vld [vmem:[%s3957 + $0x3b] sm:$0xff]
        %v4281 = vld [vmem:[%s3957 + $0x53] sm:$0xff]
        %v4282 = vld [vmem:[%s3957 + $0x6b] sm:$0xff]
        %v4283 = vld [vmem:[%s3957 + $0x83] sm:$0xff]
        %v4284 = vld [vmem:[%s3957 + $0x9b] sm:$0xff]
        %v4285 = vld [vmem:[%s3957 + $0xb3] sm:$0xff]
        %v4286 = vld [vmem:[%s3966 + $0xb] sm:$0x1]
        %v4287 = vlaneseq
        %v4288 = vshrl.u32 %v4287, 7
        %v4289 = vsub.s32 0, %v4288
        %v4290 = vrot.slane %v4286, %v4289
        %v4291 = vmul.f32 %v4278, %v4290
        %v4292 = vmul.f32 %v4279, %v4290
        %v4293 = vmul.f32 %v4280, %v4290
        %v4294 = vmul.f32 %v4281, %v4290
        %v4295 = vmul.f32 %v4282, %v4290
        %v4296 = vmul.f32 %v4283, %v4290
        %v4297 = vmul.f32 %v4284, %v4290
        %v4298 = vmul.f32 %v4285, %v4290
        %v4299 = vadd.f32 %v4270, %v4291
        %v4300 = vadd.f32 %v4271, %v4292
        %v4301 = vadd.f32 %v4272, %v4293
        %v4302 = vadd.f32 %v4273, %v4294
        %v4303 = vadd.f32 %v4274, %v4295
        %v4304 = vadd.f32 %v4275, %v4296
        %v4305 = vadd.f32 %v4276, %v4297
        %v4306 = vadd.f32 %v4277, %v4298
        %v4307 = vld [vmem:[%s3957 + $0xc] sm:$0xff]
        %v4308 = vld [vmem:[%s3957 + $0x24] sm:$0xff]
        %v4309 = vld [vmem:[%s3957 + $0x3c] sm:$0xff]
        %v4310 = vld [vmem:[%s3957 + $0x54] sm:$0xff]
        %v4311 = vld [vmem:[%s3957 + $0x6c] sm:$0xff]
        %v4312 = vld [vmem:[%s3957 + $0x84] sm:$0xff]
        %v4313 = vld [vmem:[%s3957 + $0x9c] sm:$0xff]
        %v4314 = vld [vmem:[%s3957 + $0xb4] sm:$0xff]
        %v4315 = vld [vmem:[%s3966 + $0xc] sm:$0x1]
        %v4316 = vlaneseq
        %v4317 = vshrl.u32 %v4316, 7
        %v4318 = vsub.s32 0, %v4317
        %v4319 = vrot.slane %v4315, %v4318
        %v4320 = vmul.f32 %v4307, %v4319
        %v4321 = vmul.f32 %v4308, %v4319
        %v4322 = vmul.f32 %v4309, %v4319
        %v4323 = vmul.f32 %v4310, %v4319
        %v4324 = vmul.f32 %v4311, %v4319
        %v4325 = vmul.f32 %v4312, %v4319
        %v4326 = vmul.f32 %v4313, %v4319
        %v4327 = vmul.f32 %v4314, %v4319
        %v4328 = vadd.f32 %v4299, %v4320
        %v4329 = vadd.f32 %v4300, %v4321
        %v4330 = vadd.f32 %v4301, %v4322
        %v4331 = vadd.f32 %v4302, %v4323
        %v4332 = vadd.f32 %v4303, %v4324
        %v4333 = vadd.f32 %v4304, %v4325
        %v4334 = vadd.f32 %v4305, %v4326
        %v4335 = vadd.f32 %v4306, %v4327
        %s4336 = scalar_lea.vmem %s168, 264
        %v4337 = vld [vmem:[%s4336] sm:$0xff]
        %v4338 = vld [vmem:[%s4336 + $0x18] sm:$0xff]
        %v4339 = vld [vmem:[%s4336 + $0x30] sm:$0xff]
        %v4340 = vld [vmem:[%s4336 + $0x48] sm:$0xff]
        %v4341 = vld [vmem:[%s4336 + $0x60] sm:$0xff]
        %v4342 = vld [vmem:[%s4336 + $0x78] sm:$0xff]
        %v4343 = vld [vmem:[%s4336 + $0x90] sm:$0xff]
        %v4344 = vld [vmem:[%s4336 + $0xa8] sm:$0xff]
        %s4345 = scalar_lea.vmem %s1, 176
        %v4346 = vld [vmem:[%s4345] sm:$0x1]
        %v4347 = vlaneseq
        %v4348 = vshrl.u32 %v4347, 7
        %v4349 = vsub.s32 0, %v4348
        %v4350 = vrot.slane %v4346, %v4349
        %v4351 = vmul.f32 %v4337, %v4350
        %v4352 = vmul.f32 %v4338, %v4350
        %v4353 = vmul.f32 %v4339, %v4350
        %v4354 = vmul.f32 %v4340, %v4350
        %v4355 = vmul.f32 %v4341, %v4350
        %v4356 = vmul.f32 %v4342, %v4350
        %v4357 = vmul.f32 %v4343, %v4350
        %v4358 = vmul.f32 %v4344, %v4350
        %v4359 = vadd.f32 %v4328, %v4351
        %v4360 = vadd.f32 %v4329, %v4352
        %v4361 = vadd.f32 %v4330, %v4353
        %v4362 = vadd.f32 %v4331, %v4354
        %v4363 = vadd.f32 %v4332, %v4355
        %v4364 = vadd.f32 %v4333, %v4356
        %v4365 = vadd.f32 %v4334, %v4357
        %v4366 = vadd.f32 %v4335, %v4358
        %v4367 = vld [vmem:[%s4336 + $0x1] sm:$0xff]
        %v4368 = vld [vmem:[%s4336 + $0x19] sm:$0xff]
        %v4369 = vld [vmem:[%s4336 + $0x31] sm:$0xff]
        %v4370 = vld [vmem:[%s4336 + $0x49] sm:$0xff]
        %v4371 = vld [vmem:[%s4336 + $0x61] sm:$0xff]
        %v4372 = vld [vmem:[%s4336 + $0x79] sm:$0xff]
        %v4373 = vld [vmem:[%s4336 + $0x91] sm:$0xff]
        %v4374 = vld [vmem:[%s4336 + $0xa9] sm:$0xff]
        %v4375 = vld [vmem:[%s4345 + $0x1] sm:$0x1]
        %v4376 = vlaneseq
        %v4377 = vshrl.u32 %v4376, 7
        %v4378 = vsub.s32 0, %v4377
        %v4379 = vrot.slane %v4375, %v4378
        %v4380 = vmul.f32 %v4367, %v4379
        %v4381 = vmul.f32 %v4368, %v4379
        %v4382 = vmul.f32 %v4369, %v4379
        %v4383 = vmul.f32 %v4370, %v4379
        %v4384 = vmul.f32 %v4371, %v4379
        %v4385 = vmul.f32 %v4372, %v4379
        %v4386 = vmul.f32 %v4373, %v4379
        %v4387 = vmul.f32 %v4374, %v4379
        %v4388 = vadd.f32 %v4359, %v4380
        %v4389 = vadd.f32 %v4360, %v4381
        %v4390 = vadd.f32 %v4361, %v4382
        %v4391 = vadd.f32 %v4362, %v4383
        %v4392 = vadd.f32 %v4363, %v4384
        %v4393 = vadd.f32 %v4364, %v4385
        %v4394 = vadd.f32 %v4365, %v4386
        %v4395 = vadd.f32 %v4366, %v4387
        %v4396 = vld [vmem:[%s4336 + $0x2] sm:$0xff]
        %v4397 = vld [vmem:[%s4336 + $0x1a] sm:$0xff]
        %v4398 = vld [vmem:[%s4336 + $0x32] sm:$0xff]
        %v4399 = vld [vmem:[%s4336 + $0x4a] sm:$0xff]
        %v4400 = vld [vmem:[%s4336 + $0x62] sm:$0xff]
        %v4401 = vld [vmem:[%s4336 + $0x7a] sm:$0xff]
        %v4402 = vld [vmem:[%s4336 + $0x92] sm:$0xff]
        %v4403 = vld [vmem:[%s4336 + $0xaa] sm:$0xff]
        %v4404 = vld [vmem:[%s4345 + $0x2] sm:$0x1]
        %v4405 = vlaneseq
        %v4406 = vshrl.u32 %v4405, 7
        %v4407 = vsub.s32 0, %v4406
        %v4408 = vrot.slane %v4404, %v4407
        %v4409 = vmul.f32 %v4396, %v4408
        %v4410 = vmul.f32 %v4397, %v4408
        %v4411 = vmul.f32 %v4398, %v4408
        %v4412 = vmul.f32 %v4399, %v4408
        %v4413 = vmul.f32 %v4400, %v4408
        %v4414 = vmul.f32 %v4401, %v4408
        %v4415 = vmul.f32 %v4402, %v4408
        %v4416 = vmul.f32 %v4403, %v4408
        %v4417 = vadd.f32 %v4388, %v4409
        %v4418 = vadd.f32 %v4389, %v4410
        %v4419 = vadd.f32 %v4390, %v4411
        %v4420 = vadd.f32 %v4391, %v4412
        %v4421 = vadd.f32 %v4392, %v4413
        %v4422 = vadd.f32 %v4393, %v4414
        %v4423 = vadd.f32 %v4394, %v4415
        %v4424 = vadd.f32 %v4395, %v4416
        %v4425 = vld [vmem:[%s4336 + $0x3] sm:$0xff]
        %v4426 = vld [vmem:[%s4336 + $0x1b] sm:$0xff]
        %v4427 = vld [vmem:[%s4336 + $0x33] sm:$0xff]
        %v4428 = vld [vmem:[%s4336 + $0x4b] sm:$0xff]
        %v4429 = vld [vmem:[%s4336 + $0x63] sm:$0xff]
        %v4430 = vld [vmem:[%s4336 + $0x7b] sm:$0xff]
        %v4431 = vld [vmem:[%s4336 + $0x93] sm:$0xff]
        %v4432 = vld [vmem:[%s4336 + $0xab] sm:$0xff]
        %v4433 = vld [vmem:[%s4345 + $0x3] sm:$0x1]
        %v4434 = vlaneseq
        %v4435 = vshrl.u32 %v4434, 7
        %v4436 = vsub.s32 0, %v4435
        %v4437 = vrot.slane %v4433, %v4436
        %v4438 = vmul.f32 %v4425, %v4437
        %v4439 = vmul.f32 %v4426, %v4437
        %v4440 = vmul.f32 %v4427, %v4437
        %v4441 = vmul.f32 %v4428, %v4437
        %v4442 = vmul.f32 %v4429, %v4437
        %v4443 = vmul.f32 %v4430, %v4437
        %v4444 = vmul.f32 %v4431, %v4437
        %v4445 = vmul.f32 %v4432, %v4437
        %v4446 = vadd.f32 %v4417, %v4438
        %v4447 = vadd.f32 %v4418, %v4439
        %v4448 = vadd.f32 %v4419, %v4440
        %v4449 = vadd.f32 %v4420, %v4441
        %v4450 = vadd.f32 %v4421, %v4442
        %v4451 = vadd.f32 %v4422, %v4443
        %v4452 = vadd.f32 %v4423, %v4444
        %v4453 = vadd.f32 %v4424, %v4445
        %v4454 = vld [vmem:[%s4336 + $0x4] sm:$0xff]
        %v4455 = vld [vmem:[%s4336 + $0x1c] sm:$0xff]
        %v4456 = vld [vmem:[%s4336 + $0x34] sm:$0xff]
        %v4457 = vld [vmem:[%s4336 + $0x4c] sm:$0xff]
        %v4458 = vld [vmem:[%s4336 + $0x64] sm:$0xff]
        %v4459 = vld [vmem:[%s4336 + $0x7c] sm:$0xff]
        %v4460 = vld [vmem:[%s4336 + $0x94] sm:$0xff]
        %v4461 = vld [vmem:[%s4336 + $0xac] sm:$0xff]
        %v4462 = vld [vmem:[%s4345 + $0x4] sm:$0x1]
        %v4463 = vlaneseq
        %v4464 = vshrl.u32 %v4463, 7
        %v4465 = vsub.s32 0, %v4464
        %v4466 = vrot.slane %v4462, %v4465
        %v4467 = vmul.f32 %v4454, %v4466
        %v4468 = vmul.f32 %v4455, %v4466
        %v4469 = vmul.f32 %v4456, %v4466
        %v4470 = vmul.f32 %v4457, %v4466
        %v4471 = vmul.f32 %v4458, %v4466
        %v4472 = vmul.f32 %v4459, %v4466
        %v4473 = vmul.f32 %v4460, %v4466
        %v4474 = vmul.f32 %v4461, %v4466
        %v4475 = vadd.f32 %v4446, %v4467
        %v4476 = vadd.f32 %v4447, %v4468
        %v4477 = vadd.f32 %v4448, %v4469
        %v4478 = vadd.f32 %v4449, %v4470
        %v4479 = vadd.f32 %v4450, %v4471
        %v4480 = vadd.f32 %v4451, %v4472
        %v4481 = vadd.f32 %v4452, %v4473
        %v4482 = vadd.f32 %v4453, %v4474
        %v4483 = vld [vmem:[%s4336 + $0x5] sm:$0xff]
        %v4484 = vld [vmem:[%s4336 + $0x1d] sm:$0xff]
        %v4485 = vld [vmem:[%s4336 + $0x35] sm:$0xff]
        %v4486 = vld [vmem:[%s4336 + $0x4d] sm:$0xff]
        %v4487 = vld [vmem:[%s4336 + $0x65] sm:$0xff]
        %v4488 = vld [vmem:[%s4336 + $0x7d] sm:$0xff]
        %v4489 = vld [vmem:[%s4336 + $0x95] sm:$0xff]
        %v4490 = vld [vmem:[%s4336 + $0xad] sm:$0xff]
        %v4491 = vld [vmem:[%s4345 + $0x5] sm:$0x1]
        %v4492 = vlaneseq
        %v4493 = vshrl.u32 %v4492, 7
        %v4494 = vsub.s32 0, %v4493
        %v4495 = vrot.slane %v4491, %v4494
        %v4496 = vmul.f32 %v4483, %v4495
        %v4497 = vmul.f32 %v4484, %v4495
        %v4498 = vmul.f32 %v4485, %v4495
        %v4499 = vmul.f32 %v4486, %v4495
        %v4500 = vmul.f32 %v4487, %v4495
        %v4501 = vmul.f32 %v4488, %v4495
        %v4502 = vmul.f32 %v4489, %v4495
        %v4503 = vmul.f32 %v4490, %v4495
        %v4504 = vadd.f32 %v4475, %v4496
        %v4505 = vadd.f32 %v4476, %v4497
        %v4506 = vadd.f32 %v4477, %v4498
        %v4507 = vadd.f32 %v4478, %v4499
        %v4508 = vadd.f32 %v4479, %v4500
        %v4509 = vadd.f32 %v4480, %v4501
        %v4510 = vadd.f32 %v4481, %v4502
        %v4511 = vadd.f32 %v4482, %v4503
        %v4512 = vld [vmem:[%s4336 + $0x6] sm:$0xff]
        %v4513 = vld [vmem:[%s4336 + $0x1e] sm:$0xff]
        %v4514 = vld [vmem:[%s4336 + $0x36] sm:$0xff]
        %v4515 = vld [vmem:[%s4336 + $0x4e] sm:$0xff]
        %v4516 = vld [vmem:[%s4336 + $0x66] sm:$0xff]
        %v4517 = vld [vmem:[%s4336 + $0x7e] sm:$0xff]
        %v4518 = vld [vmem:[%s4336 + $0x96] sm:$0xff]
        %v4519 = vld [vmem:[%s4336 + $0xae] sm:$0xff]
        %v4520 = vld [vmem:[%s4345 + $0x6] sm:$0x1]
        %v4521 = vlaneseq
        %v4522 = vshrl.u32 %v4521, 7
        %v4523 = vsub.s32 0, %v4522
        %v4524 = vrot.slane %v4520, %v4523
        %v4525 = vmul.f32 %v4512, %v4524
        %v4526 = vmul.f32 %v4513, %v4524
        %v4527 = vmul.f32 %v4514, %v4524
        %v4528 = vmul.f32 %v4515, %v4524
        %v4529 = vmul.f32 %v4516, %v4524
        %v4530 = vmul.f32 %v4517, %v4524
        %v4531 = vmul.f32 %v4518, %v4524
        %v4532 = vmul.f32 %v4519, %v4524
        %v4533 = vadd.f32 %v4504, %v4525
        %v4534 = vadd.f32 %v4505, %v4526
        %v4535 = vadd.f32 %v4506, %v4527
        %v4536 = vadd.f32 %v4507, %v4528
        %v4537 = vadd.f32 %v4508, %v4529
        %v4538 = vadd.f32 %v4509, %v4530
        %v4539 = vadd.f32 %v4510, %v4531
        %v4540 = vadd.f32 %v4511, %v4532
        %v4541 = vld [vmem:[%s4336 + $0x7] sm:$0xff]
        %v4542 = vld [vmem:[%s4336 + $0x1f] sm:$0xff]
        %v4543 = vld [vmem:[%s4336 + $0x37] sm:$0xff]
        %v4544 = vld [vmem:[%s4336 + $0x4f] sm:$0xff]
        %v4545 = vld [vmem:[%s4336 + $0x67] sm:$0xff]
        %v4546 = vld [vmem:[%s4336 + $0x7f] sm:$0xff]
        %v4547 = vld [vmem:[%s4336 + $0x97] sm:$0xff]
        %v4548 = vld [vmem:[%s4336 + $0xaf] sm:$0xff]
        %v4549 = vld [vmem:[%s4345 + $0x7] sm:$0x1]
        %v4550 = vlaneseq
        %v4551 = vshrl.u32 %v4550, 7
        %v4552 = vsub.s32 0, %v4551
        %v4553 = vrot.slane %v4549, %v4552
        %v4554 = vmul.f32 %v4541, %v4553
        %v4555 = vmul.f32 %v4542, %v4553
        %v4556 = vmul.f32 %v4543, %v4553
        %v4557 = vmul.f32 %v4544, %v4553
        %v4558 = vmul.f32 %v4545, %v4553
        %v4559 = vmul.f32 %v4546, %v4553
        %v4560 = vmul.f32 %v4547, %v4553
        %v4561 = vmul.f32 %v4548, %v4553
        %v4562 = vadd.f32 %v4533, %v4554
        %v4563 = vadd.f32 %v4534, %v4555
        %v4564 = vadd.f32 %v4535, %v4556
        %v4565 = vadd.f32 %v4536, %v4557
        %v4566 = vadd.f32 %v4537, %v4558
        %v4567 = vadd.f32 %v4538, %v4559
        %v4568 = vadd.f32 %v4539, %v4560
        %v4569 = vadd.f32 %v4540, %v4561
        %v4570 = vld [vmem:[%s4336 + $0x8] sm:$0xff]
        %v4571 = vld [vmem:[%s4336 + $0x20] sm:$0xff]
        %v4572 = vld [vmem:[%s4336 + $0x38] sm:$0xff]
        %v4573 = vld [vmem:[%s4336 + $0x50] sm:$0xff]
        %v4574 = vld [vmem:[%s4336 + $0x68] sm:$0xff]
        %v4575 = vld [vmem:[%s4336 + $0x80] sm:$0xff]
        %v4576 = vld [vmem:[%s4336 + $0x98] sm:$0xff]
        %v4577 = vld [vmem:[%s4336 + $0xb0] sm:$0xff]
        %v4578 = vld [vmem:[%s4345 + $0x8] sm:$0x1]
        %v4579 = vlaneseq
        %v4580 = vshrl.u32 %v4579, 7
        %v4581 = vsub.s32 0, %v4580
        %v4582 = vrot.slane %v4578, %v4581
        %v4583 = vmul.f32 %v4570, %v4582
        %v4584 = vmul.f32 %v4571, %v4582
        %v4585 = vmul.f32 %v4572, %v4582
        %v4586 = vmul.f32 %v4573, %v4582
        %v4587 = vmul.f32 %v4574, %v4582
        %v4588 = vmul.f32 %v4575, %v4582
        %v4589 = vmul.f32 %v4576, %v4582
        %v4590 = vmul.f32 %v4577, %v4582
        %v4591 = vadd.f32 %v4562, %v4583
        %v4592 = vadd.f32 %v4563, %v4584
        %v4593 = vadd.f32 %v4564, %v4585
        %v4594 = vadd.f32 %v4565, %v4586
        %v4595 = vadd.f32 %v4566, %v4587
        %v4596 = vadd.f32 %v4567, %v4588
        %v4597 = vadd.f32 %v4568, %v4589
        %v4598 = vadd.f32 %v4569, %v4590
        %v4599 = vld [vmem:[%s4336 + $0x9] sm:$0xff]
        %v4600 = vld [vmem:[%s4336 + $0x21] sm:$0xff]
        %v4601 = vld [vmem:[%s4336 + $0x39] sm:$0xff]
        %v4602 = vld [vmem:[%s4336 + $0x51] sm:$0xff]
        %v4603 = vld [vmem:[%s4336 + $0x69] sm:$0xff]
        %v4604 = vld [vmem:[%s4336 + $0x81] sm:$0xff]
        %v4605 = vld [vmem:[%s4336 + $0x99] sm:$0xff]
        %v4606 = vld [vmem:[%s4336 + $0xb1] sm:$0xff]
        %v4607 = vld [vmem:[%s4345 + $0x9] sm:$0x1]
        %v4608 = vlaneseq
        %v4609 = vshrl.u32 %v4608, 7
        %v4610 = vsub.s32 0, %v4609
        %v4611 = vrot.slane %v4607, %v4610
        %v4612 = vmul.f32 %v4599, %v4611
        %v4613 = vmul.f32 %v4600, %v4611
        %v4614 = vmul.f32 %v4601, %v4611
        %v4615 = vmul.f32 %v4602, %v4611
        %v4616 = vmul.f32 %v4603, %v4611
        %v4617 = vmul.f32 %v4604, %v4611
        %v4618 = vmul.f32 %v4605, %v4611
        %v4619 = vmul.f32 %v4606, %v4611
        %v4620 = vadd.f32 %v4591, %v4612
        %v4621 = vadd.f32 %v4592, %v4613
        %v4622 = vadd.f32 %v4593, %v4614
        %v4623 = vadd.f32 %v4594, %v4615
        %v4624 = vadd.f32 %v4595, %v4616
        %v4625 = vadd.f32 %v4596, %v4617
        %v4626 = vadd.f32 %v4597, %v4618
        %v4627 = vadd.f32 %v4598, %v4619
        %v4628 = vld [vmem:[%s4336 + $0xa] sm:$0xff]
        %v4629 = vld [vmem:[%s4336 + $0x22] sm:$0xff]
        %v4630 = vld [vmem:[%s4336 + $0x3a] sm:$0xff]
        %v4631 = vld [vmem:[%s4336 + $0x52] sm:$0xff]
        %v4632 = vld [vmem:[%s4336 + $0x6a] sm:$0xff]
        %v4633 = vld [vmem:[%s4336 + $0x82] sm:$0xff]
        %v4634 = vld [vmem:[%s4336 + $0x9a] sm:$0xff]
        %v4635 = vld [vmem:[%s4336 + $0xb2] sm:$0xff]
        %v4636 = vld [vmem:[%s4345 + $0xa] sm:$0x1]
        %v4637 = vlaneseq
        %v4638 = vshrl.u32 %v4637, 7
        %v4639 = vsub.s32 0, %v4638
        %v4640 = vrot.slane %v4636, %v4639
        %v4641 = vmul.f32 %v4628, %v4640
        %v4642 = vmul.f32 %v4629, %v4640
        %v4643 = vmul.f32 %v4630, %v4640
        %v4644 = vmul.f32 %v4631, %v4640
        %v4645 = vmul.f32 %v4632, %v4640
        %v4646 = vmul.f32 %v4633, %v4640
        %v4647 = vmul.f32 %v4634, %v4640
        %v4648 = vmul.f32 %v4635, %v4640
        %v4649 = vadd.f32 %v4620, %v4641
        %v4650 = vadd.f32 %v4621, %v4642
        %v4651 = vadd.f32 %v4622, %v4643
        %v4652 = vadd.f32 %v4623, %v4644
        %v4653 = vadd.f32 %v4624, %v4645
        %v4654 = vadd.f32 %v4625, %v4646
        %v4655 = vadd.f32 %v4626, %v4647
        %v4656 = vadd.f32 %v4627, %v4648
        %v4657 = vld [vmem:[%s4336 + $0xb] sm:$0xff]
        %v4658 = vld [vmem:[%s4336 + $0x23] sm:$0xff]
        %v4659 = vld [vmem:[%s4336 + $0x3b] sm:$0xff]
        %v4660 = vld [vmem:[%s4336 + $0x53] sm:$0xff]
        %v4661 = vld [vmem:[%s4336 + $0x6b] sm:$0xff]
        %v4662 = vld [vmem:[%s4336 + $0x83] sm:$0xff]
        %v4663 = vld [vmem:[%s4336 + $0x9b] sm:$0xff]
        %v4664 = vld [vmem:[%s4336 + $0xb3] sm:$0xff]
        %v4665 = vld [vmem:[%s4345 + $0xb] sm:$0x1]
        %v4666 = vlaneseq
        %v4667 = vshrl.u32 %v4666, 7
        %v4668 = vsub.s32 0, %v4667
        %v4669 = vrot.slane %v4665, %v4668
        %v4670 = vmul.f32 %v4657, %v4669
        %v4671 = vmul.f32 %v4658, %v4669
        %v4672 = vmul.f32 %v4659, %v4669
        %v4673 = vmul.f32 %v4660, %v4669
        %v4674 = vmul.f32 %v4661, %v4669
        %v4675 = vmul.f32 %v4662, %v4669
        %v4676 = vmul.f32 %v4663, %v4669
        %v4677 = vmul.f32 %v4664, %v4669
        %v4678 = vadd.f32 %v4649, %v4670
        %v4679 = vadd.f32 %v4650, %v4671
        %v4680 = vadd.f32 %v4651, %v4672
        %v4681 = vadd.f32 %v4652, %v4673
        %v4682 = vadd.f32 %v4653, %v4674
        %v4683 = vadd.f32 %v4654, %v4675
        %v4684 = vadd.f32 %v4655, %v4676
        %v4685 = vadd.f32 %v4656, %v4677
        %v4686 = vld [vmem:[%s4336 + $0xc] sm:$0xff]
        %v4687 = vld [vmem:[%s4336 + $0x24] sm:$0xff]
        %v4688 = vld [vmem:[%s4336 + $0x3c] sm:$0xff]
        %v4689 = vld [vmem:[%s4336 + $0x54] sm:$0xff]
        %v4690 = vld [vmem:[%s4336 + $0x6c] sm:$0xff]
        %v4691 = vld [vmem:[%s4336 + $0x84] sm:$0xff]
        %v4692 = vld [vmem:[%s4336 + $0x9c] sm:$0xff]
        %v4693 = vld [vmem:[%s4336 + $0xb4] sm:$0xff]
        %v4694 = vld [vmem:[%s4345 + $0xc] sm:$0x1]
        %v4695 = vlaneseq
        %v4696 = vshrl.u32 %v4695, 7
        %v4697 = vsub.s32 0, %v4696
        %v4698 = vrot.slane %v4694, %v4697
        %v4699 = vmul.f32 %v4686, %v4698
        %v4700 = vmul.f32 %v4687, %v4698
        %v4701 = vmul.f32 %v4688, %v4698
        %v4702 = vmul.f32 %v4689, %v4698
        %v4703 = vmul.f32 %v4690, %v4698
        %v4704 = vmul.f32 %v4691, %v4698
        %v4705 = vmul.f32 %v4692, %v4698
        %v4706 = vmul.f32 %v4693, %v4698
        %v4707 = vadd.f32 %v4678, %v4699
        %v4708 = vadd.f32 %v4679, %v4700
        %v4709 = vadd.f32 %v4680, %v4701
        %v4710 = vadd.f32 %v4681, %v4702
        %v4711 = vadd.f32 %v4682, %v4703
        %v4712 = vadd.f32 %v4683, %v4704
        %v4713 = vadd.f32 %v4684, %v4705
        %v4714 = vadd.f32 %v4685, %v4706
        %s4715 = scalar_lea.vmem %s168, 288
        %v4716 = vld [vmem:[%s4715] sm:$0xff]
        %v4717 = vld [vmem:[%s4715 + $0x18] sm:$0xff]
        %v4718 = vld [vmem:[%s4715 + $0x30] sm:$0xff]
        %v4719 = vld [vmem:[%s4715 + $0x48] sm:$0xff]
        %v4720 = vld [vmem:[%s4715 + $0x60] sm:$0xff]
        %v4721 = vld [vmem:[%s4715 + $0x78] sm:$0xff]
        %v4722 = vld [vmem:[%s4715 + $0x90] sm:$0xff]
        %v4723 = vld [vmem:[%s4715 + $0xa8] sm:$0xff]
        %s4724 = scalar_lea.vmem %s1, 192
        %v4725 = vld [vmem:[%s4724] sm:$0x1]
        %v4726 = vlaneseq
        %v4727 = vshrl.u32 %v4726, 7
        %v4728 = vsub.s32 0, %v4727
        %v4729 = vrot.slane %v4725, %v4728
        %v4730 = vmul.f32 %v4716, %v4729
        %v4731 = vmul.f32 %v4717, %v4729
        %v4732 = vmul.f32 %v4718, %v4729
        %v4733 = vmul.f32 %v4719, %v4729
        %v4734 = vmul.f32 %v4720, %v4729
        %v4735 = vmul.f32 %v4721, %v4729
        %v4736 = vmul.f32 %v4722, %v4729
        %v4737 = vmul.f32 %v4723, %v4729
        %v4738 = vadd.f32 %v4707, %v4730
        %v4739 = vadd.f32 %v4708, %v4731
        %v4740 = vadd.f32 %v4709, %v4732
        %v4741 = vadd.f32 %v4710, %v4733
        %v4742 = vadd.f32 %v4711, %v4734
        %v4743 = vadd.f32 %v4712, %v4735
        %v4744 = vadd.f32 %v4713, %v4736
        %v4745 = vadd.f32 %v4714, %v4737
        %v4746 = vld [vmem:[%s4715 + $0x1] sm:$0xff]
        %v4747 = vld [vmem:[%s4715 + $0x19] sm:$0xff]
        %v4748 = vld [vmem:[%s4715 + $0x31] sm:$0xff]
        %v4749 = vld [vmem:[%s4715 + $0x49] sm:$0xff]
        %v4750 = vld [vmem:[%s4715 + $0x61] sm:$0xff]
        %v4751 = vld [vmem:[%s4715 + $0x79] sm:$0xff]
        %v4752 = vld [vmem:[%s4715 + $0x91] sm:$0xff]
        %v4753 = vld [vmem:[%s4715 + $0xa9] sm:$0xff]
        %v4754 = vld [vmem:[%s4724 + $0x1] sm:$0x1]
        %v4755 = vlaneseq
        %v4756 = vshrl.u32 %v4755, 7
        %v4757 = vsub.s32 0, %v4756
        %v4758 = vrot.slane %v4754, %v4757
        %v4759 = vmul.f32 %v4746, %v4758
        %v4760 = vmul.f32 %v4747, %v4758
        %v4761 = vmul.f32 %v4748, %v4758
        %v4762 = vmul.f32 %v4749, %v4758
        %v4763 = vmul.f32 %v4750, %v4758
        %v4764 = vmul.f32 %v4751, %v4758
        %v4765 = vmul.f32 %v4752, %v4758
        %v4766 = vmul.f32 %v4753, %v4758
        %v4767 = vadd.f32 %v4738, %v4759
        %v4768 = vadd.f32 %v4739, %v4760
        %v4769 = vadd.f32 %v4740, %v4761
        %v4770 = vadd.f32 %v4741, %v4762
        %v4771 = vadd.f32 %v4742, %v4763
        %v4772 = vadd.f32 %v4743, %v4764
        %v4773 = vadd.f32 %v4744, %v4765
        %v4774 = vadd.f32 %v4745, %v4766
        %v4775 = vld [vmem:[%s4715 + $0x2] sm:$0xff]
        %v4776 = vld [vmem:[%s4715 + $0x1a] sm:$0xff]
        %v4777 = vld [vmem:[%s4715 + $0x32] sm:$0xff]
        %v4778 = vld [vmem:[%s4715 + $0x4a] sm:$0xff]
        %v4779 = vld [vmem:[%s4715 + $0x62] sm:$0xff]
        %v4780 = vld [vmem:[%s4715 + $0x7a] sm:$0xff]
        %v4781 = vld [vmem:[%s4715 + $0x92] sm:$0xff]
        %v4782 = vld [vmem:[%s4715 + $0xaa] sm:$0xff]
        %v4783 = vld [vmem:[%s4724 + $0x2] sm:$0x1]
        %v4784 = vlaneseq
        %v4785 = vshrl.u32 %v4784, 7
        %v4786 = vsub.s32 0, %v4785
        %v4787 = vrot.slane %v4783, %v4786
        %v4788 = vmul.f32 %v4775, %v4787
        %v4789 = vmul.f32 %v4776, %v4787
        %v4790 = vmul.f32 %v4777, %v4787
        %v4791 = vmul.f32 %v4778, %v4787
        %v4792 = vmul.f32 %v4779, %v4787
        %v4793 = vmul.f32 %v4780, %v4787
        %v4794 = vmul.f32 %v4781, %v4787
        %v4795 = vmul.f32 %v4782, %v4787
        %v4796 = vadd.f32 %v4767, %v4788
        %v4797 = vadd.f32 %v4768, %v4789
        %v4798 = vadd.f32 %v4769, %v4790
        %v4799 = vadd.f32 %v4770, %v4791
        %v4800 = vadd.f32 %v4771, %v4792
        %v4801 = vadd.f32 %v4772, %v4793
        %v4802 = vadd.f32 %v4773, %v4794
        %v4803 = vadd.f32 %v4774, %v4795
        %v4804 = vld [vmem:[%s4715 + $0x3] sm:$0xff]
        %v4805 = vld [vmem:[%s4715 + $0x1b] sm:$0xff]
        %v4806 = vld [vmem:[%s4715 + $0x33] sm:$0xff]
        %v4807 = vld [vmem:[%s4715 + $0x4b] sm:$0xff]
        %v4808 = vld [vmem:[%s4715 + $0x63] sm:$0xff]
        %v4809 = vld [vmem:[%s4715 + $0x7b] sm:$0xff]
        %v4810 = vld [vmem:[%s4715 + $0x93] sm:$0xff]
        %v4811 = vld [vmem:[%s4715 + $0xab] sm:$0xff]
        %v4812 = vld [vmem:[%s4724 + $0x3] sm:$0x1]
        %v4813 = vlaneseq
        %v4814 = vshrl.u32 %v4813, 7
        %v4815 = vsub.s32 0, %v4814
        %v4816 = vrot.slane %v4812, %v4815
        %v4817 = vmul.f32 %v4804, %v4816
        %v4818 = vmul.f32 %v4805, %v4816
        %v4819 = vmul.f32 %v4806, %v4816
        %v4820 = vmul.f32 %v4807, %v4816
        %v4821 = vmul.f32 %v4808, %v4816
        %v4822 = vmul.f32 %v4809, %v4816
        %v4823 = vmul.f32 %v4810, %v4816
        %v4824 = vmul.f32 %v4811, %v4816
        %v4825 = vadd.f32 %v4796, %v4817
        %v4826 = vadd.f32 %v4797, %v4818
        %v4827 = vadd.f32 %v4798, %v4819
        %v4828 = vadd.f32 %v4799, %v4820
        %v4829 = vadd.f32 %v4800, %v4821
        %v4830 = vadd.f32 %v4801, %v4822
        %v4831 = vadd.f32 %v4802, %v4823
        %v4832 = vadd.f32 %v4803, %v4824
        %v4833 = vld [vmem:[%s4715 + $0x4] sm:$0xff]
        %v4834 = vld [vmem:[%s4715 + $0x1c] sm:$0xff]
        %v4835 = vld [vmem:[%s4715 + $0x34] sm:$0xff]
        %v4836 = vld [vmem:[%s4715 + $0x4c] sm:$0xff]
        %v4837 = vld [vmem:[%s4715 + $0x64] sm:$0xff]
        %v4838 = vld [vmem:[%s4715 + $0x7c] sm:$0xff]
        %v4839 = vld [vmem:[%s4715 + $0x94] sm:$0xff]
        %v4840 = vld [vmem:[%s4715 + $0xac] sm:$0xff]
        %v4841 = vld [vmem:[%s4724 + $0x4] sm:$0x1]
        %v4842 = vlaneseq
        %v4843 = vshrl.u32 %v4842, 7
        %v4844 = vsub.s32 0, %v4843
        %v4845 = vrot.slane %v4841, %v4844
        %v4846 = vmul.f32 %v4833, %v4845
        %v4847 = vmul.f32 %v4834, %v4845
        %v4848 = vmul.f32 %v4835, %v4845
        %v4849 = vmul.f32 %v4836, %v4845
        %v4850 = vmul.f32 %v4837, %v4845
        %v4851 = vmul.f32 %v4838, %v4845
        %v4852 = vmul.f32 %v4839, %v4845
        %v4853 = vmul.f32 %v4840, %v4845
        %v4854 = vadd.f32 %v4825, %v4846
        %v4855 = vadd.f32 %v4826, %v4847
        %v4856 = vadd.f32 %v4827, %v4848
        %v4857 = vadd.f32 %v4828, %v4849
        %v4858 = vadd.f32 %v4829, %v4850
        %v4859 = vadd.f32 %v4830, %v4851
        %v4860 = vadd.f32 %v4831, %v4852
        %v4861 = vadd.f32 %v4832, %v4853
        %v4862 = vld [vmem:[%s4715 + $0x5] sm:$0xff]
        %v4863 = vld [vmem:[%s4715 + $0x1d] sm:$0xff]
        %v4864 = vld [vmem:[%s4715 + $0x35] sm:$0xff]
        %v4865 = vld [vmem:[%s4715 + $0x4d] sm:$0xff]
        %v4866 = vld [vmem:[%s4715 + $0x65] sm:$0xff]
        %v4867 = vld [vmem:[%s4715 + $0x7d] sm:$0xff]
        %v4868 = vld [vmem:[%s4715 + $0x95] sm:$0xff]
        %v4869 = vld [vmem:[%s4715 + $0xad] sm:$0xff]
        %v4870 = vld [vmem:[%s4724 + $0x5] sm:$0x1]
        %v4871 = vlaneseq
        %v4872 = vshrl.u32 %v4871, 7
        %v4873 = vsub.s32 0, %v4872
        %v4874 = vrot.slane %v4870, %v4873
        %v4875 = vmul.f32 %v4862, %v4874
        %v4876 = vmul.f32 %v4863, %v4874
        %v4877 = vmul.f32 %v4864, %v4874
        %v4878 = vmul.f32 %v4865, %v4874
        %v4879 = vmul.f32 %v4866, %v4874
        %v4880 = vmul.f32 %v4867, %v4874
        %v4881 = vmul.f32 %v4868, %v4874
        %v4882 = vmul.f32 %v4869, %v4874
        %v4883 = vadd.f32 %v4854, %v4875
        %v4884 = vadd.f32 %v4855, %v4876
        %v4885 = vadd.f32 %v4856, %v4877
        %v4886 = vadd.f32 %v4857, %v4878
        %v4887 = vadd.f32 %v4858, %v4879
        %v4888 = vadd.f32 %v4859, %v4880
        %v4889 = vadd.f32 %v4860, %v4881
        %v4890 = vadd.f32 %v4861, %v4882
        %v4891 = vld [vmem:[%s4715 + $0x6] sm:$0xff]
        %v4892 = vld [vmem:[%s4715 + $0x1e] sm:$0xff]
        %v4893 = vld [vmem:[%s4715 + $0x36] sm:$0xff]
        %v4894 = vld [vmem:[%s4715 + $0x4e] sm:$0xff]
        %v4895 = vld [vmem:[%s4715 + $0x66] sm:$0xff]
        %v4896 = vld [vmem:[%s4715 + $0x7e] sm:$0xff]
        %v4897 = vld [vmem:[%s4715 + $0x96] sm:$0xff]
        %v4898 = vld [vmem:[%s4715 + $0xae] sm:$0xff]
        %v4899 = vld [vmem:[%s4724 + $0x6] sm:$0x1]
        %v4900 = vlaneseq
        %v4901 = vshrl.u32 %v4900, 7
        %v4902 = vsub.s32 0, %v4901
        %v4903 = vrot.slane %v4899, %v4902
        %v4904 = vmul.f32 %v4891, %v4903
        %v4905 = vmul.f32 %v4892, %v4903
        %v4906 = vmul.f32 %v4893, %v4903
        %v4907 = vmul.f32 %v4894, %v4903
        %v4908 = vmul.f32 %v4895, %v4903
        %v4909 = vmul.f32 %v4896, %v4903
        %v4910 = vmul.f32 %v4897, %v4903
        %v4911 = vmul.f32 %v4898, %v4903
        %v4912 = vadd.f32 %v4883, %v4904
        %v4913 = vadd.f32 %v4884, %v4905
        %v4914 = vadd.f32 %v4885, %v4906
        %v4915 = vadd.f32 %v4886, %v4907
        %v4916 = vadd.f32 %v4887, %v4908
        %v4917 = vadd.f32 %v4888, %v4909
        %v4918 = vadd.f32 %v4889, %v4910
        %v4919 = vadd.f32 %v4890, %v4911
        %v4920 = vld [vmem:[%s4715 + $0x7] sm:$0xff]
        %v4921 = vld [vmem:[%s4715 + $0x1f] sm:$0xff]
        %v4922 = vld [vmem:[%s4715 + $0x37] sm:$0xff]
        %v4923 = vld [vmem:[%s4715 + $0x4f] sm:$0xff]
        %v4924 = vld [vmem:[%s4715 + $0x67] sm:$0xff]
        %v4925 = vld [vmem:[%s4715 + $0x7f] sm:$0xff]
        %v4926 = vld [vmem:[%s4715 + $0x97] sm:$0xff]
        %v4927 = vld [vmem:[%s4715 + $0xaf] sm:$0xff]
        %v4928 = vld [vmem:[%s4724 + $0x7] sm:$0x1]
        %v4929 = vlaneseq
        %v4930 = vshrl.u32 %v4929, 7
        %v4931 = vsub.s32 0, %v4930
        %v4932 = vrot.slane %v4928, %v4931
        %v4933 = vmul.f32 %v4920, %v4932
        %v4934 = vmul.f32 %v4921, %v4932
        %v4935 = vmul.f32 %v4922, %v4932
        %v4936 = vmul.f32 %v4923, %v4932
        %v4937 = vmul.f32 %v4924, %v4932
        %v4938 = vmul.f32 %v4925, %v4932
        %v4939 = vmul.f32 %v4926, %v4932
        %v4940 = vmul.f32 %v4927, %v4932
        %v4941 = vadd.f32 %v4912, %v4933
        %v4942 = vadd.f32 %v4913, %v4934
        %v4943 = vadd.f32 %v4914, %v4935
        %v4944 = vadd.f32 %v4915, %v4936
        %v4945 = vadd.f32 %v4916, %v4937
        %v4946 = vadd.f32 %v4917, %v4938
        %v4947 = vadd.f32 %v4918, %v4939
        %v4948 = vadd.f32 %v4919, %v4940
        %v4949 = vld [vmem:[%s4715 + $0x8] sm:$0xff]
        %v4950 = vld [vmem:[%s4715 + $0x20] sm:$0xff]
        %v4951 = vld [vmem:[%s4715 + $0x38] sm:$0xff]
        %v4952 = vld [vmem:[%s4715 + $0x50] sm:$0xff]
        %v4953 = vld [vmem:[%s4715 + $0x68] sm:$0xff]
        %v4954 = vld [vmem:[%s4715 + $0x80] sm:$0xff]
        %v4955 = vld [vmem:[%s4715 + $0x98] sm:$0xff]
        %v4956 = vld [vmem:[%s4715 + $0xb0] sm:$0xff]
        %v4957 = vld [vmem:[%s4724 + $0x8] sm:$0x1]
        %v4958 = vlaneseq
        %v4959 = vshrl.u32 %v4958, 7
        %v4960 = vsub.s32 0, %v4959
        %v4961 = vrot.slane %v4957, %v4960
        %v4962 = vmul.f32 %v4949, %v4961
        %v4963 = vmul.f32 %v4950, %v4961
        %v4964 = vmul.f32 %v4951, %v4961
        %v4965 = vmul.f32 %v4952, %v4961
        %v4966 = vmul.f32 %v4953, %v4961
        %v4967 = vmul.f32 %v4954, %v4961
        %v4968 = vmul.f32 %v4955, %v4961
        %v4969 = vmul.f32 %v4956, %v4961
        %v4970 = vadd.f32 %v4941, %v4962
        %v4971 = vadd.f32 %v4942, %v4963
        %v4972 = vadd.f32 %v4943, %v4964
        %v4973 = vadd.f32 %v4944, %v4965
        %v4974 = vadd.f32 %v4945, %v4966
        %v4975 = vadd.f32 %v4946, %v4967
        %v4976 = vadd.f32 %v4947, %v4968
        %v4977 = vadd.f32 %v4948, %v4969
        %v4978 = vld [vmem:[%s4715 + $0x9] sm:$0xff]
        %v4979 = vld [vmem:[%s4715 + $0x21] sm:$0xff]
        %v4980 = vld [vmem:[%s4715 + $0x39] sm:$0xff]
        %v4981 = vld [vmem:[%s4715 + $0x51] sm:$0xff]
        %v4982 = vld [vmem:[%s4715 + $0x69] sm:$0xff]
        %v4983 = vld [vmem:[%s4715 + $0x81] sm:$0xff]
        %v4984 = vld [vmem:[%s4715 + $0x99] sm:$0xff]
        %v4985 = vld [vmem:[%s4715 + $0xb1] sm:$0xff]
        %v4986 = vld [vmem:[%s4724 + $0x9] sm:$0x1]
        %v4987 = vlaneseq
        %v4988 = vshrl.u32 %v4987, 7
        %v4989 = vsub.s32 0, %v4988
        %v4990 = vrot.slane %v4986, %v4989
        %v4991 = vmul.f32 %v4978, %v4990
        %v4992 = vmul.f32 %v4979, %v4990
        %v4993 = vmul.f32 %v4980, %v4990
        %v4994 = vmul.f32 %v4981, %v4990
        %v4995 = vmul.f32 %v4982, %v4990
        %v4996 = vmul.f32 %v4983, %v4990
        %v4997 = vmul.f32 %v4984, %v4990
        %v4998 = vmul.f32 %v4985, %v4990
        %v4999 = vadd.f32 %v4970, %v4991
        %v5000 = vadd.f32 %v4971, %v4992
        %v5001 = vadd.f32 %v4972, %v4993
        %v5002 = vadd.f32 %v4973, %v4994
        %v5003 = vadd.f32 %v4974, %v4995
        %v5004 = vadd.f32 %v4975, %v4996
        %v5005 = vadd.f32 %v4976, %v4997
        %v5006 = vadd.f32 %v4977, %v4998
        %v5007 = vld [vmem:[%s4715 + $0xa] sm:$0xff]
        %v5008 = vld [vmem:[%s4715 + $0x22] sm:$0xff]
        %v5009 = vld [vmem:[%s4715 + $0x3a] sm:$0xff]
        %v5010 = vld [vmem:[%s4715 + $0x52] sm:$0xff]
        %v5011 = vld [vmem:[%s4715 + $0x6a] sm:$0xff]
        %v5012 = vld [vmem:[%s4715 + $0x82] sm:$0xff]
        %v5013 = vld [vmem:[%s4715 + $0x9a] sm:$0xff]
        %v5014 = vld [vmem:[%s4715 + $0xb2] sm:$0xff]
        %v5015 = vld [vmem:[%s4724 + $0xa] sm:$0x1]
        %v5016 = vlaneseq
        %v5017 = vshrl.u32 %v5016, 7
        %v5018 = vsub.s32 0, %v5017
        %v5019 = vrot.slane %v5015, %v5018
        %v5020 = vmul.f32 %v5007, %v5019
        %v5021 = vmul.f32 %v5008, %v5019
        %v5022 = vmul.f32 %v5009, %v5019
        %v5023 = vmul.f32 %v5010, %v5019
        %v5024 = vmul.f32 %v5011, %v5019
        %v5025 = vmul.f32 %v5012, %v5019
        %v5026 = vmul.f32 %v5013, %v5019
        %v5027 = vmul.f32 %v5014, %v5019
        %v5028 = vadd.f32 %v4999, %v5020
        %v5029 = vadd.f32 %v5000, %v5021
        %v5030 = vadd.f32 %v5001, %v5022
        %v5031 = vadd.f32 %v5002, %v5023
        %v5032 = vadd.f32 %v5003, %v5024
        %v5033 = vadd.f32 %v5004, %v5025
        %v5034 = vadd.f32 %v5005, %v5026
        %v5035 = vadd.f32 %v5006, %v5027
        %v5036 = vld [vmem:[%s4715 + $0xb] sm:$0xff]
        %v5037 = vld [vmem:[%s4715 + $0x23] sm:$0xff]
        %v5038 = vld [vmem:[%s4715 + $0x3b] sm:$0xff]
        %v5039 = vld [vmem:[%s4715 + $0x53] sm:$0xff]
        %v5040 = vld [vmem:[%s4715 + $0x6b] sm:$0xff]
        %v5041 = vld [vmem:[%s4715 + $0x83] sm:$0xff]
        %v5042 = vld [vmem:[%s4715 + $0x9b] sm:$0xff]
        %v5043 = vld [vmem:[%s4715 + $0xb3] sm:$0xff]
        %v5044 = vld [vmem:[%s4724 + $0xb] sm:$0x1]
        %v5045 = vlaneseq
        %v5046 = vshrl.u32 %v5045, 7
        %v5047 = vsub.s32 0, %v5046
        %v5048 = vrot.slane %v5044, %v5047
        %v5049 = vmul.f32 %v5036, %v5048
        %v5050 = vmul.f32 %v5037, %v5048
        %v5051 = vmul.f32 %v5038, %v5048
        %v5052 = vmul.f32 %v5039, %v5048
        %v5053 = vmul.f32 %v5040, %v5048
        %v5054 = vmul.f32 %v5041, %v5048
        %v5055 = vmul.f32 %v5042, %v5048
        %v5056 = vmul.f32 %v5043, %v5048
        %v5057 = vadd.f32 %v5028, %v5049
        %v5058 = vadd.f32 %v5029, %v5050
        %v5059 = vadd.f32 %v5030, %v5051
        %v5060 = vadd.f32 %v5031, %v5052
        %v5061 = vadd.f32 %v5032, %v5053
        %v5062 = vadd.f32 %v5033, %v5054
        %v5063 = vadd.f32 %v5034, %v5055
        %v5064 = vadd.f32 %v5035, %v5056
        %v5065 = vld [vmem:[%s4715 + $0xc] sm:$0xff]
        %v5066 = vld [vmem:[%s4715 + $0x24] sm:$0xff]
        %v5067 = vld [vmem:[%s4715 + $0x3c] sm:$0xff]
        %v5068 = vld [vmem:[%s4715 + $0x54] sm:$0xff]
        %v5069 = vld [vmem:[%s4715 + $0x6c] sm:$0xff]
        %v5070 = vld [vmem:[%s4715 + $0x84] sm:$0xff]
        %v5071 = vld [vmem:[%s4715 + $0x9c] sm:$0xff]
        %v5072 = vld [vmem:[%s4715 + $0xb4] sm:$0xff]
        %v5073 = vld [vmem:[%s4724 + $0xc] sm:$0x1]
        %v5074 = vlaneseq
        %v5075 = vshrl.u32 %v5074, 7
        %v5076 = vsub.s32 0, %v5075
        %v5077 = vrot.slane %v5073, %v5076
        %v5078 = vmul.f32 %v5065, %v5077
        %v5079 = vmul.f32 %v5066, %v5077
        %v5080 = vmul.f32 %v5067, %v5077
        %v5081 = vmul.f32 %v5068, %v5077
        %v5082 = vmul.f32 %v5069, %v5077
        %v5083 = vmul.f32 %v5070, %v5077
        %v5084 = vmul.f32 %v5071, %v5077
        %v5085 = vmul.f32 %v5072, %v5077
        %v5086 = vadd.f32 %v5057, %v5078
        %v5087 = vadd.f32 %v5058, %v5079
        %v5088 = vadd.f32 %v5059, %v5080
        %v5089 = vadd.f32 %v5060, %v5081
        %v5090 = vadd.f32 %v5061, %v5082
        %v5091 = vadd.f32 %v5062, %v5083
        %v5092 = vadd.f32 %v5063, %v5084
        %v5093 = vadd.f32 %v5064, %v5085
        %v5094 = vld [vmem:[%s2] sm:$0x1]
        %v5096 = vlaneseq
        %v5097 = vshrl.u32 %v5096, 7
        %v5098 = vsub.s32 0, %v5097
        %v5099 = vrot.slane %v5094, %v5098
        %v5101 = vadd.f32 %v5086, %v5099
        %v5102 = vadd.f32 %v5087, %v5099
        %v5103 = vadd.f32 %v5088, %v5099
        %v5104 = vadd.f32 %v5089, %v5099
        %v5105 = vadd.f32 %v5090, %v5099
        %v5106 = vadd.f32 %v5091, %v5099
        %v5107 = vadd.f32 %v5092, %v5099
        %v5108 = vadd.f32 %v5093, %v5099
        %5109 = vst [vmem:[%s163] sm:$0xff] %v5101
        %5110 = vst [vmem:[%s163 + $0x8] sm:$0xff] %v5102
        %5111 = vst [vmem:[%s163 + $0x10] sm:$0xff] %v5103
        %5112 = vst [vmem:[%s163 + $0x18] sm:$0xff] %v5104
        %5113 = vst [vmem:[%s163 + $0x20] sm:$0xff] %v5105
        %5114 = vst [vmem:[%s163 + $0x28] sm:$0xff] %v5106
        %5115 = vst [vmem:[%s163 + $0x30] sm:$0xff] %v5107
        %5116 = vst [vmem:[%s163 + $0x38] sm:$0xff] %v5108
        %s5117 = sand.u32 %s93, 1
        %s5118 = scalar_lea.sflag [#allocation3], %s5117
        %s5119 = sand.u32 %s93, 1
        %s5120 = smul.addr %s5119, 64
        %s5121 = scalar_lea.vmem [#allocation2], %s5120
        // Predicated region
        $region33: #{tpu_custom_call.1} parent=31 // pred_check
          %p5122 = pneg %p103
        $region34: #{tpu_custom_call.1} parent=31 // pred_check_branch
          %5124 = sbr.rel (%p5122) target = $region36
        $region35: #{tpu_custom_call.1} parent=31 // pred_region
          %s5126 = ssub.s32 1024, 1024
          %5127 = vsyncadd %s5118, %s5126
          %s5128 = smul.addr %s17, 8
          %s5129 = smul.addr %s5128, 128
          %s5130 = scalar_lea.hbm %s3, %s5129
          %s5131 = sshll.u32 %s5121, 4
          %s5132 = int_to_ptr.vmem [resolvable:$true] %s5131
          %5137 = dma.vmem_to_hbm [thread:$0]  %s5132, 1024, %s5130, %s5118, 128, 128, 8
        $region36: #{tpu_custom_call.1} parent=31 // pred_fallthru
          _
      $region32: #{tpu_custom_call.1} parent=5 // pred_fallthru
        _
      %p5138 = scmp.le.s32.totalorder 2, %s12
      // Predicated region
      $region37: #{tpu_custom_call.1} parent=5 // pred_check
        %p5139 = pneg %p5138
      $region38: #{tpu_custom_call.1} parent=5 // pred_check_branch
        %5141 = sbr.rel (%p5139) target = $region40
      $region39: #{tpu_custom_call.1} parent=5 // pred_region
        %s5142 = ssub.s32 %s12, 2
        // Predicated region
        $region41: #{tpu_custom_call.1} parent=39 // pred_check
          %p5143 = pneg %p109
        $region42: #{tpu_custom_call.1} parent=39 // pred_check_branch
          %5145 = sbr.rel (%p5143) target = $region44
        $region43: #{tpu_custom_call.1} parent=39 // pred_region
          %s5146 = sand.u32 %s94, 1
          %s5147 = scalar_lea.sflag [#allocation3], %s5146
          %s5148 = sand.u32 %s94, 1
          %s5149 = smul.addr %s5148, 64
          %s5150 = scalar_lea.vmem [#allocation2], %s5149
          %5151 = dma.done %s5147, 1024
        $region44: #{tpu_custom_call.1} parent=39 // pred_fallthru
          _
      $region40: #{tpu_custom_call.1} parent=5 // pred_fallthru
        _
    $region6: #{tpu_custom_call.1} parent=1 // loop_footer
      %s16 = sadd.s32 1, %s12
    $region7: #{tpu_custom_call.1} parent=1 // loop_footer_branch
      %11 = sbr.rel target = $region3
    $region8: #{tpu_custom_call.1} parent=1 // loop_exit
      _
    %5152 = vsyncpa [#allocation3], 1
    %s5153 = scalar_lea.sflag [#allocation3], 1
    %5154 = vsyncpa %s5153, 1

</llo_original>
